<compile_context>
chip_gen: v6e
topology: v6e:2x2x1
jax: 0.10.0
libtpu: 0.0.40
codegen_flags: <defaults>
</compile_context>

<pallas_src>
import numpy as np
import jax
import jax.numpy as jnp
from jax import lax
from jax.experimental import pallas as pl
from jax.experimental.pallas import tpu as pltpu

LANE = 128
SUBLANE = 8
VMEM_LIMIT = 48 * 1024 * 1024  # below v7x's 64 MiB physical VMEM


def _round_up(x, m):
    return (x + m - 1) // m * m


def _pick_strip(h):
    # Largest H-strip <= 8 that divides H (bounds the per-strip accumulator).
    for th in (8, 4, 2, 1):
        if h % th == 0:
            return th
    return 1


# ----------------------------------------------------------------------------
# Bilinear (align_corners=True) interpolation matrix, matches nn.Upsample.
# ----------------------------------------------------------------------------
def _bilinear_matrix(n_out: int, n_in: int) -> np.ndarray:
    A = np.zeros((n_out, n_in), dtype=np.float32)
    if n_out == 1 or n_in == 1:
        A[:, 0] = 1.0
        return A
    for i in range(n_out):
        src = i * (n_in - 1) / (n_out - 1)
        i0 = int(np.floor(src))
        i1 = min(i0 + 1, n_in - 1)
        f = src - i0
        A[i, i0] += 1.0 - f
        A[i, i1] += f
    return A


# ----------------------------------------------------------------------------
# Pallas kernels: separable bilinear 2x upsample, NHWC, grid over batch only.
# ----------------------------------------------------------------------------
def _wmix_kernel(x_ref, aw_ref, o_ref):
    # x: (1, H, W, C); aw: (W2, W); o: (1, H, W2, C)
    H = x_ref.shape[1]
    for h in range(H):  # static unroll; H is small per block
        o_ref[0, h] = jnp.dot(aw_ref[...], x_ref[0, h],
                              preferred_element_type=jnp.float32)


def _hmix_kernel(x_ref, ah_ref, o_ref):
    # x: (1, H, W2*C); ah: (H2, H); o: (1, H2, W2*C)  -- lane dim = W2*C
    o_ref[0] = jnp.dot(ah_ref[...], x_ref[0], preferred_element_type=jnp.float32)


def upsample_bilinear_x2(x):
    """NHWC (N, H, W, C) -> (N, 2H, 2W, C), bilinear, align_corners=True."""
    N, H, W, C = x.shape
    H2, W2 = 2 * H, 2 * W
    aw = jnp.asarray(_bilinear_matrix(W2, W))   # (W2, W) - used directly, no .T
    ah = jnp.asarray(_bilinear_matrix(H2, H))   # (H2, H)
    params = pltpu.CompilerParams(dimension_semantics=("parallel",),
                                  vmem_limit_bytes=VMEM_LIMIT)
    # Step 1: W-mix (per-row MXU matmuls inside one grid step per batch item).
    y = pl.pallas_call(
        _wmix_kernel,
        out_shape=jax.ShapeDtypeStruct((N, H, W2, C), jnp.float32),
        grid=(N,),
        in_specs=[pl.BlockSpec((1, H, W, C), lambda n: (n, 0, 0, 0)),
                  pl.BlockSpec((W2, W), lambda n: (0, 0))],
        out_specs=pl.BlockSpec((1, H, W2, C), lambda n: (n, 0, 0, 0)),
        compiler_params=params,
    )(x, aw)
    # Step 2: H-mix as one wide matmul per batch item (free HBM reshape between).
    y2 = y.reshape(N, H, W2 * C)
    z = pl.pallas_call(
        _hmix_kernel,
        out_shape=jax.ShapeDtypeStruct((N, H2, W2 * C), jnp.float32),
        grid=(N,),
        in_specs=[pl.BlockSpec((1, H, W2 * C), lambda n: (n, 0, 0)),
                  pl.BlockSpec((H2, H), lambda n: (0, 0))],
        out_specs=pl.BlockSpec((1, H2, W2 * C), lambda n: (n, 0, 0)),
        compiler_params=params,
    )(y2, ah)
    return z.reshape(N, H2, W2, C)


# ----------------------------------------------------------------------------
# Pallas kernel: fused Conv3x3 (padding=1, no bias) + folded BN + ReLU.
# Multiple inputs = channel-concat fused into the kernel (no concat in HBM).
# ----------------------------------------------------------------------------
def _make_conv_kernel(n_inputs, TH, Wp):
    def kernel(*refs):
        x_refs = refs[:n_inputs]                     # each (1, Hp, Wp, Cin_i)
        w_refs = refs[n_inputs:2 * n_inputs]         # each (3, 3*Cin_i, Cout)
        scale_ref, shift_ref, o_ref = refs[2 * n_inputs:]
        cout = o_ref.shape[-1]
        s = pl.program_id(1)
        row0 = s * TH                                # strip top row (with halo)
        nrows = (TH + 2) * Wp

        acc = jnp.zeros((TH * Wp, cout), jnp.float32)
        for x_ref, w_ref in zip(x_refs, w_refs):
            cin = x_ref.shape[-1]
            # Contiguous row-slab with 2-row halo; only the (untiled) H axis is
            # sliced.  Reshape to 2D is layout preserving since Wp % 8 == 0.
            slab = x_ref[0, pl.ds(row0, TH + 2)]     # (TH+2, Wp, Cin)
            s2d = slab.reshape(nrows, cin)
            # Two W-shifted copies built once per strip and reused for all 3 dy
            # taps; wrapped rows only pollute the discarded columns >= W.
            # TODO(synk): pltpu.roll(axis=0) would move these shifts onto the XLU.
            xs = jnp.concatenate(
                [s2d,
                 jnp.roll(s2d, -1, axis=0),
                 jnp.roll(s2d, -2, axis=0)],
                axis=-1)                             # (nrows, 3*Cin)
            for dy in range(3):
                # dy*Wp is a multiple of 8 -> aligned (cheap) row slice.
                sub = xs[dy * Wp: dy * Wp + TH * Wp, :]
                acc = acc + jnp.dot(sub, w_ref[dy],
                                    preferred_element_type=jnp.float32)

        out = jnp.maximum(acc * scale_ref[...] + shift_ref[...], 0.0)
        o_ref[0] = out.reshape(TH, Wp, cout)
    return kernel


def conv3x3_bn_relu(inputs, weights_pt, gamma, beta, mean, var, eps=1e-5):
    """Fused 3x3 conv (padding=1, no bias) + BN (eval) + ReLU over the channel
    concat of `inputs`, without materializing the concat.

    inputs:      list of (x_nhwc, (top, bottom, left, right)) spatial paddings;
                 all inputs must map onto the same padded frame.
    weights_pt:  list of (Cout, Cin_i, 3, 3) PyTorch-layout weight slices.
    Returns (N, H, W, Cout_padded) with padded channels exactly zero.
    """
    x0, (t0, b0, l0, r0) = inputs[0]
    N = x0.shape[0]
    Hp = x0.shape[1] + t0 + b0                 # = H + 2
    Wv = x0.shape[2] + l0 + r0 - 2             # valid output width
    H = Hp - 2
    Wp = _round_up(Wv + 2, SUBLANE)            # W-aligned padded width
    Cout = weights_pt[0].shape[0]
    Coutp = _round_up(Cout, LANE)              # lane-dense output channels

    xps, wsts, cins = [], [], []
    for (x, (t, b, l, r)), w in zip(inputs, weights_pt):
        n, h, wdt, c = x.shape
        assert h + t + b == Hp and wdt + l + r == Wv + 2
        cp = _round_up(c, LANE)                # lane-dense input channels
        xp = jnp.pad(x, ((0, 0), (t, b), (l, Wp - wdt - l), (0, cp - c)))
        xps.append(xp)
        cin_w = w.shape[1]
        wt = jnp.transpose(w, (2, 3, 1, 0))    # (3, 3, Cin_w, Cout)
        wt = jnp.pad(wt, ((0, 0), (0, 0), (0, cp - cin_w), (0, Coutp - Cout)))
        wsts.append(wt.reshape(3, 3 * cp, Coutp))   # dx stacked along K
        cins.append(cp)

    inv_std = gamma / jnp.sqrt(var + eps)
    scale = jnp.pad(inv_std, (0, Coutp - Cout)).reshape(1, Coutp)
    shift = jnp.pad(beta - mean * inv_std, (0, Coutp - Cout)).reshape(1, Coutp)

    TH = _pick_strip(H)
    num_strips = H // TH
    n_in = len(xps)
    kernel = _make_conv_kernel(n_in, TH, Wp)

    in_specs = (
        [pl.BlockSpec((1, Hp, Wp, cp), lambda n, s: (n, 0, 0, 0)) for cp in cins]
        + [pl.BlockSpec((3, 3 * cp, Coutp), lambda n, s: (0, 0, 0)) for cp in cins]
        + [pl.BlockSpec((1, Coutp), lambda n, s: (0, 0)),
           pl.BlockSpec((1, Coutp), lambda n, s: (0, 0))])

    out = pl.pallas_call(
        kernel,
        out_shape=jax.ShapeDtypeStruct((N, H, Wp, Coutp), jnp.float32),
        grid=(N, num_strips),
        in_specs=in_specs,
        out_specs=pl.BlockSpec((1, TH, Wp, Coutp), lambda n, s: (n, s, 0, 0)),
        compiler_params=pltpu.CompilerParams(
            dimension_semantics=("parallel", "parallel"),
            vmem_limit_bytes=VMEM_LIMIT),
    )(*xps, *wsts, scale, shift)
    # Drop the W-alignment garbage columns; channels stay 128-padded (zeros).
    return out[:, :, :Wv, :]


# ----------------------------------------------------------------------------
# `Up` module (bilinear=True): parameters initialized deterministically.
# ----------------------------------------------------------------------------
class UpPallas:
    def __init__(self, in_channels, out_channels, key):
        mid = in_channels // 2
        k1, k2, k3, k4, k5, k6 = jax.random.split(key, 6)
        self.w1 = jax.random.normal(k1, (mid, in_channels, 3, 3), jnp.float32) * (
            1.0 / np.sqrt(in_channels * 9))
        self.w2 = jax.random.normal(k2, (out_channels, mid, 3, 3), jnp.float32) * (
            1.0 / np.sqrt(mid * 9))
        self.g1 = jax.random.uniform(k3, (mid,), jnp.float32, 0.5, 1.5)
        self.b1 = jax.random.normal(k4, (mid,), jnp.float32) * 0.1
        self.m1 = jnp.zeros((mid,), jnp.float32)
        self.v1 = jnp.ones((mid,), jnp.float32)
        self.g2 = jax.random.uniform(k5, (out_channels,), jnp.float32, 0.5, 1.5)
        self.b2 = jax.random.normal(k6, (out_channels,), jnp.float32) * 0.1
        self.m2 = jnp.zeros((out_channels,), jnp.float32)
        self.v2 = jnp.ones((out_channels,), jnp.float32)

    def __call__(self, x1_nchw, x2_nchw):
        # NCHW (PyTorch convention) -> NHWC for the kernels.
        x1 = jnp.transpose(x1_nchw, (0, 2, 3, 1))
        x2 = jnp.transpose(x2_nchw, (0, 2, 3, 1))
        x1 = upsample_bilinear_x2(x1)
        diffY = x2.shape[1] - x1.shape[1]
        diffX = x2.shape[2] - x1.shape[2]
        c2 = x2.shape[-1]
        # F.pad centering of x1 and torch.cat([x2, x1], dim=1) are fused into
        # conv1: the two tensors are separate kernel inputs, the conv weight is
        # split along Cin (first c2 channels belong to x2).
        pads_x2 = (1, 1, 1, 1)
        pads_x1 = (1 + diffY // 2, 1 + (diffY - diffY // 2),
                   1 + diffX // 2, 1 + (diffX - diffX // 2))
        w1a = self.w1[:, :c2]
        w1b = self.w1[:, c2:]
        h = conv3x3_bn_relu([(x2, pads_x2), (x1, pads_x1)], [w1a, w1b],
                            self.g1, self.b1, self.m1, self.v1)
        y = conv3x3_bn_relu([(h, (1, 1, 1, 1))], [self.w2],
                            self.g2, self.b2, self.m2, self.v2)
        y = y[:, :, :, :self.w2.shape[0]]          # drop lane-padding channels
        return jnp.transpose(y, (0, 3, 1, 2))      # back to NCHW


# ----------------------------------------------------------------------------
# Main: small deterministic example + pure-JAX reference check.
# ----------------------------------------------------------------------------
if __name__ == "__main__":
    key = jax.random.PRNGKey(0)
    kx1, kx2, kp = jax.random.split(key, 3)

    N, in_ch, out_ch = 2, 8, 4        # concat channels = in_ch (x1: 4ch, x2: 4ch)
    H1, W1 = 8, 8
    x1 = jax.random.normal(kx1, (N, in_ch // 2, H1, W1), jnp.float32)
    x2 = jax.random.normal(kx2, (N, in_ch // 2, 2 * H1, 2 * W1), jnp.float32)

    up = UpPallas(in_ch, out_ch, kp)
    y = jax.block_until_ready(jax.jit(up.__call__)(x1, x2))
    assert y.shape == (N, out_ch, 2 * H1, 2 * W1), y.shape

    # Pure-JAX reference of the same math (NCHW, eval-mode BN).
    ah = jnp.asarray(_bilinear_matrix(2 * H1, H1))
    aw = jnp.asarray(_bilinear_matrix(2 * W1, W1))
    x1u = jnp.einsum('Hh,nchw->ncHw', ah, x1)
    x1u = jnp.einsum('Ww,ncHw->ncHW', aw, x1u)
    xr = jnp.concatenate([x2, x1u], axis=1)

    def ref_block(x, w, g, b, m, v, eps=1e-5):
        o = lax.conv_general_dilated(x, w, (1, 1), 'SAME',
                                     dimension_numbers=('NCHW', 'OIHW', 'NCHW'))
        o = (o - m[None, :, None, None]) * (g / jnp.sqrt(v + eps))[None, :, None, None] \
            + b[None, :, None, None]
        return jnp.maximum(o, 0.0)

    ref = ref_block(ref_block(xr, up.w1, up.g1, up.b1, up.m1, up.v1),
                    up.w2, up.g2, up.b2, up.m2, up.v2)
    np.testing.assert_allclose(np.asarray(y), np.asarray(ref), atol=1e-4, rtol=1e-4)

    print("KERNEL_OK")
</pallas_src>

<mosaic_0001>
module attributes {stable_mosaic.version = 11 : i64} {
  func.func @_wmix_kernel(%arg0: i32, %arg1: memref<1x8x8x4xf32, #tpu.memory_space<vmem>>, %arg2: memref<16x8xf32, #tpu.memory_space<vmem>>, %arg3: memref<1x8x16x4xf32, #tpu.memory_space<vmem>>) attributes {dimension_semantics = [#tpu.dimension_semantics<parallel>], iteration_bounds = array<i64: 2>, scalar_prefetch = 0 : i64, scratch_operands = 0 : i64, tpu.core_type = #tpu.core_type<tc>, window_params = [{transform_indices = @transform_0, window_bounds = array<i64: 1, 8, 8, 4>}, {pipeline_mode = #tpu.pipeline_mode<synchronous>, transform_indices = @transform_1, window_bounds = array<i64: 16, 8>}, {transform_indices = @transform_2, window_bounds = array<i64: 1, 8, 16, 4>}]} {
    %c0 = arith.constant 0 : index
    %c0_0 = arith.constant 0 : index
    %0 = vector.load %arg2[%c0, %c0_0] : memref<16x8xf32, #tpu.memory_space<vmem>>, vector<16x8xf32>
    %c0_1 = arith.constant 0 : index
    %c0_2 = arith.constant 0 : index
    %c0_3 = arith.constant 0 : index
    %c0_4 = arith.constant 0 : index
    %1 = vector.load %arg1[%c0_1, %c0_2, %c0_3, %c0_4] : memref<1x8x8x4xf32, #tpu.memory_space<vmem>>, vector<1x1x8x4xf32>
    %2 = vector.shape_cast %1 : vector<1x1x8x4xf32> to vector<8x4xf32>
    %cst = arith.constant dense<0.000000e+00> : vector<16x4xf32>
    %3 = tpu.matmul %0, %2, %cst {dimension_numbers = #tpu.dot_dimension_numbers<[1], [0], [0], [1], [0, 0, 1, 1], [], []>} : vector<16x8xf32>, vector<8x4xf32>, vector<16x4xf32> -> vector<16x4xf32>
    %c0_5 = arith.constant 0 : index
    %c0_6 = arith.constant 0 : index
    %c0_7 = arith.constant 0 : index
    %c0_8 = arith.constant 0 : index
    %4 = vector.load %arg3[%c0_5, %c0_6, %c0_7, %c0_8] : memref<1x8x16x4xf32, #tpu.memory_space<vmem>>, vector<1x1x16x4xf32>
    %5 = vector.shape_cast %4 : vector<1x1x16x4xf32> to vector<16x4xf32>
    %6 = vector.shape_cast %3 : vector<16x4xf32> to vector<1x1x16x4xf32>
    tpu.vector_store %arg3[%c0_5, %c0_6, %c0_7, %c0_8], %6 {strides = array<i32>} : memref<1x8x16x4xf32, #tpu.memory_space<vmem>>, vector<1x1x16x4xf32>,
    %c0_9 = arith.constant 0 : index
    %c0_10 = arith.constant 0 : index
    %7 = vector.load %arg2[%c0_9, %c0_10] : memref<16x8xf32, #tpu.memory_space<vmem>>, vector<16x8xf32>
    %c0_11 = arith.constant 0 : index
    %c1 = arith.constant 1 : index
    %c0_12 = arith.constant 0 : index
    %c0_13 = arith.constant 0 : index
    %8 = vector.load %arg1[%c0_11, %c1, %c0_12, %c0_13] : memref<1x8x8x4xf32, #tpu.memory_space<vmem>>, vector<1x1x8x4xf32>
    %9 = vector.shape_cast %8 : vector<1x1x8x4xf32> to vector<8x4xf32>
    %cst_14 = arith.constant dense<0.000000e+00> : vector<16x4xf32>
    %10 = tpu.matmul %7, %9, %cst_14 {dimension_numbers = #tpu.dot_dimension_numbers<[1], [0], [0], [1], [0, 0, 1, 1], [], []>} : vector<16x8xf32>, vector<8x4xf32>, vector<16x4xf32> -> vector<16x4xf32>
    %c0_15 = arith.constant 0 : index
    %c1_16 = arith.constant 1 : index
    %c0_17 = arith.constant 0 : index
    %c0_18 = arith.constant 0 : index
    %11 = vector.load %arg3[%c0_15, %c1_16, %c0_17, %c0_18] : memref<1x8x16x4xf32, #tpu.memory_space<vmem>>, vector<1x1x16x4xf32>
    %12 = vector.shape_cast %11 : vector<1x1x16x4xf32> to vector<16x4xf32>
    %13 = vector.shape_cast %10 : vector<16x4xf32> to vector<1x1x16x4xf32>
    tpu.vector_store %arg3[%c0_15, %c1_16, %c0_17, %c0_18], %13 {strides = array<i32>} : memref<1x8x16x4xf32, #tpu.memory_space<vmem>>, vector<1x1x16x4xf32>,
    %c0_19 = arith.constant 0 : index
    %c0_20 = arith.constant 0 : index
    %14 = vector.load %arg2[%c0_19, %c0_20] : memref<16x8xf32, #tpu.memory_space<vmem>>, vector<16x8xf32>
    %c0_21 = arith.constant 0 : index
    %c2 = arith.constant 2 : index
    %c0_22 = arith.constant 0 : index
    %c0_23 = arith.constant 0 : index
    %15 = vector.load %arg1[%c0_21, %c2, %c0_22, %c0_23] : memref<1x8x8x4xf32, #tpu.memory_space<vmem>>, vector<1x1x8x4xf32>
    %16 = vector.shape_cast %15 : vector<1x1x8x4xf32> to vector<8x4xf32>
    %cst_24 = arith.constant dense<0.000000e+00> : vector<16x4xf32>
    %17 = tpu.matmul %14, %16, %cst_24 {dimension_numbers = #tpu.dot_dimension_numbers<[1], [0], [0], [1], [0, 0, 1, 1], [], []>} : vector<16x8xf32>, vector<8x4xf32>, vector<16x4xf32> -> vector<16x4xf32>
    %c0_25 = arith.constant 0 : index
    %c2_26 = arith.constant 2 : index
    %c0_27 = arith.constant 0 : index
    %c0_28 = arith.constant 0 : index
    %18 = vector.load %arg3[%c0_25, %c2_26, %c0_27, %c0_28] : memref<1x8x16x4xf32, #tpu.memory_space<vmem>>, vector<1x1x16x4xf32>
    %19 = vector.shape_cast %18 : vector<1x1x16x4xf32> to vector<16x4xf32>
    %20 = vector.shape_cast %17 : vector<16x4xf32> to vector<1x1x16x4xf32>
    tpu.vector_store %arg3[%c0_25, %c2_26, %c0_27, %c0_28], %20 {strides = array<i32>} : memref<1x8x16x4xf32, #tpu.memory_space<vmem>>, vector<1x1x16x4xf32>,
    %c0_29 = arith.constant 0 : index
    %c0_30 = arith.constant 0 : index
    %21 = vector.load %arg2[%c0_29, %c0_30] : memref<16x8xf32, #tpu.memory_space<vmem>>, vector<16x8xf32>
    %c0_31 = arith.constant 0 : index
    %c3 = arith.constant 3 : index
    %c0_32 = arith.constant 0 : index
    %c0_33 = arith.constant 0 : index
    %22 = vector.load %arg1[%c0_31, %c3, %c0_32, %c0_33] : memref<1x8x8x4xf32, #tpu.memory_space<vmem>>, vector<1x1x8x4xf32>
    %23 = vector.shape_cast %22 : vector<1x1x8x4xf32> to vector<8x4xf32>
    %cst_34 = arith.constant dense<0.000000e+00> : vector<16x4xf32>
    %24 = tpu.matmul %21, %23, %cst_34 {dimension_numbers = #tpu.dot_dimension_numbers<[1], [0], [0], [1], [0, 0, 1, 1], [], []>} : vector<16x8xf32>, vector<8x4xf32>, vector<16x4xf32> -> vector<16x4xf32>
    %c0_35 = arith.constant 0 : index
    %c3_36 = arith.constant 3 : index
    %c0_37 = arith.constant 0 : index
    %c0_38 = arith.constant 0 : index
    %25 = vector.load %arg3[%c0_35, %c3_36, %c0_37, %c0_38] : memref<1x8x16x4xf32, #tpu.memory_space<vmem>>, vector<1x1x16x4xf32>
    %26 = vector.shape_cast %25 : vector<1x1x16x4xf32> to vector<16x4xf32>
    %27 = vector.shape_cast %24 : vector<16x4xf32> to vector<1x1x16x4xf32>
    tpu.vector_store %arg3[%c0_35, %c3_36, %c0_37, %c0_38], %27 {strides = array<i32>} : memref<1x8x16x4xf32, #tpu.memory_space<vmem>>, vector<1x1x16x4xf32>,
    %c0_39 = arith.constant 0 : index
    %c0_40 = arith.constant 0 : index
    %28 = vector.load %arg2[%c0_39, %c0_40] : memref<16x8xf32, #tpu.memory_space<vmem>>, vector<16x8xf32>
    %c0_41 = arith.constant 0 : index
    %c4 = arith.constant 4 : index
    %c0_42 = arith.constant 0 : index
    %c0_43 = arith.constant 0 : index
    %29 = vector.load %arg1[%c0_41, %c4, %c0_42, %c0_43] : memref<1x8x8x4xf32, #tpu.memory_space<vmem>>, vector<1x1x8x4xf32>
    %30 = vector.shape_cast %29 : vector<1x1x8x4xf32> to vector<8x4xf32>
    %cst_44 = arith.constant dense<0.000000e+00> : vector<16x4xf32>
    %31 = tpu.matmul %28, %30, %cst_44 {dimension_numbers = #tpu.dot_dimension_numbers<[1], [0], [0], [1], [0, 0, 1, 1], [], []>} : vector<16x8xf32>, vector<8x4xf32>, vector<16x4xf32> -> vector<16x4xf32>
    %c0_45 = arith.constant 0 : index
    %c4_46 = arith.constant 4 : index
    %c0_47 = arith.constant 0 : index
    %c0_48 = arith.constant 0 : index
    %32 = vector.load %arg3[%c0_45, %c4_46, %c0_47, %c0_48] : memref<1x8x16x4xf32, #tpu.memory_space<vmem>>, vector<1x1x16x4xf32>
    %33 = vector.shape_cast %32 : vector<1x1x16x4xf32> to vector<16x4xf32>
    %34 = vector.shape_cast %31 : vector<16x4xf32> to vector<1x1x16x4xf32>
    tpu.vector_store %arg3[%c0_45, %c4_46, %c0_47, %c0_48], %34 {strides = array<i32>} : memref<1x8x16x4xf32, #tpu.memory_space<vmem>>, vector<1x1x16x4xf32>,
    %c0_49 = arith.constant 0 : index
    %c0_50 = arith.constant 0 : index
    %35 = vector.load %arg2[%c0_49, %c0_50] : memref<16x8xf32, #tpu.memory_space<vmem>>, vector<16x8xf32>
    %c0_51 = arith.constant 0 : index
    %c5 = arith.constant 5 : index
    %c0_52 = arith.constant 0 : index
    %c0_53 = arith.constant 0 : index
    %36 = vector.load %arg1[%c0_51, %c5, %c0_52, %c0_53] : memref<1x8x8x4xf32, #tpu.memory_space<vmem>>, vector<1x1x8x4xf32>
    %37 = vector.shape_cast %36 : vector<1x1x8x4xf32> to vector<8x4xf32>
    %cst_54 = arith.constant dense<0.000000e+00> : vector<16x4xf32>
    %38 = tpu.matmul %35, %37, %cst_54 {dimension_numbers = #tpu.dot_dimension_numbers<[1], [0], [0], [1], [0, 0, 1, 1], [], []>} : vector<16x8xf32>, vector<8x4xf32>, vector<16x4xf32> -> vector<16x4xf32>
    %c0_55 = arith.constant 0 : index
    %c5_56 = arith.constant 5 : index
    %c0_57 = arith.constant 0 : index
    %c0_58 = arith.constant 0 : index
    %39 = vector.load %arg3[%c0_55, %c5_56, %c0_57, %c0_58] : memref<1x8x16x4xf32, #tpu.memory_space<vmem>>, vector<1x1x16x4xf32>
    %40 = vector.shape_cast %39 : vector<1x1x16x4xf32> to vector<16x4xf32>
    %41 = vector.shape_cast %38 : vector<16x4xf32> to vector<1x1x16x4xf32>
    tpu.vector_store %arg3[%c0_55, %c5_56, %c0_57, %c0_58], %41 {strides = array<i32>} : memref<1x8x16x4xf32, #tpu.memory_space<vmem>>, vector<1x1x16x4xf32>,
    %c0_59 = arith.constant 0 : index
    %c0_60 = arith.constant 0 : index
    %42 = vector.load %arg2[%c0_59, %c0_60] : memref<16x8xf32, #tpu.memory_space<vmem>>, vector<16x8xf32>
    %c0_61 = arith.constant 0 : index
    %c6 = arith.constant 6 : index
    %c0_62 = arith.constant 0 : index
    %c0_63 = arith.constant 0 : index
    %43 = vector.load %arg1[%c0_61, %c6, %c0_62, %c0_63] : memref<1x8x8x4xf32, #tpu.memory_space<vmem>>, vector<1x1x8x4xf32>
    %44 = vector.shape_cast %43 : vector<1x1x8x4xf32> to vector<8x4xf32>
    %cst_64 = arith.constant dense<0.000000e+00> : vector<16x4xf32>
    %45 = tpu.matmul %42, %44, %cst_64 {dimension_numbers = #tpu.dot_dimension_numbers<[1], [0], [0], [1], [0, 0, 1, 1], [], []>} : vector<16x8xf32>, vector<8x4xf32>, vector<16x4xf32> -> vector<16x4xf32>
    %c0_65 = arith.constant 0 : index
    %c6_66 = arith.constant 6 : index
    %c0_67 = arith.constant 0 : index
    %c0_68 = arith.constant 0 : index
    %46 = vector.load %arg3[%c0_65, %c6_66, %c0_67, %c0_68] : memref<1x8x16x4xf32, #tpu.memory_space<vmem>>, vector<1x1x16x4xf32>
    %47 = vector.shape_cast %46 : vector<1x1x16x4xf32> to vector<16x4xf32>
    %48 = vector.shape_cast %45 : vector<16x4xf32> to vector<1x1x16x4xf32>
    tpu.vector_store %arg3[%c0_65, %c6_66, %c0_67, %c0_68], %48 {strides = array<i32>} : memref<1x8x16x4xf32, #tpu.memory_space<vmem>>, vector<1x1x16x4xf32>,
    %c0_69 = arith.constant 0 : index
    %c0_70 = arith.constant 0 : index
    %49 = vector.load %arg2[%c0_69, %c0_70] : memref<16x8xf32, #tpu.memory_space<vmem>>, vector<16x8xf32>
    %c0_71 = arith.constant 0 : index
    %c7 = arith.constant 7 : index
    %c0_72 = arith.constant 0 : index
    %c0_73 = arith.constant 0 : index
    %50 = vector.load %arg1[%c0_71, %c7, %c0_72, %c0_73] : memref<1x8x8x4xf32, #tpu.memory_space<vmem>>, vector<1x1x8x4xf32>
    %51 = vector.shape_cast %50 : vector<1x1x8x4xf32> to vector<8x4xf32>
    %cst_74 = arith.constant dense<0.000000e+00> : vector<16x4xf32>
    %52 = tpu.matmul %49, %51, %cst_74 {dimension_numbers = #tpu.dot_dimension_numbers<[1], [0], [0], [1], [0, 0, 1, 1], [], []>} : vector<16x8xf32>, vector<8x4xf32>, vector<16x4xf32> -> vector<16x4xf32>
    %c0_75 = arith.constant 0 : index
    %c7_76 = arith.constant 7 : index
    %c0_77 = arith.constant 0 : index
    %c0_78 = arith.constant 0 : index
    %53 = vector.load %arg3[%c0_75, %c7_76, %c0_77, %c0_78] : memref<1x8x16x4xf32, #tpu.memory_space<vmem>>, vector<1x1x16x4xf32>
    %54 = vector.shape_cast %53 : vector<1x1x16x4xf32> to vector<16x4xf32>
    %55 = vector.shape_cast %52 : vector<16x4xf32> to vector<1x1x16x4xf32>
    tpu.vector_store %arg3[%c0_75, %c7_76, %c0_77, %c0_78], %55 {strides = array<i32>} : memref<1x8x16x4xf32, #tpu.memory_space<vmem>>, vector<1x1x16x4xf32>,
    return
  }
  func.func @transform_0(%arg0: i32) -> (i32, i32, i32, i32) {
    %c0_i32 = arith.constant 0 : i32
    %c0_i32_0 = arith.constant 0 : i32
    %c0_i32_1 = arith.constant 0 : i32
    %c0_i32_2 = arith.constant 0 : i32
    return %arg0, %c0_i32, %c0_i32_0, %c0_i32_1 : i32, i32, i32, i32
  }
  func.func @transform_1(%arg0: i32) -> (i32, i32) {
    %c0_i32 = arith.constant 0 : i32
    %c0_i32_0 = arith.constant 0 : i32
    %c0_i32_1 = arith.constant 0 : i32
    return %c0_i32, %c0_i32_0 : i32, i32
  }
  func.func @transform_2(%arg0: i32) -> (i32, i32, i32, i32) {
    %c0_i32 = arith.constant 0 : i32
    %c0_i32_0 = arith.constant 0 : i32
    %c0_i32_1 = arith.constant 0 : i32
    %c0_i32_2 = arith.constant 0 : i32
    return %arg0, %c0_i32, %c0_i32_0, %c0_i32_1 : i32, i32, i32, i32
  }
}

module attributes {stable_mosaic.version = 11 : i64} {
  func.func @_hmix_kernel(%arg0: i32, %arg1: memref<1x8x64xf32, #tpu.memory_space<vmem>>, %arg2: memref<16x8xf32, #tpu.memory_space<vmem>>, %arg3: memref<1x16x64xf32, #tpu.memory_space<vmem>>) attributes {dimension_semantics = [#tpu.dimension_semantics<parallel>], iteration_bounds = array<i64: 2>, scalar_prefetch = 0 : i64, scratch_operands = 0 : i64, tpu.core_type = #tpu.core_type<tc>, window_params = [{transform_indices = @transform_0, window_bounds = array<i64: 1, 8, 64>}, {pipeline_mode = #tpu.pipeline_mode<synchronous>, transform_indices = @transform_1, window_bounds = array<i64: 16, 8>}, {transform_indices = @transform_2, window_bounds = array<i64: 1, 16, 64>}]} {
    %c0 = arith.constant 0 : index
    %c0_0 = arith.constant 0 : index
    %0 = vector.load %arg2[%c0, %c0_0] : memref<16x8xf32, #tpu.memory_space<vmem>>, vector<16x8xf32>
    %c0_1 = arith.constant 0 : index
    %c0_2 = arith.constant 0 : index
    %c0_3 = arith.constant 0 : index
    %1 = vector.load %arg1[%c0_1, %c0_2, %c0_3] : memref<1x8x64xf32, #tpu.memory_space<vmem>>, vector<1x8x64xf32>
    %2 = vector.shape_cast %1 : vector<1x8x64xf32> to vector<8x64xf32>
    %cst = arith.constant dense<0.000000e+00> : vector<16x64xf32>
    %3 = tpu.matmul %0, %2, %cst {dimension_numbers = #tpu.dot_dimension_numbers<[1], [0], [0], [1], [0, 0, 1, 1], [], []>} : vector<16x8xf32>, vector<8x64xf32>, vector<16x64xf32> -> vector<16x64xf32>
    %c0_4 = arith.constant 0 : index
    %c0_5 = arith.constant 0 : index
    %c0_6 = arith.constant 0 : index
    %4 = vector.load %arg3[%c0_4, %c0_5, %c0_6] : memref<1x16x64xf32, #tpu.memory_space<vmem>>, vector<1x16x64xf32>
    %5 = vector.shape_cast %4 : vector<1x16x64xf32> to vector<16x64xf32>
    %6 = vector.shape_cast %3 : vector<16x64xf32> to vector<1x16x64xf32>
    tpu.vector_store %arg3[%c0_4, %c0_5, %c0_6], %6 {strides = array<i32>} : memref<1x16x64xf32, #tpu.memory_space<vmem>>, vector<1x16x64xf32>,
    return
  }
  func.func @transform_0(%arg0: i32) -> (i32, i32, i32) {
    %c0_i32 = arith.constant 0 : i32
    %c0_i32_0 = arith.constant 0 : i32
    %c0_i32_1 = arith.constant 0 : i32
    return %arg0, %c0_i32, %c0_i32_0 : i32, i32, i32
  }
  func.func @transform_1(%arg0: i32) -> (i32, i32) {
    %c0_i32 = arith.constant 0 : i32
    %c0_i32_0 = arith.constant 0 : i32
    %c0_i32_1 = arith.constant 0 : i32
    return %c0_i32, %c0_i32_0 : i32, i32
  }
  func.func @transform_2(%arg0: i32) -> (i32, i32, i32) {
    %c0_i32 = arith.constant 0 : i32
    %c0_i32_0 = arith.constant 0 : i32
    %c0_i32_1 = arith.constant 0 : i32
    return %arg0, %c0_i32, %c0_i32_0 : i32, i32, i32
  }
}

module attributes {stable_mosaic.version = 11 : i64} {
  func.func @kernel(%arg0: i32, %arg1: i32, %arg2: memref<1x18x24x128xf32, #tpu.memory_space<vmem>>, %arg3: memref<1x18x24x128xf32, #tpu.memory_space<vmem>>, %arg4: memref<3x384x128xf32, #tpu.memory_space<vmem>>, %arg5: memref<3x384x128xf32, #tpu.memory_space<vmem>>, %arg6: memref<1x128xf32, #tpu.memory_space<vmem>>, %arg7: memref<1x128xf32, #tpu.memory_space<vmem>>, %arg8: memref<1x8x24x128xf32, #tpu.memory_space<vmem>>) attributes {dimension_semantics = [#tpu.dimension_semantics<parallel>, #tpu.dimension_semantics<parallel>], iteration_bounds = array<i64: 2, 2>, scalar_prefetch = 0 : i64, scratch_operands = 0 : i64, tpu.core_type = #tpu.core_type<tc>, window_params = [{transform_indices = @transform_0, window_bounds = array<i64: 1, 18, 24, 128>}, {transform_indices = @transform_1, window_bounds = array<i64: 1, 18, 24, 128>}, {pipeline_mode = #tpu.pipeline_mode<synchronous>, transform_indices = @transform_2, window_bounds = array<i64: 3, 384, 128>}, {pipeline_mode = #tpu.pipeline_mode<synchronous>, transform_indices = @transform_3, window_bounds = array<i64: 3, 384, 128>}, {pipeline_mode = #tpu.pipeline_mode<synchronous>, transform_indices = @transform_4, window_bounds = array<i64: 1, 128>}, {pipeline_mode = #tpu.pipeline_mode<synchronous>, transform_indices = @transform_5, window_bounds = array<i64: 1, 128>}, {transform_indices = @transform_6, window_bounds = array<i64: 1, 8, 24, 128>}]} {
    %c8_i32 = arith.constant 8 : i32
    %0 = arith.muli %arg1, %c8_i32 : i32
    %cst = arith.constant 0.000000e+00 : f32
    %1 = vector.broadcast %cst : f32 to vector<192x128xf32>
    %c0 = arith.constant 0 : index
    %2 = arith.index_cast %0 : i32 to index
    %c0_0 = arith.constant 0 : index
    %c0_1 = arith.constant 0 : index
    %3 = vector.load %arg2[%c0, %2, %c0_0, %c0_1] : memref<1x18x24x128xf32, #tpu.memory_space<vmem>>, vector<1x10x24x128xf32>
    %4 = vector.shape_cast %3 : vector<1x10x24x128xf32> to vector<10x24x128xf32>
    %5 = vector.shape_cast %4 : vector<10x24x128xf32> to vector<240x128xf32>
    %6 = vector.extract_strided_slice %5 {offsets = [1, 0], sizes = [239, 128], strides = [1, 1]} : vector<240x128xf32> to vector<239x128xf32>
    %7 = vector.extract_strided_slice %5 {offsets = [0, 0], sizes = [1, 128], strides = [1, 1]} : vector<240x128xf32> to vector<1x128xf32>
    %8 = tpu.concatenate %6, %7 in 0 : vector<239x128xf32>, vector<1x128xf32> -> vector<240x128xf32>
    %9 = vector.extract_strided_slice %5 {offsets = [2, 0], sizes = [238, 128], strides = [1, 1]} : vector<240x128xf32> to vector<238x128xf32>
    %10 = vector.extract_strided_slice %5 {offsets = [0, 0], sizes = [2, 128], strides = [1, 1]} : vector<240x128xf32> to vector<2x128xf32>
    %11 = tpu.concatenate %9, %10 in 0 : vector<238x128xf32>, vector<2x128xf32> -> vector<240x128xf32>
    %12 = tpu.concatenate %5, %8, %11 in 1 : vector<240x128xf32>, vector<240x128xf32>, vector<240x128xf32> -> vector<240x384xf32>
    %13 = vector.extract_strided_slice %12 {offsets = [0, 0], sizes = [192, 384], strides = [1, 1]} : vector<240x384xf32> to vector<192x384xf32>
    %c0_2 = arith.constant 0 : index
    %c0_3 = arith.constant 0 : index
    %c0_4 = arith.constant 0 : index
    %14 = vector.load %arg4[%c0_2, %c0_3, %c0_4] : memref<3x384x128xf32, #tpu.memory_space<vmem>>, vector<1x384x128xf32>
    %15 = vector.shape_cast %14 : vector<1x384x128xf32> to vector<384x128xf32>
    %cst_5 = arith.constant dense<0.000000e+00> : vector<192x128xf32>
    %16 = tpu.matmul %13, %15, %cst_5 {dimension_numbers = #tpu.dot_dimension_numbers<[1], [0], [0], [1], [0, 0, 1, 1], [], []>} : vector<192x384xf32>, vector<384x128xf32>, vector<192x128xf32> -> vector<192x128xf32>
    %17 = arith.addf %1, %16 : vector<192x128xf32>
    %18 = vector.extract_strided_slice %12 {offsets = [24, 0], sizes = [192, 384], strides = [1, 1]} : vector<240x384xf32> to vector<192x384xf32>
    %c1 = arith.constant 1 : index
    %c0_6 = arith.constant 0 : index
    %c0_7 = arith.constant 0 : index
    %19 = vector.load %arg4[%c1, %c0_6, %c0_7] : memref<3x384x128xf32, #tpu.memory_space<vmem>>, vector<1x384x128xf32>
    %20 = vector.shape_cast %19 : vector<1x384x128xf32> to vector<384x128xf32>
    %cst_8 = arith.constant dense<0.000000e+00> : vector<192x128xf32>
    %21 = tpu.matmul %18, %20, %cst_8 {dimension_numbers = #tpu.dot_dimension_numbers<[1], [0], [0], [1], [0, 0, 1, 1], [], []>} : vector<192x384xf32>, vector<384x128xf32>, vector<192x128xf32> -> vector<192x128xf32>
    %22 = arith.addf %17, %21 : vector<192x128xf32>
    %23 = vector.extract_strided_slice %12 {offsets = [48, 0], sizes = [192, 384], strides = [1, 1]} : vector<240x384xf32> to vector<192x384xf32>
    %c2 = arith.constant 2 : index
    %c0_9 = arith.constant 0 : index
    %c0_10 = arith.constant 0 : index
    %24 = vector.load %arg4[%c2, %c0_9, %c0_10] : memref<3x384x128xf32, #tpu.memory_space<vmem>>, vector<1x384x128xf32>
    %25 = vector.shape_cast %24 : vector<1x384x128xf32> to vector<384x128xf32>
    %cst_11 = arith.constant dense<0.000000e+00> : vector<192x128xf32>
    %26 = tpu.matmul %23, %25, %cst_11 {dimension_numbers = #tpu.dot_dimension_numbers<[1], [0], [0], [1], [0, 0, 1, 1], [], []>} : vector<192x384xf32>, vector<384x128xf32>, vector<192x128xf32> -> vector<192x128xf32>
    %27 = arith.addf %22, %26 : vector<192x128xf32>
    %c0_12 = arith.constant 0 : index
    %28 = arith.index_cast %0 : i32 to index
    %c0_13 = arith.constant 0 : index
    %c0_14 = arith.constant 0 : index
    %29 = vector.load %arg3[%c0_12, %28, %c0_13, %c0_14] : memref<1x18x24x128xf32, #tpu.memory_space<vmem>>, vector<1x10x24x128xf32>
    %30 = vector.shape_cast %29 : vector<1x10x24x128xf32> to vector<10x24x128xf32>
    %31 = vector.shape_cast %30 : vector<10x24x128xf32> to vector<240x128xf32>
    %32 = vector.extract_strided_slice %31 {offsets = [1, 0], sizes = [239, 128], strides = [1, 1]} : vector<240x128xf32> to vector<239x128xf32>
    %33 = vector.extract_strided_slice %31 {offsets = [0, 0], sizes = [1, 128], strides = [1, 1]} : vector<240x128xf32> to vector<1x128xf32>
    %34 = tpu.concatenate %32, %33 in 0 : vector<239x128xf32>, vector<1x128xf32> -> vector<240x128xf32>
    %35 = vector.extract_strided_slice %31 {offsets = [2, 0], sizes = [238, 128], strides = [1, 1]} : vector<240x128xf32> to vector<238x128xf32>
    %36 = vector.extract_strided_slice %31 {offsets = [0, 0], sizes = [2, 128], strides = [1, 1]} : vector<240x128xf32> to vector<2x128xf32>
    %37 = tpu.concatenate %35, %36 in 0 : vector<238x128xf32>, vector<2x128xf32> -> vector<240x128xf32>
    %38 = tpu.concatenate %31, %34, %37 in 1 : vector<240x128xf32>, vector<240x128xf32>, vector<240x128xf32> -> vector<240x384xf32>
    %39 = vector.extract_strided_slice %38 {offsets = [0, 0], sizes = [192, 384], strides = [1, 1]} : vector<240x384xf32> to vector<192x384xf32>
    %c0_15 = arith.constant 0 : index
    %c0_16 = arith.constant 0 : index
    %c0_17 = arith.constant 0 : index
    %40 = vector.load %arg5[%c0_15, %c0_16, %c0_17] : memref<3x384x128xf32, #tpu.memory_space<vmem>>, vector<1x384x128xf32>
    %41 = vector.shape_cast %40 : vector<1x384x128xf32> to vector<384x128xf32>
    %cst_18 = arith.constant dense<0.000000e+00> : vector<192x128xf32>
    %42 = tpu.matmul %39, %41, %cst_18 {dimension_numbers = #tpu.dot_dimension_numbers<[1], [0], [0], [1], [0, 0, 1, 1], [], []>} : vector<192x384xf32>, vector<384x128xf32>, vector<192x128xf32> -> vector<192x128xf32>
    %43 = arith.addf %27, %42 : vector<192x128xf32>
    %44 = vector.extract_strided_slice %38 {offsets = [24, 0], sizes = [192, 384], strides = [1, 1]} : vector<240x384xf32> to vector<192x384xf32>
    %c1_19 = arith.constant 1 : index
    %c0_20 = arith.constant 0 : index
    %c0_21 = arith.constant 0 : index
    %45 = vector.load %arg5[%c1_19, %c0_20, %c0_21] : memref<3x384x128xf32, #tpu.memory_space<vmem>>, vector<1x384x128xf32>
    %46 = vector.shape_cast %45 : vector<1x384x128xf32> to vector<384x128xf32>
    %cst_22 = arith.constant dense<0.000000e+00> : vector<192x128xf32>
    %47 = tpu.matmul %44, %46, %cst_22 {dimension_numbers = #tpu.dot_dimension_numbers<[1], [0], [0], [1], [0, 0, 1, 1], [], []>} : vector<192x384xf32>, vector<384x128xf32>, vector<192x128xf32> -> vector<192x128xf32>
    %48 = arith.addf %43, %47 : vector<192x128xf32>
    %49 = vector.extract_strided_slice %38 {offsets = [48, 0], sizes = [192, 384], strides = [1, 1]} : vector<240x384xf32> to vector<192x384xf32>
    %c2_23 = arith.constant 2 : index
    %c0_24 = arith.constant 0 : index
    %c0_25 = arith.constant 0 : index
    %50 = vector.load %arg5[%c2_23, %c0_24, %c0_25] : memref<3x384x128xf32, #tpu.memory_space<vmem>>, vector<1x384x128xf32>
    %51 = vector.shape_cast %50 : vector<1x384x128xf32> to vector<384x128xf32>
    %cst_26 = arith.constant dense<0.000000e+00> : vector<192x128xf32>
    %52 = tpu.matmul %49, %51, %cst_26 {dimension_numbers = #tpu.dot_dimension_numbers<[1], [0], [0], [1], [0, 0, 1, 1], [], []>} : vector<192x384xf32>, vector<384x128xf32>, vector<192x128xf32> -> vector<192x128xf32>
    %53 = arith.addf %48, %52 : vector<192x128xf32>
    %c0_27 = arith.constant 0 : index
    %c0_28 = arith.constant 0 : index
    %54 = vector.load %arg6[%c0_27, %c0_28] : memref<1x128xf32, #tpu.memory_space<vmem>>, vector<1x128xf32>
    %55 = vector.broadcast %54 : vector<1x128xf32> to vector<192x128xf32>
    %56 = arith.mulf %53, %55 : vector<192x128xf32>
    %c0_29 = arith.constant 0 : index
    %c0_30 = arith.constant 0 : index
    %57 = vector.load %arg7[%c0_29, %c0_30] : memref<1x128xf32, #tpu.memory_space<vmem>>, vector<1x128xf32>
    %58 = vector.broadcast %57 : vector<1x128xf32> to vector<192x128xf32>
    %59 = arith.addf %56, %58 : vector<192x128xf32>
    %cst_31 = arith.constant 0.000000e+00 : f32
    %60 = vector.broadcast %cst_31 : f32 to vector<192x128xf32>
    %61 = arith.maximumf %59, %60 : vector<192x128xf32>
    %62 = vector.shape_cast %61 : vector<192x128xf32> to vector<8x24x128xf32>
    %c0_32 = arith.constant 0 : index
    %c0_33 = arith.constant 0 : index
    %c0_34 = arith.constant 0 : index
    %c0_35 = arith.constant 0 : index
    %63 = vector.load %arg8[%c0_32, %c0_33, %c0_34, %c0_35] : memref<1x8x24x128xf32, #tpu.memory_space<vmem>>, vector<1x8x24x128xf32>
    %64 = vector.shape_cast %63 : vector<1x8x24x128xf32> to vector<8x24x128xf32>
    %65 = vector.shape_cast %62 : vector<8x24x128xf32> to vector<1x8x24x128xf32>
    tpu.vector_store %arg8[%c0_32, %c0_33, %c0_34, %c0_35], %65 {strides = array<i32>} : memref<1x8x24x128xf32, #tpu.memory_space<vmem>>, vector<1x8x24x128xf32>,
    return
  }
  func.func @transform_0(%arg0: i32, %arg1: i32) -> (i32, i32, i32, i32) {
    %c0_i32 = arith.constant 0 : i32
    %c0_i32_0 = arith.constant 0 : i32
    %c0_i32_1 = arith.constant 0 : i32
    %c0_i32_2 = arith.constant 0 : i32
    return %arg0, %c0_i32, %c0_i32_0, %c0_i32_1 : i32, i32, i32, i32
  }
  func.func @transform_1(%arg0: i32, %arg1: i32) -> (i32, i32, i32, i32) {
    %c0_i32 = arith.constant 0 : i32
    %c0_i32_0 = arith.constant 0 : i32
    %c0_i32_1 = arith.constant 0 : i32
    %c0_i32_2 = arith.constant 0 : i32
    return %arg0, %c0_i32, %c0_i32_0, %c0_i32_1 : i32, i32, i32, i32
  }
  func.func @transform_2(%arg0: i32, %arg1: i32) -> (i32, i32, i32) {
    %c0_i32 = arith.constant 0 : i32
    %c0_i32_0 = arith.constant 0 : i32
    %c0_i32_1 = arith.constant 0 : i32
    %c0_i32_2 = arith.constant 0 : i32
    return %c0_i32, %c0_i32_0, %c0_i32_1 : i32, i32, i32
  }
  func.func @transform_3(%arg0: i32, %arg1: i32) -> (i32, i32, i32) {
    %c0_i32 = arith.constant 0 : i32
    %c0_i32_0 = arith.constant 0 : i32
    %c0_i32_1 = arith.constant 0 : i32
    %c0_i32_2 = arith.constant 0 : i32
    return %c0_i32, %c0_i32_0, %c0_i32_1 : i32, i32, i32
  }
  func.func @transform_4(%arg0: i32, %arg1: i32) -> (i32, i32) {
    %c0_i32 = arith.constant 0 : i32
    %c0_i32_0 = arith.constant 0 : i32
    %c0_i32_1 = arith.constant 0 : i32
    return %c0_i32, %c0_i32_0 : i32, i32
  }
  func.func @transform_5(%arg0: i32, %arg1: i32) -> (i32, i32) {
    %c0_i32 = arith.constant 0 : i32
    %c0_i32_0 = arith.constant 0 : i32
    %c0_i32_1 = arith.constant 0 : i32
    return %c0_i32, %c0_i32_0 : i32, i32
  }
  func.func @transform_6(%arg0: i32, %arg1: i32) -> (i32, i32, i32, i32) {
    %c0_i32 = arith.constant 0 : i32
    %c0_i32_0 = arith.constant 0 : i32
    %c0_i32_1 = arith.constant 0 : i32
    return %arg0, %arg1, %c0_i32, %c0_i32_0 : i32, i32, i32, i32
  }
}

module attributes {stable_mosaic.version = 11 : i64} {
  func.func @kernel(%arg0: i32, %arg1: i32, %arg2: memref<1x18x24x128xf32, #tpu.memory_space<vmem>>, %arg3: memref<3x384x128xf32, #tpu.memory_space<vmem>>, %arg4: memref<1x128xf32, #tpu.memory_space<vmem>>, %arg5: memref<1x128xf32, #tpu.memory_space<vmem>>, %arg6: memref<1x8x24x128xf32, #tpu.memory_space<vmem>>) attributes {dimension_semantics = [#tpu.dimension_semantics<parallel>, #tpu.dimension_semantics<parallel>], iteration_bounds = array<i64: 2, 2>, scalar_prefetch = 0 : i64, scratch_operands = 0 : i64, tpu.core_type = #tpu.core_type<tc>, window_params = [{transform_indices = @transform_0, window_bounds = array<i64: 1, 18, 24, 128>}, {pipeline_mode = #tpu.pipeline_mode<synchronous>, transform_indices = @transform_1, window_bounds = array<i64: 3, 384, 128>}, {pipeline_mode = #tpu.pipeline_mode<synchronous>, transform_indices = @transform_2, window_bounds = array<i64: 1, 128>}, {pipeline_mode = #tpu.pipeline_mode<synchronous>, transform_indices = @transform_3, window_bounds = array<i64: 1, 128>}, {transform_indices = @transform_4, window_bounds = array<i64: 1, 8, 24, 128>}]} {
    %c8_i32 = arith.constant 8 : i32
    %0 = arith.muli %arg1, %c8_i32 : i32
    %cst = arith.constant 0.000000e+00 : f32
    %1 = vector.broadcast %cst : f32 to vector<192x128xf32>
    %c0 = arith.constant 0 : index
    %2 = arith.index_cast %0 : i32 to index
    %c0_0 = arith.constant 0 : index
    %c0_1 = arith.constant 0 : index
    %3 = vector.load %arg2[%c0, %2, %c0_0, %c0_1] : memref<1x18x24x128xf32, #tpu.memory_space<vmem>>, vector<1x10x24x128xf32>
    %4 = vector.shape_cast %3 : vector<1x10x24x128xf32> to vector<10x24x128xf32>
    %5 = vector.shape_cast %4 : vector<10x24x128xf32> to vector<240x128xf32>
    %6 = vector.extract_strided_slice %5 {offsets = [1, 0], sizes = [239, 128], strides = [1, 1]} : vector<240x128xf32> to vector<239x128xf32>
    %7 = vector.extract_strided_slice %5 {offsets = [0, 0], sizes = [1, 128], strides = [1, 1]} : vector<240x128xf32> to vector<1x128xf32>
    %8 = tpu.concatenate %6, %7 in 0 : vector<239x128xf32>, vector<1x128xf32> -> vector<240x128xf32>
    %9 = vector.extract_strided_slice %5 {offsets = [2, 0], sizes = [238, 128], strides = [1, 1]} : vector<240x128xf32> to vector<238x128xf32>
    %10 = vector.extract_strided_slice %5 {offsets = [0, 0], sizes = [2, 128], strides = [1, 1]} : vector<240x128xf32> to vector<2x128xf32>
    %11 = tpu.concatenate %9, %10 in 0 : vector<238x128xf32>, vector<2x128xf32> -> vector<240x128xf32>
    %12 = tpu.concatenate %5, %8, %11 in 1 : vector<240x128xf32>, vector<240x128xf32>, vector<240x128xf32> -> vector<240x384xf32>
    %13 = vector.extract_strided_slice %12 {offsets = [0, 0], sizes = [192, 384], strides = [1, 1]} : vector<240x384xf32> to vector<192x384xf32>
    %c0_2 = arith.constant 0 : index
    %c0_3 = arith.constant 0 : index
    %c0_4 = arith.constant 0 : index
    %14 = vector.load %arg3[%c0_2, %c0_3, %c0_4] : memref<3x384x128xf32, #tpu.memory_space<vmem>>, vector<1x384x128xf32>
    %15 = vector.shape_cast %14 : vector<1x384x128xf32> to vector<384x128xf32>
    %cst_5 = arith.constant dense<0.000000e+00> : vector<192x128xf32>
    %16 = tpu.matmul %13, %15, %cst_5 {dimension_numbers = #tpu.dot_dimension_numbers<[1], [0], [0], [1], [0, 0, 1, 1], [], []>} : vector<192x384xf32>, vector<384x128xf32>, vector<192x128xf32> -> vector<192x128xf32>
    %17 = arith.addf %1, %16 : vector<192x128xf32>
    %18 = vector.extract_strided_slice %12 {offsets = [24, 0], sizes = [192, 384], strides = [1, 1]} : vector<240x384xf32> to vector<192x384xf32>
    %c1 = arith.constant 1 : index
    %c0_6 = arith.constant 0 : index
    %c0_7 = arith.constant 0 : index
    %19 = vector.load %arg3[%c1, %c0_6, %c0_7] : memref<3x384x128xf32, #tpu.memory_space<vmem>>, vector<1x384x128xf32>
    %20 = vector.shape_cast %19 : vector<1x384x128xf32> to vector<384x128xf32>
    %cst_8 = arith.constant dense<0.000000e+00> : vector<192x128xf32>
    %21 = tpu.matmul %18, %20, %cst_8 {dimension_numbers = #tpu.dot_dimension_numbers<[1], [0], [0], [1], [0, 0, 1, 1], [], []>} : vector<192x384xf32>, vector<384x128xf32>, vector<192x128xf32> -> vector<192x128xf32>
    %22 = arith.addf %17, %21 : vector<192x128xf32>
    %23 = vector.extract_strided_slice %12 {offsets = [48, 0], sizes = [192, 384], strides = [1, 1]} : vector<240x384xf32> to vector<192x384xf32>
    %c2 = arith.constant 2 : index
    %c0_9 = arith.constant 0 : index
    %c0_10 = arith.constant 0 : index
    %24 = vector.load %arg3[%c2, %c0_9, %c0_10] : memref<3x384x128xf32, #tpu.memory_space<vmem>>, vector<1x384x128xf32>
    %25 = vector.shape_cast %24 : vector<1x384x128xf32> to vector<384x128xf32>
    %cst_11 = arith.constant dense<0.000000e+00> : vector<192x128xf32>
    %26 = tpu.matmul %23, %25, %cst_11 {dimension_numbers = #tpu.dot_dimension_numbers<[1], [0], [0], [1], [0, 0, 1, 1], [], []>} : vector<192x384xf32>, vector<384x128xf32>, vector<192x128xf32> -> vector<192x128xf32>
    %27 = arith.addf %22, %26 : vector<192x128xf32>
    %c0_12 = arith.constant 0 : index
    %c0_13 = arith.constant 0 : index
    %28 = vector.load %arg4[%c0_12, %c0_13] : memref<1x128xf32, #tpu.memory_space<vmem>>, vector<1x128xf32>
    %29 = vector.broadcast %28 : vector<1x128xf32> to vector<192x128xf32>
    %30 = arith.mulf %27, %29 : vector<192x128xf32>
    %c0_14 = arith.constant 0 : index
    %c0_15 = arith.constant 0 : index
    %31 = vector.load %arg5[%c0_14, %c0_15] : memref<1x128xf32, #tpu.memory_space<vmem>>, vector<1x128xf32>
    %32 = vector.broadcast %31 : vector<1x128xf32> to vector<192x128xf32>
    %33 = arith.addf %30, %32 : vector<192x128xf32>
    %cst_16 = arith.constant 0.000000e+00 : f32
    %34 = vector.broadcast %cst_16 : f32 to vector<192x128xf32>
    %35 = arith.maximumf %33, %34 : vector<192x128xf32>
    %36 = vector.shape_cast %35 : vector<192x128xf32> to vector<8x24x128xf32>
    %c0_17 = arith.constant 0 : index
    %c0_18 = arith.constant 0 : index
    %c0_19 = arith.constant 0 : index
    %c0_20 = arith.constant 0 : index
    %37 = vector.load %arg6[%c0_17, %c0_18, %c0_19, %c0_20] : memref<1x8x24x128xf32, #tpu.memory_space<vmem>>, vector<1x8x24x128xf32>
    %38 = vector.shape_cast %37 : vector<1x8x24x128xf32> to vector<8x24x128xf32>
    %39 = vector.shape_cast %36 : vector<8x24x128xf32> to vector<1x8x24x128xf32>
    tpu.vector_store %arg6[%c0_17, %c0_18, %c0_19, %c0_20], %39 {strides = array<i32>} : memref<1x8x24x128xf32, #tpu.memory_space<vmem>>, vector<1x8x24x128xf32>,
    return
  }
  func.func @transform_0(%arg0: i32, %arg1: i32) -> (i32, i32, i32, i32) {
    %c0_i32 = arith.constant 0 : i32
    %c0_i32_0 = arith.constant 0 : i32
    %c0_i32_1 = arith.constant 0 : i32
    %c0_i32_2 = arith.constant 0 : i32
    return %arg0, %c0_i32, %c0_i32_0, %c0_i32_1 : i32, i32, i32, i32
  }
  func.func @transform_1(%arg0: i32, %arg1: i32) -> (i32, i32, i32) {
    %c0_i32 = arith.constant 0 : i32
    %c0_i32_0 = arith.constant 0 : i32
    %c0_i32_1 = arith.constant 0 : i32
    %c0_i32_2 = arith.constant 0 : i32
    return %c0_i32, %c0_i32_0, %c0_i32_1 : i32, i32, i32
  }
  func.func @transform_2(%arg0: i32, %arg1: i32) -> (i32, i32) {
    %c0_i32 = arith.constant 0 : i32
    %c0_i32_0 = arith.constant 0 : i32
    %c0_i32_1 = arith.constant 0 : i32
    return %c0_i32, %c0_i32_0 : i32, i32
  }
  func.func @transform_3(%arg0: i32, %arg1: i32) -> (i32, i32) {
    %c0_i32 = arith.constant 0 : i32
    %c0_i32_0 = arith.constant 0 : i32
    %c0_i32_1 = arith.constant 0 : i32
    return %c0_i32, %c0_i32_0 : i32, i32
  }
  func.func @transform_4(%arg0: i32, %arg1: i32) -> (i32, i32, i32, i32) {
    %c0_i32 = arith.constant 0 : i32
    %c0_i32_0 = arith.constant 0 : i32
    %c0_i32_1 = arith.constant 0 : i32
    return %arg0, %arg1, %c0_i32, %c0_i32_0 : i32, i32, i32, i32
  }
}

</mosaic_0001>

<llo_original>
// kernel: a_call__.4
$region0: #{a_call__.4}
  #allocation0 [shape = 'u32[]', space=smem, size = 0x4, offset = 0x4, fixed_abs, tag = 'smem constant byte address 0x4 - core index']
  #allocation1 [shape = 'u32[144,128]{1,0:T(1,128)}', space=vmem, size = 0x12000, scoped, tag = 'internal scratch']
  %s0 = inlined_call_operand.vmem [shape: f32[2,8,8,4], index: 0, kind: input, shape index: {}]
  %s1 = inlined_call_operand.vmem [shape: f32[16,8], index: 1, kind: input, shape index: {}]
  %s2 = inlined_call_operand.vmem [shape: f32[2,8,16,4], index: 2, kind: output, shape index: {}]
  %s3 = sld [smem:[#allocation0]]
  $region41: #{a_call__.4} parent=0
    _
  %s5 = ssub.s32 1, %s3
  %s6 = scalar_select 0, %s5, %s3
  loop: start=0, step=1, limit=4
  $region2: #{a_call__.4} parent=0 // loop_pre_header
    _
  $region3: #{a_call__.4} parent=0 // loop_header
    %s8 = sphi 0, %s12
    %p9 = scmp.ge.s32.totalorder %s8, 4
    %s18 = sphi 0, %s20
    %s21 = sphi 0, %s18
    %s22 = sphi 0, %s21
    %s38 = sphi 0, %s22
    %s42 = sphi 0, %s42
    %s44 = sphi 0, %s42
    %s45 = sphi 0, %s44
    %s59 = sphi 0, %s45
    %s65 = sphi 0, %s67
    %s68 = sphi 0, %s65
    %s69 = sphi 0, %s68
    %s85 = sphi 0, %s69
  $region4: #{a_call__.4} parent=0 // loop_header_branch
    %11 = sbr.rel (%p9) target = $region8
  $region5: #{a_call__.4} parent=0 // loop_body
    %s13 = ssub.s32 %s8, 1
    %s14 = ssub.s32 %s8, 2
    %s15 = sadd.s32 %s8, 1
    %s16 = ssub.s32 %s8, %s15
    %p17 = scmp.eq.s32.totalorder %s16, 0
    %s19 = sadd.s32 %s18, 1
    %s20 = scalar_select %p17, %s18, %s19
    %p23 = pneg %p17
    %p24 = scmp.eq.s32.totalorder %s8, 1
    %p25 = por %p23, %p24
    %p26 = scmp.ne.s32.totalorder %s18, %s21
    %p27 = scmp.eq.s32.totalorder %s8, 0
    %p28 = por %p26, %p27
    %p29 = scmp.ne.s32.totalorder %s18, %s21
    %p30 = scmp.eq.s32.totalorder %s13, 1
    %p31 = por %p29, %p30
    %p32 = scmp.ne.s32.totalorder %s21, %s22
    %p33 = scmp.eq.s32.totalorder %s13, 0
    %p34 = por %p32, %p33
    %p35 = scmp.ne.s32.totalorder %s21, %s22
    %p36 = scmp.eq.s32.totalorder %s14, 1
    %p37 = por %p35, %p36
    %p39 = scmp.ne.s32.totalorder %s22, %s38
    %p40 = scmp.eq.s32.totalorder %s14, 0
    %p41 = por %p39, %p40
    %s43 = sadd.s32 %s42, 1
    %p46 = scmp.eq.s32.totalorder %s8, 1
    %p47 = scmp.ne.s32.totalorder %s42, %s44
    %p48 = scmp.eq.s32.totalorder %s8, 0
    %p49 = por %p47, %p48
    %p50 = scmp.ne.s32.totalorder %s42, %s44
    %p51 = scmp.eq.s32.totalorder %s13, 1
    %p52 = por %p50, %p51
    %p53 = scmp.ne.s32.totalorder %s44, %s45
    %p54 = scmp.eq.s32.totalorder %s13, 0
    %p55 = por %p53, %p54
    %p56 = scmp.ne.s32.totalorder %s44, %s45
    %p57 = scmp.eq.s32.totalorder %s14, 1
    %p58 = por %p56, %p57
    %p60 = scmp.ne.s32.totalorder %s45, %s59
    %p61 = scmp.eq.s32.totalorder %s14, 0
    %p62 = por %p60, %p61
    %s63 = ssub.s32 %s8, %s15
    %p64 = scmp.eq.s32.totalorder %s63, 0
    %s66 = sadd.s32 %s65, 1
    %s67 = scalar_select %p64, %s65, %s66
    %p70 = pneg %p64
    %p71 = scmp.eq.s32.totalorder %s8, 1
    %p72 = por %p70, %p71
    %p73 = scmp.ne.s32.totalorder %s65, %s68
    %p74 = scmp.eq.s32.totalorder %s8, 0
    %p75 = por %p73, %p74
    %p76 = scmp.ne.s32.totalorder %s65, %s68
    %p77 = scmp.eq.s32.totalorder %s13, 1
    %p78 = por %p76, %p77
    %p79 = scmp.ne.s32.totalorder %s68, %s69
    %p80 = scmp.eq.s32.totalorder %s13, 0
    %p81 = por %p79, %p80
    %p82 = scmp.ne.s32.totalorder %s68, %s69
    %p83 = scmp.eq.s32.totalorder %s14, 1
    %p84 = por %p82, %p83
    %p86 = scmp.ne.s32.totalorder %s69, %s85
    %p87 = scmp.eq.s32.totalorder %s14, 0
    %p88 = por %p86, %p87
    %p89 = scmp.le.s32.totalorder 1, %s8
    %p90 = scmp.lt.s32.totalorder %s8, 3
    %p91 = pnand %p89, %p90
    %p92 = pneg %p91
    // Predicated region
    $region9: #{a_call__.4} parent=5 // pred_check
      _
    $region10: #{a_call__.4} parent=5 // pred_check_branch
      %94 = sbr.rel (%p91) target = $region12
    $region11: #{a_call__.4} parent=5 // pred_region
      %s95 = ssub.s32 %s8, 1
      // Predicated region
      $region13: #{a_call__.4} parent=11 // pred_check
        %p96 = pneg %p55
      $region14: #{a_call__.4} parent=11 // pred_check_branch
        %98 = sbr.rel (%p96) target = $region16
      $region15: #{a_call__.4} parent=11 // pred_region
        _
      $region16: #{a_call__.4} parent=11 // pred_fallthru
        _
    $region12: #{a_call__.4} parent=5 // pred_fallthru
      _
    %p99 = scmp.lt.s32.totalorder %s8, 2
    // Predicated region
    $region17: #{a_call__.4} parent=5 // pred_check
      %p100 = pneg %p99
    $region18: #{a_call__.4} parent=5 // pred_check_branch
      %102 = sbr.rel (%p100) target = $region20
    $region19: #{a_call__.4} parent=5 // pred_region
      // Predicated region
      $region21: #{a_call__.4} parent=19 // pred_check
        %p103 = pneg %p28
      $region22: #{a_call__.4} parent=19 // pred_check_branch
        %105 = sbr.rel (%p103) target = $region24
      $region23: #{a_call__.4} parent=19 // pred_region
        %p106 = scmp.lt.s32.totalorder %s8, 1
        %s107 = scalar_select %p106, %s8, 1
        %s108 = smul.addr %s107, 8
        %s109 = smul.addr %s108, 8
        %s110 = scalar_lea.vmem %s0, %s109
      $region24: #{a_call__.4} parent=19 // pred_fallthru
        _
    $region20: #{a_call__.4} parent=5 // pred_fallthru
      _
    %p111 = scmp.le.s32.totalorder 1, %s8
    %p112 = scmp.lt.s32.totalorder %s8, 3
    %p113 = pnand %p111, %p112
    %p114 = pneg %p113
    // Predicated region
    $region25: #{a_call__.4} parent=5 // pred_check
      _
    $region26: #{a_call__.4} parent=5 // pred_check_branch
      %116 = sbr.rel (%p113) target = $region28
    $region27: #{a_call__.4} parent=5 // pred_region
      %s117 = ssub.s32 %s8, 1
      %p118 = scmp.lt.s32.totalorder %s13, 1
      %s119 = scalar_select %p118, %s13, 1
      %s120 = smul.addr %s119, 8
      %s121 = smul.addr %s120, 8
      %s122 = scalar_lea.vmem %s0, %s121
      %p123 = pneg %p34
      %p124 = pneg %p31
      %p125 = pneg %p55
      %p126 = pneg %p52
      %p127 = pneg %p81
      %p128 = pneg %p78
      %p129 = scmp.lt.s32.totalorder %s13, 1
      %s130 = scalar_select %p129, %s13, 1
      %s131 = smul.addr %s130, 16
      %s132 = smul.addr %s131, 8
      %s133 = scalar_lea.vmem %s2, %s132
      %p134 = scmp.lt.s32.totalorder %s13, 1
      %s135 = scalar_select %p134, %s13, 1
      %s136 = smul.addr %s135, 8
      %s137 = smul.addr %s136, 8
      %s138 = scalar_lea.vmem %s0, %s137
      %p139 = scmp.lt.s32.totalorder %s13, 1
      %s140 = scalar_select %p139, %s13, 1
      %s141 = smul.addr %s140, 16
      %s142 = smul.addr %s141, 8
      %s143 = scalar_lea.vmem %s2, %s142
      %v144 = vld [vmem:[%s1] sm:$0xff]
      %v145 = vld [vmem:[%s1 + $0x8] sm:$0xff]
      %v146 = vld [vmem:[%s138] sm:$0xff]
      %vm147 = vcmask 64512
      %v149 = vsel %vm147, %v144, 0
      %v152 = vsel %vm147, %v145, 0
      %154 = vmatprep.subr.mxu0 0.0
      %155 = vmatpush1.msra.mxu0 0.0
      %156 = vmatprep.subr.mxu0 0.0
      %157 = vmatpush1.msra.mxu0 0.0
      %158 = vmatprep.subr.mxu0 0.0
      %159 = vmatpush1.msra.mxu0 0.0
      %160 = vmatprep.subr.mxu0 0.0
      %161 = vmatpush1.msra.mxu0 0.0
      %162 = vmatprep.subr.mxu0 0.0
      %163 = vmatpush1.msra.mxu0 0.0
      %164 = vmatprep.subr.mxu0 0.0
      %165 = vmatpush1.msra.mxu0 0.0
      %166 = vmatprep.subr.mxu0 0.0
      %167 = vmatpush1.msra.mxu0 0.0
      %168 = vmatprep.subr.mxu0 0.0
      %169 = vmatpush1.msra.mxu0 0.0
      %170 = vmatprep.subr.mxu0 0.0
      %171 = vmatpush1.msra.mxu0 0.0
      %172 = vmatprep.subr.mxu0 0.0
      %173 = vmatpush1.msra.mxu0 0.0
      %174 = vmatprep.subr.mxu0 0.0
      %175 = vmatpush1.msra.mxu0 0.0
      %176 = vmatprep.subr.mxu0 0.0
      %177 = vmatpush1.msra.mxu0 0.0
      %178 = vmatprep.subr.mxu0 0.0
      %179 = vmatpush1.msra.mxu0 0.0
      %180 = vmatprep.subr.mxu0 0.0
      %181 = vmatpush1.msra.mxu0 0.0
      %182 = vmatprep.subr.mxu0 0.0
      %183 = vmatpush1.msra.mxu0 0.0
      %184 = vmatprep.subr.mxu0 0.0
      %185 = vmatpush1.msra.mxu0 %v146
      %186 = vmatprep.subr.mxu0 0.0
      %187 = vmatpush2.msra.mxu0 0.0
      %188 = vmatprep.subr.mxu0 0.0
      %189 = vmatpush2.msra.mxu0 0.0
      %190 = vmatprep.subr.mxu0 0.0
      %191 = vmatpush2.msra.mxu0 0.0
      %192 = vmatprep.subr.mxu0 0.0
      %193 = vmatpush2.msra.mxu0 0.0
      %194 = vmatprep.subr.mxu0 0.0
      %195 = vmatpush2.msra.mxu0 0.0
      %196 = vmatprep.subr.mxu0 0.0
      %197 = vmatpush2.msra.mxu0 0.0
      %198 = vmatprep.subr.mxu0 0.0
      %199 = vmatpush2.msra.mxu0 0.0
      %200 = vmatprep.subr.mxu0 0.0
      %201 = vmatpush2.msra.mxu0 0.0
      %202 = vmatprep.subr.mxu0 0.0
      %203 = vmatpush2.msra.mxu0 0.0
      %204 = vmatprep.subr.mxu0 0.0
      %205 = vmatpush2.msra.mxu0 0.0
      %206 = vmatprep.subr.mxu0 0.0
      %207 = vmatpush2.msra.mxu0 0.0
      %208 = vmatprep.subr.mxu0 0.0
      %209 = vmatpush2.msra.mxu0 0.0
      %210 = vmatprep.subr.mxu0 0.0
      %211 = vmatpush2.msra.mxu0 0.0
      %212 = vmatprep.subr.mxu0 0.0
      %213 = vmatpush2.msra.mxu0 0.0
      %214 = vmatprep.subr.mxu0 0.0
      %215 = vmatpush2.msra.mxu0 0.0
      %216 = vmatprep.subr.mxu0 0.0
      %217 = vmatpush2.msra.mxu0 0.0
      %218 = vmatprep.mubr.f32.mxu0 0.0
      %219 = vmatmul.mubr.f32.gmra.mxu0 %v149
      %v220 = vpop.f32.mrf.mxu0
      %v221 = vadd.f32 0.0, %v220
      %v222 = vpop.f32.mrf.mxu0
      %223 = vmatprep.mubr.f32.mxu0 0.0
      %224 = vmatmul.mubr.f32.gmra.mxu0 %v152
      %v225 = vpop.f32.mrf.mxu0
      %v226 = vadd.f32 0.0, %v225
      %v227 = vpop.f32.mrf.mxu0
      %228 = vdwg.mxu0
      %vm229 = vcmask 31744
      %230 = vst.msk [vmem:[%s143] sm:$0xff] %vm229, %v221
      %231 = vst.msk [vmem:[%s143 + $0x8] sm:$0xff] %vm229, %v226
      %v232 = vld [vmem:[%s1] sm:$0xff]
      %v233 = vld [vmem:[%s1 + $0x8] sm:$0xff]
      %s234 = scalar_lea.vmem %s138, 8
      %v235 = vld [vmem:[%s234] sm:$0xff]
      %v237 = vsel %vm147, %v232, 0
      %v240 = vsel %vm147, %v233, 0
      %242 = vmatprep.subr.mxu0 0.0
      %243 = vmatpush1.msra.mxu0 0.0
      %244 = vmatprep.subr.mxu0 0.0
      %245 = vmatpush1.msra.mxu0 0.0
      %246 = vmatprep.subr.mxu0 0.0
      %247 = vmatpush1.msra.mxu0 0.0
      %248 = vmatprep.subr.mxu0 0.0
      %249 = vmatpush1.msra.mxu0 0.0
      %250 = vmatprep.subr.mxu0 0.0
      %251 = vmatpush1.msra.mxu0 0.0
      %252 = vmatprep.subr.mxu0 0.0
      %253 = vmatpush1.msra.mxu0 0.0
      %254 = vmatprep.subr.mxu0 0.0
      %255 = vmatpush1.msra.mxu0 0.0
      %256 = vmatprep.subr.mxu0 0.0
      %257 = vmatpush1.msra.mxu0 0.0
      %258 = vmatprep.subr.mxu0 0.0
      %259 = vmatpush1.msra.mxu0 0.0
      %260 = vmatprep.subr.mxu0 0.0
      %261 = vmatpush1.msra.mxu0 0.0
      %262 = vmatprep.subr.mxu0 0.0
      %263 = vmatpush1.msra.mxu0 0.0
      %264 = vmatprep.subr.mxu0 0.0
      %265 = vmatpush1.msra.mxu0 0.0
      %266 = vmatprep.subr.mxu0 0.0
      %267 = vmatpush1.msra.mxu0 0.0
      %268 = vmatprep.subr.mxu0 0.0
      %269 = vmatpush1.msra.mxu0 0.0
      %270 = vmatprep.subr.mxu0 0.0
      %271 = vmatpush1.msra.mxu0 0.0
      %272 = vmatprep.subr.mxu0 0.0
      %273 = vmatpush1.msra.mxu0 %v235
      %274 = vmatprep.subr.mxu0 0.0
      %275 = vmatpush2.msra.mxu0 0.0
      %276 = vmatprep.subr.mxu0 0.0
      %277 = vmatpush2.msra.mxu0 0.0
      %278 = vmatprep.subr.mxu0 0.0
      %279 = vmatpush2.msra.mxu0 0.0
      %280 = vmatprep.subr.mxu0 0.0
      %281 = vmatpush2.msra.mxu0 0.0
      %282 = vmatprep.subr.mxu0 0.0
      %283 = vmatpush2.msra.mxu0 0.0
      %284 = vmatprep.subr.mxu0 0.0
      %285 = vmatpush2.msra.mxu0 0.0
      %286 = vmatprep.subr.mxu0 0.0
      %287 = vmatpush2.msra.mxu0 0.0
      %288 = vmatprep.subr.mxu0 0.0
      %289 = vmatpush2.msra.mxu0 0.0
      %290 = vmatprep.subr.mxu0 0.0
      %291 = vmatpush2.msra.mxu0 0.0
      %292 = vmatprep.subr.mxu0 0.0
      %293 = vmatpush2.msra.mxu0 0.0
      %294 = vmatprep.subr.mxu0 0.0
      %295 = vmatpush2.msra.mxu0 0.0
      %296 = vmatprep.subr.mxu0 0.0
      %297 = vmatpush2.msra.mxu0 0.0
      %298 = vmatprep.subr.mxu0 0.0
      %299 = vmatpush2.msra.mxu0 0.0
      %300 = vmatprep.subr.mxu0 0.0
      %301 = vmatpush2.msra.mxu0 0.0
      %302 = vmatprep.subr.mxu0 0.0
      %303 = vmatpush2.msra.mxu0 0.0
      %304 = vmatprep.subr.mxu0 0.0
      %305 = vmatpush2.msra.mxu0 0.0
      %306 = vmatprep.mubr.f32.mxu0 0.0
      %307 = vmatmul.mubr.f32.gmra.mxu0 %v237
      %v308 = vpop.f32.mrf.mxu0
      %v309 = vadd.f32 0.0, %v308
      %v310 = vpop.f32.mrf.mxu0
      %311 = vmatprep.mubr.f32.mxu0 0.0
      %312 = vmatmul.mubr.f32.gmra.mxu0 %v240
      %v313 = vpop.f32.mrf.mxu0
      %v314 = vadd.f32 0.0, %v313
      %v315 = vpop.f32.mrf.mxu0
      %316 = vdwg.mxu0
      %s317 = scalar_lea.vmem %s143, 16
      %318 = vst.msk [vmem:[%s317] sm:$0xff] %vm229, %v309
      %319 = vst.msk [vmem:[%s317 + $0x8] sm:$0xff] %vm229, %v314
      %v320 = vld [vmem:[%s1] sm:$0xff]
      %v321 = vld [vmem:[%s1 + $0x8] sm:$0xff]
      %s322 = scalar_lea.vmem %s138, 16
      %v323 = vld [vmem:[%s322] sm:$0xff]
      %v325 = vsel %vm147, %v320, 0
      %v328 = vsel %vm147, %v321, 0
      %330 = vmatprep.subr.mxu0 0.0
      %331 = vmatpush1.msra.mxu0 0.0
      %332 = vmatprep.subr.mxu0 0.0
      %333 = vmatpush1.msra.mxu0 0.0
      %334 = vmatprep.subr.mxu0 0.0
      %335 = vmatpush1.msra.mxu0 0.0
      %336 = vmatprep.subr.mxu0 0.0
      %337 = vmatpush1.msra.mxu0 0.0
      %338 = vmatprep.subr.mxu0 0.0
      %339 = vmatpush1.msra.mxu0 0.0
      %340 = vmatprep.subr.mxu0 0.0
      %341 = vmatpush1.msra.mxu0 0.0
      %342 = vmatprep.subr.mxu0 0.0
      %343 = vmatpush1.msra.mxu0 0.0
      %344 = vmatprep.subr.mxu0 0.0
      %345 = vmatpush1.msra.mxu0 0.0
      %346 = vmatprep.subr.mxu0 0.0
      %347 = vmatpush1.msra.mxu0 0.0
      %348 = vmatprep.subr.mxu0 0.0
      %349 = vmatpush1.msra.mxu0 0.0
      %350 = vmatprep.subr.mxu0 0.0
      %351 = vmatpush1.msra.mxu0 0.0
      %352 = vmatprep.subr.mxu0 0.0
      %353 = vmatpush1.msra.mxu0 0.0
      %354 = vmatprep.subr.mxu0 0.0
      %355 = vmatpush1.msra.mxu0 0.0
      %356 = vmatprep.subr.mxu0 0.0
      %357 = vmatpush1.msra.mxu0 0.0
      %358 = vmatprep.subr.mxu0 0.0
      %359 = vmatpush1.msra.mxu0 0.0
      %360 = vmatprep.subr.mxu0 0.0
      %361 = vmatpush1.msra.mxu0 %v323
      %362 = vmatprep.subr.mxu0 0.0
      %363 = vmatpush2.msra.mxu0 0.0
      %364 = vmatprep.subr.mxu0 0.0
      %365 = vmatpush2.msra.mxu0 0.0
      %366 = vmatprep.subr.mxu0 0.0
      %367 = vmatpush2.msra.mxu0 0.0
      %368 = vmatprep.subr.mxu0 0.0
      %369 = vmatpush2.msra.mxu0 0.0
      %370 = vmatprep.subr.mxu0 0.0
      %371 = vmatpush2.msra.mxu0 0.0
      %372 = vmatprep.subr.mxu0 0.0
      %373 = vmatpush2.msra.mxu0 0.0
      %374 = vmatprep.subr.mxu0 0.0
      %375 = vmatpush2.msra.mxu0 0.0
      %376 = vmatprep.subr.mxu0 0.0
      %377 = vmatpush2.msra.mxu0 0.0
      %378 = vmatprep.subr.mxu0 0.0
      %379 = vmatpush2.msra.mxu0 0.0
      %380 = vmatprep.subr.mxu0 0.0
      %381 = vmatpush2.msra.mxu0 0.0
      %382 = vmatprep.subr.mxu0 0.0
      %383 = vmatpush2.msra.mxu0 0.0
      %384 = vmatprep.subr.mxu0 0.0
      %385 = vmatpush2.msra.mxu0 0.0
      %386 = vmatprep.subr.mxu0 0.0
      %387 = vmatpush2.msra.mxu0 0.0
      %388 = vmatprep.subr.mxu0 0.0
      %389 = vmatpush2.msra.mxu0 0.0
      %390 = vmatprep.subr.mxu0 0.0
      %391 = vmatpush2.msra.mxu0 0.0
      %392 = vmatprep.subr.mxu0 0.0
      %393 = vmatpush2.msra.mxu0 0.0
      %394 = vmatprep.mubr.f32.mxu0 0.0
      %395 = vmatmul.mubr.f32.gmra.mxu0 %v325
      %v396 = vpop.f32.mrf.mxu0
      %v397 = vadd.f32 0.0, %v396
      %v398 = vpop.f32.mrf.mxu0
      %399 = vmatprep.mubr.f32.mxu0 0.0
      %400 = vmatmul.mubr.f32.gmra.mxu0 %v328
      %v401 = vpop.f32.mrf.mxu0
      %v402 = vadd.f32 0.0, %v401
      %v403 = vpop.f32.mrf.mxu0
      %404 = vdwg.mxu0
      %s405 = scalar_lea.vmem %s143, 32
      %406 = vst.msk [vmem:[%s405] sm:$0xff] %vm229, %v397
      %407 = vst.msk [vmem:[%s405 + $0x8] sm:$0xff] %vm229, %v402
      %v408 = vld [vmem:[%s1] sm:$0xff]
      %v409 = vld [vmem:[%s1 + $0x8] sm:$0xff]
      %s410 = scalar_lea.vmem %s138, 24
      %v411 = vld [vmem:[%s410] sm:$0xff]
      %v413 = vsel %vm147, %v408, 0
      %v416 = vsel %vm147, %v409, 0
      %418 = vmatprep.subr.mxu0 0.0
      %419 = vmatpush1.msra.mxu0 0.0
      %420 = vmatprep.subr.mxu0 0.0
      %421 = vmatpush1.msra.mxu0 0.0
      %422 = vmatprep.subr.mxu0 0.0
      %423 = vmatpush1.msra.mxu0 0.0
      %424 = vmatprep.subr.mxu0 0.0
      %425 = vmatpush1.msra.mxu0 0.0
      %426 = vmatprep.subr.mxu0 0.0
      %427 = vmatpush1.msra.mxu0 0.0
      %428 = vmatprep.subr.mxu0 0.0
      %429 = vmatpush1.msra.mxu0 0.0
      %430 = vmatprep.subr.mxu0 0.0
      %431 = vmatpush1.msra.mxu0 0.0
      %432 = vmatprep.subr.mxu0 0.0
      %433 = vmatpush1.msra.mxu0 0.0
      %434 = vmatprep.subr.mxu0 0.0
      %435 = vmatpush1.msra.mxu0 0.0
      %436 = vmatprep.subr.mxu0 0.0
      %437 = vmatpush1.msra.mxu0 0.0
      %438 = vmatprep.subr.mxu0 0.0
      %439 = vmatpush1.msra.mxu0 0.0
      %440 = vmatprep.subr.mxu0 0.0
      %441 = vmatpush1.msra.mxu0 0.0
      %442 = vmatprep.subr.mxu0 0.0
      %443 = vmatpush1.msra.mxu0 0.0
      %444 = vmatprep.subr.mxu0 0.0
      %445 = vmatpush1.msra.mxu0 0.0
      %446 = vmatprep.subr.mxu0 0.0
      %447 = vmatpush1.msra.mxu0 0.0
      %448 = vmatprep.subr.mxu0 0.0
      %449 = vmatpush1.msra.mxu0 %v411
      %450 = vmatprep.subr.mxu0 0.0
      %451 = vmatpush2.msra.mxu0 0.0
      %452 = vmatprep.subr.mxu0 0.0
      %453 = vmatpush2.msra.mxu0 0.0
      %454 = vmatprep.subr.mxu0 0.0
      %455 = vmatpush2.msra.mxu0 0.0
      %456 = vmatprep.subr.mxu0 0.0
      %457 = vmatpush2.msra.mxu0 0.0
      %458 = vmatprep.subr.mxu0 0.0
      %459 = vmatpush2.msra.mxu0 0.0
      %460 = vmatprep.subr.mxu0 0.0
      %461 = vmatpush2.msra.mxu0 0.0
      %462 = vmatprep.subr.mxu0 0.0
      %463 = vmatpush2.msra.mxu0 0.0
      %464 = vmatprep.subr.mxu0 0.0
      %465 = vmatpush2.msra.mxu0 0.0
      %466 = vmatprep.subr.mxu0 0.0
      %467 = vmatpush2.msra.mxu0 0.0
      %468 = vmatprep.subr.mxu0 0.0
      %469 = vmatpush2.msra.mxu0 0.0
      %470 = vmatprep.subr.mxu0 0.0
      %471 = vmatpush2.msra.mxu0 0.0
      %472 = vmatprep.subr.mxu0 0.0
      %473 = vmatpush2.msra.mxu0 0.0
      %474 = vmatprep.subr.mxu0 0.0
      %475 = vmatpush2.msra.mxu0 0.0
      %476 = vmatprep.subr.mxu0 0.0
      %477 = vmatpush2.msra.mxu0 0.0
      %478 = vmatprep.subr.mxu0 0.0
      %479 = vmatpush2.msra.mxu0 0.0
      %480 = vmatprep.subr.mxu0 0.0
      %481 = vmatpush2.msra.mxu0 0.0
      %482 = vmatprep.mubr.f32.mxu0 0.0
      %483 = vmatmul.mubr.f32.gmra.mxu0 %v413
      %v484 = vpop.f32.mrf.mxu0
      %v485 = vadd.f32 0.0, %v484
      %v486 = vpop.f32.mrf.mxu0
      %487 = vmatprep.mubr.f32.mxu0 0.0
      %488 = vmatmul.mubr.f32.gmra.mxu0 %v416
      %v489 = vpop.f32.mrf.mxu0
      %v490 = vadd.f32 0.0, %v489
      %v491 = vpop.f32.mrf.mxu0
      %492 = vdwg.mxu0
      %s493 = scalar_lea.vmem %s143, 48
      %494 = vst.msk [vmem:[%s493] sm:$0xff] %vm229, %v485
      %495 = vst.msk [vmem:[%s493 + $0x8] sm:$0xff] %vm229, %v490
      %v496 = vld [vmem:[%s1] sm:$0xff]
      %v497 = vld [vmem:[%s1 + $0x8] sm:$0xff]
      %s498 = scalar_lea.vmem %s138, 32
      %v499 = vld [vmem:[%s498] sm:$0xff]
      %v501 = vsel %vm147, %v496, 0
      %v504 = vsel %vm147, %v497, 0
      %506 = vmatprep.subr.mxu0 0.0
      %507 = vmatpush1.msra.mxu0 0.0
      %508 = vmatprep.subr.mxu0 0.0
      %509 = vmatpush1.msra.mxu0 0.0
      %510 = vmatprep.subr.mxu0 0.0
      %511 = vmatpush1.msra.mxu0 0.0
      %512 = vmatprep.subr.mxu0 0.0
      %513 = vmatpush1.msra.mxu0 0.0
      %514 = vmatprep.subr.mxu0 0.0
      %515 = vmatpush1.msra.mxu0 0.0
      %516 = vmatprep.subr.mxu0 0.0
      %517 = vmatpush1.msra.mxu0 0.0
      %518 = vmatprep.subr.mxu0 0.0
      %519 = vmatpush1.msra.mxu0 0.0
      %520 = vmatprep.subr.mxu0 0.0
      %521 = vmatpush1.msra.mxu0 0.0
      %522 = vmatprep.subr.mxu0 0.0
      %523 = vmatpush1.msra.mxu0 0.0
      %524 = vmatprep.subr.mxu0 0.0
      %525 = vmatpush1.msra.mxu0 0.0
      %526 = vmatprep.subr.mxu0 0.0
      %527 = vmatpush1.msra.mxu0 0.0
      %528 = vmatprep.subr.mxu0 0.0
      %529 = vmatpush1.msra.mxu0 0.0
      %530 = vmatprep.subr.mxu0 0.0
      %531 = vmatpush1.msra.mxu0 0.0
      %532 = vmatprep.subr.mxu0 0.0
      %533 = vmatpush1.msra.mxu0 0.0
      %534 = vmatprep.subr.mxu0 0.0
      %535 = vmatpush1.msra.mxu0 0.0
      %536 = vmatprep.subr.mxu0 0.0
      %537 = vmatpush1.msra.mxu0 %v499
      %538 = vmatprep.subr.mxu0 0.0
      %539 = vmatpush2.msra.mxu0 0.0
      %540 = vmatprep.subr.mxu0 0.0
      %541 = vmatpush2.msra.mxu0 0.0
      %542 = vmatprep.subr.mxu0 0.0
      %543 = vmatpush2.msra.mxu0 0.0
      %544 = vmatprep.subr.mxu0 0.0
      %545 = vmatpush2.msra.mxu0 0.0
      %546 = vmatprep.subr.mxu0 0.0
      %547 = vmatpush2.msra.mxu0 0.0
      %548 = vmatprep.subr.mxu0 0.0
      %549 = vmatpush2.msra.mxu0 0.0
      %550 = vmatprep.subr.mxu0 0.0
      %551 = vmatpush2.msra.mxu0 0.0
      %552 = vmatprep.subr.mxu0 0.0
      %553 = vmatpush2.msra.mxu0 0.0
      %554 = vmatprep.subr.mxu0 0.0
      %555 = vmatpush2.msra.mxu0 0.0
      %556 = vmatprep.subr.mxu0 0.0
      %557 = vmatpush2.msra.mxu0 0.0
      %558 = vmatprep.subr.mxu0 0.0
      %559 = vmatpush2.msra.mxu0 0.0
      %560 = vmatprep.subr.mxu0 0.0
      %561 = vmatpush2.msra.mxu0 0.0
      %562 = vmatprep.subr.mxu0 0.0
      %563 = vmatpush2.msra.mxu0 0.0
      %564 = vmatprep.subr.mxu0 0.0
      %565 = vmatpush2.msra.mxu0 0.0
      %566 = vmatprep.subr.mxu0 0.0
      %567 = vmatpush2.msra.mxu0 0.0
      %568 = vmatprep.subr.mxu0 0.0
      %569 = vmatpush2.msra.mxu0 0.0
      %570 = vmatprep.mubr.f32.mxu0 0.0
      %571 = vmatmul.mubr.f32.gmra.mxu0 %v501
      %v572 = vpop.f32.mrf.mxu0
      %v573 = vadd.f32 0.0, %v572
      %v574 = vpop.f32.mrf.mxu0
      %575 = vmatprep.mubr.f32.mxu0 0.0
      %576 = vmatmul.mubr.f32.gmra.mxu0 %v504
      %v577 = vpop.f32.mrf.mxu0
      %v578 = vadd.f32 0.0, %v577
      %v579 = vpop.f32.mrf.mxu0
      %580 = vdwg.mxu0
      %s581 = scalar_lea.vmem %s143, 64
      %582 = vst.msk [vmem:[%s581] sm:$0xff] %vm229, %v573
      %583 = vst.msk [vmem:[%s581 + $0x8] sm:$0xff] %vm229, %v578
      %v584 = vld [vmem:[%s1] sm:$0xff]
      %v585 = vld [vmem:[%s1 + $0x8] sm:$0xff]
      %s586 = scalar_lea.vmem %s138, 40
      %v587 = vld [vmem:[%s586] sm:$0xff]
      %v589 = vsel %vm147, %v584, 0
      %v592 = vsel %vm147, %v585, 0
      %594 = vmatprep.subr.mxu0 0.0
      %595 = vmatpush1.msra.mxu0 0.0
      %596 = vmatprep.subr.mxu0 0.0
      %597 = vmatpush1.msra.mxu0 0.0
      %598 = vmatprep.subr.mxu0 0.0
      %599 = vmatpush1.msra.mxu0 0.0
      %600 = vmatprep.subr.mxu0 0.0
      %601 = vmatpush1.msra.mxu0 0.0
      %602 = vmatprep.subr.mxu0 0.0
      %603 = vmatpush1.msra.mxu0 0.0
      %604 = vmatprep.subr.mxu0 0.0
      %605 = vmatpush1.msra.mxu0 0.0
      %606 = vmatprep.subr.mxu0 0.0
      %607 = vmatpush1.msra.mxu0 0.0
      %608 = vmatprep.subr.mxu0 0.0
      %609 = vmatpush1.msra.mxu0 0.0
      %610 = vmatprep.subr.mxu0 0.0
      %611 = vmatpush1.msra.mxu0 0.0
      %612 = vmatprep.subr.mxu0 0.0
      %613 = vmatpush1.msra.mxu0 0.0
      %614 = vmatprep.subr.mxu0 0.0
      %615 = vmatpush1.msra.mxu0 0.0
      %616 = vmatprep.subr.mxu0 0.0
      %617 = vmatpush1.msra.mxu0 0.0
      %618 = vmatprep.subr.mxu0 0.0
      %619 = vmatpush1.msra.mxu0 0.0
      %620 = vmatprep.subr.mxu0 0.0
      %621 = vmatpush1.msra.mxu0 0.0
      %622 = vmatprep.subr.mxu0 0.0
      %623 = vmatpush1.msra.mxu0 0.0
      %624 = vmatprep.subr.mxu0 0.0
      %625 = vmatpush1.msra.mxu0 %v587
      %626 = vmatprep.subr.mxu0 0.0
      %627 = vmatpush2.msra.mxu0 0.0
      %628 = vmatprep.subr.mxu0 0.0
      %629 = vmatpush2.msra.mxu0 0.0
      %630 = vmatprep.subr.mxu0 0.0
      %631 = vmatpush2.msra.mxu0 0.0
      %632 = vmatprep.subr.mxu0 0.0
      %633 = vmatpush2.msra.mxu0 0.0
      %634 = vmatprep.subr.mxu0 0.0
      %635 = vmatpush2.msra.mxu0 0.0
      %636 = vmatprep.subr.mxu0 0.0
      %637 = vmatpush2.msra.mxu0 0.0
      %638 = vmatprep.subr.mxu0 0.0
      %639 = vmatpush2.msra.mxu0 0.0
      %640 = vmatprep.subr.mxu0 0.0
      %641 = vmatpush2.msra.mxu0 0.0
      %642 = vmatprep.subr.mxu0 0.0
      %643 = vmatpush2.msra.mxu0 0.0
      %644 = vmatprep.subr.mxu0 0.0
      %645 = vmatpush2.msra.mxu0 0.0
      %646 = vmatprep.subr.mxu0 0.0
      %647 = vmatpush2.msra.mxu0 0.0
      %648 = vmatprep.subr.mxu0 0.0
      %649 = vmatpush2.msra.mxu0 0.0
      %650 = vmatprep.subr.mxu0 0.0
      %651 = vmatpush2.msra.mxu0 0.0
      %652 = vmatprep.subr.mxu0 0.0
      %653 = vmatpush2.msra.mxu0 0.0
      %654 = vmatprep.subr.mxu0 0.0
      %655 = vmatpush2.msra.mxu0 0.0
      %656 = vmatprep.subr.mxu0 0.0
      %657 = vmatpush2.msra.mxu0 0.0
      %658 = vmatprep.mubr.f32.mxu0 0.0
      %659 = vmatmul.mubr.f32.gmra.mxu0 %v589
      %v660 = vpop.f32.mrf.mxu0
      %v661 = vadd.f32 0.0, %v660
      %v662 = vpop.f32.mrf.mxu0
      %663 = vmatprep.mubr.f32.mxu0 0.0
      %664 = vmatmul.mubr.f32.gmra.mxu0 %v592
      %v665 = vpop.f32.mrf.mxu0
      %v666 = vadd.f32 0.0, %v665
      %v667 = vpop.f32.mrf.mxu0
      %668 = vdwg.mxu0
      %s669 = scalar_lea.vmem %s143, 80
      %670 = vst.msk [vmem:[%s669] sm:$0xff] %vm229, %v661
      %671 = vst.msk [vmem:[%s669 + $0x8] sm:$0xff] %vm229, %v666
      %v672 = vld [vmem:[%s1] sm:$0xff]
      %v673 = vld [vmem:[%s1 + $0x8] sm:$0xff]
      %s674 = scalar_lea.vmem %s138, 48
      %v675 = vld [vmem:[%s674] sm:$0xff]
      %v677 = vsel %vm147, %v672, 0
      %v680 = vsel %vm147, %v673, 0
      %682 = vmatprep.subr.mxu0 0.0
      %683 = vmatpush1.msra.mxu0 0.0
      %684 = vmatprep.subr.mxu0 0.0
      %685 = vmatpush1.msra.mxu0 0.0
      %686 = vmatprep.subr.mxu0 0.0
      %687 = vmatpush1.msra.mxu0 0.0
      %688 = vmatprep.subr.mxu0 0.0
      %689 = vmatpush1.msra.mxu0 0.0
      %690 = vmatprep.subr.mxu0 0.0
      %691 = vmatpush1.msra.mxu0 0.0
      %692 = vmatprep.subr.mxu0 0.0
      %693 = vmatpush1.msra.mxu0 0.0
      %694 = vmatprep.subr.mxu0 0.0
      %695 = vmatpush1.msra.mxu0 0.0
      %696 = vmatprep.subr.mxu0 0.0
      %697 = vmatpush1.msra.mxu0 0.0
      %698 = vmatprep.subr.mxu0 0.0
      %699 = vmatpush1.msra.mxu0 0.0
      %700 = vmatprep.subr.mxu0 0.0
      %701 = vmatpush1.msra.mxu0 0.0
      %702 = vmatprep.subr.mxu0 0.0
      %703 = vmatpush1.msra.mxu0 0.0
      %704 = vmatprep.subr.mxu0 0.0
      %705 = vmatpush1.msra.mxu0 0.0
      %706 = vmatprep.subr.mxu0 0.0
      %707 = vmatpush1.msra.mxu0 0.0
      %708 = vmatprep.subr.mxu0 0.0
      %709 = vmatpush1.msra.mxu0 0.0
      %710 = vmatprep.subr.mxu0 0.0
      %711 = vmatpush1.msra.mxu0 0.0
      %712 = vmatprep.subr.mxu0 0.0
      %713 = vmatpush1.msra.mxu0 %v675
      %714 = vmatprep.subr.mxu0 0.0
      %715 = vmatpush2.msra.mxu0 0.0
      %716 = vmatprep.subr.mxu0 0.0
      %717 = vmatpush2.msra.mxu0 0.0
      %718 = vmatprep.subr.mxu0 0.0
      %719 = vmatpush2.msra.mxu0 0.0
      %720 = vmatprep.subr.mxu0 0.0
      %721 = vmatpush2.msra.mxu0 0.0
      %722 = vmatprep.subr.mxu0 0.0
      %723 = vmatpush2.msra.mxu0 0.0
      %724 = vmatprep.subr.mxu0 0.0
      %725 = vmatpush2.msra.mxu0 0.0
      %726 = vmatprep.subr.mxu0 0.0
      %727 = vmatpush2.msra.mxu0 0.0
      %728 = vmatprep.subr.mxu0 0.0
      %729 = vmatpush2.msra.mxu0 0.0
      %730 = vmatprep.subr.mxu0 0.0
      %731 = vmatpush2.msra.mxu0 0.0
      %732 = vmatprep.subr.mxu0 0.0
      %733 = vmatpush2.msra.mxu0 0.0
      %734 = vmatprep.subr.mxu0 0.0
      %735 = vmatpush2.msra.mxu0 0.0
      %736 = vmatprep.subr.mxu0 0.0
      %737 = vmatpush2.msra.mxu0 0.0
      %738 = vmatprep.subr.mxu0 0.0
      %739 = vmatpush2.msra.mxu0 0.0
      %740 = vmatprep.subr.mxu0 0.0
      %741 = vmatpush2.msra.mxu0 0.0
      %742 = vmatprep.subr.mxu0 0.0
      %743 = vmatpush2.msra.mxu0 0.0
      %744 = vmatprep.subr.mxu0 0.0
      %745 = vmatpush2.msra.mxu0 0.0
      %746 = vmatprep.mubr.f32.mxu0 0.0
      %747 = vmatmul.mubr.f32.gmra.mxu0 %v677
      %v748 = vpop.f32.mrf.mxu0
      %v749 = vadd.f32 0.0, %v748
      %v750 = vpop.f32.mrf.mxu0
      %751 = vmatprep.mubr.f32.mxu0 0.0
      %752 = vmatmul.mubr.f32.gmra.mxu0 %v680
      %v753 = vpop.f32.mrf.mxu0
      %v754 = vadd.f32 0.0, %v753
      %v755 = vpop.f32.mrf.mxu0
      %756 = vdwg.mxu0
      %s757 = scalar_lea.vmem %s143, 96
      %758 = vst.msk [vmem:[%s757] sm:$0xff] %vm229, %v749
      %759 = vst.msk [vmem:[%s757 + $0x8] sm:$0xff] %vm229, %v754
      %v760 = vld [vmem:[%s1] sm:$0xff]
      %v761 = vld [vmem:[%s1 + $0x8] sm:$0xff]
      %s762 = scalar_lea.vmem %s138, 56
      %v763 = vld [vmem:[%s762] sm:$0xff]
      %v765 = vsel %vm147, %v760, 0
      %v768 = vsel %vm147, %v761, 0
      %770 = vmatprep.subr.mxu0 0.0
      %771 = vmatpush1.msra.mxu0 0.0
      %772 = vmatprep.subr.mxu0 0.0
      %773 = vmatpush1.msra.mxu0 0.0
      %774 = vmatprep.subr.mxu0 0.0
      %775 = vmatpush1.msra.mxu0 0.0
      %776 = vmatprep.subr.mxu0 0.0
      %777 = vmatpush1.msra.mxu0 0.0
      %778 = vmatprep.subr.mxu0 0.0
      %779 = vmatpush1.msra.mxu0 0.0
      %780 = vmatprep.subr.mxu0 0.0
      %781 = vmatpush1.msra.mxu0 0.0
      %782 = vmatprep.subr.mxu0 0.0
      %783 = vmatpush1.msra.mxu0 0.0
      %784 = vmatprep.subr.mxu0 0.0
      %785 = vmatpush1.msra.mxu0 0.0
      %786 = vmatprep.subr.mxu0 0.0
      %787 = vmatpush1.msra.mxu0 0.0
      %788 = vmatprep.subr.mxu0 0.0
      %789 = vmatpush1.msra.mxu0 0.0
      %790 = vmatprep.subr.mxu0 0.0
      %791 = vmatpush1.msra.mxu0 0.0
      %792 = vmatprep.subr.mxu0 0.0
      %793 = vmatpush1.msra.mxu0 0.0
      %794 = vmatprep.subr.mxu0 0.0
      %795 = vmatpush1.msra.mxu0 0.0
      %796 = vmatprep.subr.mxu0 0.0
      %797 = vmatpush1.msra.mxu0 0.0
      %798 = vmatprep.subr.mxu0 0.0
      %799 = vmatpush1.msra.mxu0 0.0
      %800 = vmatprep.subr.mxu0 0.0
      %801 = vmatpush1.msra.mxu0 %v763
      %802 = vmatprep.subr.mxu0 0.0
      %803 = vmatpush2.msra.mxu0 0.0
      %804 = vmatprep.subr.mxu0 0.0
      %805 = vmatpush2.msra.mxu0 0.0
      %806 = vmatprep.subr.mxu0 0.0
      %807 = vmatpush2.msra.mxu0 0.0
      %808 = vmatprep.subr.mxu0 0.0
      %809 = vmatpush2.msra.mxu0 0.0
      %810 = vmatprep.subr.mxu0 0.0
      %811 = vmatpush2.msra.mxu0 0.0
      %812 = vmatprep.subr.mxu0 0.0
      %813 = vmatpush2.msra.mxu0 0.0
      %814 = vmatprep.subr.mxu0 0.0
      %815 = vmatpush2.msra.mxu0 0.0
      %816 = vmatprep.subr.mxu0 0.0
      %817 = vmatpush2.msra.mxu0 0.0
      %818 = vmatprep.subr.mxu0 0.0
      %819 = vmatpush2.msra.mxu0 0.0
      %820 = vmatprep.subr.mxu0 0.0
      %821 = vmatpush2.msra.mxu0 0.0
      %822 = vmatprep.subr.mxu0 0.0
      %823 = vmatpush2.msra.mxu0 0.0
      %824 = vmatprep.subr.mxu0 0.0
      %825 = vmatpush2.msra.mxu0 0.0
      %826 = vmatprep.subr.mxu0 0.0
      %827 = vmatpush2.msra.mxu0 0.0
      %828 = vmatprep.subr.mxu0 0.0
      %829 = vmatpush2.msra.mxu0 0.0
      %830 = vmatprep.subr.mxu0 0.0
      %831 = vmatpush2.msra.mxu0 0.0
      %832 = vmatprep.subr.mxu0 0.0
      %833 = vmatpush2.msra.mxu0 0.0
      %834 = vmatprep.mubr.f32.mxu0 0.0
      %835 = vmatmul.mubr.f32.gmra.mxu0 %v765
      %v836 = vpop.f32.mrf.mxu0
      %v837 = vadd.f32 0.0, %v836
      %v838 = vpop.f32.mrf.mxu0
      %839 = vmatprep.mubr.f32.mxu0 0.0
      %840 = vmatmul.mubr.f32.gmra.mxu0 %v768
      %v841 = vpop.f32.mrf.mxu0
      %v842 = vadd.f32 0.0, %v841
      %v843 = vpop.f32.mrf.mxu0
      %844 = vdwg.mxu0
      %s845 = scalar_lea.vmem %s143, 112
      %846 = vst.msk [vmem:[%s845] sm:$0xff] %vm229, %v837
      %847 = vst.msk [vmem:[%s845 + $0x8] sm:$0xff] %vm229, %v842
      %p848 = scmp.lt.s32.totalorder %s13, 1
      %s849 = scalar_select %p848, %s13, 1
      %s850 = smul.addr %s849, 16
      %s851 = smul.addr %s850, 8
      %s852 = scalar_lea.vmem %s2, %s851
      // Predicated region
      $region29: #{a_call__.4} parent=27 // pred_check
        %p853 = pneg %p78
      $region30: #{a_call__.4} parent=27 // pred_check_branch
        %855 = sbr.rel (%p853) target = $region32
      $region31: #{a_call__.4} parent=27 // pred_region
        _
      $region32: #{a_call__.4} parent=27 // pred_fallthru
        _
    $region28: #{a_call__.4} parent=5 // pred_fallthru
      _
    %p856 = scmp.le.s32.totalorder 2, %s8
    // Predicated region
    $region33: #{a_call__.4} parent=5 // pred_check
      %p857 = pneg %p856
    $region34: #{a_call__.4} parent=5 // pred_check_branch
      %859 = sbr.rel (%p857) target = $region36
    $region35: #{a_call__.4} parent=5 // pred_region
      %s860 = ssub.s32 %s8, 2
      // Predicated region
      $region37: #{a_call__.4} parent=35 // pred_check
        %p861 = pneg %p84
      $region38: #{a_call__.4} parent=35 // pred_check_branch
        %863 = sbr.rel (%p861) target = $region40
      $region39: #{a_call__.4} parent=35 // pred_region
        %p864 = scmp.lt.s32.totalorder %s14, 1
        %s865 = scalar_select %p864, %s14, 1
        %s866 = smul.addr %s865, 16
        %s867 = smul.addr %s866, 8
        %s868 = scalar_lea.vmem %s2, %s867
      $region40: #{a_call__.4} parent=35 // pred_fallthru
        _
    $region36: #{a_call__.4} parent=5 // pred_fallthru
      _
  $region6: #{a_call__.4} parent=0 // loop_footer
    %s12 = sadd.s32 1, %s8
  $region7: #{a_call__.4} parent=0 // loop_footer_branch
    %7 = sbr.rel target = $region3
  $region8: #{a_call__.4} parent=0 // loop_exit
    _

// kernel: a_call__.5
$region0: #{a_call__.5}
  #allocation0 [shape = 'u32[]', space=smem, size = 0x4, offset = 0x4, fixed_abs, tag = 'smem constant byte address 0x4 - core index']
  #allocation1 [shape = 'u32[144,128]{1,0:T(1,128)}', space=vmem, size = 0x12000, scoped, tag = 'internal scratch']
  %s0 = inlined_call_operand.vmem [shape: f32[2,8,64], index: 0, kind: input, shape index: {}]
  %s1 = inlined_call_operand.vmem [shape: f32[16,8], index: 1, kind: input, shape index: {}]
  %s2 = inlined_call_operand.vmem [shape: f32[2,16,64], index: 2, kind: output, shape index: {}]
  %s3 = sld [smem:[#allocation0]]
  $region41: #{a_call__.5} parent=0
    _
  %s5 = ssub.s32 1, %s3
  %s6 = scalar_select 0, %s5, %s3
  loop: start=0, step=1, limit=4
  $region2: #{a_call__.5} parent=0 // loop_pre_header
    _
  $region3: #{a_call__.5} parent=0 // loop_header
    %s8 = sphi 0, %s12
    %p9 = scmp.ge.s32.totalorder %s8, 4
    %s18 = sphi 0, %s20
    %s21 = sphi 0, %s18
    %s22 = sphi 0, %s21
    %s38 = sphi 0, %s22
    %s42 = sphi 0, %s42
    %s44 = sphi 0, %s42
    %s45 = sphi 0, %s44
    %s59 = sphi 0, %s45
    %s65 = sphi 0, %s67
    %s68 = sphi 0, %s65
    %s69 = sphi 0, %s68
    %s85 = sphi 0, %s69
  $region4: #{a_call__.5} parent=0 // loop_header_branch
    %11 = sbr.rel (%p9) target = $region8
  $region5: #{a_call__.5} parent=0 // loop_body
    %s13 = ssub.s32 %s8, 1
    %s14 = ssub.s32 %s8, 2
    %s15 = sadd.s32 %s8, 1
    %s16 = ssub.s32 %s8, %s15
    %p17 = scmp.eq.s32.totalorder %s16, 0
    %s19 = sadd.s32 %s18, 1
    %s20 = scalar_select %p17, %s18, %s19
    %p23 = pneg %p17
    %p24 = scmp.eq.s32.totalorder %s8, 1
    %p25 = por %p23, %p24
    %p26 = scmp.ne.s32.totalorder %s18, %s21
    %p27 = scmp.eq.s32.totalorder %s8, 0
    %p28 = por %p26, %p27
    %p29 = scmp.ne.s32.totalorder %s18, %s21
    %p30 = scmp.eq.s32.totalorder %s13, 1
    %p31 = por %p29, %p30
    %p32 = scmp.ne.s32.totalorder %s21, %s22
    %p33 = scmp.eq.s32.totalorder %s13, 0
    %p34 = por %p32, %p33
    %p35 = scmp.ne.s32.totalorder %s21, %s22
    %p36 = scmp.eq.s32.totalorder %s14, 1
    %p37 = por %p35, %p36
    %p39 = scmp.ne.s32.totalorder %s22, %s38
    %p40 = scmp.eq.s32.totalorder %s14, 0
    %p41 = por %p39, %p40
    %s43 = sadd.s32 %s42, 1
    %p46 = scmp.eq.s32.totalorder %s8, 1
    %p47 = scmp.ne.s32.totalorder %s42, %s44
    %p48 = scmp.eq.s32.totalorder %s8, 0
    %p49 = por %p47, %p48
    %p50 = scmp.ne.s32.totalorder %s42, %s44
    %p51 = scmp.eq.s32.totalorder %s13, 1
    %p52 = por %p50, %p51
    %p53 = scmp.ne.s32.totalorder %s44, %s45
    %p54 = scmp.eq.s32.totalorder %s13, 0
    %p55 = por %p53, %p54
    %p56 = scmp.ne.s32.totalorder %s44, %s45
    %p57 = scmp.eq.s32.totalorder %s14, 1
    %p58 = por %p56, %p57
    %p60 = scmp.ne.s32.totalorder %s45, %s59
    %p61 = scmp.eq.s32.totalorder %s14, 0
    %p62 = por %p60, %p61
    %s63 = ssub.s32 %s8, %s15
    %p64 = scmp.eq.s32.totalorder %s63, 0
    %s66 = sadd.s32 %s65, 1
    %s67 = scalar_select %p64, %s65, %s66
    %p70 = pneg %p64
    %p71 = scmp.eq.s32.totalorder %s8, 1
    %p72 = por %p70, %p71
    %p73 = scmp.ne.s32.totalorder %s65, %s68
    %p74 = scmp.eq.s32.totalorder %s8, 0
    %p75 = por %p73, %p74
    %p76 = scmp.ne.s32.totalorder %s65, %s68
    %p77 = scmp.eq.s32.totalorder %s13, 1
    %p78 = por %p76, %p77
    %p79 = scmp.ne.s32.totalorder %s68, %s69
    %p80 = scmp.eq.s32.totalorder %s13, 0
    %p81 = por %p79, %p80
    %p82 = scmp.ne.s32.totalorder %s68, %s69
    %p83 = scmp.eq.s32.totalorder %s14, 1
    %p84 = por %p82, %p83
    %p86 = scmp.ne.s32.totalorder %s69, %s85
    %p87 = scmp.eq.s32.totalorder %s14, 0
    %p88 = por %p86, %p87
    %p89 = scmp.le.s32.totalorder 1, %s8
    %p90 = scmp.lt.s32.totalorder %s8, 3
    %p91 = pnand %p89, %p90
    %p92 = pneg %p91
    // Predicated region
    $region9: #{a_call__.5} parent=5 // pred_check
      _
    $region10: #{a_call__.5} parent=5 // pred_check_branch
      %94 = sbr.rel (%p91) target = $region12
    $region11: #{a_call__.5} parent=5 // pred_region
      %s95 = ssub.s32 %s8, 1
      // Predicated region
      $region13: #{a_call__.5} parent=11 // pred_check
        %p96 = pneg %p55
      $region14: #{a_call__.5} parent=11 // pred_check_branch
        %98 = sbr.rel (%p96) target = $region16
      $region15: #{a_call__.5} parent=11 // pred_region
        _
      $region16: #{a_call__.5} parent=11 // pred_fallthru
        _
    $region12: #{a_call__.5} parent=5 // pred_fallthru
      _
    %p99 = scmp.lt.s32.totalorder %s8, 2
    // Predicated region
    $region17: #{a_call__.5} parent=5 // pred_check
      %p100 = pneg %p99
    $region18: #{a_call__.5} parent=5 // pred_check_branch
      %102 = sbr.rel (%p100) target = $region20
    $region19: #{a_call__.5} parent=5 // pred_region
      // Predicated region
      $region21: #{a_call__.5} parent=19 // pred_check
        %p103 = pneg %p28
      $region22: #{a_call__.5} parent=19 // pred_check_branch
        %105 = sbr.rel (%p103) target = $region24
      $region23: #{a_call__.5} parent=19 // pred_region
        %p106 = scmp.lt.s32.totalorder %s8, 1
        %s107 = scalar_select %p106, %s8, 1
        %s108 = smul.addr %s107, 8
        %s109 = scalar_lea.vmem %s0, %s108
      $region24: #{a_call__.5} parent=19 // pred_fallthru
        _
    $region20: #{a_call__.5} parent=5 // pred_fallthru
      _
    %p110 = scmp.le.s32.totalorder 1, %s8
    %p111 = scmp.lt.s32.totalorder %s8, 3
    %p112 = pnand %p110, %p111
    %p113 = pneg %p112
    // Predicated region
    $region25: #{a_call__.5} parent=5 // pred_check
      _
    $region26: #{a_call__.5} parent=5 // pred_check_branch
      %115 = sbr.rel (%p112) target = $region28
    $region27: #{a_call__.5} parent=5 // pred_region
      %s116 = ssub.s32 %s8, 1
      %p117 = scmp.lt.s32.totalorder %s13, 1
      %s118 = scalar_select %p117, %s13, 1
      %s119 = smul.addr %s118, 8
      %s120 = scalar_lea.vmem %s0, %s119
      %p121 = pneg %p34
      %p122 = pneg %p31
      %p123 = pneg %p55
      %p124 = pneg %p52
      %p125 = pneg %p81
      %p126 = pneg %p78
      %p127 = scmp.lt.s32.totalorder %s13, 1
      %s128 = scalar_select %p127, %s13, 1
      %s129 = smul.addr %s128, 2
      %s130 = smul.addr %s129, 8
      %s131 = scalar_lea.vmem %s2, %s130
      %p132 = scmp.lt.s32.totalorder %s13, 1
      %s133 = scalar_select %p132, %s13, 1
      %s134 = smul.addr %s133, 8
      %s135 = scalar_lea.vmem %s0, %s134
      %p136 = scmp.lt.s32.totalorder %s13, 1
      %s137 = scalar_select %p136, %s13, 1
      %s138 = smul.addr %s137, 2
      %s139 = smul.addr %s138, 8
      %s140 = scalar_lea.vmem %s2, %s139
      %v141 = vld [vmem:[%s1] sm:$0xff]
      %v142 = vld [vmem:[%s1 + $0x8] sm:$0xff]
      %v143 = vld [vmem:[%s135] sm:$0xff]
      %vm144 = vcmask 64512
      %v146 = vsel %vm144, %v141, 0
      %v149 = vsel %vm144, %v142, 0
      %151 = vmatprep.subr.mxu0 0.0
      %152 = vmatpush1.msra.mxu0 0.0
      %153 = vmatprep.subr.mxu0 0.0
      %154 = vmatpush1.msra.mxu0 0.0
      %155 = vmatprep.subr.mxu0 0.0
      %156 = vmatpush1.msra.mxu0 0.0
      %157 = vmatprep.subr.mxu0 0.0
      %158 = vmatpush1.msra.mxu0 0.0
      %159 = vmatprep.subr.mxu0 0.0
      %160 = vmatpush1.msra.mxu0 0.0
      %161 = vmatprep.subr.mxu0 0.0
      %162 = vmatpush1.msra.mxu0 0.0
      %163 = vmatprep.subr.mxu0 0.0
      %164 = vmatpush1.msra.mxu0 0.0
      %165 = vmatprep.subr.mxu0 0.0
      %166 = vmatpush1.msra.mxu0 0.0
      %167 = vmatprep.subr.mxu0 0.0
      %168 = vmatpush1.msra.mxu0 0.0
      %169 = vmatprep.subr.mxu0 0.0
      %170 = vmatpush1.msra.mxu0 0.0
      %171 = vmatprep.subr.mxu0 0.0
      %172 = vmatpush1.msra.mxu0 0.0
      %173 = vmatprep.subr.mxu0 0.0
      %174 = vmatpush1.msra.mxu0 0.0
      %175 = vmatprep.subr.mxu0 0.0
      %176 = vmatpush1.msra.mxu0 0.0
      %177 = vmatprep.subr.mxu0 0.0
      %178 = vmatpush1.msra.mxu0 0.0
      %179 = vmatprep.subr.mxu0 0.0
      %180 = vmatpush1.msra.mxu0 0.0
      %181 = vmatprep.subr.mxu0 0.0
      %182 = vmatpush1.msra.mxu0 %v143
      %183 = vmatprep.subr.mxu0 0.0
      %184 = vmatpush2.msra.mxu0 0.0
      %185 = vmatprep.subr.mxu0 0.0
      %186 = vmatpush2.msra.mxu0 0.0
      %187 = vmatprep.subr.mxu0 0.0
      %188 = vmatpush2.msra.mxu0 0.0
      %189 = vmatprep.subr.mxu0 0.0
      %190 = vmatpush2.msra.mxu0 0.0
      %191 = vmatprep.subr.mxu0 0.0
      %192 = vmatpush2.msra.mxu0 0.0
      %193 = vmatprep.subr.mxu0 0.0
      %194 = vmatpush2.msra.mxu0 0.0
      %195 = vmatprep.subr.mxu0 0.0
      %196 = vmatpush2.msra.mxu0 0.0
      %197 = vmatprep.subr.mxu0 0.0
      %198 = vmatpush2.msra.mxu0 0.0
      %199 = vmatprep.subr.mxu0 0.0
      %200 = vmatpush2.msra.mxu0 0.0
      %201 = vmatprep.subr.mxu0 0.0
      %202 = vmatpush2.msra.mxu0 0.0
      %203 = vmatprep.subr.mxu0 0.0
      %204 = vmatpush2.msra.mxu0 0.0
      %205 = vmatprep.subr.mxu0 0.0
      %206 = vmatpush2.msra.mxu0 0.0
      %207 = vmatprep.subr.mxu0 0.0
      %208 = vmatpush2.msra.mxu0 0.0
      %209 = vmatprep.subr.mxu0 0.0
      %210 = vmatpush2.msra.mxu0 0.0
      %211 = vmatprep.subr.mxu0 0.0
      %212 = vmatpush2.msra.mxu0 0.0
      %213 = vmatprep.subr.mxu0 0.0
      %214 = vmatpush2.msra.mxu0 0.0
      %215 = vmatprep.mubr.f32.mxu0 0.0
      %216 = vmatmul.mubr.f32.gmra.mxu0 %v146
      %v217 = vpop.f32.mrf.mxu0
      %v218 = vadd.f32 0.0, %v217
      %v219 = vpop.f32.mrf.mxu0
      %220 = vmatprep.mubr.f32.mxu0 0.0
      %221 = vmatmul.mubr.f32.gmra.mxu0 %v149
      %v222 = vpop.f32.mrf.mxu0
      %v223 = vadd.f32 0.0, %v222
      %v224 = vpop.f32.mrf.mxu0
      %225 = vdwg.mxu0
      %vm226 = vcmask 523264
      %227 = vst.msk [vmem:[%s140] sm:$0xff] %vm226, %v218
      %228 = vst.msk [vmem:[%s140 + $0x8] sm:$0xff] %vm226, %v223
      %p229 = scmp.lt.s32.totalorder %s13, 1
      %s230 = scalar_select %p229, %s13, 1
      %s231 = smul.addr %s230, 2
      %s232 = smul.addr %s231, 8
      %s233 = scalar_lea.vmem %s2, %s232
      // Predicated region
      $region29: #{a_call__.5} parent=27 // pred_check
        %p234 = pneg %p78
      $region30: #{a_call__.5} parent=27 // pred_check_branch
        %236 = sbr.rel (%p234) target = $region32
      $region31: #{a_call__.5} parent=27 // pred_region
        _
      $region32: #{a_call__.5} parent=27 // pred_fallthru
        _
    $region28: #{a_call__.5} parent=5 // pred_fallthru
      _
    %p237 = scmp.le.s32.totalorder 2, %s8
    // Predicated region
    $region33: #{a_call__.5} parent=5 // pred_check
      %p238 = pneg %p237
    $region34: #{a_call__.5} parent=5 // pred_check_branch
      %240 = sbr.rel (%p238) target = $region36
    $region35: #{a_call__.5} parent=5 // pred_region
      %s241 = ssub.s32 %s8, 2
      // Predicated region
      $region37: #{a_call__.5} parent=35 // pred_check
        %p242 = pneg %p84
      $region38: #{a_call__.5} parent=35 // pred_check_branch
        %244 = sbr.rel (%p242) target = $region40
      $region39: #{a_call__.5} parent=35 // pred_region
        %p245 = scmp.lt.s32.totalorder %s14, 1
        %s246 = scalar_select %p245, %s14, 1
        %s247 = smul.addr %s246, 2
        %s248 = smul.addr %s247, 8
        %s249 = scalar_lea.vmem %s2, %s248
      $region40: #{a_call__.5} parent=35 // pred_fallthru
        _
    $region36: #{a_call__.5} parent=5 // pred_fallthru
      _
  $region6: #{a_call__.5} parent=0 // loop_footer
    %s12 = sadd.s32 1, %s8
  $region7: #{a_call__.5} parent=0 // loop_footer_branch
    %7 = sbr.rel target = $region3
  $region8: #{a_call__.5} parent=0 // loop_exit
    _

// kernel: a_call__.7
$region0: #{a_call__.7}
  #allocation0 [shape = 'u32[]', space=smem, size = 0x4, offset = 0x4, fixed_abs, tag = 'smem constant byte address 0x4 - core index']
  #allocation1 [shape = 'u32[144,128]{1,0:T(1,128)}', space=vmem, size = 0x12000, scoped, tag = 'internal scratch']
  %s0 = inlined_call_operand.vmem [shape: f32[2,18,24,128], index: 0, kind: input, shape index: {}]
  %s1 = inlined_call_operand.vmem [shape: f32[3,384,128], index: 1, kind: input, shape index: {}]
  %s2 = inlined_call_operand.vmem [shape: f32[1,128], index: 2, kind: input, shape index: {}]
  %s3 = inlined_call_operand.vmem [shape: f32[1,128], index: 3, kind: input, shape index: {}]
  %s4 = inlined_call_operand.vmem [shape: f32[2,16,24,128], index: 4, kind: output, shape index: {}]
  %s5 = sld [smem:[#allocation0]]
  $region49: #{a_call__.7} parent=0
    _
  %s7 = ssub.s32 1, %s5
  %s8 = scalar_select 0, %s7, %s5
  loop: start=0, step=1, limit=6
  $region2: #{a_call__.7} parent=0 // loop_pre_header
    _
  $region3: #{a_call__.7} parent=0 // loop_header
    %s10 = sphi 0, %s14
    %p11 = scmp.ge.s32.totalorder %s10, 6
    %s17 = sphi 0, %s29
    %s18 = sphi 0, %s25
    %s19 = sphi 0, %s17
    %s20 = sphi 0, %s18
    %s21 = sphi 0, %s19
    %s22 = sphi 0, %s20
    %s32 = sphi 0, %s34
    %s35 = sphi 0, %s32
    %s36 = sphi 0, %s35
    %s52 = sphi 0, %s36
    %s56 = sphi 0, %s56
    %s58 = sphi 0, %s56
    %s59 = sphi 0, %s58
    %s73 = sphi 0, %s59
    %s77 = sphi 0, %s77
    %s79 = sphi 0, %s77
    %s80 = sphi 0, %s79
    %s94 = sphi 0, %s80
    %s98 = sphi 0, %s98
    %s100 = sphi 0, %s98
    %s101 = sphi 0, %s100
    %s115 = sphi 0, %s101
    %s123 = sphi 0, %s125
    %s126 = sphi 0, %s123
    %s127 = sphi 0, %s126
    %s143 = sphi 0, %s127
  $region4: #{a_call__.7} parent=0 // loop_header_branch
    %13 = sbr.rel (%p11) target = $region8
  $region5: #{a_call__.7} parent=0 // loop_body
    %s15 = ssub.s32 %s10, 1
    %s16 = ssub.s32 %s10, 2
    %s23 = sadd.s32 1, %s18
    %p24 = scmp.ge.s32.totalorder %s23, 2
    %s25 = scalar_select %p24, 0, %s23
    %s26 = sadd.s32 1, %s17
    %s27 = scalar_select %p24, %s26, %s17
    %p28 = scmp.ge.s32.totalorder %s27, 2
    %s29 = scalar_select %p28, 0, %s27
    %s30 = ssub.s32 %s17, %s29
    %p31 = scmp.eq.s32.totalorder %s30, 0
    %s33 = sadd.s32 %s32, 1
    %s34 = scalar_select %p31, %s32, %s33
    %p37 = pneg %p31
    %p38 = scmp.eq.s32.totalorder %s10, 3
    %p39 = por %p37, %p38
    %p40 = scmp.ne.s32.totalorder %s32, %s35
    %p41 = scmp.eq.s32.totalorder %s10, 0
    %p42 = por %p40, %p41
    %p43 = scmp.ne.s32.totalorder %s32, %s35
    %p44 = scmp.eq.s32.totalorder %s15, 3
    %p45 = por %p43, %p44
    %p46 = scmp.ne.s32.totalorder %s35, %s36
    %p47 = scmp.eq.s32.totalorder %s15, 0
    %p48 = por %p46, %p47
    %p49 = scmp.ne.s32.totalorder %s35, %s36
    %p50 = scmp.eq.s32.totalorder %s16, 3
    %p51 = por %p49, %p50
    %p53 = scmp.ne.s32.totalorder %s36, %s52
    %p54 = scmp.eq.s32.totalorder %s16, 0
    %p55 = por %p53, %p54
    %s57 = sadd.s32 %s56, 1
    %p60 = scmp.eq.s32.totalorder %s10, 3
    %p61 = scmp.ne.s32.totalorder %s56, %s58
    %p62 = scmp.eq.s32.totalorder %s10, 0
    %p63 = por %p61, %p62
    %p64 = scmp.ne.s32.totalorder %s56, %s58
    %p65 = scmp.eq.s32.totalorder %s15, 3
    %p66 = por %p64, %p65
    %p67 = scmp.ne.s32.totalorder %s58, %s59
    %p68 = scmp.eq.s32.totalorder %s15, 0
    %p69 = por %p67, %p68
    %p70 = scmp.ne.s32.totalorder %s58, %s59
    %p71 = scmp.eq.s32.totalorder %s16, 3
    %p72 = por %p70, %p71
    %p74 = scmp.ne.s32.totalorder %s59, %s73
    %p75 = scmp.eq.s32.totalorder %s16, 0
    %p76 = por %p74, %p75
    %s78 = sadd.s32 %s77, 1
    %p81 = scmp.eq.s32.totalorder %s10, 3
    %p82 = scmp.ne.s32.totalorder %s77, %s79
    %p83 = scmp.eq.s32.totalorder %s10, 0
    %p84 = por %p82, %p83
    %p85 = scmp.ne.s32.totalorder %s77, %s79
    %p86 = scmp.eq.s32.totalorder %s15, 3
    %p87 = por %p85, %p86
    %p88 = scmp.ne.s32.totalorder %s79, %s80
    %p89 = scmp.eq.s32.totalorder %s15, 0
    %p90 = por %p88, %p89
    %p91 = scmp.ne.s32.totalorder %s79, %s80
    %p92 = scmp.eq.s32.totalorder %s16, 3
    %p93 = por %p91, %p92
    %p95 = scmp.ne.s32.totalorder %s80, %s94
    %p96 = scmp.eq.s32.totalorder %s16, 0
    %p97 = por %p95, %p96
    %s99 = sadd.s32 %s98, 1
    %p102 = scmp.eq.s32.totalorder %s10, 3
    %p103 = scmp.ne.s32.totalorder %s98, %s100
    %p104 = scmp.eq.s32.totalorder %s10, 0
    %p105 = por %p103, %p104
    %p106 = scmp.ne.s32.totalorder %s98, %s100
    %p107 = scmp.eq.s32.totalorder %s15, 3
    %p108 = por %p106, %p107
    %p109 = scmp.ne.s32.totalorder %s100, %s101
    %p110 = scmp.eq.s32.totalorder %s15, 0
    %p111 = por %p109, %p110
    %p112 = scmp.ne.s32.totalorder %s100, %s101
    %p113 = scmp.eq.s32.totalorder %s16, 3
    %p114 = por %p112, %p113
    %p116 = scmp.ne.s32.totalorder %s101, %s115
    %p117 = scmp.eq.s32.totalorder %s16, 0
    %p118 = por %p116, %p117
    %s119 = ssub.s32 %s17, %s29
    %s120 = ssub.s32 %s18, %s25
    %s121 = sor.u32 %s119, %s120
    %p122 = scmp.eq.s32.totalorder %s121, 0
    %s124 = sadd.s32 %s123, 1
    %s125 = scalar_select %p122, %s123, %s124
    %p128 = pneg %p122
    %p129 = scmp.eq.s32.totalorder %s10, 3
    %p130 = por %p128, %p129
    %p131 = scmp.ne.s32.totalorder %s123, %s126
    %p132 = scmp.eq.s32.totalorder %s10, 0
    %p133 = por %p131, %p132
    %p134 = scmp.ne.s32.totalorder %s123, %s126
    %p135 = scmp.eq.s32.totalorder %s15, 3
    %p136 = por %p134, %p135
    %p137 = scmp.ne.s32.totalorder %s126, %s127
    %p138 = scmp.eq.s32.totalorder %s15, 0
    %p139 = por %p137, %p138
    %p140 = scmp.ne.s32.totalorder %s126, %s127
    %p141 = scmp.eq.s32.totalorder %s16, 3
    %p142 = por %p140, %p141
    %p144 = scmp.ne.s32.totalorder %s127, %s143
    %p145 = scmp.eq.s32.totalorder %s16, 0
    %p146 = por %p144, %p145
    %p147 = scmp.le.s32.totalorder 1, %s10
    %p148 = scmp.lt.s32.totalorder %s10, 5
    %p149 = pnand %p147, %p148
    %p150 = pneg %p149
    // Predicated region
    $region9: #{a_call__.7} parent=5 // pred_check
      _
    $region10: #{a_call__.7} parent=5 // pred_check_branch
      %152 = sbr.rel (%p149) target = $region12
    $region11: #{a_call__.7} parent=5 // pred_region
      %s153 = ssub.s32 %s10, 1
      // Predicated region
      $region13: #{a_call__.7} parent=11 // pred_check
        %p154 = pneg %p69
      $region14: #{a_call__.7} parent=11 // pred_check_branch
        %156 = sbr.rel (%p154) target = $region16
      $region15: #{a_call__.7} parent=11 // pred_region
        _
      $region16: #{a_call__.7} parent=11 // pred_fallthru
        _
      // Predicated region
      $region17: #{a_call__.7} parent=11 // pred_check
        %p157 = pneg %p90
      $region18: #{a_call__.7} parent=11 // pred_check_branch
        %159 = sbr.rel (%p157) target = $region20
      $region19: #{a_call__.7} parent=11 // pred_region
        _
      $region20: #{a_call__.7} parent=11 // pred_fallthru
        _
      // Predicated region
      $region21: #{a_call__.7} parent=11 // pred_check
        %p160 = pneg %p111
      $region22: #{a_call__.7} parent=11 // pred_check_branch
        %162 = sbr.rel (%p160) target = $region24
      $region23: #{a_call__.7} parent=11 // pred_region
        _
      $region24: #{a_call__.7} parent=11 // pred_fallthru
        _
    $region12: #{a_call__.7} parent=5 // pred_fallthru
      _
    %p163 = scmp.lt.s32.totalorder %s10, 4
    // Predicated region
    $region25: #{a_call__.7} parent=5 // pred_check
      %p164 = pneg %p163
    $region26: #{a_call__.7} parent=5 // pred_check_branch
      %166 = sbr.rel (%p164) target = $region28
    $region27: #{a_call__.7} parent=5 // pred_region
      // Predicated region
      $region29: #{a_call__.7} parent=27 // pred_check
        %p167 = pneg %p42
      $region30: #{a_call__.7} parent=27 // pred_check_branch
        %169 = sbr.rel (%p167) target = $region32
      $region31: #{a_call__.7} parent=27 // pred_region
        %p170 = scmp.lt.s32.totalorder %s17, 1
        %s171 = scalar_select %p170, %s17, 1
        %s172 = smul.addr %s171, 54
        %s173 = smul.addr %s172, 8
        %s174 = scalar_lea.vmem %s0, %s173
      $region32: #{a_call__.7} parent=27 // pred_fallthru
        _
    $region28: #{a_call__.7} parent=5 // pred_fallthru
      _
    %p175 = scmp.le.s32.totalorder 1, %s10
    %p176 = scmp.lt.s32.totalorder %s10, 5
    %p177 = pnand %p175, %p176
    %p178 = pneg %p177
    // Predicated region
    $region33: #{a_call__.7} parent=5 // pred_check
      _
    $region34: #{a_call__.7} parent=5 // pred_check_branch
      %180 = sbr.rel (%p177) target = $region36
    $region35: #{a_call__.7} parent=5 // pred_region
      %s181 = ssub.s32 %s10, 1
      %p182 = scmp.lt.s32.totalorder %s19, 1
      %s183 = scalar_select %p182, %s19, 1
      %s184 = smul.addr %s183, 54
      %s185 = smul.addr %s184, 8
      %s186 = scalar_lea.vmem %s0, %s185
      %p187 = pneg %p48
      %p188 = pneg %p45
      %p189 = pneg %p69
      %p190 = pneg %p66
      %p191 = pneg %p90
      %p192 = pneg %p87
      %p193 = pneg %p111
      %p194 = pneg %p108
      %p195 = pneg %p139
      %p196 = pneg %p136
      %s197 = smul.u32 8, %s20
      %p198 = scmp.lt.s32.totalorder %s19, 1
      %s199 = scalar_select %p198, %s19, 1
      %p200 = scmp.lt.s32.totalorder %s197, 15
      %s201 = scalar_select %p200, %s197, 15
      %s202 = smul.addr %s201, 3
      %s203 = smul.addr %s199, 48
      %s204 = sadd.s32 %s202, %s203
      %s205 = smul.addr %s204, 8
      %s206 = scalar_lea.vmem %s4, %s205
      %p207 = scmp.lt.s32.totalorder %s19, 1
      %s208 = scalar_select %p207, %s19, 1
      %s209 = smul.addr %s208, 54
      %s210 = smul.addr %s209, 8
      %s211 = scalar_lea.vmem %s0, %s210
      %s212 = smul.u32 8, %s20
      %p213 = scmp.lt.s32.totalorder %s19, 1
      %s214 = scalar_select %p213, %s19, 1
      %p215 = scmp.lt.s32.totalorder %s212, 15
      %s216 = scalar_select %p215, %s212, 15
      %s217 = smul.addr %s216, 3
      %s218 = smul.addr %s214, 48
      %s219 = sadd.s32 %s217, %s218
      %s220 = smul.addr %s219, 8
      %s221 = scalar_lea.vmem %s4, %s220
      %s222 = smul.u32 8, %s20
      %s223 = smul.u32 %s20, 8
      %s224 = smul.u32 %s223, 24
      %s225 = scalar_lea.vmem %s211, %s224
      %v226 = vld [vmem:[%s225] sm:$0xff]
      %v227 = vld [vmem:[%s225 + $0x8] sm:$0xff]
      %v228 = vld [vmem:[%s225 + $0x10] sm:$0xff]
      %v229 = vld [vmem:[%s225 + $0x18] sm:$0xff]
      %v230 = vld [vmem:[%s225 + $0x20] sm:$0xff]
      %v231 = vld [vmem:[%s225 + $0x28] sm:$0xff]
      %v232 = vld [vmem:[%s225 + $0x30] sm:$0xff]
      %v233 = vld [vmem:[%s225 + $0x38] sm:$0xff]
      %v234 = vld [vmem:[%s225 + $0x40] sm:$0xff]
      %v235 = vld [vmem:[%s225 + $0x48] sm:$0xff]
      %v236 = vld [vmem:[%s225 + $0x50] sm:$0xff]
      %v237 = vld [vmem:[%s225 + $0x58] sm:$0xff]
      %v238 = vld [vmem:[%s225 + $0x60] sm:$0xff]
      %v239 = vld [vmem:[%s225 + $0x68] sm:$0xff]
      %v240 = vld [vmem:[%s225 + $0x70] sm:$0xff]
      %v241 = vld [vmem:[%s225 + $0x78] sm:$0xff]
      %v242 = vld [vmem:[%s225 + $0x80] sm:$0xff]
      %v243 = vld [vmem:[%s225 + $0x88] sm:$0xff]
      %v244 = vld [vmem:[%s225 + $0x90] sm:$0xff]
      %v245 = vld [vmem:[%s225 + $0x98] sm:$0xff]
      %v246 = vld [vmem:[%s225 + $0xa0] sm:$0xff]
      %v247 = vld [vmem:[%s225 + $0xa8] sm:$0xff]
      %v248 = vld [vmem:[%s225 + $0xb0] sm:$0xff]
      %v249 = vld [vmem:[%s225 + $0xb8] sm:$0xff]
      %v250 = vld [vmem:[%s225 + $0xc0] sm:$0xff]
      %v251 = vld [vmem:[%s225 + $0xc8] sm:$0xff]
      %v252 = vld [vmem:[%s225 + $0xd0] sm:$0xff]
      %v253 = vld [vmem:[%s225 + $0xd8] sm:$0xff]
      %v254 = vld [vmem:[%s225 + $0xe0] sm:$0xff]
      %v255 = vld [vmem:[%s225 + $0xe8] sm:$0xff]
      %vm286 = vcmask 1046528
      %v287 = vrot.slane %v226, 1
      %v288 = vrot.slane %v227, 1
      %v289 = vsel %vm286, %v287, %v288
      %v290 = vrot.slane %v228, 1
      %v291 = vsel %vm286, %v288, %v290
      %v292 = vrot.slane %v229, 1
      %v293 = vsel %vm286, %v290, %v292
      %v294 = vrot.slane %v230, 1
      %v295 = vsel %vm286, %v292, %v294
      %v296 = vrot.slane %v231, 1
      %v297 = vsel %vm286, %v294, %v296
      %v298 = vrot.slane %v232, 1
      %v299 = vsel %vm286, %v296, %v298
      %v300 = vrot.slane %v233, 1
      %v301 = vsel %vm286, %v298, %v300
      %v302 = vrot.slane %v234, 1
      %v303 = vsel %vm286, %v300, %v302
      %v304 = vrot.slane %v235, 1
      %v305 = vsel %vm286, %v302, %v304
      %v306 = vrot.slane %v236, 1
      %v307 = vsel %vm286, %v304, %v306
      %v308 = vrot.slane %v237, 1
      %v309 = vsel %vm286, %v306, %v308
      %v310 = vrot.slane %v238, 1
      %v311 = vsel %vm286, %v308, %v310
      %v312 = vrot.slane %v239, 1
      %v313 = vsel %vm286, %v310, %v312
      %v314 = vrot.slane %v240, 1
      %v315 = vsel %vm286, %v312, %v314
      %v316 = vrot.slane %v241, 1
      %v317 = vsel %vm286, %v314, %v316
      %v318 = vrot.slane %v242, 1
      %v319 = vsel %vm286, %v316, %v318
      %v320 = vrot.slane %v243, 1
      %v321 = vsel %vm286, %v318, %v320
      %v322 = vrot.slane %v244, 1
      %v323 = vsel %vm286, %v320, %v322
      %v324 = vrot.slane %v245, 1
      %v325 = vsel %vm286, %v322, %v324
      %v326 = vrot.slane %v246, 1
      %v327 = vsel %vm286, %v324, %v326
      %v328 = vrot.slane %v247, 1
      %v329 = vsel %vm286, %v326, %v328
      %v330 = vrot.slane %v248, 1
      %v331 = vsel %vm286, %v328, %v330
      %v332 = vrot.slane %v249, 1
      %v333 = vsel %vm286, %v330, %v332
      %v334 = vrot.slane %v250, 1
      %v335 = vsel %vm286, %v332, %v334
      %v336 = vrot.slane %v251, 1
      %v337 = vsel %vm286, %v334, %v336
      %v338 = vrot.slane %v252, 1
      %v339 = vsel %vm286, %v336, %v338
      %v340 = vrot.slane %v253, 1
      %v341 = vsel %vm286, %v338, %v340
      %v342 = vrot.slane %v254, 1
      %v343 = vsel %vm286, %v340, %v342
      %v344 = vrot.slane %v255, 1
      %v345 = vsel %vm286, %v342, %v344
      %v377 = vsel %vm286, %v344, %v287
      %vm378 = vcmask 1045504
      %v379 = vrot.slane %v226, 2
      %v380 = vrot.slane %v227, 2
      %v381 = vsel %vm378, %v379, %v380
      %v382 = vrot.slane %v228, 2
      %v383 = vsel %vm378, %v380, %v382
      %v384 = vrot.slane %v229, 2
      %v385 = vsel %vm378, %v382, %v384
      %v386 = vrot.slane %v230, 2
      %v387 = vsel %vm378, %v384, %v386
      %v388 = vrot.slane %v231, 2
      %v389 = vsel %vm378, %v386, %v388
      %v390 = vrot.slane %v232, 2
      %v391 = vsel %vm378, %v388, %v390
      %v392 = vrot.slane %v233, 2
      %v393 = vsel %vm378, %v390, %v392
      %v394 = vrot.slane %v234, 2
      %v395 = vsel %vm378, %v392, %v394
      %v396 = vrot.slane %v235, 2
      %v397 = vsel %vm378, %v394, %v396
      %v398 = vrot.slane %v236, 2
      %v399 = vsel %vm378, %v396, %v398
      %v400 = vrot.slane %v237, 2
      %v401 = vsel %vm378, %v398, %v400
      %v402 = vrot.slane %v238, 2
      %v403 = vsel %vm378, %v400, %v402
      %v404 = vrot.slane %v239, 2
      %v405 = vsel %vm378, %v402, %v404
      %v406 = vrot.slane %v240, 2
      %v407 = vsel %vm378, %v404, %v406
      %v408 = vrot.slane %v241, 2
      %v409 = vsel %vm378, %v406, %v408
      %v410 = vrot.slane %v242, 2
      %v411 = vsel %vm378, %v408, %v410
      %v412 = vrot.slane %v243, 2
      %v413 = vsel %vm378, %v410, %v412
      %v414 = vrot.slane %v244, 2
      %v415 = vsel %vm378, %v412, %v414
      %v416 = vrot.slane %v245, 2
      %v417 = vsel %vm378, %v414, %v416
      %v418 = vrot.slane %v246, 2
      %v419 = vsel %vm378, %v416, %v418
      %v420 = vrot.slane %v247, 2
      %v421 = vsel %vm378, %v418, %v420
      %v422 = vrot.slane %v248, 2
      %v423 = vsel %vm378, %v420, %v422
      %v424 = vrot.slane %v249, 2
      %v425 = vsel %vm378, %v422, %v424
      %v426 = vrot.slane %v250, 2
      %v427 = vsel %vm378, %v424, %v426
      %v428 = vrot.slane %v251, 2
      %v429 = vsel %vm378, %v426, %v428
      %v430 = vrot.slane %v252, 2
      %v431 = vsel %vm378, %v428, %v430
      %v432 = vrot.slane %v253, 2
      %v433 = vsel %vm378, %v430, %v432
      %v434 = vrot.slane %v254, 2
      %v435 = vsel %vm378, %v432, %v434
      %v436 = vrot.slane %v255, 2
      %v437 = vsel %vm378, %v434, %v436
      %v469 = vsel %vm378, %v436, %v379
      %v470 = vld [vmem:[%s1] sm:$0xff]
      %v471 = vld [vmem:[%s1 + $0x8] sm:$0xff]
      %v472 = vld [vmem:[%s1 + $0x10] sm:$0xff]
      %v473 = vld [vmem:[%s1 + $0x18] sm:$0xff]
      %v474 = vld [vmem:[%s1 + $0x20] sm:$0xff]
      %v475 = vld [vmem:[%s1 + $0x28] sm:$0xff]
      %v476 = vld [vmem:[%s1 + $0x30] sm:$0xff]
      %v477 = vld [vmem:[%s1 + $0x38] sm:$0xff]
      %v478 = vld [vmem:[%s1 + $0x40] sm:$0xff]
      %v479 = vld [vmem:[%s1 + $0x48] sm:$0xff]
      %v480 = vld [vmem:[%s1 + $0x50] sm:$0xff]
      %v481 = vld [vmem:[%s1 + $0x58] sm:$0xff]
      %v482 = vld [vmem:[%s1 + $0x60] sm:$0xff]
      %v483 = vld [vmem:[%s1 + $0x68] sm:$0xff]
      %v484 = vld [vmem:[%s1 + $0x70] sm:$0xff]
      %v485 = vld [vmem:[%s1 + $0x78] sm:$0xff]
      %v486 = vld [vmem:[%s1 + $0x80] sm:$0xff]
      %v487 = vld [vmem:[%s1 + $0x88] sm:$0xff]
      %v488 = vld [vmem:[%s1 + $0x90] sm:$0xff]
      %v489 = vld [vmem:[%s1 + $0x98] sm:$0xff]
      %v490 = vld [vmem:[%s1 + $0xa0] sm:$0xff]
      %v491 = vld [vmem:[%s1 + $0xa8] sm:$0xff]
      %v492 = vld [vmem:[%s1 + $0xb0] sm:$0xff]
      %v493 = vld [vmem:[%s1 + $0xb8] sm:$0xff]
      %v494 = vld [vmem:[%s1 + $0xc0] sm:$0xff]
      %v495 = vld [vmem:[%s1 + $0xc8] sm:$0xff]
      %v496 = vld [vmem:[%s1 + $0xd0] sm:$0xff]
      %v497 = vld [vmem:[%s1 + $0xd8] sm:$0xff]
      %v498 = vld [vmem:[%s1 + $0xe0] sm:$0xff]
      %v499 = vld [vmem:[%s1 + $0xe8] sm:$0xff]
      %v500 = vld [vmem:[%s1 + $0xf0] sm:$0xff]
      %v501 = vld [vmem:[%s1 + $0xf8] sm:$0xff]
      %v502 = vld [vmem:[%s1 + $0x100] sm:$0xff]
      %v503 = vld [vmem:[%s1 + $0x108] sm:$0xff]
      %v504 = vld [vmem:[%s1 + $0x110] sm:$0xff]
      %v505 = vld [vmem:[%s1 + $0x118] sm:$0xff]
      %v506 = vld [vmem:[%s1 + $0x120] sm:$0xff]
      %v507 = vld [vmem:[%s1 + $0x128] sm:$0xff]
      %v508 = vld [vmem:[%s1 + $0x130] sm:$0xff]
      %v509 = vld [vmem:[%s1 + $0x138] sm:$0xff]
      %v510 = vld [vmem:[%s1 + $0x140] sm:$0xff]
      %v511 = vld [vmem:[%s1 + $0x148] sm:$0xff]
      %v512 = vld [vmem:[%s1 + $0x150] sm:$0xff]
      %v513 = vld [vmem:[%s1 + $0x158] sm:$0xff]
      %v514 = vld [vmem:[%s1 + $0x160] sm:$0xff]
      %v515 = vld [vmem:[%s1 + $0x168] sm:$0xff]
      %v516 = vld [vmem:[%s1 + $0x170] sm:$0xff]
      %v517 = vld [vmem:[%s1 + $0x178] sm:$0xff]
      %s518 = scalar_lea.vmem %s1, 384
      %v519 = vld [vmem:[%s518] sm:$0xff]
      %v520 = vld [vmem:[%s518 + $0x8] sm:$0xff]
      %v521 = vld [vmem:[%s518 + $0x10] sm:$0xff]
      %v522 = vld [vmem:[%s518 + $0x18] sm:$0xff]
      %v523 = vld [vmem:[%s518 + $0x20] sm:$0xff]
      %v524 = vld [vmem:[%s518 + $0x28] sm:$0xff]
      %v525 = vld [vmem:[%s518 + $0x30] sm:$0xff]
      %v526 = vld [vmem:[%s518 + $0x38] sm:$0xff]
      %v527 = vld [vmem:[%s518 + $0x40] sm:$0xff]
      %v528 = vld [vmem:[%s518 + $0x48] sm:$0xff]
      %v529 = vld [vmem:[%s518 + $0x50] sm:$0xff]
      %v530 = vld [vmem:[%s518 + $0x58] sm:$0xff]
      %v531 = vld [vmem:[%s518 + $0x60] sm:$0xff]
      %v532 = vld [vmem:[%s518 + $0x68] sm:$0xff]
      %v533 = vld [vmem:[%s518 + $0x70] sm:$0xff]
      %v534 = vld [vmem:[%s518 + $0x78] sm:$0xff]
      %v535 = vld [vmem:[%s518 + $0x80] sm:$0xff]
      %v536 = vld [vmem:[%s518 + $0x88] sm:$0xff]
      %v537 = vld [vmem:[%s518 + $0x90] sm:$0xff]
      %v538 = vld [vmem:[%s518 + $0x98] sm:$0xff]
      %v539 = vld [vmem:[%s518 + $0xa0] sm:$0xff]
      %v540 = vld [vmem:[%s518 + $0xa8] sm:$0xff]
      %v541 = vld [vmem:[%s518 + $0xb0] sm:$0xff]
      %v542 = vld [vmem:[%s518 + $0xb8] sm:$0xff]
      %v543 = vld [vmem:[%s518 + $0xc0] sm:$0xff]
      %v544 = vld [vmem:[%s518 + $0xc8] sm:$0xff]
      %v545 = vld [vmem:[%s518 + $0xd0] sm:$0xff]
      %v546 = vld [vmem:[%s518 + $0xd8] sm:$0xff]
      %v547 = vld [vmem:[%s518 + $0xe0] sm:$0xff]
      %v548 = vld [vmem:[%s518 + $0xe8] sm:$0xff]
      %v549 = vld [vmem:[%s518 + $0xf0] sm:$0xff]
      %v550 = vld [vmem:[%s518 + $0xf8] sm:$0xff]
      %v551 = vld [vmem:[%s518 + $0x100] sm:$0xff]
      %v552 = vld [vmem:[%s518 + $0x108] sm:$0xff]
      %v553 = vld [vmem:[%s518 + $0x110] sm:$0xff]
      %v554 = vld [vmem:[%s518 + $0x118] sm:$0xff]
      %v555 = vld [vmem:[%s518 + $0x120] sm:$0xff]
      %v556 = vld [vmem:[%s518 + $0x128] sm:$0xff]
      %v557 = vld [vmem:[%s518 + $0x130] sm:$0xff]
      %v558 = vld [vmem:[%s518 + $0x138] sm:$0xff]
      %v559 = vld [vmem:[%s518 + $0x140] sm:$0xff]
      %v560 = vld [vmem:[%s518 + $0x148] sm:$0xff]
      %v561 = vld [vmem:[%s518 + $0x150] sm:$0xff]
      %v562 = vld [vmem:[%s518 + $0x158] sm:$0xff]
      %v563 = vld [vmem:[%s518 + $0x160] sm:$0xff]
      %v564 = vld [vmem:[%s518 + $0x168] sm:$0xff]
      %v565 = vld [vmem:[%s518 + $0x170] sm:$0xff]
      %v566 = vld [vmem:[%s518 + $0x178] sm:$0xff]
      %567 = vmatprep.subr.mxu0 0.0
      %568 = vmatpush1.msra.mxu0 %v534
      %569 = vmatprep.subr.mxu0 0.0
      %570 = vmatpush1.msra.mxu0 %v533
      %571 = vmatprep.subr.mxu0 0.0
      %572 = vmatpush1.msra.mxu0 %v532
      %573 = vmatprep.subr.mxu0 0.0
      %574 = vmatpush1.msra.mxu0 %v531
      %575 = vmatprep.subr.mxu0 0.0
      %576 = vmatpush1.msra.mxu0 %v530
      %577 = vmatprep.subr.mxu0 0.0
      %578 = vmatpush1.msra.mxu0 %v529
      %579 = vmatprep.subr.mxu0 0.0
      %580 = vmatpush1.msra.mxu0 %v528
      %581 = vmatprep.subr.mxu0 0.0
      %582 = vmatpush1.msra.mxu0 %v527
      %583 = vmatprep.subr.mxu0 0.0
      %584 = vmatpush1.msra.mxu0 %v526
      %585 = vmatprep.subr.mxu0 0.0
      %586 = vmatpush1.msra.mxu0 %v525
      %587 = vmatprep.subr.mxu0 0.0
      %588 = vmatpush1.msra.mxu0 %v524
      %589 = vmatprep.subr.mxu0 0.0
      %590 = vmatpush1.msra.mxu0 %v523
      %591 = vmatprep.subr.mxu0 0.0
      %592 = vmatpush1.msra.mxu0 %v522
      %593 = vmatprep.subr.mxu0 0.0
      %594 = vmatpush1.msra.mxu0 %v521
      %595 = vmatprep.subr.mxu0 0.0
      %596 = vmatpush1.msra.mxu0 %v520
      %597 = vmatprep.subr.mxu0 0.0
      %598 = vmatpush1.msra.mxu0 %v519
      %599 = vmatprep.subr.mxu0 0.0
      %600 = vmatpush2.msra.mxu0 %v550
      %601 = vmatprep.subr.mxu0 0.0
      %602 = vmatpush2.msra.mxu0 %v549
      %603 = vmatprep.subr.mxu0 0.0
      %604 = vmatpush2.msra.mxu0 %v548
      %605 = vmatprep.subr.mxu0 0.0
      %606 = vmatpush2.msra.mxu0 %v547
      %607 = vmatprep.subr.mxu0 0.0
      %608 = vmatpush2.msra.mxu0 %v546
      %609 = vmatprep.subr.mxu0 0.0
      %610 = vmatpush2.msra.mxu0 %v545
      %611 = vmatprep.subr.mxu0 0.0
      %612 = vmatpush2.msra.mxu0 %v544
      %613 = vmatprep.subr.mxu0 0.0
      %614 = vmatpush2.msra.mxu0 %v543
      %615 = vmatprep.subr.mxu0 0.0
      %616 = vmatpush2.msra.mxu0 %v542
      %617 = vmatprep.subr.mxu0 0.0
      %618 = vmatpush2.msra.mxu0 %v541
      %619 = vmatprep.subr.mxu0 0.0
      %620 = vmatpush2.msra.mxu0 %v540
      %621 = vmatprep.subr.mxu0 0.0
      %622 = vmatpush2.msra.mxu0 %v539
      %623 = vmatprep.subr.mxu0 0.0
      %624 = vmatpush2.msra.mxu0 %v538
      %625 = vmatprep.subr.mxu0 0.0
      %626 = vmatpush2.msra.mxu0 %v537
      %627 = vmatprep.subr.mxu0 0.0
      %628 = vmatpush2.msra.mxu0 %v536
      %629 = vmatprep.subr.mxu0 0.0
      %630 = vmatpush2.msra.mxu0 %v535
      %631 = vmatprep.mubr.f32.mxu0 %v295
      %632 = vmatmul.mubr.f32.gmra.mxu0 %v229
      %v633 = vpop.f32.mrf.mxu0
      %v634 = vadd.f32 0.0, %v633
      %v635 = vpop.f32.mrf.mxu0
      %636 = vmatprep.mubr.f32.mxu0 %v297
      %637 = vmatmul.mubr.f32.gmra.mxu0 %v230
      %v638 = vpop.f32.mrf.mxu0
      %v639 = vadd.f32 0.0, %v638
      %v640 = vpop.f32.mrf.mxu0
      %641 = vmatprep.mubr.f32.mxu0 %v299
      %642 = vmatmul.mubr.f32.gmra.mxu0 %v231
      %v643 = vpop.f32.mrf.mxu0
      %v644 = vadd.f32 0.0, %v643
      %v645 = vpop.f32.mrf.mxu0
      %646 = vmatprep.mubr.f32.mxu0 %v301
      %647 = vmatmul.mubr.f32.gmra.mxu0 %v232
      %v648 = vpop.f32.mrf.mxu0
      %v649 = vadd.f32 0.0, %v648
      %v650 = vpop.f32.mrf.mxu0
      %651 = vmatprep.mubr.f32.mxu0 %v303
      %652 = vmatmul.mubr.f32.gmra.mxu0 %v233
      %v653 = vpop.f32.mrf.mxu0
      %v654 = vadd.f32 0.0, %v653
      %v655 = vpop.f32.mrf.mxu0
      %656 = vmatprep.mubr.f32.mxu0 %v305
      %657 = vmatmul.mubr.f32.gmra.mxu0 %v234
      %v658 = vpop.f32.mrf.mxu0
      %v659 = vadd.f32 0.0, %v658
      %v660 = vpop.f32.mrf.mxu0
      %661 = vmatprep.mubr.f32.mxu0 %v307
      %662 = vmatmul.mubr.f32.gmra.mxu0 %v235
      %v663 = vpop.f32.mrf.mxu0
      %v664 = vadd.f32 0.0, %v663
      %v665 = vpop.f32.mrf.mxu0
      %666 = vmatprep.mubr.f32.mxu0 %v309
      %667 = vmatmul.mubr.f32.gmra.mxu0 %v236
      %v668 = vpop.f32.mrf.mxu0
      %v669 = vadd.f32 0.0, %v668
      %v670 = vpop.f32.mrf.mxu0
      %671 = vmatprep.mubr.f32.mxu0 %v311
      %672 = vmatmul.mubr.f32.gmra.mxu0 %v237
      %v673 = vpop.f32.mrf.mxu0
      %v674 = vadd.f32 0.0, %v673
      %v675 = vpop.f32.mrf.mxu0
      %676 = vmatprep.mubr.f32.mxu0 %v313
      %677 = vmatmul.mubr.f32.gmra.mxu0 %v238
      %v678 = vpop.f32.mrf.mxu0
      %v679 = vadd.f32 0.0, %v678
      %v680 = vpop.f32.mrf.mxu0
      %681 = vmatprep.mubr.f32.mxu0 %v315
      %682 = vmatmul.mubr.f32.gmra.mxu0 %v239
      %v683 = vpop.f32.mrf.mxu0
      %v684 = vadd.f32 0.0, %v683
      %v685 = vpop.f32.mrf.mxu0
      %686 = vmatprep.mubr.f32.mxu0 %v317
      %687 = vmatmul.mubr.f32.gmra.mxu0 %v240
      %v688 = vpop.f32.mrf.mxu0
      %v689 = vadd.f32 0.0, %v688
      %v690 = vpop.f32.mrf.mxu0
      %691 = vmatprep.mubr.f32.mxu0 %v319
      %692 = vmatmul.mubr.f32.gmra.mxu0 %v241
      %v693 = vpop.f32.mrf.mxu0
      %v694 = vadd.f32 0.0, %v693
      %v695 = vpop.f32.mrf.mxu0
      %696 = vmatprep.mubr.f32.mxu0 %v321
      %697 = vmatmul.mubr.f32.gmra.mxu0 %v242
      %v698 = vpop.f32.mrf.mxu0
      %v699 = vadd.f32 0.0, %v698
      %v700 = vpop.f32.mrf.mxu0
      %701 = vmatprep.mubr.f32.mxu0 %v323
      %702 = vmatmul.mubr.f32.gmra.mxu0 %v243
      %v703 = vpop.f32.mrf.mxu0
      %v704 = vadd.f32 0.0, %v703
      %v705 = vpop.f32.mrf.mxu0
      %706 = vmatprep.mubr.f32.mxu0 %v325
      %707 = vmatmul.mubr.f32.gmra.mxu0 %v244
      %v708 = vpop.f32.mrf.mxu0
      %v709 = vadd.f32 0.0, %v708
      %v710 = vpop.f32.mrf.mxu0
      %711 = vmatprep.mubr.f32.mxu0 %v327
      %712 = vmatmul.mubr.f32.gmra.mxu0 %v245
      %v713 = vpop.f32.mrf.mxu0
      %v714 = vadd.f32 0.0, %v713
      %v715 = vpop.f32.mrf.mxu0
      %716 = vmatprep.mubr.f32.mxu0 %v329
      %717 = vmatmul.mubr.f32.gmra.mxu0 %v246
      %v718 = vpop.f32.mrf.mxu0
      %v719 = vadd.f32 0.0, %v718
      %v720 = vpop.f32.mrf.mxu0
      %721 = vmatprep.mubr.f32.mxu0 %v331
      %722 = vmatmul.mubr.f32.gmra.mxu0 %v247
      %v723 = vpop.f32.mrf.mxu0
      %v724 = vadd.f32 0.0, %v723
      %v725 = vpop.f32.mrf.mxu0
      %726 = vmatprep.mubr.f32.mxu0 %v333
      %727 = vmatmul.mubr.f32.gmra.mxu0 %v248
      %v728 = vpop.f32.mrf.mxu0
      %v729 = vadd.f32 0.0, %v728
      %v730 = vpop.f32.mrf.mxu0
      %731 = vmatprep.mubr.f32.mxu0 %v335
      %732 = vmatmul.mubr.f32.gmra.mxu0 %v249
      %v733 = vpop.f32.mrf.mxu0
      %v734 = vadd.f32 0.0, %v733
      %v735 = vpop.f32.mrf.mxu0
      %736 = vmatprep.mubr.f32.mxu0 %v337
      %737 = vmatmul.mubr.f32.gmra.mxu0 %v250
      %v738 = vpop.f32.mrf.mxu0
      %v739 = vadd.f32 0.0, %v738
      %v740 = vpop.f32.mrf.mxu0
      %741 = vmatprep.mubr.f32.mxu0 %v339
      %742 = vmatmul.mubr.f32.gmra.mxu0 %v251
      %v743 = vpop.f32.mrf.mxu0
      %v744 = vadd.f32 0.0, %v743
      %v745 = vpop.f32.mrf.mxu0
      %746 = vmatprep.mubr.f32.mxu0 %v341
      %747 = vmatmul.mubr.f32.gmra.mxu0 %v252
      %v748 = vpop.f32.mrf.mxu0
      %v749 = vadd.f32 0.0, %v748
      %v750 = vpop.f32.mrf.mxu0
      %751 = vdwg.mxu0
      %752 = vmatprep.subr.mxu0 0.0
      %753 = vmatpush1.msra.mxu0 %v566
      %754 = vmatprep.subr.mxu0 0.0
      %755 = vmatpush1.msra.mxu0 %v565
      %756 = vmatprep.subr.mxu0 0.0
      %757 = vmatpush1.msra.mxu0 %v564
      %758 = vmatprep.subr.mxu0 0.0
      %759 = vmatpush1.msra.mxu0 %v563
      %760 = vmatprep.subr.mxu0 0.0
      %761 = vmatpush1.msra.mxu0 %v562
      %762 = vmatprep.subr.mxu0 0.0
      %763 = vmatpush1.msra.mxu0 %v561
      %764 = vmatprep.subr.mxu0 0.0
      %765 = vmatpush1.msra.mxu0 %v560
      %766 = vmatprep.subr.mxu0 0.0
      %767 = vmatpush1.msra.mxu0 %v559
      %768 = vmatprep.subr.mxu0 0.0
      %769 = vmatpush1.msra.mxu0 %v558
      %770 = vmatprep.subr.mxu0 0.0
      %771 = vmatpush1.msra.mxu0 %v557
      %772 = vmatprep.subr.mxu0 0.0
      %773 = vmatpush1.msra.mxu0 %v556
      %774 = vmatprep.subr.mxu0 0.0
      %775 = vmatpush1.msra.mxu0 %v555
      %776 = vmatprep.subr.mxu0 0.0
      %777 = vmatpush1.msra.mxu0 %v554
      %778 = vmatprep.subr.mxu0 0.0
      %779 = vmatpush1.msra.mxu0 %v553
      %780 = vmatprep.subr.mxu0 0.0
      %781 = vmatpush1.msra.mxu0 %v552
      %782 = vmatprep.subr.mxu0 0.0
      %783 = vmatpush1.msra.mxu0 %v551
      %784 = vmatprep.subr.mxu0 0.0
      %785 = vmatpush2.msra.mxu0 0.0
      %786 = vmatprep.subr.mxu0 0.0
      %787 = vmatpush2.msra.mxu0 0.0
      %788 = vmatprep.subr.mxu0 0.0
      %789 = vmatpush2.msra.mxu0 0.0
      %790 = vmatprep.subr.mxu0 0.0
      %791 = vmatpush2.msra.mxu0 0.0
      %792 = vmatprep.subr.mxu0 0.0
      %793 = vmatpush2.msra.mxu0 0.0
      %794 = vmatprep.subr.mxu0 0.0
      %795 = vmatpush2.msra.mxu0 0.0
      %796 = vmatprep.subr.mxu0 0.0
      %797 = vmatpush2.msra.mxu0 0.0
      %798 = vmatprep.subr.mxu0 0.0
      %799 = vmatpush2.msra.mxu0 0.0
      %800 = vmatprep.subr.mxu0 0.0
      %801 = vmatpush2.msra.mxu0 0.0
      %802 = vmatprep.subr.mxu0 0.0
      %803 = vmatpush2.msra.mxu0 0.0
      %804 = vmatprep.subr.mxu0 0.0
      %805 = vmatpush2.msra.mxu0 0.0
      %806 = vmatprep.subr.mxu0 0.0
      %807 = vmatpush2.msra.mxu0 0.0
      %808 = vmatprep.subr.mxu0 0.0
      %809 = vmatpush2.msra.mxu0 0.0
      %810 = vmatprep.subr.mxu0 0.0
      %811 = vmatpush2.msra.mxu0 0.0
      %812 = vmatprep.subr.mxu0 0.0
      %813 = vmatpush2.msra.mxu0 0.0
      %814 = vmatprep.subr.mxu0 0.0
      %815 = vmatpush2.msra.mxu0 0.0
      %816 = vmatprep.mubr.f32.mxu0 0.0
      %817 = vmatmul.mubr.f32.gmra.mxu0 %v387
      %v818 = vpop.f32.mrf.mxu0
      %v819 = vadd.f32 %v634, %v818
      %v820 = vpop.f32.mrf.mxu0
      %821 = vmatprep.mubr.f32.mxu0 0.0
      %822 = vmatmul.mubr.f32.gmra.mxu0 %v389
      %v823 = vpop.f32.mrf.mxu0
      %v824 = vadd.f32 %v639, %v823
      %v825 = vpop.f32.mrf.mxu0
      %826 = vmatprep.mubr.f32.mxu0 0.0
      %827 = vmatmul.mubr.f32.gmra.mxu0 %v391
      %v828 = vpop.f32.mrf.mxu0
      %v829 = vadd.f32 %v644, %v828
      %v830 = vpop.f32.mrf.mxu0
      %831 = vmatprep.mubr.f32.mxu0 0.0
      %832 = vmatmul.mubr.f32.gmra.mxu0 %v393
      %v833 = vpop.f32.mrf.mxu0
      %v834 = vadd.f32 %v649, %v833
      %v835 = vpop.f32.mrf.mxu0
      %836 = vmatprep.mubr.f32.mxu0 0.0
      %837 = vmatmul.mubr.f32.gmra.mxu0 %v395
      %v838 = vpop.f32.mrf.mxu0
      %v839 = vadd.f32 %v654, %v838
      %v840 = vpop.f32.mrf.mxu0
      %841 = vmatprep.mubr.f32.mxu0 0.0
      %842 = vmatmul.mubr.f32.gmra.mxu0 %v397
      %v843 = vpop.f32.mrf.mxu0
      %v844 = vadd.f32 %v659, %v843
      %v845 = vpop.f32.mrf.mxu0
      %846 = vmatprep.mubr.f32.mxu0 0.0
      %847 = vmatmul.mubr.f32.gmra.mxu0 %v399
      %v848 = vpop.f32.mrf.mxu0
      %v849 = vadd.f32 %v664, %v848
      %v850 = vpop.f32.mrf.mxu0
      %851 = vmatprep.mubr.f32.mxu0 0.0
      %852 = vmatmul.mubr.f32.gmra.mxu0 %v401
      %v853 = vpop.f32.mrf.mxu0
      %v854 = vadd.f32 %v669, %v853
      %v855 = vpop.f32.mrf.mxu0
      %856 = vmatprep.mubr.f32.mxu0 0.0
      %857 = vmatmul.mubr.f32.gmra.mxu0 %v403
      %v858 = vpop.f32.mrf.mxu0
      %v859 = vadd.f32 %v674, %v858
      %v860 = vpop.f32.mrf.mxu0
      %861 = vmatprep.mubr.f32.mxu0 0.0
      %862 = vmatmul.mubr.f32.gmra.mxu0 %v405
      %v863 = vpop.f32.mrf.mxu0
      %v864 = vadd.f32 %v679, %v863
      %v865 = vpop.f32.mrf.mxu0
      %866 = vmatprep.mubr.f32.mxu0 0.0
      %867 = vmatmul.mubr.f32.gmra.mxu0 %v407
      %v868 = vpop.f32.mrf.mxu0
      %v869 = vadd.f32 %v684, %v868
      %v870 = vpop.f32.mrf.mxu0
      %871 = vmatprep.mubr.f32.mxu0 0.0
      %872 = vmatmul.mubr.f32.gmra.mxu0 %v409
      %v873 = vpop.f32.mrf.mxu0
      %v874 = vadd.f32 %v689, %v873
      %v875 = vpop.f32.mrf.mxu0
      %876 = vmatprep.mubr.f32.mxu0 0.0
      %877 = vmatmul.mubr.f32.gmra.mxu0 %v411
      %v878 = vpop.f32.mrf.mxu0
      %v879 = vadd.f32 %v694, %v878
      %v880 = vpop.f32.mrf.mxu0
      %881 = vmatprep.mubr.f32.mxu0 0.0
      %882 = vmatmul.mubr.f32.gmra.mxu0 %v413
      %v883 = vpop.f32.mrf.mxu0
      %v884 = vadd.f32 %v699, %v883
      %v885 = vpop.f32.mrf.mxu0
      %886 = vmatprep.mubr.f32.mxu0 0.0
      %887 = vmatmul.mubr.f32.gmra.mxu0 %v415
      %v888 = vpop.f32.mrf.mxu0
      %v889 = vadd.f32 %v704, %v888
      %v890 = vpop.f32.mrf.mxu0
      %891 = vmatprep.mubr.f32.mxu0 0.0
      %892 = vmatmul.mubr.f32.gmra.mxu0 %v417
      %v893 = vpop.f32.mrf.mxu0
      %v894 = vadd.f32 %v709, %v893
      %v895 = vpop.f32.mrf.mxu0
      %896 = vmatprep.mubr.f32.mxu0 0.0
      %897 = vmatmul.mubr.f32.gmra.mxu0 %v419
      %v898 = vpop.f32.mrf.mxu0
      %v899 = vadd.f32 %v714, %v898
      %v900 = vpop.f32.mrf.mxu0
      %901 = vmatprep.mubr.f32.mxu0 0.0
      %902 = vmatmul.mubr.f32.gmra.mxu0 %v421
      %v903 = vpop.f32.mrf.mxu0
      %v904 = vadd.f32 %v719, %v903
      %v905 = vpop.f32.mrf.mxu0
      %906 = vmatprep.mubr.f32.mxu0 0.0
      %907 = vmatmul.mubr.f32.gmra.mxu0 %v423
      %v908 = vpop.f32.mrf.mxu0
      %v909 = vadd.f32 %v724, %v908
      %v910 = vpop.f32.mrf.mxu0
      %911 = vmatprep.mubr.f32.mxu0 0.0
      %912 = vmatmul.mubr.f32.gmra.mxu0 %v425
      %v913 = vpop.f32.mrf.mxu0
      %v914 = vadd.f32 %v729, %v913
      %v915 = vpop.f32.mrf.mxu0
      %916 = vmatprep.mubr.f32.mxu0 0.0
      %917 = vmatmul.mubr.f32.gmra.mxu0 %v427
      %v918 = vpop.f32.mrf.mxu0
      %v919 = vadd.f32 %v734, %v918
      %v920 = vpop.f32.mrf.mxu0
      %921 = vmatprep.mubr.f32.mxu0 0.0
      %922 = vmatmul.mubr.f32.gmra.mxu0 %v429
      %v923 = vpop.f32.mrf.mxu0
      %v924 = vadd.f32 %v739, %v923
      %v925 = vpop.f32.mrf.mxu0
      %926 = vmatprep.mubr.f32.mxu0 0.0
      %927 = vmatmul.mubr.f32.gmra.mxu0 %v431
      %v928 = vpop.f32.mrf.mxu0
      %v929 = vadd.f32 %v744, %v928
      %v930 = vpop.f32.mrf.mxu0
      %931 = vmatprep.mubr.f32.mxu0 0.0
      %932 = vmatmul.mubr.f32.gmra.mxu0 %v433
      %v933 = vpop.f32.mrf.mxu0
      %v934 = vadd.f32 %v749, %v933
      %v935 = vpop.f32.mrf.mxu0
      %936 = vdwg.mxu0
      %937 = vmatprep.subr.mxu0 0.0
      %938 = vmatpush1.msra.mxu0 %v485
      %939 = vmatprep.subr.mxu0 0.0
      %940 = vmatpush1.msra.mxu0 %v484
      %941 = vmatprep.subr.mxu0 0.0
      %942 = vmatpush1.msra.mxu0 %v483
      %943 = vmatprep.subr.mxu0 0.0
      %944 = vmatpush1.msra.mxu0 %v482
      %945 = vmatprep.subr.mxu0 0.0
      %946 = vmatpush1.msra.mxu0 %v481
      %947 = vmatprep.subr.mxu0 0.0
      %948 = vmatpush1.msra.mxu0 %v480
      %949 = vmatprep.subr.mxu0 0.0
      %950 = vmatpush1.msra.mxu0 %v479
      %951 = vmatprep.subr.mxu0 0.0
      %952 = vmatpush1.msra.mxu0 %v478
      %953 = vmatprep.subr.mxu0 0.0
      %954 = vmatpush1.msra.mxu0 %v477
      %955 = vmatprep.subr.mxu0 0.0
      %956 = vmatpush1.msra.mxu0 %v476
      %957 = vmatprep.subr.mxu0 0.0
      %958 = vmatpush1.msra.mxu0 %v475
      %959 = vmatprep.subr.mxu0 0.0
      %960 = vmatpush1.msra.mxu0 %v474
      %961 = vmatprep.subr.mxu0 0.0
      %962 = vmatpush1.msra.mxu0 %v473
      %963 = vmatprep.subr.mxu0 0.0
      %964 = vmatpush1.msra.mxu0 %v472
      %965 = vmatprep.subr.mxu0 0.0
      %966 = vmatpush1.msra.mxu0 %v471
      %967 = vmatprep.subr.mxu0 0.0
      %968 = vmatpush1.msra.mxu0 %v470
      %969 = vmatprep.subr.mxu0 0.0
      %970 = vmatpush2.msra.mxu0 %v501
      %971 = vmatprep.subr.mxu0 0.0
      %972 = vmatpush2.msra.mxu0 %v500
      %973 = vmatprep.subr.mxu0 0.0
      %974 = vmatpush2.msra.mxu0 %v499
      %975 = vmatprep.subr.mxu0 0.0
      %976 = vmatpush2.msra.mxu0 %v498
      %977 = vmatprep.subr.mxu0 0.0
      %978 = vmatpush2.msra.mxu0 %v497
      %979 = vmatprep.subr.mxu0 0.0
      %980 = vmatpush2.msra.mxu0 %v496
      %981 = vmatprep.subr.mxu0 0.0
      %982 = vmatpush2.msra.mxu0 %v495
      %983 = vmatprep.subr.mxu0 0.0
      %984 = vmatpush2.msra.mxu0 %v494
      %985 = vmatprep.subr.mxu0 0.0
      %986 = vmatpush2.msra.mxu0 %v493
      %987 = vmatprep.subr.mxu0 0.0
      %988 = vmatpush2.msra.mxu0 %v492
      %989 = vmatprep.subr.mxu0 0.0
      %990 = vmatpush2.msra.mxu0 %v491
      %991 = vmatprep.subr.mxu0 0.0
      %992 = vmatpush2.msra.mxu0 %v490
      %993 = vmatprep.subr.mxu0 0.0
      %994 = vmatpush2.msra.mxu0 %v489
      %995 = vmatprep.subr.mxu0 0.0
      %996 = vmatpush2.msra.mxu0 %v488
      %997 = vmatprep.subr.mxu0 0.0
      %998 = vmatpush2.msra.mxu0 %v487
      %999 = vmatprep.subr.mxu0 0.0
      %1000 = vmatpush2.msra.mxu0 %v486
      %1001 = vmatprep.mubr.f32.mxu0 %v289
      %1002 = vmatmul.mubr.f32.gmra.mxu0 %v226
      %v1003 = vpop.f32.mrf.mxu0
      %v1004 = vadd.f32 %v819, %v1003
      %v1005 = vpop.f32.mrf.mxu0
      %1006 = vmatprep.mubr.f32.mxu0 %v291
      %1007 = vmatmul.mubr.f32.gmra.mxu0 %v227
      %v1008 = vpop.f32.mrf.mxu0
      %v1009 = vadd.f32 %v824, %v1008
      %v1010 = vpop.f32.mrf.mxu0
      %1011 = vmatprep.mubr.f32.mxu0 %v293
      %1012 = vmatmul.mubr.f32.gmra.mxu0 %v228
      %v1013 = vpop.f32.mrf.mxu0
      %v1014 = vadd.f32 %v829, %v1013
      %v1015 = vpop.f32.mrf.mxu0
      %1016 = vmatprep.mubr.f32.mxu0 %v295
      %1017 = vmatmul.mubr.f32.gmra.mxu0 %v229
      %v1018 = vpop.f32.mrf.mxu0
      %v1019 = vadd.f32 %v834, %v1018
      %v1020 = vpop.f32.mrf.mxu0
      %1021 = vmatprep.mubr.f32.mxu0 %v297
      %1022 = vmatmul.mubr.f32.gmra.mxu0 %v230
      %v1023 = vpop.f32.mrf.mxu0
      %v1024 = vadd.f32 %v839, %v1023
      %v1025 = vpop.f32.mrf.mxu0
      %1026 = vmatprep.mubr.f32.mxu0 %v299
      %1027 = vmatmul.mubr.f32.gmra.mxu0 %v231
      %v1028 = vpop.f32.mrf.mxu0
      %v1029 = vadd.f32 %v844, %v1028
      %v1030 = vpop.f32.mrf.mxu0
      %1031 = vmatprep.mubr.f32.mxu0 %v301
      %1032 = vmatmul.mubr.f32.gmra.mxu0 %v232
      %v1033 = vpop.f32.mrf.mxu0
      %v1034 = vadd.f32 %v849, %v1033
      %v1035 = vpop.f32.mrf.mxu0
      %1036 = vmatprep.mubr.f32.mxu0 %v303
      %1037 = vmatmul.mubr.f32.gmra.mxu0 %v233
      %v1038 = vpop.f32.mrf.mxu0
      %v1039 = vadd.f32 %v854, %v1038
      %v1040 = vpop.f32.mrf.mxu0
      %1041 = vmatprep.mubr.f32.mxu0 %v305
      %1042 = vmatmul.mubr.f32.gmra.mxu0 %v234
      %v1043 = vpop.f32.mrf.mxu0
      %v1044 = vadd.f32 %v859, %v1043
      %v1045 = vpop.f32.mrf.mxu0
      %1046 = vmatprep.mubr.f32.mxu0 %v307
      %1047 = vmatmul.mubr.f32.gmra.mxu0 %v235
      %v1048 = vpop.f32.mrf.mxu0
      %v1049 = vadd.f32 %v864, %v1048
      %v1050 = vpop.f32.mrf.mxu0
      %1051 = vmatprep.mubr.f32.mxu0 %v309
      %1052 = vmatmul.mubr.f32.gmra.mxu0 %v236
      %v1053 = vpop.f32.mrf.mxu0
      %v1054 = vadd.f32 %v869, %v1053
      %v1055 = vpop.f32.mrf.mxu0
      %1056 = vmatprep.mubr.f32.mxu0 %v311
      %1057 = vmatmul.mubr.f32.gmra.mxu0 %v237
      %v1058 = vpop.f32.mrf.mxu0
      %v1059 = vadd.f32 %v874, %v1058
      %v1060 = vpop.f32.mrf.mxu0
      %1061 = vmatprep.mubr.f32.mxu0 %v313
      %1062 = vmatmul.mubr.f32.gmra.mxu0 %v238
      %v1063 = vpop.f32.mrf.mxu0
      %v1064 = vadd.f32 %v879, %v1063
      %v1065 = vpop.f32.mrf.mxu0
      %1066 = vmatprep.mubr.f32.mxu0 %v315
      %1067 = vmatmul.mubr.f32.gmra.mxu0 %v239
      %v1068 = vpop.f32.mrf.mxu0
      %v1069 = vadd.f32 %v884, %v1068
      %v1070 = vpop.f32.mrf.mxu0
      %1071 = vmatprep.mubr.f32.mxu0 %v317
      %1072 = vmatmul.mubr.f32.gmra.mxu0 %v240
      %v1073 = vpop.f32.mrf.mxu0
      %v1074 = vadd.f32 %v889, %v1073
      %v1075 = vpop.f32.mrf.mxu0
      %1076 = vmatprep.mubr.f32.mxu0 %v319
      %1077 = vmatmul.mubr.f32.gmra.mxu0 %v241
      %v1078 = vpop.f32.mrf.mxu0
      %v1079 = vadd.f32 %v894, %v1078
      %v1080 = vpop.f32.mrf.mxu0
      %1081 = vmatprep.mubr.f32.mxu0 %v321
      %1082 = vmatmul.mubr.f32.gmra.mxu0 %v242
      %v1083 = vpop.f32.mrf.mxu0
      %v1084 = vadd.f32 %v899, %v1083
      %v1085 = vpop.f32.mrf.mxu0
      %1086 = vmatprep.mubr.f32.mxu0 %v323
      %1087 = vmatmul.mubr.f32.gmra.mxu0 %v243
      %v1088 = vpop.f32.mrf.mxu0
      %v1089 = vadd.f32 %v904, %v1088
      %v1090 = vpop.f32.mrf.mxu0
      %1091 = vmatprep.mubr.f32.mxu0 %v325
      %1092 = vmatmul.mubr.f32.gmra.mxu0 %v244
      %v1093 = vpop.f32.mrf.mxu0
      %v1094 = vadd.f32 %v909, %v1093
      %v1095 = vpop.f32.mrf.mxu0
      %1096 = vmatprep.mubr.f32.mxu0 %v327
      %1097 = vmatmul.mubr.f32.gmra.mxu0 %v245
      %v1098 = vpop.f32.mrf.mxu0
      %v1099 = vadd.f32 %v914, %v1098
      %v1100 = vpop.f32.mrf.mxu0
      %1101 = vmatprep.mubr.f32.mxu0 %v329
      %1102 = vmatmul.mubr.f32.gmra.mxu0 %v246
      %v1103 = vpop.f32.mrf.mxu0
      %v1104 = vadd.f32 %v919, %v1103
      %v1105 = vpop.f32.mrf.mxu0
      %1106 = vmatprep.mubr.f32.mxu0 %v331
      %1107 = vmatmul.mubr.f32.gmra.mxu0 %v247
      %v1108 = vpop.f32.mrf.mxu0
      %v1109 = vadd.f32 %v924, %v1108
      %v1110 = vpop.f32.mrf.mxu0
      %1111 = vmatprep.mubr.f32.mxu0 %v333
      %1112 = vmatmul.mubr.f32.gmra.mxu0 %v248
      %v1113 = vpop.f32.mrf.mxu0
      %v1114 = vadd.f32 %v929, %v1113
      %v1115 = vpop.f32.mrf.mxu0
      %1116 = vmatprep.mubr.f32.mxu0 %v335
      %1117 = vmatmul.mubr.f32.gmra.mxu0 %v249
      %v1118 = vpop.f32.mrf.mxu0
      %v1119 = vadd.f32 %v934, %v1118
      %v1120 = vpop.f32.mrf.mxu0
      %1121 = vdwg.mxu0
      %1122 = vmatprep.subr.mxu0 0.0
      %1123 = vmatpush1.msra.mxu0 %v517
      %1124 = vmatprep.subr.mxu0 0.0
      %1125 = vmatpush1.msra.mxu0 %v516
      %1126 = vmatprep.subr.mxu0 0.0
      %1127 = vmatpush1.msra.mxu0 %v515
      %1128 = vmatprep.subr.mxu0 0.0
      %1129 = vmatpush1.msra.mxu0 %v514
      %1130 = vmatprep.subr.mxu0 0.0
      %1131 = vmatpush1.msra.mxu0 %v513
      %1132 = vmatprep.subr.mxu0 0.0
      %1133 = vmatpush1.msra.mxu0 %v512
      %1134 = vmatprep.subr.mxu0 0.0
      %1135 = vmatpush1.msra.mxu0 %v511
      %1136 = vmatprep.subr.mxu0 0.0
      %1137 = vmatpush1.msra.mxu0 %v510
      %1138 = vmatprep.subr.mxu0 0.0
      %1139 = vmatpush1.msra.mxu0 %v509
      %1140 = vmatprep.subr.mxu0 0.0
      %1141 = vmatpush1.msra.mxu0 %v508
      %1142 = vmatprep.subr.mxu0 0.0
      %1143 = vmatpush1.msra.mxu0 %v507
      %1144 = vmatprep.subr.mxu0 0.0
      %1145 = vmatpush1.msra.mxu0 %v506
      %1146 = vmatprep.subr.mxu0 0.0
      %1147 = vmatpush1.msra.mxu0 %v505
      %1148 = vmatprep.subr.mxu0 0.0
      %1149 = vmatpush1.msra.mxu0 %v504
      %1150 = vmatprep.subr.mxu0 0.0
      %1151 = vmatpush1.msra.mxu0 %v503
      %1152 = vmatprep.subr.mxu0 0.0
      %1153 = vmatpush1.msra.mxu0 %v502
      %1154 = vmatprep.subr.mxu0 0.0
      %1155 = vmatpush2.msra.mxu0 0.0
      %1156 = vmatprep.subr.mxu0 0.0
      %1157 = vmatpush2.msra.mxu0 0.0
      %1158 = vmatprep.subr.mxu0 0.0
      %1159 = vmatpush2.msra.mxu0 0.0
      %1160 = vmatprep.subr.mxu0 0.0
      %1161 = vmatpush2.msra.mxu0 0.0
      %1162 = vmatprep.subr.mxu0 0.0
      %1163 = vmatpush2.msra.mxu0 0.0
      %1164 = vmatprep.subr.mxu0 0.0
      %1165 = vmatpush2.msra.mxu0 0.0
      %1166 = vmatprep.subr.mxu0 0.0
      %1167 = vmatpush2.msra.mxu0 0.0
      %1168 = vmatprep.subr.mxu0 0.0
      %1169 = vmatpush2.msra.mxu0 0.0
      %1170 = vmatprep.subr.mxu0 0.0
      %1171 = vmatpush2.msra.mxu0 0.0
      %1172 = vmatprep.subr.mxu0 0.0
      %1173 = vmatpush2.msra.mxu0 0.0
      %1174 = vmatprep.subr.mxu0 0.0
      %1175 = vmatpush2.msra.mxu0 0.0
      %1176 = vmatprep.subr.mxu0 0.0
      %1177 = vmatpush2.msra.mxu0 0.0
      %1178 = vmatprep.subr.mxu0 0.0
      %1179 = vmatpush2.msra.mxu0 0.0
      %1180 = vmatprep.subr.mxu0 0.0
      %1181 = vmatpush2.msra.mxu0 0.0
      %1182 = vmatprep.subr.mxu0 0.0
      %1183 = vmatpush2.msra.mxu0 0.0
      %1184 = vmatprep.subr.mxu0 0.0
      %1185 = vmatpush2.msra.mxu0 0.0
      %1186 = vmatprep.mubr.f32.mxu0 0.0
      %1187 = vmatmul.mubr.f32.gmra.mxu0 %v381
      %v1188 = vpop.f32.mrf.mxu0
      %v1189 = vadd.f32 %v1004, %v1188
      %v1190 = vpop.f32.mrf.mxu0
      %1191 = vmatprep.mubr.f32.mxu0 0.0
      %1192 = vmatmul.mubr.f32.gmra.mxu0 %v383
      %v1193 = vpop.f32.mrf.mxu0
      %v1194 = vadd.f32 %v1009, %v1193
      %v1195 = vpop.f32.mrf.mxu0
      %1196 = vmatprep.mubr.f32.mxu0 0.0
      %1197 = vmatmul.mubr.f32.gmra.mxu0 %v385
      %v1198 = vpop.f32.mrf.mxu0
      %v1199 = vadd.f32 %v1014, %v1198
      %v1200 = vpop.f32.mrf.mxu0
      %1201 = vmatprep.mubr.f32.mxu0 0.0
      %1202 = vmatmul.mubr.f32.gmra.mxu0 %v387
      %v1203 = vpop.f32.mrf.mxu0
      %v1204 = vadd.f32 %v1019, %v1203
      %v1205 = vpop.f32.mrf.mxu0
      %1206 = vmatprep.mubr.f32.mxu0 0.0
      %1207 = vmatmul.mubr.f32.gmra.mxu0 %v389
      %v1208 = vpop.f32.mrf.mxu0
      %v1209 = vadd.f32 %v1024, %v1208
      %v1210 = vpop.f32.mrf.mxu0
      %1211 = vmatprep.mubr.f32.mxu0 0.0
      %1212 = vmatmul.mubr.f32.gmra.mxu0 %v391
      %v1213 = vpop.f32.mrf.mxu0
      %v1214 = vadd.f32 %v1029, %v1213
      %v1215 = vpop.f32.mrf.mxu0
      %1216 = vmatprep.mubr.f32.mxu0 0.0
      %1217 = vmatmul.mubr.f32.gmra.mxu0 %v393
      %v1218 = vpop.f32.mrf.mxu0
      %v1219 = vadd.f32 %v1034, %v1218
      %v1220 = vpop.f32.mrf.mxu0
      %1221 = vmatprep.mubr.f32.mxu0 0.0
      %1222 = vmatmul.mubr.f32.gmra.mxu0 %v395
      %v1223 = vpop.f32.mrf.mxu0
      %v1224 = vadd.f32 %v1039, %v1223
      %v1225 = vpop.f32.mrf.mxu0
      %1226 = vmatprep.mubr.f32.mxu0 0.0
      %1227 = vmatmul.mubr.f32.gmra.mxu0 %v397
      %v1228 = vpop.f32.mrf.mxu0
      %v1229 = vadd.f32 %v1044, %v1228
      %v1230 = vpop.f32.mrf.mxu0
      %1231 = vmatprep.mubr.f32.mxu0 0.0
      %1232 = vmatmul.mubr.f32.gmra.mxu0 %v399
      %v1233 = vpop.f32.mrf.mxu0
      %v1234 = vadd.f32 %v1049, %v1233
      %v1235 = vpop.f32.mrf.mxu0
      %1236 = vmatprep.mubr.f32.mxu0 0.0
      %1237 = vmatmul.mubr.f32.gmra.mxu0 %v401
      %v1238 = vpop.f32.mrf.mxu0
      %v1239 = vadd.f32 %v1054, %v1238
      %v1240 = vpop.f32.mrf.mxu0
      %1241 = vmatprep.mubr.f32.mxu0 0.0
      %1242 = vmatmul.mubr.f32.gmra.mxu0 %v403
      %v1243 = vpop.f32.mrf.mxu0
      %v1244 = vadd.f32 %v1059, %v1243
      %v1245 = vpop.f32.mrf.mxu0
      %1246 = vmatprep.mubr.f32.mxu0 0.0
      %1247 = vmatmul.mubr.f32.gmra.mxu0 %v405
      %v1248 = vpop.f32.mrf.mxu0
      %v1249 = vadd.f32 %v1064, %v1248
      %v1250 = vpop.f32.mrf.mxu0
      %1251 = vmatprep.mubr.f32.mxu0 0.0
      %1252 = vmatmul.mubr.f32.gmra.mxu0 %v407
      %v1253 = vpop.f32.mrf.mxu0
      %v1254 = vadd.f32 %v1069, %v1253
      %v1255 = vpop.f32.mrf.mxu0
      %1256 = vmatprep.mubr.f32.mxu0 0.0
      %1257 = vmatmul.mubr.f32.gmra.mxu0 %v409
      %v1258 = vpop.f32.mrf.mxu0
      %v1259 = vadd.f32 %v1074, %v1258
      %v1260 = vpop.f32.mrf.mxu0
      %1261 = vmatprep.mubr.f32.mxu0 0.0
      %1262 = vmatmul.mubr.f32.gmra.mxu0 %v411
      %v1263 = vpop.f32.mrf.mxu0
      %v1264 = vadd.f32 %v1079, %v1263
      %v1265 = vpop.f32.mrf.mxu0
      %1266 = vmatprep.mubr.f32.mxu0 0.0
      %1267 = vmatmul.mubr.f32.gmra.mxu0 %v413
      %v1268 = vpop.f32.mrf.mxu0
      %v1269 = vadd.f32 %v1084, %v1268
      %v1270 = vpop.f32.mrf.mxu0
      %1271 = vmatprep.mubr.f32.mxu0 0.0
      %1272 = vmatmul.mubr.f32.gmra.mxu0 %v415
      %v1273 = vpop.f32.mrf.mxu0
      %v1274 = vadd.f32 %v1089, %v1273
      %v1275 = vpop.f32.mrf.mxu0
      %1276 = vmatprep.mubr.f32.mxu0 0.0
      %1277 = vmatmul.mubr.f32.gmra.mxu0 %v417
      %v1278 = vpop.f32.mrf.mxu0
      %v1279 = vadd.f32 %v1094, %v1278
      %v1280 = vpop.f32.mrf.mxu0
      %1281 = vmatprep.mubr.f32.mxu0 0.0
      %1282 = vmatmul.mubr.f32.gmra.mxu0 %v419
      %v1283 = vpop.f32.mrf.mxu0
      %v1284 = vadd.f32 %v1099, %v1283
      %v1285 = vpop.f32.mrf.mxu0
      %1286 = vmatprep.mubr.f32.mxu0 0.0
      %1287 = vmatmul.mubr.f32.gmra.mxu0 %v421
      %v1288 = vpop.f32.mrf.mxu0
      %v1289 = vadd.f32 %v1104, %v1288
      %v1290 = vpop.f32.mrf.mxu0
      %1291 = vmatprep.mubr.f32.mxu0 0.0
      %1292 = vmatmul.mubr.f32.gmra.mxu0 %v423
      %v1293 = vpop.f32.mrf.mxu0
      %v1294 = vadd.f32 %v1109, %v1293
      %v1295 = vpop.f32.mrf.mxu0
      %1296 = vmatprep.mubr.f32.mxu0 0.0
      %1297 = vmatmul.mubr.f32.gmra.mxu0 %v425
      %v1298 = vpop.f32.mrf.mxu0
      %v1299 = vadd.f32 %v1114, %v1298
      %v1300 = vpop.f32.mrf.mxu0
      %1301 = vmatprep.mubr.f32.mxu0 0.0
      %1302 = vmatmul.mubr.f32.gmra.mxu0 %v427
      %v1303 = vpop.f32.mrf.mxu0
      %v1304 = vadd.f32 %v1119, %v1303
      %v1305 = vpop.f32.mrf.mxu0
      %1306 = vdwg.mxu0
      %s1307 = scalar_lea.vmem %s1, 768
      %v1308 = vld [vmem:[%s1307] sm:$0xff]
      %v1309 = vld [vmem:[%s1307 + $0x8] sm:$0xff]
      %v1310 = vld [vmem:[%s1307 + $0x10] sm:$0xff]
      %v1311 = vld [vmem:[%s1307 + $0x18] sm:$0xff]
      %v1312 = vld [vmem:[%s1307 + $0x20] sm:$0xff]
      %v1313 = vld [vmem:[%s1307 + $0x28] sm:$0xff]
      %v1314 = vld [vmem:[%s1307 + $0x30] sm:$0xff]
      %v1315 = vld [vmem:[%s1307 + $0x38] sm:$0xff]
      %v1316 = vld [vmem:[%s1307 + $0x40] sm:$0xff]
      %v1317 = vld [vmem:[%s1307 + $0x48] sm:$0xff]
      %v1318 = vld [vmem:[%s1307 + $0x50] sm:$0xff]
      %v1319 = vld [vmem:[%s1307 + $0x58] sm:$0xff]
      %v1320 = vld [vmem:[%s1307 + $0x60] sm:$0xff]
      %v1321 = vld [vmem:[%s1307 + $0x68] sm:$0xff]
      %v1322 = vld [vmem:[%s1307 + $0x70] sm:$0xff]
      %v1323 = vld [vmem:[%s1307 + $0x78] sm:$0xff]
      %v1324 = vld [vmem:[%s1307 + $0x80] sm:$0xff]
      %v1325 = vld [vmem:[%s1307 + $0x88] sm:$0xff]
      %v1326 = vld [vmem:[%s1307 + $0x90] sm:$0xff]
      %v1327 = vld [vmem:[%s1307 + $0x98] sm:$0xff]
      %v1328 = vld [vmem:[%s1307 + $0xa0] sm:$0xff]
      %v1329 = vld [vmem:[%s1307 + $0xa8] sm:$0xff]
      %v1330 = vld [vmem:[%s1307 + $0xb0] sm:$0xff]
      %v1331 = vld [vmem:[%s1307 + $0xb8] sm:$0xff]
      %v1332 = vld [vmem:[%s1307 + $0xc0] sm:$0xff]
      %v1333 = vld [vmem:[%s1307 + $0xc8] sm:$0xff]
      %v1334 = vld [vmem:[%s1307 + $0xd0] sm:$0xff]
      %v1335 = vld [vmem:[%s1307 + $0xd8] sm:$0xff]
      %v1336 = vld [vmem:[%s1307 + $0xe0] sm:$0xff]
      %v1337 = vld [vmem:[%s1307 + $0xe8] sm:$0xff]
      %v1338 = vld [vmem:[%s1307 + $0xf0] sm:$0xff]
      %v1339 = vld [vmem:[%s1307 + $0xf8] sm:$0xff]
      %v1340 = vld [vmem:[%s1307 + $0x100] sm:$0xff]
      %v1341 = vld [vmem:[%s1307 + $0x108] sm:$0xff]
      %v1342 = vld [vmem:[%s1307 + $0x110] sm:$0xff]
      %v1343 = vld [vmem:[%s1307 + $0x118] sm:$0xff]
      %v1344 = vld [vmem:[%s1307 + $0x120] sm:$0xff]
      %v1345 = vld [vmem:[%s1307 + $0x128] sm:$0xff]
      %v1346 = vld [vmem:[%s1307 + $0x130] sm:$0xff]
      %v1347 = vld [vmem:[%s1307 + $0x138] sm:$0xff]
      %v1348 = vld [vmem:[%s1307 + $0x140] sm:$0xff]
      %v1349 = vld [vmem:[%s1307 + $0x148] sm:$0xff]
      %v1350 = vld [vmem:[%s1307 + $0x150] sm:$0xff]
      %v1351 = vld [vmem:[%s1307 + $0x158] sm:$0xff]
      %v1352 = vld [vmem:[%s1307 + $0x160] sm:$0xff]
      %v1353 = vld [vmem:[%s1307 + $0x168] sm:$0xff]
      %v1354 = vld [vmem:[%s1307 + $0x170] sm:$0xff]
      %v1355 = vld [vmem:[%s1307 + $0x178] sm:$0xff]
      %1356 = vmatprep.subr.mxu0 0.0
      %1357 = vmatpush1.msra.mxu0 %v1323
      %1358 = vmatprep.subr.mxu0 0.0
      %1359 = vmatpush1.msra.mxu0 %v1322
      %1360 = vmatprep.subr.mxu0 0.0
      %1361 = vmatpush1.msra.mxu0 %v1321
      %1362 = vmatprep.subr.mxu0 0.0
      %1363 = vmatpush1.msra.mxu0 %v1320
      %1364 = vmatprep.subr.mxu0 0.0
      %1365 = vmatpush1.msra.mxu0 %v1319
      %1366 = vmatprep.subr.mxu0 0.0
      %1367 = vmatpush1.msra.mxu0 %v1318
      %1368 = vmatprep.subr.mxu0 0.0
      %1369 = vmatpush1.msra.mxu0 %v1317
      %1370 = vmatprep.subr.mxu0 0.0
      %1371 = vmatpush1.msra.mxu0 %v1316
      %1372 = vmatprep.subr.mxu0 0.0
      %1373 = vmatpush1.msra.mxu0 %v1315
      %1374 = vmatprep.subr.mxu0 0.0
      %1375 = vmatpush1.msra.mxu0 %v1314
      %1376 = vmatprep.subr.mxu0 0.0
      %1377 = vmatpush1.msra.mxu0 %v1313
      %1378 = vmatprep.subr.mxu0 0.0
      %1379 = vmatpush1.msra.mxu0 %v1312
      %1380 = vmatprep.subr.mxu0 0.0
      %1381 = vmatpush1.msra.mxu0 %v1311
      %1382 = vmatprep.subr.mxu0 0.0
      %1383 = vmatpush1.msra.mxu0 %v1310
      %1384 = vmatprep.subr.mxu0 0.0
      %1385 = vmatpush1.msra.mxu0 %v1309
      %1386 = vmatprep.subr.mxu0 0.0
      %1387 = vmatpush1.msra.mxu0 %v1308
      %1388 = vmatprep.subr.mxu0 0.0
      %1389 = vmatpush2.msra.mxu0 %v1339
      %1390 = vmatprep.subr.mxu0 0.0
      %1391 = vmatpush2.msra.mxu0 %v1338
      %1392 = vmatprep.subr.mxu0 0.0
      %1393 = vmatpush2.msra.mxu0 %v1337
      %1394 = vmatprep.subr.mxu0 0.0
      %1395 = vmatpush2.msra.mxu0 %v1336
      %1396 = vmatprep.subr.mxu0 0.0
      %1397 = vmatpush2.msra.mxu0 %v1335
      %1398 = vmatprep.subr.mxu0 0.0
      %1399 = vmatpush2.msra.mxu0 %v1334
      %1400 = vmatprep.subr.mxu0 0.0
      %1401 = vmatpush2.msra.mxu0 %v1333
      %1402 = vmatprep.subr.mxu0 0.0
      %1403 = vmatpush2.msra.mxu0 %v1332
      %1404 = vmatprep.subr.mxu0 0.0
      %1405 = vmatpush2.msra.mxu0 %v1331
      %1406 = vmatprep.subr.mxu0 0.0
      %1407 = vmatpush2.msra.mxu0 %v1330
      %1408 = vmatprep.subr.mxu0 0.0
      %1409 = vmatpush2.msra.mxu0 %v1329
      %1410 = vmatprep.subr.mxu0 0.0
      %1411 = vmatpush2.msra.mxu0 %v1328
      %1412 = vmatprep.subr.mxu0 0.0
      %1413 = vmatpush2.msra.mxu0 %v1327
      %1414 = vmatprep.subr.mxu0 0.0
      %1415 = vmatpush2.msra.mxu0 %v1326
      %1416 = vmatprep.subr.mxu0 0.0
      %1417 = vmatpush2.msra.mxu0 %v1325
      %1418 = vmatprep.subr.mxu0 0.0
      %1419 = vmatpush2.msra.mxu0 %v1324
      %1420 = vmatprep.mubr.f32.mxu0 %v301
      %1421 = vmatmul.mubr.f32.gmra.mxu0 %v232
      %v1422 = vpop.f32.mrf.mxu0
      %v1423 = vadd.f32 0.0, %v1422
      %v1424 = vpop.f32.mrf.mxu0
      %1425 = vmatprep.mubr.f32.mxu0 %v303
      %1426 = vmatmul.mubr.f32.gmra.mxu0 %v233
      %v1427 = vpop.f32.mrf.mxu0
      %v1428 = vadd.f32 0.0, %v1427
      %v1429 = vpop.f32.mrf.mxu0
      %1430 = vmatprep.mubr.f32.mxu0 %v305
      %1431 = vmatmul.mubr.f32.gmra.mxu0 %v234
      %v1432 = vpop.f32.mrf.mxu0
      %v1433 = vadd.f32 0.0, %v1432
      %v1434 = vpop.f32.mrf.mxu0
      %1435 = vmatprep.mubr.f32.mxu0 %v307
      %1436 = vmatmul.mubr.f32.gmra.mxu0 %v235
      %v1437 = vpop.f32.mrf.mxu0
      %v1438 = vadd.f32 0.0, %v1437
      %v1439 = vpop.f32.mrf.mxu0
      %1440 = vmatprep.mubr.f32.mxu0 %v309
      %1441 = vmatmul.mubr.f32.gmra.mxu0 %v236
      %v1442 = vpop.f32.mrf.mxu0
      %v1443 = vadd.f32 0.0, %v1442
      %v1444 = vpop.f32.mrf.mxu0
      %1445 = vmatprep.mubr.f32.mxu0 %v311
      %1446 = vmatmul.mubr.f32.gmra.mxu0 %v237
      %v1447 = vpop.f32.mrf.mxu0
      %v1448 = vadd.f32 0.0, %v1447
      %v1449 = vpop.f32.mrf.mxu0
      %1450 = vmatprep.mubr.f32.mxu0 %v313
      %1451 = vmatmul.mubr.f32.gmra.mxu0 %v238
      %v1452 = vpop.f32.mrf.mxu0
      %v1453 = vadd.f32 0.0, %v1452
      %v1454 = vpop.f32.mrf.mxu0
      %1455 = vmatprep.mubr.f32.mxu0 %v315
      %1456 = vmatmul.mubr.f32.gmra.mxu0 %v239
      %v1457 = vpop.f32.mrf.mxu0
      %v1458 = vadd.f32 0.0, %v1457
      %v1459 = vpop.f32.mrf.mxu0
      %1460 = vmatprep.mubr.f32.mxu0 %v317
      %1461 = vmatmul.mubr.f32.gmra.mxu0 %v240
      %v1462 = vpop.f32.mrf.mxu0
      %v1463 = vadd.f32 0.0, %v1462
      %v1464 = vpop.f32.mrf.mxu0
      %1465 = vmatprep.mubr.f32.mxu0 %v319
      %1466 = vmatmul.mubr.f32.gmra.mxu0 %v241
      %v1467 = vpop.f32.mrf.mxu0
      %v1468 = vadd.f32 0.0, %v1467
      %v1469 = vpop.f32.mrf.mxu0
      %1470 = vmatprep.mubr.f32.mxu0 %v321
      %1471 = vmatmul.mubr.f32.gmra.mxu0 %v242
      %v1472 = vpop.f32.mrf.mxu0
      %v1473 = vadd.f32 0.0, %v1472
      %v1474 = vpop.f32.mrf.mxu0
      %1475 = vmatprep.mubr.f32.mxu0 %v323
      %1476 = vmatmul.mubr.f32.gmra.mxu0 %v243
      %v1477 = vpop.f32.mrf.mxu0
      %v1478 = vadd.f32 0.0, %v1477
      %v1479 = vpop.f32.mrf.mxu0
      %1480 = vmatprep.mubr.f32.mxu0 %v325
      %1481 = vmatmul.mubr.f32.gmra.mxu0 %v244
      %v1482 = vpop.f32.mrf.mxu0
      %v1483 = vadd.f32 0.0, %v1482
      %v1484 = vpop.f32.mrf.mxu0
      %1485 = vmatprep.mubr.f32.mxu0 %v327
      %1486 = vmatmul.mubr.f32.gmra.mxu0 %v245
      %v1487 = vpop.f32.mrf.mxu0
      %v1488 = vadd.f32 0.0, %v1487
      %v1489 = vpop.f32.mrf.mxu0
      %1490 = vmatprep.mubr.f32.mxu0 %v329
      %1491 = vmatmul.mubr.f32.gmra.mxu0 %v246
      %v1492 = vpop.f32.mrf.mxu0
      %v1493 = vadd.f32 0.0, %v1492
      %v1494 = vpop.f32.mrf.mxu0
      %1495 = vmatprep.mubr.f32.mxu0 %v331
      %1496 = vmatmul.mubr.f32.gmra.mxu0 %v247
      %v1497 = vpop.f32.mrf.mxu0
      %v1498 = vadd.f32 0.0, %v1497
      %v1499 = vpop.f32.mrf.mxu0
      %1500 = vmatprep.mubr.f32.mxu0 %v333
      %1501 = vmatmul.mubr.f32.gmra.mxu0 %v248
      %v1502 = vpop.f32.mrf.mxu0
      %v1503 = vadd.f32 0.0, %v1502
      %v1504 = vpop.f32.mrf.mxu0
      %1505 = vmatprep.mubr.f32.mxu0 %v335
      %1506 = vmatmul.mubr.f32.gmra.mxu0 %v249
      %v1507 = vpop.f32.mrf.mxu0
      %v1508 = vadd.f32 0.0, %v1507
      %v1509 = vpop.f32.mrf.mxu0
      %1510 = vmatprep.mubr.f32.mxu0 %v337
      %1511 = vmatmul.mubr.f32.gmra.mxu0 %v250
      %v1512 = vpop.f32.mrf.mxu0
      %v1513 = vadd.f32 0.0, %v1512
      %v1514 = vpop.f32.mrf.mxu0
      %1515 = vmatprep.mubr.f32.mxu0 %v339
      %1516 = vmatmul.mubr.f32.gmra.mxu0 %v251
      %v1517 = vpop.f32.mrf.mxu0
      %v1518 = vadd.f32 0.0, %v1517
      %v1519 = vpop.f32.mrf.mxu0
      %1520 = vmatprep.mubr.f32.mxu0 %v341
      %1521 = vmatmul.mubr.f32.gmra.mxu0 %v252
      %v1522 = vpop.f32.mrf.mxu0
      %v1523 = vadd.f32 0.0, %v1522
      %v1524 = vpop.f32.mrf.mxu0
      %1525 = vmatprep.mubr.f32.mxu0 %v343
      %1526 = vmatmul.mubr.f32.gmra.mxu0 %v253
      %v1527 = vpop.f32.mrf.mxu0
      %v1528 = vadd.f32 0.0, %v1527
      %v1529 = vpop.f32.mrf.mxu0
      %1530 = vmatprep.mubr.f32.mxu0 %v345
      %1531 = vmatmul.mubr.f32.gmra.mxu0 %v254
      %v1532 = vpop.f32.mrf.mxu0
      %v1533 = vadd.f32 0.0, %v1532
      %v1534 = vpop.f32.mrf.mxu0
      %1535 = vmatprep.mubr.f32.mxu0 %v377
      %1536 = vmatmul.mubr.f32.gmra.mxu0 %v255
      %v1537 = vpop.f32.mrf.mxu0
      %v1538 = vadd.f32 0.0, %v1537
      %v1539 = vpop.f32.mrf.mxu0
      %1540 = vdwg.mxu0
      %1541 = vmatprep.subr.mxu0 0.0
      %1542 = vmatpush1.msra.mxu0 %v1355
      %1543 = vmatprep.subr.mxu0 0.0
      %1544 = vmatpush1.msra.mxu0 %v1354
      %1545 = vmatprep.subr.mxu0 0.0
      %1546 = vmatpush1.msra.mxu0 %v1353
      %1547 = vmatprep.subr.mxu0 0.0
      %1548 = vmatpush1.msra.mxu0 %v1352
      %1549 = vmatprep.subr.mxu0 0.0
      %1550 = vmatpush1.msra.mxu0 %v1351
      %1551 = vmatprep.subr.mxu0 0.0
      %1552 = vmatpush1.msra.mxu0 %v1350
      %1553 = vmatprep.subr.mxu0 0.0
      %1554 = vmatpush1.msra.mxu0 %v1349
      %1555 = vmatprep.subr.mxu0 0.0
      %1556 = vmatpush1.msra.mxu0 %v1348
      %1557 = vmatprep.subr.mxu0 0.0
      %1558 = vmatpush1.msra.mxu0 %v1347
      %1559 = vmatprep.subr.mxu0 0.0
      %1560 = vmatpush1.msra.mxu0 %v1346
      %1561 = vmatprep.subr.mxu0 0.0
      %1562 = vmatpush1.msra.mxu0 %v1345
      %1563 = vmatprep.subr.mxu0 0.0
      %1564 = vmatpush1.msra.mxu0 %v1344
      %1565 = vmatprep.subr.mxu0 0.0
      %1566 = vmatpush1.msra.mxu0 %v1343
      %1567 = vmatprep.subr.mxu0 0.0
      %1568 = vmatpush1.msra.mxu0 %v1342
      %1569 = vmatprep.subr.mxu0 0.0
      %1570 = vmatpush1.msra.mxu0 %v1341
      %1571 = vmatprep.subr.mxu0 0.0
      %1572 = vmatpush1.msra.mxu0 %v1340
      %1573 = vmatprep.subr.mxu0 0.0
      %1574 = vmatpush2.msra.mxu0 0.0
      %1575 = vmatprep.subr.mxu0 0.0
      %1576 = vmatpush2.msra.mxu0 0.0
      %1577 = vmatprep.subr.mxu0 0.0
      %1578 = vmatpush2.msra.mxu0 0.0
      %1579 = vmatprep.subr.mxu0 0.0
      %1580 = vmatpush2.msra.mxu0 0.0
      %1581 = vmatprep.subr.mxu0 0.0
      %1582 = vmatpush2.msra.mxu0 0.0
      %1583 = vmatprep.subr.mxu0 0.0
      %1584 = vmatpush2.msra.mxu0 0.0
      %1585 = vmatprep.subr.mxu0 0.0
      %1586 = vmatpush2.msra.mxu0 0.0
      %1587 = vmatprep.subr.mxu0 0.0
      %1588 = vmatpush2.msra.mxu0 0.0
      %1589 = vmatprep.subr.mxu0 0.0
      %1590 = vmatpush2.msra.mxu0 0.0
      %1591 = vmatprep.subr.mxu0 0.0
      %1592 = vmatpush2.msra.mxu0 0.0
      %1593 = vmatprep.subr.mxu0 0.0
      %1594 = vmatpush2.msra.mxu0 0.0
      %1595 = vmatprep.subr.mxu0 0.0
      %1596 = vmatpush2.msra.mxu0 0.0
      %1597 = vmatprep.subr.mxu0 0.0
      %1598 = vmatpush2.msra.mxu0 0.0
      %1599 = vmatprep.subr.mxu0 0.0
      %1600 = vmatpush2.msra.mxu0 0.0
      %1601 = vmatprep.subr.mxu0 0.0
      %1602 = vmatpush2.msra.mxu0 0.0
      %1603 = vmatprep.subr.mxu0 0.0
      %1604 = vmatpush2.msra.mxu0 0.0
      %1605 = vmatprep.mubr.f32.mxu0 0.0
      %1606 = vmatmul.mubr.f32.gmra.mxu0 %v393
      %v1607 = vpop.f32.mrf.mxu0
      %v1608 = vadd.f32 %v1423, %v1607
      %v1609 = vpop.f32.mrf.mxu0
      %1610 = vmatprep.mubr.f32.mxu0 0.0
      %1611 = vmatmul.mubr.f32.gmra.mxu0 %v395
      %v1612 = vpop.f32.mrf.mxu0
      %v1613 = vadd.f32 %v1428, %v1612
      %v1614 = vpop.f32.mrf.mxu0
      %1615 = vmatprep.mubr.f32.mxu0 0.0
      %1616 = vmatmul.mubr.f32.gmra.mxu0 %v397
      %v1617 = vpop.f32.mrf.mxu0
      %v1618 = vadd.f32 %v1433, %v1617
      %v1619 = vpop.f32.mrf.mxu0
      %1620 = vmatprep.mubr.f32.mxu0 0.0
      %1621 = vmatmul.mubr.f32.gmra.mxu0 %v399
      %v1622 = vpop.f32.mrf.mxu0
      %v1623 = vadd.f32 %v1438, %v1622
      %v1624 = vpop.f32.mrf.mxu0
      %1625 = vmatprep.mubr.f32.mxu0 0.0
      %1626 = vmatmul.mubr.f32.gmra.mxu0 %v401
      %v1627 = vpop.f32.mrf.mxu0
      %v1628 = vadd.f32 %v1443, %v1627
      %v1629 = vpop.f32.mrf.mxu0
      %1630 = vmatprep.mubr.f32.mxu0 0.0
      %1631 = vmatmul.mubr.f32.gmra.mxu0 %v403
      %v1632 = vpop.f32.mrf.mxu0
      %v1633 = vadd.f32 %v1448, %v1632
      %v1634 = vpop.f32.mrf.mxu0
      %1635 = vmatprep.mubr.f32.mxu0 0.0
      %1636 = vmatmul.mubr.f32.gmra.mxu0 %v405
      %v1637 = vpop.f32.mrf.mxu0
      %v1638 = vadd.f32 %v1453, %v1637
      %v1639 = vpop.f32.mrf.mxu0
      %1640 = vmatprep.mubr.f32.mxu0 0.0
      %1641 = vmatmul.mubr.f32.gmra.mxu0 %v407
      %v1642 = vpop.f32.mrf.mxu0
      %v1643 = vadd.f32 %v1458, %v1642
      %v1644 = vpop.f32.mrf.mxu0
      %1645 = vmatprep.mubr.f32.mxu0 0.0
      %1646 = vmatmul.mubr.f32.gmra.mxu0 %v409
      %v1647 = vpop.f32.mrf.mxu0
      %v1648 = vadd.f32 %v1463, %v1647
      %v1649 = vpop.f32.mrf.mxu0
      %1650 = vmatprep.mubr.f32.mxu0 0.0
      %1651 = vmatmul.mubr.f32.gmra.mxu0 %v411
      %v1652 = vpop.f32.mrf.mxu0
      %v1653 = vadd.f32 %v1468, %v1652
      %v1654 = vpop.f32.mrf.mxu0
      %1655 = vmatprep.mubr.f32.mxu0 0.0
      %1656 = vmatmul.mubr.f32.gmra.mxu0 %v413
      %v1657 = vpop.f32.mrf.mxu0
      %v1658 = vadd.f32 %v1473, %v1657
      %v1659 = vpop.f32.mrf.mxu0
      %1660 = vmatprep.mubr.f32.mxu0 0.0
      %1661 = vmatmul.mubr.f32.gmra.mxu0 %v415
      %v1662 = vpop.f32.mrf.mxu0
      %v1663 = vadd.f32 %v1478, %v1662
      %v1664 = vpop.f32.mrf.mxu0
      %1665 = vmatprep.mubr.f32.mxu0 0.0
      %1666 = vmatmul.mubr.f32.gmra.mxu0 %v417
      %v1667 = vpop.f32.mrf.mxu0
      %v1668 = vadd.f32 %v1483, %v1667
      %v1669 = vpop.f32.mrf.mxu0
      %1670 = vmatprep.mubr.f32.mxu0 0.0
      %1671 = vmatmul.mubr.f32.gmra.mxu0 %v419
      %v1672 = vpop.f32.mrf.mxu0
      %v1673 = vadd.f32 %v1488, %v1672
      %v1674 = vpop.f32.mrf.mxu0
      %1675 = vmatprep.mubr.f32.mxu0 0.0
      %1676 = vmatmul.mubr.f32.gmra.mxu0 %v421
      %v1677 = vpop.f32.mrf.mxu0
      %v1678 = vadd.f32 %v1493, %v1677
      %v1679 = vpop.f32.mrf.mxu0
      %1680 = vmatprep.mubr.f32.mxu0 0.0
      %1681 = vmatmul.mubr.f32.gmra.mxu0 %v423
      %v1682 = vpop.f32.mrf.mxu0
      %v1683 = vadd.f32 %v1498, %v1682
      %v1684 = vpop.f32.mrf.mxu0
      %1685 = vmatprep.mubr.f32.mxu0 0.0
      %1686 = vmatmul.mubr.f32.gmra.mxu0 %v425
      %v1687 = vpop.f32.mrf.mxu0
      %v1688 = vadd.f32 %v1503, %v1687
      %v1689 = vpop.f32.mrf.mxu0
      %1690 = vmatprep.mubr.f32.mxu0 0.0
      %1691 = vmatmul.mubr.f32.gmra.mxu0 %v427
      %v1692 = vpop.f32.mrf.mxu0
      %v1693 = vadd.f32 %v1508, %v1692
      %v1694 = vpop.f32.mrf.mxu0
      %1695 = vmatprep.mubr.f32.mxu0 0.0
      %1696 = vmatmul.mubr.f32.gmra.mxu0 %v429
      %v1697 = vpop.f32.mrf.mxu0
      %v1698 = vadd.f32 %v1513, %v1697
      %v1699 = vpop.f32.mrf.mxu0
      %1700 = vmatprep.mubr.f32.mxu0 0.0
      %1701 = vmatmul.mubr.f32.gmra.mxu0 %v431
      %v1702 = vpop.f32.mrf.mxu0
      %v1703 = vadd.f32 %v1518, %v1702
      %v1704 = vpop.f32.mrf.mxu0
      %1705 = vmatprep.mubr.f32.mxu0 0.0
      %1706 = vmatmul.mubr.f32.gmra.mxu0 %v433
      %v1707 = vpop.f32.mrf.mxu0
      %v1708 = vadd.f32 %v1523, %v1707
      %v1709 = vpop.f32.mrf.mxu0
      %1710 = vmatprep.mubr.f32.mxu0 0.0
      %1711 = vmatmul.mubr.f32.gmra.mxu0 %v435
      %v1712 = vpop.f32.mrf.mxu0
      %v1713 = vadd.f32 %v1528, %v1712
      %v1714 = vpop.f32.mrf.mxu0
      %1715 = vmatprep.mubr.f32.mxu0 0.0
      %1716 = vmatmul.mubr.f32.gmra.mxu0 %v437
      %v1717 = vpop.f32.mrf.mxu0
      %v1718 = vadd.f32 %v1533, %v1717
      %v1719 = vpop.f32.mrf.mxu0
      %1720 = vmatprep.mubr.f32.mxu0 0.0
      %1721 = vmatmul.mubr.f32.gmra.mxu0 %v469
      %v1722 = vpop.f32.mrf.mxu0
      %v1723 = vadd.f32 %v1538, %v1722
      %v1724 = vpop.f32.mrf.mxu0
      %1725 = vdwg.mxu0
      %v1726 = vadd.f32 %v1189, %v1608
      %v1727 = vadd.f32 %v1194, %v1613
      %v1728 = vadd.f32 %v1199, %v1618
      %v1729 = vadd.f32 %v1204, %v1623
      %v1730 = vadd.f32 %v1209, %v1628
      %v1731 = vadd.f32 %v1214, %v1633
      %v1732 = vadd.f32 %v1219, %v1638
      %v1733 = vadd.f32 %v1224, %v1643
      %v1734 = vadd.f32 %v1229, %v1648
      %v1735 = vadd.f32 %v1234, %v1653
      %v1736 = vadd.f32 %v1239, %v1658
      %v1737 = vadd.f32 %v1244, %v1663
      %v1738 = vadd.f32 %v1249, %v1668
      %v1739 = vadd.f32 %v1254, %v1673
      %v1740 = vadd.f32 %v1259, %v1678
      %v1741 = vadd.f32 %v1264, %v1683
      %v1742 = vadd.f32 %v1269, %v1688
      %v1743 = vadd.f32 %v1274, %v1693
      %v1744 = vadd.f32 %v1279, %v1698
      %v1745 = vadd.f32 %v1284, %v1703
      %v1746 = vadd.f32 %v1289, %v1708
      %v1747 = vadd.f32 %v1294, %v1713
      %v1748 = vadd.f32 %v1299, %v1718
      %v1749 = vadd.f32 %v1304, %v1723
      %v1750 = vld [vmem:[%s2] sm:$0x1]
      %v1752 = vlaneseq
      %v1753 = vshrl.u32 %v1752, 7
      %v1754 = vsub.s32 0, %v1753
      %v1755 = vrot.slane %v1750, %v1754
      %v1757 = vmul.f32 %v1726, %v1755
      %v1758 = vmul.f32 %v1727, %v1755
      %v1759 = vmul.f32 %v1728, %v1755
      %v1760 = vmul.f32 %v1729, %v1755
      %v1761 = vmul.f32 %v1730, %v1755
      %v1762 = vmul.f32 %v1731, %v1755
      %v1763 = vmul.f32 %v1732, %v1755
      %v1764 = vmul.f32 %v1733, %v1755
      %v1765 = vmul.f32 %v1734, %v1755
      %v1766 = vmul.f32 %v1735, %v1755
      %v1767 = vmul.f32 %v1736, %v1755
      %v1768 = vmul.f32 %v1737, %v1755
      %v1769 = vmul.f32 %v1738, %v1755
      %v1770 = vmul.f32 %v1739, %v1755
      %v1771 = vmul.f32 %v1740, %v1755
      %v1772 = vmul.f32 %v1741, %v1755
      %v1773 = vmul.f32 %v1742, %v1755
      %v1774 = vmul.f32 %v1743, %v1755
      %v1775 = vmul.f32 %v1744, %v1755
      %v1776 = vmul.f32 %v1745, %v1755
      %v1777 = vmul.f32 %v1746, %v1755
      %v1778 = vmul.f32 %v1747, %v1755
      %v1779 = vmul.f32 %v1748, %v1755
      %v1780 = vmul.f32 %v1749, %v1755
      %v1781 = vld [vmem:[%s3] sm:$0x1]
      %v1783 = vlaneseq
      %v1784 = vshrl.u32 %v1783, 7
      %v1785 = vsub.s32 0, %v1784
      %v1786 = vrot.slane %v1781, %v1785
      %v1788 = vadd.f32 %v1757, %v1786
      %v1789 = vadd.f32 %v1758, %v1786
      %v1790 = vadd.f32 %v1759, %v1786
      %v1791 = vadd.f32 %v1760, %v1786
      %v1792 = vadd.f32 %v1761, %v1786
      %v1793 = vadd.f32 %v1762, %v1786
      %v1794 = vadd.f32 %v1763, %v1786
      %v1795 = vadd.f32 %v1764, %v1786
      %v1796 = vadd.f32 %v1765, %v1786
      %v1797 = vadd.f32 %v1766, %v1786
      %v1798 = vadd.f32 %v1767, %v1786
      %v1799 = vadd.f32 %v1768, %v1786
      %v1800 = vadd.f32 %v1769, %v1786
      %v1801 = vadd.f32 %v1770, %v1786
      %v1802 = vadd.f32 %v1771, %v1786
      %v1803 = vadd.f32 %v1772, %v1786
      %v1804 = vadd.f32 %v1773, %v1786
      %v1805 = vadd.f32 %v1774, %v1786
      %v1806 = vadd.f32 %v1775, %v1786
      %v1807 = vadd.f32 %v1776, %v1786
      %v1808 = vadd.f32 %v1777, %v1786
      %v1809 = vadd.f32 %v1778, %v1786
      %v1810 = vadd.f32 %v1779, %v1786
      %v1811 = vadd.f32 %v1780, %v1786
      %v1812 = vmax.f32 %v1788, 0.0
      %v1813 = vmax.f32 %v1789, 0.0
      %v1814 = vmax.f32 %v1790, 0.0
      %v1815 = vmax.f32 %v1791, 0.0
      %v1816 = vmax.f32 %v1792, 0.0
      %v1817 = vmax.f32 %v1793, 0.0
      %v1818 = vmax.f32 %v1794, 0.0
      %v1819 = vmax.f32 %v1795, 0.0
      %v1820 = vmax.f32 %v1796, 0.0
      %v1821 = vmax.f32 %v1797, 0.0
      %v1822 = vmax.f32 %v1798, 0.0
      %v1823 = vmax.f32 %v1799, 0.0
      %v1824 = vmax.f32 %v1800, 0.0
      %v1825 = vmax.f32 %v1801, 0.0
      %v1826 = vmax.f32 %v1802, 0.0
      %v1827 = vmax.f32 %v1803, 0.0
      %v1828 = vmax.f32 %v1804, 0.0
      %v1829 = vmax.f32 %v1805, 0.0
      %v1830 = vmax.f32 %v1806, 0.0
      %v1831 = vmax.f32 %v1807, 0.0
      %v1832 = vmax.f32 %v1808, 0.0
      %v1833 = vmax.f32 %v1809, 0.0
      %v1834 = vmax.f32 %v1810, 0.0
      %v1835 = vmax.f32 %v1811, 0.0
      %1836 = vst [vmem:[%s221] sm:$0xff] %v1812
      %1837 = vst [vmem:[%s221 + $0x8] sm:$0xff] %v1813
      %1838 = vst [vmem:[%s221 + $0x10] sm:$0xff] %v1814
      %1839 = vst [vmem:[%s221 + $0x18] sm:$0xff] %v1815
      %1840 = vst [vmem:[%s221 + $0x20] sm:$0xff] %v1816
      %1841 = vst [vmem:[%s221 + $0x28] sm:$0xff] %v1817
      %1842 = vst [vmem:[%s221 + $0x30] sm:$0xff] %v1818
      %1843 = vst [vmem:[%s221 + $0x38] sm:$0xff] %v1819
      %1844 = vst [vmem:[%s221 + $0x40] sm:$0xff] %v1820
      %1845 = vst [vmem:[%s221 + $0x48] sm:$0xff] %v1821
      %1846 = vst [vmem:[%s221 + $0x50] sm:$0xff] %v1822
      %1847 = vst [vmem:[%s221 + $0x58] sm:$0xff] %v1823
      %1848 = vst [vmem:[%s221 + $0x60] sm:$0xff] %v1824
      %1849 = vst [vmem:[%s221 + $0x68] sm:$0xff] %v1825
      %1850 = vst [vmem:[%s221 + $0x70] sm:$0xff] %v1826
      %1851 = vst [vmem:[%s221 + $0x78] sm:$0xff] %v1827
      %1852 = vst [vmem:[%s221 + $0x80] sm:$0xff] %v1828
      %1853 = vst [vmem:[%s221 + $0x88] sm:$0xff] %v1829
      %1854 = vst [vmem:[%s221 + $0x90] sm:$0xff] %v1830
      %1855 = vst [vmem:[%s221 + $0x98] sm:$0xff] %v1831
      %1856 = vst [vmem:[%s221 + $0xa0] sm:$0xff] %v1832
      %1857 = vst [vmem:[%s221 + $0xa8] sm:$0xff] %v1833
      %1858 = vst [vmem:[%s221 + $0xb0] sm:$0xff] %v1834
      %1859 = vst [vmem:[%s221 + $0xb8] sm:$0xff] %v1835
      %s1860 = smul.u32 8, %s20
      %p1861 = scmp.lt.s32.totalorder %s19, 1
      %s1862 = scalar_select %p1861, %s19, 1
      %p1863 = scmp.lt.s32.totalorder %s1860, 15
      %s1864 = scalar_select %p1863, %s1860, 15
      %s1865 = smul.addr %s1864, 3
      %s1866 = smul.addr %s1862, 48
      %s1867 = sadd.s32 %s1865, %s1866
      %s1868 = smul.addr %s1867, 8
      %s1869 = scalar_lea.vmem %s4, %s1868
      // Predicated region
      $region37: #{a_call__.7} parent=35 // pred_check
        %p1870 = pneg %p136
      $region38: #{a_call__.7} parent=35 // pred_check_branch
        %1872 = sbr.rel (%p1870) target = $region40
      $region39: #{a_call__.7} parent=35 // pred_region
        %s1873 = smul.u32 8, %s20
      $region40: #{a_call__.7} parent=35 // pred_fallthru
        _
    $region36: #{a_call__.7} parent=5 // pred_fallthru
      _
    %p1874 = scmp.le.s32.totalorder 2, %s10
    // Predicated region
    $region41: #{a_call__.7} parent=5 // pred_check
      %p1875 = pneg %p1874
    $region42: #{a_call__.7} parent=5 // pred_check_branch
      %1877 = sbr.rel (%p1875) target = $region44
    $region43: #{a_call__.7} parent=5 // pred_region
      %s1878 = ssub.s32 %s10, 2
      // Predicated region
      $region45: #{a_call__.7} parent=43 // pred_check
        %p1879 = pneg %p142
      $region46: #{a_call__.7} parent=43 // pred_check_branch
        %1881 = sbr.rel (%p1879) target = $region48
      $region47: #{a_call__.7} parent=43 // pred_region
        %s1882 = smul.u32 8, %s22
        %p1883 = scmp.lt.s32.totalorder %s21, 1
        %s1884 = scalar_select %p1883, %s21, 1
        %p1885 = scmp.lt.s32.totalorder %s1882, 15
        %s1886 = scalar_select %p1885, %s1882, 15
        %s1887 = smul.addr %s1886, 3
        %s1888 = smul.addr %s1884, 48
        %s1889 = sadd.s32 %s1887, %s1888
        %s1890 = smul.addr %s1889, 8
        %s1891 = scalar_lea.vmem %s4, %s1890
      $region48: #{a_call__.7} parent=43 // pred_fallthru
        _
    $region44: #{a_call__.7} parent=5 // pred_fallthru
      _
  $region6: #{a_call__.7} parent=0 // loop_footer
    %s14 = sadd.s32 1, %s10
  $region7: #{a_call__.7} parent=0 // loop_footer_branch
    %9 = sbr.rel target = $region3
  $region8: #{a_call__.7} parent=0 // loop_exit
    _

// kernel: a_call__.6
$region0: #{a_call__.6}
  #allocation0 [shape = 'u32[]', space=smem, size = 0x4, offset = 0x4, fixed_abs, tag = 'smem constant byte address 0x4 - core index']
  #allocation1 [shape = 'u32[144,128]{1,0:T(1,128)}', space=vmem, size = 0x12000, scoped, tag = 'internal scratch']
  %s0 = inlined_call_operand.vmem [shape: f32[2,18,24,128], index: 0, kind: input, shape index: {}]
  %s1 = inlined_call_operand.vmem [shape: f32[2,18,24,128], index: 1, kind: input, shape index: {}]
  %s2 = inlined_call_operand.vmem [shape: f32[3,384,128], index: 2, kind: input, shape index: {}]
  %s3 = inlined_call_operand.vmem [shape: f32[3,384,128], index: 3, kind: input, shape index: {}]
  %s4 = inlined_call_operand.vmem [shape: f32[1,128], index: 4, kind: input, shape index: {}]
  %s5 = inlined_call_operand.vmem [shape: f32[1,128], index: 5, kind: input, shape index: {}]
  %s6 = inlined_call_operand.vmem [shape: f32[2,16,24,128], index: 6, kind: output, shape index: {}]
  %s7 = sld [smem:[#allocation0]]
  $region57: #{a_call__.6} parent=0
    _
  %s9 = ssub.s32 1, %s7
  %s10 = scalar_select 0, %s9, %s7
  loop: start=0, step=1, limit=6
  $region2: #{a_call__.6} parent=0 // loop_pre_header
    _
  $region3: #{a_call__.6} parent=0 // loop_header
    %s12 = sphi 0, %s16
    %p13 = scmp.ge.s32.totalorder %s12, 6
    %s19 = sphi 0, %s31
    %s20 = sphi 0, %s27
    %s21 = sphi 0, %s19
    %s22 = sphi 0, %s20
    %s23 = sphi 0, %s21
    %s24 = sphi 0, %s22
    %s34 = sphi 0, %s36
    %s37 = sphi 0, %s34
    %s38 = sphi 0, %s37
    %s54 = sphi 0, %s38
    %s60 = sphi 0, %s62
    %s63 = sphi 0, %s60
    %s64 = sphi 0, %s63
    %s80 = sphi 0, %s64
    %s84 = sphi 0, %s84
    %s86 = sphi 0, %s84
    %s87 = sphi 0, %s86
    %s101 = sphi 0, %s87
    %s105 = sphi 0, %s105
    %s107 = sphi 0, %s105
    %s108 = sphi 0, %s107
    %s122 = sphi 0, %s108
    %s126 = sphi 0, %s126
    %s128 = sphi 0, %s126
    %s129 = sphi 0, %s128
    %s143 = sphi 0, %s129
    %s147 = sphi 0, %s147
    %s149 = sphi 0, %s147
    %s150 = sphi 0, %s149
    %s164 = sphi 0, %s150
    %s172 = sphi 0, %s174
    %s175 = sphi 0, %s172
    %s176 = sphi 0, %s175
    %s192 = sphi 0, %s176
  $region4: #{a_call__.6} parent=0 // loop_header_branch
    %15 = sbr.rel (%p13) target = $region8
  $region5: #{a_call__.6} parent=0 // loop_body
    %s17 = ssub.s32 %s12, 1
    %s18 = ssub.s32 %s12, 2
    %s25 = sadd.s32 1, %s20
    %p26 = scmp.ge.s32.totalorder %s25, 2
    %s27 = scalar_select %p26, 0, %s25
    %s28 = sadd.s32 1, %s19
    %s29 = scalar_select %p26, %s28, %s19
    %p30 = scmp.ge.s32.totalorder %s29, 2
    %s31 = scalar_select %p30, 0, %s29
    %s32 = ssub.s32 %s19, %s31
    %p33 = scmp.eq.s32.totalorder %s32, 0
    %s35 = sadd.s32 %s34, 1
    %s36 = scalar_select %p33, %s34, %s35
    %p39 = pneg %p33
    %p40 = scmp.eq.s32.totalorder %s12, 3
    %p41 = por %p39, %p40
    %p42 = scmp.ne.s32.totalorder %s34, %s37
    %p43 = scmp.eq.s32.totalorder %s12, 0
    %p44 = por %p42, %p43
    %p45 = scmp.ne.s32.totalorder %s34, %s37
    %p46 = scmp.eq.s32.totalorder %s17, 3
    %p47 = por %p45, %p46
    %p48 = scmp.ne.s32.totalorder %s37, %s38
    %p49 = scmp.eq.s32.totalorder %s17, 0
    %p50 = por %p48, %p49
    %p51 = scmp.ne.s32.totalorder %s37, %s38
    %p52 = scmp.eq.s32.totalorder %s18, 3
    %p53 = por %p51, %p52
    %p55 = scmp.ne.s32.totalorder %s38, %s54
    %p56 = scmp.eq.s32.totalorder %s18, 0
    %p57 = por %p55, %p56
    %s58 = ssub.s32 %s19, %s31
    %p59 = scmp.eq.s32.totalorder %s58, 0
    %s61 = sadd.s32 %s60, 1
    %s62 = scalar_select %p59, %s60, %s61
    %p65 = pneg %p59
    %p66 = scmp.eq.s32.totalorder %s12, 3
    %p67 = por %p65, %p66
    %p68 = scmp.ne.s32.totalorder %s60, %s63
    %p69 = scmp.eq.s32.totalorder %s12, 0
    %p70 = por %p68, %p69
    %p71 = scmp.ne.s32.totalorder %s60, %s63
    %p72 = scmp.eq.s32.totalorder %s17, 3
    %p73 = por %p71, %p72
    %p74 = scmp.ne.s32.totalorder %s63, %s64
    %p75 = scmp.eq.s32.totalorder %s17, 0
    %p76 = por %p74, %p75
    %p77 = scmp.ne.s32.totalorder %s63, %s64
    %p78 = scmp.eq.s32.totalorder %s18, 3
    %p79 = por %p77, %p78
    %p81 = scmp.ne.s32.totalorder %s64, %s80
    %p82 = scmp.eq.s32.totalorder %s18, 0
    %p83 = por %p81, %p82
    %s85 = sadd.s32 %s84, 1
    %p88 = scmp.eq.s32.totalorder %s12, 3
    %p89 = scmp.ne.s32.totalorder %s84, %s86
    %p90 = scmp.eq.s32.totalorder %s12, 0
    %p91 = por %p89, %p90
    %p92 = scmp.ne.s32.totalorder %s84, %s86
    %p93 = scmp.eq.s32.totalorder %s17, 3
    %p94 = por %p92, %p93
    %p95 = scmp.ne.s32.totalorder %s86, %s87
    %p96 = scmp.eq.s32.totalorder %s17, 0
    %p97 = por %p95, %p96
    %p98 = scmp.ne.s32.totalorder %s86, %s87
    %p99 = scmp.eq.s32.totalorder %s18, 3
    %p100 = por %p98, %p99
    %p102 = scmp.ne.s32.totalorder %s87, %s101
    %p103 = scmp.eq.s32.totalorder %s18, 0
    %p104 = por %p102, %p103
    %s106 = sadd.s32 %s105, 1
    %p109 = scmp.eq.s32.totalorder %s12, 3
    %p110 = scmp.ne.s32.totalorder %s105, %s107
    %p111 = scmp.eq.s32.totalorder %s12, 0
    %p112 = por %p110, %p111
    %p113 = scmp.ne.s32.totalorder %s105, %s107
    %p114 = scmp.eq.s32.totalorder %s17, 3
    %p115 = por %p113, %p114
    %p116 = scmp.ne.s32.totalorder %s107, %s108
    %p117 = scmp.eq.s32.totalorder %s17, 0
    %p118 = por %p116, %p117
    %p119 = scmp.ne.s32.totalorder %s107, %s108
    %p120 = scmp.eq.s32.totalorder %s18, 3
    %p121 = por %p119, %p120
    %p123 = scmp.ne.s32.totalorder %s108, %s122
    %p124 = scmp.eq.s32.totalorder %s18, 0
    %p125 = por %p123, %p124
    %s127 = sadd.s32 %s126, 1
    %p130 = scmp.eq.s32.totalorder %s12, 3
    %p131 = scmp.ne.s32.totalorder %s126, %s128
    %p132 = scmp.eq.s32.totalorder %s12, 0
    %p133 = por %p131, %p132
    %p134 = scmp.ne.s32.totalorder %s126, %s128
    %p135 = scmp.eq.s32.totalorder %s17, 3
    %p136 = por %p134, %p135
    %p137 = scmp.ne.s32.totalorder %s128, %s129
    %p138 = scmp.eq.s32.totalorder %s17, 0
    %p139 = por %p137, %p138
    %p140 = scmp.ne.s32.totalorder %s128, %s129
    %p141 = scmp.eq.s32.totalorder %s18, 3
    %p142 = por %p140, %p141
    %p144 = scmp.ne.s32.totalorder %s129, %s143
    %p145 = scmp.eq.s32.totalorder %s18, 0
    %p146 = por %p144, %p145
    %s148 = sadd.s32 %s147, 1
    %p151 = scmp.eq.s32.totalorder %s12, 3
    %p152 = scmp.ne.s32.totalorder %s147, %s149
    %p153 = scmp.eq.s32.totalorder %s12, 0
    %p154 = por %p152, %p153
    %p155 = scmp.ne.s32.totalorder %s147, %s149
    %p156 = scmp.eq.s32.totalorder %s17, 3
    %p157 = por %p155, %p156
    %p158 = scmp.ne.s32.totalorder %s149, %s150
    %p159 = scmp.eq.s32.totalorder %s17, 0
    %p160 = por %p158, %p159
    %p161 = scmp.ne.s32.totalorder %s149, %s150
    %p162 = scmp.eq.s32.totalorder %s18, 3
    %p163 = por %p161, %p162
    %p165 = scmp.ne.s32.totalorder %s150, %s164
    %p166 = scmp.eq.s32.totalorder %s18, 0
    %p167 = por %p165, %p166
    %s168 = ssub.s32 %s19, %s31
    %s169 = ssub.s32 %s20, %s27
    %s170 = sor.u32 %s168, %s169
    %p171 = scmp.eq.s32.totalorder %s170, 0
    %s173 = sadd.s32 %s172, 1
    %s174 = scalar_select %p171, %s172, %s173
    %p177 = pneg %p171
    %p178 = scmp.eq.s32.totalorder %s12, 3
    %p179 = por %p177, %p178
    %p180 = scmp.ne.s32.totalorder %s172, %s175
    %p181 = scmp.eq.s32.totalorder %s12, 0
    %p182 = por %p180, %p181
    %p183 = scmp.ne.s32.totalorder %s172, %s175
    %p184 = scmp.eq.s32.totalorder %s17, 3
    %p185 = por %p183, %p184
    %p186 = scmp.ne.s32.totalorder %s175, %s176
    %p187 = scmp.eq.s32.totalorder %s17, 0
    %p188 = por %p186, %p187
    %p189 = scmp.ne.s32.totalorder %s175, %s176
    %p190 = scmp.eq.s32.totalorder %s18, 3
    %p191 = por %p189, %p190
    %p193 = scmp.ne.s32.totalorder %s176, %s192
    %p194 = scmp.eq.s32.totalorder %s18, 0
    %p195 = por %p193, %p194
    %p196 = scmp.le.s32.totalorder 1, %s12
    %p197 = scmp.lt.s32.totalorder %s12, 5
    %p198 = pnand %p196, %p197
    %p199 = pneg %p198
    // Predicated region
    $region9: #{a_call__.6} parent=5 // pred_check
      _
    $region10: #{a_call__.6} parent=5 // pred_check_branch
      %201 = sbr.rel (%p198) target = $region12
    $region11: #{a_call__.6} parent=5 // pred_region
      %s202 = ssub.s32 %s12, 1
      // Predicated region
      $region13: #{a_call__.6} parent=11 // pred_check
        %p203 = pneg %p97
      $region14: #{a_call__.6} parent=11 // pred_check_branch
        %205 = sbr.rel (%p203) target = $region16
      $region15: #{a_call__.6} parent=11 // pred_region
        _
      $region16: #{a_call__.6} parent=11 // pred_fallthru
        _
      // Predicated region
      $region17: #{a_call__.6} parent=11 // pred_check
        %p206 = pneg %p118
      $region18: #{a_call__.6} parent=11 // pred_check_branch
        %208 = sbr.rel (%p206) target = $region20
      $region19: #{a_call__.6} parent=11 // pred_region
        _
      $region20: #{a_call__.6} parent=11 // pred_fallthru
        _
      // Predicated region
      $region21: #{a_call__.6} parent=11 // pred_check
        %p209 = pneg %p139
      $region22: #{a_call__.6} parent=11 // pred_check_branch
        %211 = sbr.rel (%p209) target = $region24
      $region23: #{a_call__.6} parent=11 // pred_region
        _
      $region24: #{a_call__.6} parent=11 // pred_fallthru
        _
      // Predicated region
      $region25: #{a_call__.6} parent=11 // pred_check
        %p212 = pneg %p160
      $region26: #{a_call__.6} parent=11 // pred_check_branch
        %214 = sbr.rel (%p212) target = $region28
      $region27: #{a_call__.6} parent=11 // pred_region
        _
      $region28: #{a_call__.6} parent=11 // pred_fallthru
        _
    $region12: #{a_call__.6} parent=5 // pred_fallthru
      _
    %p215 = scmp.lt.s32.totalorder %s12, 4
    // Predicated region
    $region29: #{a_call__.6} parent=5 // pred_check
      %p216 = pneg %p215
    $region30: #{a_call__.6} parent=5 // pred_check_branch
      %218 = sbr.rel (%p216) target = $region32
    $region31: #{a_call__.6} parent=5 // pred_region
      // Predicated region
      $region33: #{a_call__.6} parent=31 // pred_check
        %p219 = pneg %p44
      $region34: #{a_call__.6} parent=31 // pred_check_branch
        %221 = sbr.rel (%p219) target = $region36
      $region35: #{a_call__.6} parent=31 // pred_region
        %p222 = scmp.lt.s32.totalorder %s19, 1
        %s223 = scalar_select %p222, %s19, 1
        %s224 = smul.addr %s223, 54
        %s225 = smul.addr %s224, 8
        %s226 = scalar_lea.vmem %s0, %s225
      $region36: #{a_call__.6} parent=31 // pred_fallthru
        _
      // Predicated region
      $region37: #{a_call__.6} parent=31 // pred_check
        %p227 = pneg %p70
      $region38: #{a_call__.6} parent=31 // pred_check_branch
        %229 = sbr.rel (%p227) target = $region40
      $region39: #{a_call__.6} parent=31 // pred_region
        %p230 = scmp.lt.s32.totalorder %s19, 1
        %s231 = scalar_select %p230, %s19, 1
        %s232 = smul.addr %s231, 54
        %s233 = smul.addr %s232, 8
        %s234 = scalar_lea.vmem %s1, %s233
      $region40: #{a_call__.6} parent=31 // pred_fallthru
        _
    $region32: #{a_call__.6} parent=5 // pred_fallthru
      _
    %p235 = scmp.le.s32.totalorder 1, %s12
    %p236 = scmp.lt.s32.totalorder %s12, 5
    %p237 = pnand %p235, %p236
    %p238 = pneg %p237
    // Predicated region
    $region41: #{a_call__.6} parent=5 // pred_check
      _
    $region42: #{a_call__.6} parent=5 // pred_check_branch
      %240 = sbr.rel (%p237) target = $region44
    $region43: #{a_call__.6} parent=5 // pred_region
      %s241 = ssub.s32 %s12, 1
      %p242 = scmp.lt.s32.totalorder %s21, 1
      %s243 = scalar_select %p242, %s21, 1
      %s244 = smul.addr %s243, 54
      %s245 = smul.addr %s244, 8
      %s246 = scalar_lea.vmem %s0, %s245
      %p247 = pneg %p50
      %p248 = pneg %p47
      %p249 = scmp.lt.s32.totalorder %s21, 1
      %s250 = scalar_select %p249, %s21, 1
      %s251 = smul.addr %s250, 54
      %s252 = smul.addr %s251, 8
      %s253 = scalar_lea.vmem %s1, %s252
      %p254 = pneg %p76
      %p255 = pneg %p73
      %p256 = pneg %p97
      %p257 = pneg %p94
      %p258 = pneg %p118
      %p259 = pneg %p115
      %p260 = pneg %p139
      %p261 = pneg %p136
      %p262 = pneg %p160
      %p263 = pneg %p157
      %p264 = pneg %p188
      %p265 = pneg %p185
      %s266 = smul.u32 8, %s22
      %p267 = scmp.lt.s32.totalorder %s21, 1
      %s268 = scalar_select %p267, %s21, 1
      %p269 = scmp.lt.s32.totalorder %s266, 15
      %s270 = scalar_select %p269, %s266, 15
      %s271 = smul.addr %s270, 3
      %s272 = smul.addr %s268, 48
      %s273 = sadd.s32 %s271, %s272
      %s274 = smul.addr %s273, 8
      %s275 = scalar_lea.vmem %s6, %s274
      %p276 = scmp.lt.s32.totalorder %s21, 1
      %s277 = scalar_select %p276, %s21, 1
      %s278 = smul.addr %s277, 54
      %s279 = smul.addr %s278, 8
      %s280 = scalar_lea.vmem %s0, %s279
      %p281 = scmp.lt.s32.totalorder %s21, 1
      %s282 = scalar_select %p281, %s21, 1
      %s283 = smul.addr %s282, 54
      %s284 = smul.addr %s283, 8
      %s285 = scalar_lea.vmem %s1, %s284
      %s286 = smul.u32 8, %s22
      %p287 = scmp.lt.s32.totalorder %s21, 1
      %s288 = scalar_select %p287, %s21, 1
      %p289 = scmp.lt.s32.totalorder %s286, 15
      %s290 = scalar_select %p289, %s286, 15
      %s291 = smul.addr %s290, 3
      %s292 = smul.addr %s288, 48
      %s293 = sadd.s32 %s291, %s292
      %s294 = smul.addr %s293, 8
      %s295 = scalar_lea.vmem %s6, %s294
      %s296 = smul.u32 8, %s22
      %s297 = smul.u32 %s22, 8
      %s298 = smul.u32 %s297, 24
      %s299 = scalar_lea.vmem %s280, %s298
      %v300 = vld [vmem:[%s299] sm:$0xff]
      %v301 = vld [vmem:[%s299 + $0x8] sm:$0xff]
      %v302 = vld [vmem:[%s299 + $0x10] sm:$0xff]
      %v303 = vld [vmem:[%s299 + $0x18] sm:$0xff]
      %v304 = vld [vmem:[%s299 + $0x20] sm:$0xff]
      %v305 = vld [vmem:[%s299 + $0x28] sm:$0xff]
      %v306 = vld [vmem:[%s299 + $0x30] sm:$0xff]
      %v307 = vld [vmem:[%s299 + $0x38] sm:$0xff]
      %v308 = vld [vmem:[%s299 + $0x40] sm:$0xff]
      %v309 = vld [vmem:[%s299 + $0x48] sm:$0xff]
      %v310 = vld [vmem:[%s299 + $0x50] sm:$0xff]
      %v311 = vld [vmem:[%s299 + $0x58] sm:$0xff]
      %v312 = vld [vmem:[%s299 + $0x60] sm:$0xff]
      %v313 = vld [vmem:[%s299 + $0x68] sm:$0xff]
      %v314 = vld [vmem:[%s299 + $0x70] sm:$0xff]
      %v315 = vld [vmem:[%s299 + $0x78] sm:$0xff]
      %v316 = vld [vmem:[%s299 + $0x80] sm:$0xff]
      %v317 = vld [vmem:[%s299 + $0x88] sm:$0xff]
      %v318 = vld [vmem:[%s299 + $0x90] sm:$0xff]
      %v319 = vld [vmem:[%s299 + $0x98] sm:$0xff]
      %v320 = vld [vmem:[%s299 + $0xa0] sm:$0xff]
      %v321 = vld [vmem:[%s299 + $0xa8] sm:$0xff]
      %v322 = vld [vmem:[%s299 + $0xb0] sm:$0xff]
      %v323 = vld [vmem:[%s299 + $0xb8] sm:$0xff]
      %v324 = vld [vmem:[%s299 + $0xc0] sm:$0xff]
      %v325 = vld [vmem:[%s299 + $0xc8] sm:$0xff]
      %v326 = vld [vmem:[%s299 + $0xd0] sm:$0xff]
      %v327 = vld [vmem:[%s299 + $0xd8] sm:$0xff]
      %v328 = vld [vmem:[%s299 + $0xe0] sm:$0xff]
      %v329 = vld [vmem:[%s299 + $0xe8] sm:$0xff]
      %vm360 = vcmask 1046528
      %v361 = vrot.slane %v300, 1
      %v362 = vrot.slane %v301, 1
      %v363 = vsel %vm360, %v361, %v362
      %v364 = vrot.slane %v302, 1
      %v365 = vsel %vm360, %v362, %v364
      %v366 = vrot.slane %v303, 1
      %v367 = vsel %vm360, %v364, %v366
      %v368 = vrot.slane %v304, 1
      %v369 = vsel %vm360, %v366, %v368
      %v370 = vrot.slane %v305, 1
      %v371 = vsel %vm360, %v368, %v370
      %v372 = vrot.slane %v306, 1
      %v373 = vsel %vm360, %v370, %v372
      %v374 = vrot.slane %v307, 1
      %v375 = vsel %vm360, %v372, %v374
      %v376 = vrot.slane %v308, 1
      %v377 = vsel %vm360, %v374, %v376
      %v378 = vrot.slane %v309, 1
      %v379 = vsel %vm360, %v376, %v378
      %v380 = vrot.slane %v310, 1
      %v381 = vsel %vm360, %v378, %v380
      %v382 = vrot.slane %v311, 1
      %v383 = vsel %vm360, %v380, %v382
      %v384 = vrot.slane %v312, 1
      %v385 = vsel %vm360, %v382, %v384
      %v386 = vrot.slane %v313, 1
      %v387 = vsel %vm360, %v384, %v386
      %v388 = vrot.slane %v314, 1
      %v389 = vsel %vm360, %v386, %v388
      %v390 = vrot.slane %v315, 1
      %v391 = vsel %vm360, %v388, %v390
      %v392 = vrot.slane %v316, 1
      %v393 = vsel %vm360, %v390, %v392
      %v394 = vrot.slane %v317, 1
      %v395 = vsel %vm360, %v392, %v394
      %v396 = vrot.slane %v318, 1
      %v397 = vsel %vm360, %v394, %v396
      %v398 = vrot.slane %v319, 1
      %v399 = vsel %vm360, %v396, %v398
      %v400 = vrot.slane %v320, 1
      %v401 = vsel %vm360, %v398, %v400
      %v402 = vrot.slane %v321, 1
      %v403 = vsel %vm360, %v400, %v402
      %v404 = vrot.slane %v322, 1
      %v405 = vsel %vm360, %v402, %v404
      %v406 = vrot.slane %v323, 1
      %v407 = vsel %vm360, %v404, %v406
      %v408 = vrot.slane %v324, 1
      %v409 = vsel %vm360, %v406, %v408
      %v410 = vrot.slane %v325, 1
      %v411 = vsel %vm360, %v408, %v410
      %v412 = vrot.slane %v326, 1
      %v413 = vsel %vm360, %v410, %v412
      %v414 = vrot.slane %v327, 1
      %v415 = vsel %vm360, %v412, %v414
      %v416 = vrot.slane %v328, 1
      %v417 = vsel %vm360, %v414, %v416
      %v418 = vrot.slane %v329, 1
      %v419 = vsel %vm360, %v416, %v418
      %v451 = vsel %vm360, %v418, %v361
      %vm452 = vcmask 1045504
      %v453 = vrot.slane %v300, 2
      %v454 = vrot.slane %v301, 2
      %v455 = vsel %vm452, %v453, %v454
      %v456 = vrot.slane %v302, 2
      %v457 = vsel %vm452, %v454, %v456
      %v458 = vrot.slane %v303, 2
      %v459 = vsel %vm452, %v456, %v458
      %v460 = vrot.slane %v304, 2
      %v461 = vsel %vm452, %v458, %v460
      %v462 = vrot.slane %v305, 2
      %v463 = vsel %vm452, %v460, %v462
      %v464 = vrot.slane %v306, 2
      %v465 = vsel %vm452, %v462, %v464
      %v466 = vrot.slane %v307, 2
      %v467 = vsel %vm452, %v464, %v466
      %v468 = vrot.slane %v308, 2
      %v469 = vsel %vm452, %v466, %v468
      %v470 = vrot.slane %v309, 2
      %v471 = vsel %vm452, %v468, %v470
      %v472 = vrot.slane %v310, 2
      %v473 = vsel %vm452, %v470, %v472
      %v474 = vrot.slane %v311, 2
      %v475 = vsel %vm452, %v472, %v474
      %v476 = vrot.slane %v312, 2
      %v477 = vsel %vm452, %v474, %v476
      %v478 = vrot.slane %v313, 2
      %v479 = vsel %vm452, %v476, %v478
      %v480 = vrot.slane %v314, 2
      %v481 = vsel %vm452, %v478, %v480
      %v482 = vrot.slane %v315, 2
      %v483 = vsel %vm452, %v480, %v482
      %v484 = vrot.slane %v316, 2
      %v485 = vsel %vm452, %v482, %v484
      %v486 = vrot.slane %v317, 2
      %v487 = vsel %vm452, %v484, %v486
      %v488 = vrot.slane %v318, 2
      %v489 = vsel %vm452, %v486, %v488
      %v490 = vrot.slane %v319, 2
      %v491 = vsel %vm452, %v488, %v490
      %v492 = vrot.slane %v320, 2
      %v493 = vsel %vm452, %v490, %v492
      %v494 = vrot.slane %v321, 2
      %v495 = vsel %vm452, %v492, %v494
      %v496 = vrot.slane %v322, 2
      %v497 = vsel %vm452, %v494, %v496
      %v498 = vrot.slane %v323, 2
      %v499 = vsel %vm452, %v496, %v498
      %v500 = vrot.slane %v324, 2
      %v501 = vsel %vm452, %v498, %v500
      %v502 = vrot.slane %v325, 2
      %v503 = vsel %vm452, %v500, %v502
      %v504 = vrot.slane %v326, 2
      %v505 = vsel %vm452, %v502, %v504
      %v506 = vrot.slane %v327, 2
      %v507 = vsel %vm452, %v504, %v506
      %v508 = vrot.slane %v328, 2
      %v509 = vsel %vm452, %v506, %v508
      %v510 = vrot.slane %v329, 2
      %v511 = vsel %vm452, %v508, %v510
      %v543 = vsel %vm452, %v510, %v453
      %v544 = vld [vmem:[%s2] sm:$0xff]
      %v545 = vld [vmem:[%s2 + $0x8] sm:$0xff]
      %v546 = vld [vmem:[%s2 + $0x10] sm:$0xff]
      %v547 = vld [vmem:[%s2 + $0x18] sm:$0xff]
      %v548 = vld [vmem:[%s2 + $0x20] sm:$0xff]
      %v549 = vld [vmem:[%s2 + $0x28] sm:$0xff]
      %v550 = vld [vmem:[%s2 + $0x30] sm:$0xff]
      %v551 = vld [vmem:[%s2 + $0x38] sm:$0xff]
      %v552 = vld [vmem:[%s2 + $0x40] sm:$0xff]
      %v553 = vld [vmem:[%s2 + $0x48] sm:$0xff]
      %v554 = vld [vmem:[%s2 + $0x50] sm:$0xff]
      %v555 = vld [vmem:[%s2 + $0x58] sm:$0xff]
      %v556 = vld [vmem:[%s2 + $0x60] sm:$0xff]
      %v557 = vld [vmem:[%s2 + $0x68] sm:$0xff]
      %v558 = vld [vmem:[%s2 + $0x70] sm:$0xff]
      %v559 = vld [vmem:[%s2 + $0x78] sm:$0xff]
      %v560 = vld [vmem:[%s2 + $0x80] sm:$0xff]
      %v561 = vld [vmem:[%s2 + $0x88] sm:$0xff]
      %v562 = vld [vmem:[%s2 + $0x90] sm:$0xff]
      %v563 = vld [vmem:[%s2 + $0x98] sm:$0xff]
      %v564 = vld [vmem:[%s2 + $0xa0] sm:$0xff]
      %v565 = vld [vmem:[%s2 + $0xa8] sm:$0xff]
      %v566 = vld [vmem:[%s2 + $0xb0] sm:$0xff]
      %v567 = vld [vmem:[%s2 + $0xb8] sm:$0xff]
      %v568 = vld [vmem:[%s2 + $0xc0] sm:$0xff]
      %v569 = vld [vmem:[%s2 + $0xc8] sm:$0xff]
      %v570 = vld [vmem:[%s2 + $0xd0] sm:$0xff]
      %v571 = vld [vmem:[%s2 + $0xd8] sm:$0xff]
      %v572 = vld [vmem:[%s2 + $0xe0] sm:$0xff]
      %v573 = vld [vmem:[%s2 + $0xe8] sm:$0xff]
      %v574 = vld [vmem:[%s2 + $0xf0] sm:$0xff]
      %v575 = vld [vmem:[%s2 + $0xf8] sm:$0xff]
      %v576 = vld [vmem:[%s2 + $0x100] sm:$0xff]
      %v577 = vld [vmem:[%s2 + $0x108] sm:$0xff]
      %v578 = vld [vmem:[%s2 + $0x110] sm:$0xff]
      %v579 = vld [vmem:[%s2 + $0x118] sm:$0xff]
      %v580 = vld [vmem:[%s2 + $0x120] sm:$0xff]
      %v581 = vld [vmem:[%s2 + $0x128] sm:$0xff]
      %v582 = vld [vmem:[%s2 + $0x130] sm:$0xff]
      %v583 = vld [vmem:[%s2 + $0x138] sm:$0xff]
      %v584 = vld [vmem:[%s2 + $0x140] sm:$0xff]
      %v585 = vld [vmem:[%s2 + $0x148] sm:$0xff]
      %v586 = vld [vmem:[%s2 + $0x150] sm:$0xff]
      %v587 = vld [vmem:[%s2 + $0x158] sm:$0xff]
      %v588 = vld [vmem:[%s2 + $0x160] sm:$0xff]
      %v589 = vld [vmem:[%s2 + $0x168] sm:$0xff]
      %v590 = vld [vmem:[%s2 + $0x170] sm:$0xff]
      %v591 = vld [vmem:[%s2 + $0x178] sm:$0xff]
      %s592 = scalar_lea.vmem %s2, 384
      %v593 = vld [vmem:[%s592] sm:$0xff]
      %v594 = vld [vmem:[%s592 + $0x8] sm:$0xff]
      %v595 = vld [vmem:[%s592 + $0x10] sm:$0xff]
      %v596 = vld [vmem:[%s592 + $0x18] sm:$0xff]
      %v597 = vld [vmem:[%s592 + $0x20] sm:$0xff]
      %v598 = vld [vmem:[%s592 + $0x28] sm:$0xff]
      %v599 = vld [vmem:[%s592 + $0x30] sm:$0xff]
      %v600 = vld [vmem:[%s592 + $0x38] sm:$0xff]
      %v601 = vld [vmem:[%s592 + $0x40] sm:$0xff]
      %v602 = vld [vmem:[%s592 + $0x48] sm:$0xff]
      %v603 = vld [vmem:[%s592 + $0x50] sm:$0xff]
      %v604 = vld [vmem:[%s592 + $0x58] sm:$0xff]
      %v605 = vld [vmem:[%s592 + $0x60] sm:$0xff]
      %v606 = vld [vmem:[%s592 + $0x68] sm:$0xff]
      %v607 = vld [vmem:[%s592 + $0x70] sm:$0xff]
      %v608 = vld [vmem:[%s592 + $0x78] sm:$0xff]
      %v609 = vld [vmem:[%s592 + $0x80] sm:$0xff]
      %v610 = vld [vmem:[%s592 + $0x88] sm:$0xff]
      %v611 = vld [vmem:[%s592 + $0x90] sm:$0xff]
      %v612 = vld [vmem:[%s592 + $0x98] sm:$0xff]
      %v613 = vld [vmem:[%s592 + $0xa0] sm:$0xff]
      %v614 = vld [vmem:[%s592 + $0xa8] sm:$0xff]
      %v615 = vld [vmem:[%s592 + $0xb0] sm:$0xff]
      %v616 = vld [vmem:[%s592 + $0xb8] sm:$0xff]
      %v617 = vld [vmem:[%s592 + $0xc0] sm:$0xff]
      %v618 = vld [vmem:[%s592 + $0xc8] sm:$0xff]
      %v619 = vld [vmem:[%s592 + $0xd0] sm:$0xff]
      %v620 = vld [vmem:[%s592 + $0xd8] sm:$0xff]
      %v621 = vld [vmem:[%s592 + $0xe0] sm:$0xff]
      %v622 = vld [vmem:[%s592 + $0xe8] sm:$0xff]
      %v623 = vld [vmem:[%s592 + $0xf0] sm:$0xff]
      %v624 = vld [vmem:[%s592 + $0xf8] sm:$0xff]
      %v625 = vld [vmem:[%s592 + $0x100] sm:$0xff]
      %v626 = vld [vmem:[%s592 + $0x108] sm:$0xff]
      %v627 = vld [vmem:[%s592 + $0x110] sm:$0xff]
      %v628 = vld [vmem:[%s592 + $0x118] sm:$0xff]
      %v629 = vld [vmem:[%s592 + $0x120] sm:$0xff]
      %v630 = vld [vmem:[%s592 + $0x128] sm:$0xff]
      %v631 = vld [vmem:[%s592 + $0x130] sm:$0xff]
      %v632 = vld [vmem:[%s592 + $0x138] sm:$0xff]
      %v633 = vld [vmem:[%s592 + $0x140] sm:$0xff]
      %v634 = vld [vmem:[%s592 + $0x148] sm:$0xff]
      %v635 = vld [vmem:[%s592 + $0x150] sm:$0xff]
      %v636 = vld [vmem:[%s592 + $0x158] sm:$0xff]
      %v637 = vld [vmem:[%s592 + $0x160] sm:$0xff]
      %v638 = vld [vmem:[%s592 + $0x168] sm:$0xff]
      %v639 = vld [vmem:[%s592 + $0x170] sm:$0xff]
      %v640 = vld [vmem:[%s592 + $0x178] sm:$0xff]
      %641 = vmatprep.subr.mxu0 0.0
      %642 = vmatpush1.msra.mxu0 %v608
      %643 = vmatprep.subr.mxu0 0.0
      %644 = vmatpush1.msra.mxu0 %v607
      %645 = vmatprep.subr.mxu0 0.0
      %646 = vmatpush1.msra.mxu0 %v606
      %647 = vmatprep.subr.mxu0 0.0
      %648 = vmatpush1.msra.mxu0 %v605
      %649 = vmatprep.subr.mxu0 0.0
      %650 = vmatpush1.msra.mxu0 %v604
      %651 = vmatprep.subr.mxu0 0.0
      %652 = vmatpush1.msra.mxu0 %v603
      %653 = vmatprep.subr.mxu0 0.0
      %654 = vmatpush1.msra.mxu0 %v602
      %655 = vmatprep.subr.mxu0 0.0
      %656 = vmatpush1.msra.mxu0 %v601
      %657 = vmatprep.subr.mxu0 0.0
      %658 = vmatpush1.msra.mxu0 %v600
      %659 = vmatprep.subr.mxu0 0.0
      %660 = vmatpush1.msra.mxu0 %v599
      %661 = vmatprep.subr.mxu0 0.0
      %662 = vmatpush1.msra.mxu0 %v598
      %663 = vmatprep.subr.mxu0 0.0
      %664 = vmatpush1.msra.mxu0 %v597
      %665 = vmatprep.subr.mxu0 0.0
      %666 = vmatpush1.msra.mxu0 %v596
      %667 = vmatprep.subr.mxu0 0.0
      %668 = vmatpush1.msra.mxu0 %v595
      %669 = vmatprep.subr.mxu0 0.0
      %670 = vmatpush1.msra.mxu0 %v594
      %671 = vmatprep.subr.mxu0 0.0
      %672 = vmatpush1.msra.mxu0 %v593
      %673 = vmatprep.subr.mxu0 0.0
      %674 = vmatpush2.msra.mxu0 %v624
      %675 = vmatprep.subr.mxu0 0.0
      %676 = vmatpush2.msra.mxu0 %v623
      %677 = vmatprep.subr.mxu0 0.0
      %678 = vmatpush2.msra.mxu0 %v622
      %679 = vmatprep.subr.mxu0 0.0
      %680 = vmatpush2.msra.mxu0 %v621
      %681 = vmatprep.subr.mxu0 0.0
      %682 = vmatpush2.msra.mxu0 %v620
      %683 = vmatprep.subr.mxu0 0.0
      %684 = vmatpush2.msra.mxu0 %v619
      %685 = vmatprep.subr.mxu0 0.0
      %686 = vmatpush2.msra.mxu0 %v618
      %687 = vmatprep.subr.mxu0 0.0
      %688 = vmatpush2.msra.mxu0 %v617
      %689 = vmatprep.subr.mxu0 0.0
      %690 = vmatpush2.msra.mxu0 %v616
      %691 = vmatprep.subr.mxu0 0.0
      %692 = vmatpush2.msra.mxu0 %v615
      %693 = vmatprep.subr.mxu0 0.0
      %694 = vmatpush2.msra.mxu0 %v614
      %695 = vmatprep.subr.mxu0 0.0
      %696 = vmatpush2.msra.mxu0 %v613
      %697 = vmatprep.subr.mxu0 0.0
      %698 = vmatpush2.msra.mxu0 %v612
      %699 = vmatprep.subr.mxu0 0.0
      %700 = vmatpush2.msra.mxu0 %v611
      %701 = vmatprep.subr.mxu0 0.0
      %702 = vmatpush2.msra.mxu0 %v610
      %703 = vmatprep.subr.mxu0 0.0
      %704 = vmatpush2.msra.mxu0 %v609
      %705 = vmatprep.mubr.f32.mxu0 %v369
      %706 = vmatmul.mubr.f32.gmra.mxu0 %v303
      %v707 = vpop.f32.mrf.mxu0
      %v708 = vadd.f32 0.0, %v707
      %v709 = vpop.f32.mrf.mxu0
      %710 = vmatprep.mubr.f32.mxu0 %v371
      %711 = vmatmul.mubr.f32.gmra.mxu0 %v304
      %v712 = vpop.f32.mrf.mxu0
      %v713 = vadd.f32 0.0, %v712
      %v714 = vpop.f32.mrf.mxu0
      %715 = vmatprep.mubr.f32.mxu0 %v373
      %716 = vmatmul.mubr.f32.gmra.mxu0 %v305
      %v717 = vpop.f32.mrf.mxu0
      %v718 = vadd.f32 0.0, %v717
      %v719 = vpop.f32.mrf.mxu0
      %720 = vmatprep.mubr.f32.mxu0 %v375
      %721 = vmatmul.mubr.f32.gmra.mxu0 %v306
      %v722 = vpop.f32.mrf.mxu0
      %v723 = vadd.f32 0.0, %v722
      %v724 = vpop.f32.mrf.mxu0
      %725 = vmatprep.mubr.f32.mxu0 %v377
      %726 = vmatmul.mubr.f32.gmra.mxu0 %v307
      %v727 = vpop.f32.mrf.mxu0
      %v728 = vadd.f32 0.0, %v727
      %v729 = vpop.f32.mrf.mxu0
      %730 = vmatprep.mubr.f32.mxu0 %v379
      %731 = vmatmul.mubr.f32.gmra.mxu0 %v308
      %v732 = vpop.f32.mrf.mxu0
      %v733 = vadd.f32 0.0, %v732
      %v734 = vpop.f32.mrf.mxu0
      %735 = vmatprep.mubr.f32.mxu0 %v381
      %736 = vmatmul.mubr.f32.gmra.mxu0 %v309
      %v737 = vpop.f32.mrf.mxu0
      %v738 = vadd.f32 0.0, %v737
      %v739 = vpop.f32.mrf.mxu0
      %740 = vmatprep.mubr.f32.mxu0 %v383
      %741 = vmatmul.mubr.f32.gmra.mxu0 %v310
      %v742 = vpop.f32.mrf.mxu0
      %v743 = vadd.f32 0.0, %v742
      %v744 = vpop.f32.mrf.mxu0
      %745 = vmatprep.mubr.f32.mxu0 %v385
      %746 = vmatmul.mubr.f32.gmra.mxu0 %v311
      %v747 = vpop.f32.mrf.mxu0
      %v748 = vadd.f32 0.0, %v747
      %v749 = vpop.f32.mrf.mxu0
      %750 = vmatprep.mubr.f32.mxu0 %v387
      %751 = vmatmul.mubr.f32.gmra.mxu0 %v312
      %v752 = vpop.f32.mrf.mxu0
      %v753 = vadd.f32 0.0, %v752
      %v754 = vpop.f32.mrf.mxu0
      %755 = vmatprep.mubr.f32.mxu0 %v389
      %756 = vmatmul.mubr.f32.gmra.mxu0 %v313
      %v757 = vpop.f32.mrf.mxu0
      %v758 = vadd.f32 0.0, %v757
      %v759 = vpop.f32.mrf.mxu0
      %760 = vmatprep.mubr.f32.mxu0 %v391
      %761 = vmatmul.mubr.f32.gmra.mxu0 %v314
      %v762 = vpop.f32.mrf.mxu0
      %v763 = vadd.f32 0.0, %v762
      %v764 = vpop.f32.mrf.mxu0
      %765 = vmatprep.mubr.f32.mxu0 %v393
      %766 = vmatmul.mubr.f32.gmra.mxu0 %v315
      %v767 = vpop.f32.mrf.mxu0
      %v768 = vadd.f32 0.0, %v767
      %v769 = vpop.f32.mrf.mxu0
      %770 = vmatprep.mubr.f32.mxu0 %v395
      %771 = vmatmul.mubr.f32.gmra.mxu0 %v316
      %v772 = vpop.f32.mrf.mxu0
      %v773 = vadd.f32 0.0, %v772
      %v774 = vpop.f32.mrf.mxu0
      %775 = vmatprep.mubr.f32.mxu0 %v397
      %776 = vmatmul.mubr.f32.gmra.mxu0 %v317
      %v777 = vpop.f32.mrf.mxu0
      %v778 = vadd.f32 0.0, %v777
      %v779 = vpop.f32.mrf.mxu0
      %780 = vmatprep.mubr.f32.mxu0 %v399
      %781 = vmatmul.mubr.f32.gmra.mxu0 %v318
      %v782 = vpop.f32.mrf.mxu0
      %v783 = vadd.f32 0.0, %v782
      %v784 = vpop.f32.mrf.mxu0
      %785 = vmatprep.mubr.f32.mxu0 %v401
      %786 = vmatmul.mubr.f32.gmra.mxu0 %v319
      %v787 = vpop.f32.mrf.mxu0
      %v788 = vadd.f32 0.0, %v787
      %v789 = vpop.f32.mrf.mxu0
      %790 = vmatprep.mubr.f32.mxu0 %v403
      %791 = vmatmul.mubr.f32.gmra.mxu0 %v320
      %v792 = vpop.f32.mrf.mxu0
      %v793 = vadd.f32 0.0, %v792
      %v794 = vpop.f32.mrf.mxu0
      %795 = vmatprep.mubr.f32.mxu0 %v405
      %796 = vmatmul.mubr.f32.gmra.mxu0 %v321
      %v797 = vpop.f32.mrf.mxu0
      %v798 = vadd.f32 0.0, %v797
      %v799 = vpop.f32.mrf.mxu0
      %800 = vmatprep.mubr.f32.mxu0 %v407
      %801 = vmatmul.mubr.f32.gmra.mxu0 %v322
      %v802 = vpop.f32.mrf.mxu0
      %v803 = vadd.f32 0.0, %v802
      %v804 = vpop.f32.mrf.mxu0
      %805 = vmatprep.mubr.f32.mxu0 %v409
      %806 = vmatmul.mubr.f32.gmra.mxu0 %v323
      %v807 = vpop.f32.mrf.mxu0
      %v808 = vadd.f32 0.0, %v807
      %v809 = vpop.f32.mrf.mxu0
      %810 = vmatprep.mubr.f32.mxu0 %v411
      %811 = vmatmul.mubr.f32.gmra.mxu0 %v324
      %v812 = vpop.f32.mrf.mxu0
      %v813 = vadd.f32 0.0, %v812
      %v814 = vpop.f32.mrf.mxu0
      %815 = vmatprep.mubr.f32.mxu0 %v413
      %816 = vmatmul.mubr.f32.gmra.mxu0 %v325
      %v817 = vpop.f32.mrf.mxu0
      %v818 = vadd.f32 0.0, %v817
      %v819 = vpop.f32.mrf.mxu0
      %820 = vmatprep.mubr.f32.mxu0 %v415
      %821 = vmatmul.mubr.f32.gmra.mxu0 %v326
      %v822 = vpop.f32.mrf.mxu0
      %v823 = vadd.f32 0.0, %v822
      %v824 = vpop.f32.mrf.mxu0
      %825 = vdwg.mxu0
      %826 = vmatprep.subr.mxu0 0.0
      %827 = vmatpush1.msra.mxu0 %v640
      %828 = vmatprep.subr.mxu0 0.0
      %829 = vmatpush1.msra.mxu0 %v639
      %830 = vmatprep.subr.mxu0 0.0
      %831 = vmatpush1.msra.mxu0 %v638
      %832 = vmatprep.subr.mxu0 0.0
      %833 = vmatpush1.msra.mxu0 %v637
      %834 = vmatprep.subr.mxu0 0.0
      %835 = vmatpush1.msra.mxu0 %v636
      %836 = vmatprep.subr.mxu0 0.0
      %837 = vmatpush1.msra.mxu0 %v635
      %838 = vmatprep.subr.mxu0 0.0
      %839 = vmatpush1.msra.mxu0 %v634
      %840 = vmatprep.subr.mxu0 0.0
      %841 = vmatpush1.msra.mxu0 %v633
      %842 = vmatprep.subr.mxu0 0.0
      %843 = vmatpush1.msra.mxu0 %v632
      %844 = vmatprep.subr.mxu0 0.0
      %845 = vmatpush1.msra.mxu0 %v631
      %846 = vmatprep.subr.mxu0 0.0
      %847 = vmatpush1.msra.mxu0 %v630
      %848 = vmatprep.subr.mxu0 0.0
      %849 = vmatpush1.msra.mxu0 %v629
      %850 = vmatprep.subr.mxu0 0.0
      %851 = vmatpush1.msra.mxu0 %v628
      %852 = vmatprep.subr.mxu0 0.0
      %853 = vmatpush1.msra.mxu0 %v627
      %854 = vmatprep.subr.mxu0 0.0
      %855 = vmatpush1.msra.mxu0 %v626
      %856 = vmatprep.subr.mxu0 0.0
      %857 = vmatpush1.msra.mxu0 %v625
      %858 = vmatprep.subr.mxu0 0.0
      %859 = vmatpush2.msra.mxu0 0.0
      %860 = vmatprep.subr.mxu0 0.0
      %861 = vmatpush2.msra.mxu0 0.0
      %862 = vmatprep.subr.mxu0 0.0
      %863 = vmatpush2.msra.mxu0 0.0
      %864 = vmatprep.subr.mxu0 0.0
      %865 = vmatpush2.msra.mxu0 0.0
      %866 = vmatprep.subr.mxu0 0.0
      %867 = vmatpush2.msra.mxu0 0.0
      %868 = vmatprep.subr.mxu0 0.0
      %869 = vmatpush2.msra.mxu0 0.0
      %870 = vmatprep.subr.mxu0 0.0
      %871 = vmatpush2.msra.mxu0 0.0
      %872 = vmatprep.subr.mxu0 0.0
      %873 = vmatpush2.msra.mxu0 0.0
      %874 = vmatprep.subr.mxu0 0.0
      %875 = vmatpush2.msra.mxu0 0.0
      %876 = vmatprep.subr.mxu0 0.0
      %877 = vmatpush2.msra.mxu0 0.0
      %878 = vmatprep.subr.mxu0 0.0
      %879 = vmatpush2.msra.mxu0 0.0
      %880 = vmatprep.subr.mxu0 0.0
      %881 = vmatpush2.msra.mxu0 0.0
      %882 = vmatprep.subr.mxu0 0.0
      %883 = vmatpush2.msra.mxu0 0.0
      %884 = vmatprep.subr.mxu0 0.0
      %885 = vmatpush2.msra.mxu0 0.0
      %886 = vmatprep.subr.mxu0 0.0
      %887 = vmatpush2.msra.mxu0 0.0
      %888 = vmatprep.subr.mxu0 0.0
      %889 = vmatpush2.msra.mxu0 0.0
      %890 = vmatprep.mubr.f32.mxu0 0.0
      %891 = vmatmul.mubr.f32.gmra.mxu0 %v461
      %v892 = vpop.f32.mrf.mxu0
      %v893 = vadd.f32 %v708, %v892
      %v894 = vpop.f32.mrf.mxu0
      %895 = vmatprep.mubr.f32.mxu0 0.0
      %896 = vmatmul.mubr.f32.gmra.mxu0 %v463
      %v897 = vpop.f32.mrf.mxu0
      %v898 = vadd.f32 %v713, %v897
      %v899 = vpop.f32.mrf.mxu0
      %900 = vmatprep.mubr.f32.mxu0 0.0
      %901 = vmatmul.mubr.f32.gmra.mxu0 %v465
      %v902 = vpop.f32.mrf.mxu0
      %v903 = vadd.f32 %v718, %v902
      %v904 = vpop.f32.mrf.mxu0
      %905 = vmatprep.mubr.f32.mxu0 0.0
      %906 = vmatmul.mubr.f32.gmra.mxu0 %v467
      %v907 = vpop.f32.mrf.mxu0
      %v908 = vadd.f32 %v723, %v907
      %v909 = vpop.f32.mrf.mxu0
      %910 = vmatprep.mubr.f32.mxu0 0.0
      %911 = vmatmul.mubr.f32.gmra.mxu0 %v469
      %v912 = vpop.f32.mrf.mxu0
      %v913 = vadd.f32 %v728, %v912
      %v914 = vpop.f32.mrf.mxu0
      %915 = vmatprep.mubr.f32.mxu0 0.0
      %916 = vmatmul.mubr.f32.gmra.mxu0 %v471
      %v917 = vpop.f32.mrf.mxu0
      %v918 = vadd.f32 %v733, %v917
      %v919 = vpop.f32.mrf.mxu0
      %920 = vmatprep.mubr.f32.mxu0 0.0
      %921 = vmatmul.mubr.f32.gmra.mxu0 %v473
      %v922 = vpop.f32.mrf.mxu0
      %v923 = vadd.f32 %v738, %v922
      %v924 = vpop.f32.mrf.mxu0
      %925 = vmatprep.mubr.f32.mxu0 0.0
      %926 = vmatmul.mubr.f32.gmra.mxu0 %v475
      %v927 = vpop.f32.mrf.mxu0
      %v928 = vadd.f32 %v743, %v927
      %v929 = vpop.f32.mrf.mxu0
      %930 = vmatprep.mubr.f32.mxu0 0.0
      %931 = vmatmul.mubr.f32.gmra.mxu0 %v477
      %v932 = vpop.f32.mrf.mxu0
      %v933 = vadd.f32 %v748, %v932
      %v934 = vpop.f32.mrf.mxu0
      %935 = vmatprep.mubr.f32.mxu0 0.0
      %936 = vmatmul.mubr.f32.gmra.mxu0 %v479
      %v937 = vpop.f32.mrf.mxu0
      %v938 = vadd.f32 %v753, %v937
      %v939 = vpop.f32.mrf.mxu0
      %940 = vmatprep.mubr.f32.mxu0 0.0
      %941 = vmatmul.mubr.f32.gmra.mxu0 %v481
      %v942 = vpop.f32.mrf.mxu0
      %v943 = vadd.f32 %v758, %v942
      %v944 = vpop.f32.mrf.mxu0
      %945 = vmatprep.mubr.f32.mxu0 0.0
      %946 = vmatmul.mubr.f32.gmra.mxu0 %v483
      %v947 = vpop.f32.mrf.mxu0
      %v948 = vadd.f32 %v763, %v947
      %v949 = vpop.f32.mrf.mxu0
      %950 = vmatprep.mubr.f32.mxu0 0.0
      %951 = vmatmul.mubr.f32.gmra.mxu0 %v485
      %v952 = vpop.f32.mrf.mxu0
      %v953 = vadd.f32 %v768, %v952
      %v954 = vpop.f32.mrf.mxu0
      %955 = vmatprep.mubr.f32.mxu0 0.0
      %956 = vmatmul.mubr.f32.gmra.mxu0 %v487
      %v957 = vpop.f32.mrf.mxu0
      %v958 = vadd.f32 %v773, %v957
      %v959 = vpop.f32.mrf.mxu0
      %960 = vmatprep.mubr.f32.mxu0 0.0
      %961 = vmatmul.mubr.f32.gmra.mxu0 %v489
      %v962 = vpop.f32.mrf.mxu0
      %v963 = vadd.f32 %v778, %v962
      %v964 = vpop.f32.mrf.mxu0
      %965 = vmatprep.mubr.f32.mxu0 0.0
      %966 = vmatmul.mubr.f32.gmra.mxu0 %v491
      %v967 = vpop.f32.mrf.mxu0
      %v968 = vadd.f32 %v783, %v967
      %v969 = vpop.f32.mrf.mxu0
      %970 = vmatprep.mubr.f32.mxu0 0.0
      %971 = vmatmul.mubr.f32.gmra.mxu0 %v493
      %v972 = vpop.f32.mrf.mxu0
      %v973 = vadd.f32 %v788, %v972
      %v974 = vpop.f32.mrf.mxu0
      %975 = vmatprep.mubr.f32.mxu0 0.0
      %976 = vmatmul.mubr.f32.gmra.mxu0 %v495
      %v977 = vpop.f32.mrf.mxu0
      %v978 = vadd.f32 %v793, %v977
      %v979 = vpop.f32.mrf.mxu0
      %980 = vmatprep.mubr.f32.mxu0 0.0
      %981 = vmatmul.mubr.f32.gmra.mxu0 %v497
      %v982 = vpop.f32.mrf.mxu0
      %v983 = vadd.f32 %v798, %v982
      %v984 = vpop.f32.mrf.mxu0
      %985 = vmatprep.mubr.f32.mxu0 0.0
      %986 = vmatmul.mubr.f32.gmra.mxu0 %v499
      %v987 = vpop.f32.mrf.mxu0
      %v988 = vadd.f32 %v803, %v987
      %v989 = vpop.f32.mrf.mxu0
      %990 = vmatprep.mubr.f32.mxu0 0.0
      %991 = vmatmul.mubr.f32.gmra.mxu0 %v501
      %v992 = vpop.f32.mrf.mxu0
      %v993 = vadd.f32 %v808, %v992
      %v994 = vpop.f32.mrf.mxu0
      %995 = vmatprep.mubr.f32.mxu0 0.0
      %996 = vmatmul.mubr.f32.gmra.mxu0 %v503
      %v997 = vpop.f32.mrf.mxu0
      %v998 = vadd.f32 %v813, %v997
      %v999 = vpop.f32.mrf.mxu0
      %1000 = vmatprep.mubr.f32.mxu0 0.0
      %1001 = vmatmul.mubr.f32.gmra.mxu0 %v505
      %v1002 = vpop.f32.mrf.mxu0
      %v1003 = vadd.f32 %v818, %v1002
      %v1004 = vpop.f32.mrf.mxu0
      %1005 = vmatprep.mubr.f32.mxu0 0.0
      %1006 = vmatmul.mubr.f32.gmra.mxu0 %v507
      %v1007 = vpop.f32.mrf.mxu0
      %v1008 = vadd.f32 %v823, %v1007
      %v1009 = vpop.f32.mrf.mxu0
      %1010 = vdwg.mxu0
      %1011 = vmatprep.subr.mxu0 0.0
      %1012 = vmatpush1.msra.mxu0 %v559
      %1013 = vmatprep.subr.mxu0 0.0
      %1014 = vmatpush1.msra.mxu0 %v558
      %1015 = vmatprep.subr.mxu0 0.0
      %1016 = vmatpush1.msra.mxu0 %v557
      %1017 = vmatprep.subr.mxu0 0.0
      %1018 = vmatpush1.msra.mxu0 %v556
      %1019 = vmatprep.subr.mxu0 0.0
      %1020 = vmatpush1.msra.mxu0 %v555
      %1021 = vmatprep.subr.mxu0 0.0
      %1022 = vmatpush1.msra.mxu0 %v554
      %1023 = vmatprep.subr.mxu0 0.0
      %1024 = vmatpush1.msra.mxu0 %v553
      %1025 = vmatprep.subr.mxu0 0.0
      %1026 = vmatpush1.msra.mxu0 %v552
      %1027 = vmatprep.subr.mxu0 0.0
      %1028 = vmatpush1.msra.mxu0 %v551
      %1029 = vmatprep.subr.mxu0 0.0
      %1030 = vmatpush1.msra.mxu0 %v550
      %1031 = vmatprep.subr.mxu0 0.0
      %1032 = vmatpush1.msra.mxu0 %v549
      %1033 = vmatprep.subr.mxu0 0.0
      %1034 = vmatpush1.msra.mxu0 %v548
      %1035 = vmatprep.subr.mxu0 0.0
      %1036 = vmatpush1.msra.mxu0 %v547
      %1037 = vmatprep.subr.mxu0 0.0
      %1038 = vmatpush1.msra.mxu0 %v546
      %1039 = vmatprep.subr.mxu0 0.0
      %1040 = vmatpush1.msra.mxu0 %v545
      %1041 = vmatprep.subr.mxu0 0.0
      %1042 = vmatpush1.msra.mxu0 %v544
      %1043 = vmatprep.subr.mxu0 0.0
      %1044 = vmatpush2.msra.mxu0 %v575
      %1045 = vmatprep.subr.mxu0 0.0
      %1046 = vmatpush2.msra.mxu0 %v574
      %1047 = vmatprep.subr.mxu0 0.0
      %1048 = vmatpush2.msra.mxu0 %v573
      %1049 = vmatprep.subr.mxu0 0.0
      %1050 = vmatpush2.msra.mxu0 %v572
      %1051 = vmatprep.subr.mxu0 0.0
      %1052 = vmatpush2.msra.mxu0 %v571
      %1053 = vmatprep.subr.mxu0 0.0
      %1054 = vmatpush2.msra.mxu0 %v570
      %1055 = vmatprep.subr.mxu0 0.0
      %1056 = vmatpush2.msra.mxu0 %v569
      %1057 = vmatprep.subr.mxu0 0.0
      %1058 = vmatpush2.msra.mxu0 %v568
      %1059 = vmatprep.subr.mxu0 0.0
      %1060 = vmatpush2.msra.mxu0 %v567
      %1061 = vmatprep.subr.mxu0 0.0
      %1062 = vmatpush2.msra.mxu0 %v566
      %1063 = vmatprep.subr.mxu0 0.0
      %1064 = vmatpush2.msra.mxu0 %v565
      %1065 = vmatprep.subr.mxu0 0.0
      %1066 = vmatpush2.msra.mxu0 %v564
      %1067 = vmatprep.subr.mxu0 0.0
      %1068 = vmatpush2.msra.mxu0 %v563
      %1069 = vmatprep.subr.mxu0 0.0
      %1070 = vmatpush2.msra.mxu0 %v562
      %1071 = vmatprep.subr.mxu0 0.0
      %1072 = vmatpush2.msra.mxu0 %v561
      %1073 = vmatprep.subr.mxu0 0.0
      %1074 = vmatpush2.msra.mxu0 %v560
      %1075 = vmatprep.mubr.f32.mxu0 %v363
      %1076 = vmatmul.mubr.f32.gmra.mxu0 %v300
      %v1077 = vpop.f32.mrf.mxu0
      %v1078 = vadd.f32 %v893, %v1077
      %v1079 = vpop.f32.mrf.mxu0
      %1080 = vmatprep.mubr.f32.mxu0 %v365
      %1081 = vmatmul.mubr.f32.gmra.mxu0 %v301
      %v1082 = vpop.f32.mrf.mxu0
      %v1083 = vadd.f32 %v898, %v1082
      %v1084 = vpop.f32.mrf.mxu0
      %1085 = vmatprep.mubr.f32.mxu0 %v367
      %1086 = vmatmul.mubr.f32.gmra.mxu0 %v302
      %v1087 = vpop.f32.mrf.mxu0
      %v1088 = vadd.f32 %v903, %v1087
      %v1089 = vpop.f32.mrf.mxu0
      %1090 = vmatprep.mubr.f32.mxu0 %v369
      %1091 = vmatmul.mubr.f32.gmra.mxu0 %v303
      %v1092 = vpop.f32.mrf.mxu0
      %v1093 = vadd.f32 %v908, %v1092
      %v1094 = vpop.f32.mrf.mxu0
      %1095 = vmatprep.mubr.f32.mxu0 %v371
      %1096 = vmatmul.mubr.f32.gmra.mxu0 %v304
      %v1097 = vpop.f32.mrf.mxu0
      %v1098 = vadd.f32 %v913, %v1097
      %v1099 = vpop.f32.mrf.mxu0
      %1100 = vmatprep.mubr.f32.mxu0 %v373
      %1101 = vmatmul.mubr.f32.gmra.mxu0 %v305
      %v1102 = vpop.f32.mrf.mxu0
      %v1103 = vadd.f32 %v918, %v1102
      %v1104 = vpop.f32.mrf.mxu0
      %1105 = vmatprep.mubr.f32.mxu0 %v375
      %1106 = vmatmul.mubr.f32.gmra.mxu0 %v306
      %v1107 = vpop.f32.mrf.mxu0
      %v1108 = vadd.f32 %v923, %v1107
      %v1109 = vpop.f32.mrf.mxu0
      %1110 = vmatprep.mubr.f32.mxu0 %v377
      %1111 = vmatmul.mubr.f32.gmra.mxu0 %v307
      %v1112 = vpop.f32.mrf.mxu0
      %v1113 = vadd.f32 %v928, %v1112
      %v1114 = vpop.f32.mrf.mxu0
      %1115 = vmatprep.mubr.f32.mxu0 %v379
      %1116 = vmatmul.mubr.f32.gmra.mxu0 %v308
      %v1117 = vpop.f32.mrf.mxu0
      %v1118 = vadd.f32 %v933, %v1117
      %v1119 = vpop.f32.mrf.mxu0
      %1120 = vmatprep.mubr.f32.mxu0 %v381
      %1121 = vmatmul.mubr.f32.gmra.mxu0 %v309
      %v1122 = vpop.f32.mrf.mxu0
      %v1123 = vadd.f32 %v938, %v1122
      %v1124 = vpop.f32.mrf.mxu0
      %1125 = vmatprep.mubr.f32.mxu0 %v383
      %1126 = vmatmul.mubr.f32.gmra.mxu0 %v310
      %v1127 = vpop.f32.mrf.mxu0
      %v1128 = vadd.f32 %v943, %v1127
      %v1129 = vpop.f32.mrf.mxu0
      %1130 = vmatprep.mubr.f32.mxu0 %v385
      %1131 = vmatmul.mubr.f32.gmra.mxu0 %v311
      %v1132 = vpop.f32.mrf.mxu0
      %v1133 = vadd.f32 %v948, %v1132
      %v1134 = vpop.f32.mrf.mxu0
      %1135 = vmatprep.mubr.f32.mxu0 %v387
      %1136 = vmatmul.mubr.f32.gmra.mxu0 %v312
      %v1137 = vpop.f32.mrf.mxu0
      %v1138 = vadd.f32 %v953, %v1137
      %v1139 = vpop.f32.mrf.mxu0
      %1140 = vmatprep.mubr.f32.mxu0 %v389
      %1141 = vmatmul.mubr.f32.gmra.mxu0 %v313
      %v1142 = vpop.f32.mrf.mxu0
      %v1143 = vadd.f32 %v958, %v1142
      %v1144 = vpop.f32.mrf.mxu0
      %1145 = vmatprep.mubr.f32.mxu0 %v391
      %1146 = vmatmul.mubr.f32.gmra.mxu0 %v314
      %v1147 = vpop.f32.mrf.mxu0
      %v1148 = vadd.f32 %v963, %v1147
      %v1149 = vpop.f32.mrf.mxu0
      %1150 = vmatprep.mubr.f32.mxu0 %v393
      %1151 = vmatmul.mubr.f32.gmra.mxu0 %v315
      %v1152 = vpop.f32.mrf.mxu0
      %v1153 = vadd.f32 %v968, %v1152
      %v1154 = vpop.f32.mrf.mxu0
      %1155 = vmatprep.mubr.f32.mxu0 %v395
      %1156 = vmatmul.mubr.f32.gmra.mxu0 %v316
      %v1157 = vpop.f32.mrf.mxu0
      %v1158 = vadd.f32 %v973, %v1157
      %v1159 = vpop.f32.mrf.mxu0
      %1160 = vmatprep.mubr.f32.mxu0 %v397
      %1161 = vmatmul.mubr.f32.gmra.mxu0 %v317
      %v1162 = vpop.f32.mrf.mxu0
      %v1163 = vadd.f32 %v978, %v1162
      %v1164 = vpop.f32.mrf.mxu0
      %1165 = vmatprep.mubr.f32.mxu0 %v399
      %1166 = vmatmul.mubr.f32.gmra.mxu0 %v318
      %v1167 = vpop.f32.mrf.mxu0
      %v1168 = vadd.f32 %v983, %v1167
      %v1169 = vpop.f32.mrf.mxu0
      %1170 = vmatprep.mubr.f32.mxu0 %v401
      %1171 = vmatmul.mubr.f32.gmra.mxu0 %v319
      %v1172 = vpop.f32.mrf.mxu0
      %v1173 = vadd.f32 %v988, %v1172
      %v1174 = vpop.f32.mrf.mxu0
      %1175 = vmatprep.mubr.f32.mxu0 %v403
      %1176 = vmatmul.mubr.f32.gmra.mxu0 %v320
      %v1177 = vpop.f32.mrf.mxu0
      %v1178 = vadd.f32 %v993, %v1177
      %v1179 = vpop.f32.mrf.mxu0
      %1180 = vmatprep.mubr.f32.mxu0 %v405
      %1181 = vmatmul.mubr.f32.gmra.mxu0 %v321
      %v1182 = vpop.f32.mrf.mxu0
      %v1183 = vadd.f32 %v998, %v1182
      %v1184 = vpop.f32.mrf.mxu0
      %1185 = vmatprep.mubr.f32.mxu0 %v407
      %1186 = vmatmul.mubr.f32.gmra.mxu0 %v322
      %v1187 = vpop.f32.mrf.mxu0
      %v1188 = vadd.f32 %v1003, %v1187
      %v1189 = vpop.f32.mrf.mxu0
      %1190 = vmatprep.mubr.f32.mxu0 %v409
      %1191 = vmatmul.mubr.f32.gmra.mxu0 %v323
      %v1192 = vpop.f32.mrf.mxu0
      %v1193 = vadd.f32 %v1008, %v1192
      %v1194 = vpop.f32.mrf.mxu0
      %1195 = vdwg.mxu0
      %1196 = vmatprep.subr.mxu0 0.0
      %1197 = vmatpush1.msra.mxu0 %v591
      %1198 = vmatprep.subr.mxu0 0.0
      %1199 = vmatpush1.msra.mxu0 %v590
      %1200 = vmatprep.subr.mxu0 0.0
      %1201 = vmatpush1.msra.mxu0 %v589
      %1202 = vmatprep.subr.mxu0 0.0
      %1203 = vmatpush1.msra.mxu0 %v588
      %1204 = vmatprep.subr.mxu0 0.0
      %1205 = vmatpush1.msra.mxu0 %v587
      %1206 = vmatprep.subr.mxu0 0.0
      %1207 = vmatpush1.msra.mxu0 %v586
      %1208 = vmatprep.subr.mxu0 0.0
      %1209 = vmatpush1.msra.mxu0 %v585
      %1210 = vmatprep.subr.mxu0 0.0
      %1211 = vmatpush1.msra.mxu0 %v584
      %1212 = vmatprep.subr.mxu0 0.0
      %1213 = vmatpush1.msra.mxu0 %v583
      %1214 = vmatprep.subr.mxu0 0.0
      %1215 = vmatpush1.msra.mxu0 %v582
      %1216 = vmatprep.subr.mxu0 0.0
      %1217 = vmatpush1.msra.mxu0 %v581
      %1218 = vmatprep.subr.mxu0 0.0
      %1219 = vmatpush1.msra.mxu0 %v580
      %1220 = vmatprep.subr.mxu0 0.0
      %1221 = vmatpush1.msra.mxu0 %v579
      %1222 = vmatprep.subr.mxu0 0.0
      %1223 = vmatpush1.msra.mxu0 %v578
      %1224 = vmatprep.subr.mxu0 0.0
      %1225 = vmatpush1.msra.mxu0 %v577
      %1226 = vmatprep.subr.mxu0 0.0
      %1227 = vmatpush1.msra.mxu0 %v576
      %1228 = vmatprep.subr.mxu0 0.0
      %1229 = vmatpush2.msra.mxu0 0.0
      %1230 = vmatprep.subr.mxu0 0.0
      %1231 = vmatpush2.msra.mxu0 0.0
      %1232 = vmatprep.subr.mxu0 0.0
      %1233 = vmatpush2.msra.mxu0 0.0
      %1234 = vmatprep.subr.mxu0 0.0
      %1235 = vmatpush2.msra.mxu0 0.0
      %1236 = vmatprep.subr.mxu0 0.0
      %1237 = vmatpush2.msra.mxu0 0.0
      %1238 = vmatprep.subr.mxu0 0.0
      %1239 = vmatpush2.msra.mxu0 0.0
      %1240 = vmatprep.subr.mxu0 0.0
      %1241 = vmatpush2.msra.mxu0 0.0
      %1242 = vmatprep.subr.mxu0 0.0
      %1243 = vmatpush2.msra.mxu0 0.0
      %1244 = vmatprep.subr.mxu0 0.0
      %1245 = vmatpush2.msra.mxu0 0.0
      %1246 = vmatprep.subr.mxu0 0.0
      %1247 = vmatpush2.msra.mxu0 0.0
      %1248 = vmatprep.subr.mxu0 0.0
      %1249 = vmatpush2.msra.mxu0 0.0
      %1250 = vmatprep.subr.mxu0 0.0
      %1251 = vmatpush2.msra.mxu0 0.0
      %1252 = vmatprep.subr.mxu0 0.0
      %1253 = vmatpush2.msra.mxu0 0.0
      %1254 = vmatprep.subr.mxu0 0.0
      %1255 = vmatpush2.msra.mxu0 0.0
      %1256 = vmatprep.subr.mxu0 0.0
      %1257 = vmatpush2.msra.mxu0 0.0
      %1258 = vmatprep.subr.mxu0 0.0
      %1259 = vmatpush2.msra.mxu0 0.0
      %1260 = vmatprep.mubr.f32.mxu0 0.0
      %1261 = vmatmul.mubr.f32.gmra.mxu0 %v455
      %v1262 = vpop.f32.mrf.mxu0
      %v1263 = vadd.f32 %v1078, %v1262
      %v1264 = vpop.f32.mrf.mxu0
      %1265 = vmatprep.mubr.f32.mxu0 0.0
      %1266 = vmatmul.mubr.f32.gmra.mxu0 %v457
      %v1267 = vpop.f32.mrf.mxu0
      %v1268 = vadd.f32 %v1083, %v1267
      %v1269 = vpop.f32.mrf.mxu0
      %1270 = vmatprep.mubr.f32.mxu0 0.0
      %1271 = vmatmul.mubr.f32.gmra.mxu0 %v459
      %v1272 = vpop.f32.mrf.mxu0
      %v1273 = vadd.f32 %v1088, %v1272
      %v1274 = vpop.f32.mrf.mxu0
      %1275 = vmatprep.mubr.f32.mxu0 0.0
      %1276 = vmatmul.mubr.f32.gmra.mxu0 %v461
      %v1277 = vpop.f32.mrf.mxu0
      %v1278 = vadd.f32 %v1093, %v1277
      %v1279 = vpop.f32.mrf.mxu0
      %1280 = vmatprep.mubr.f32.mxu0 0.0
      %1281 = vmatmul.mubr.f32.gmra.mxu0 %v463
      %v1282 = vpop.f32.mrf.mxu0
      %v1283 = vadd.f32 %v1098, %v1282
      %v1284 = vpop.f32.mrf.mxu0
      %1285 = vmatprep.mubr.f32.mxu0 0.0
      %1286 = vmatmul.mubr.f32.gmra.mxu0 %v465
      %v1287 = vpop.f32.mrf.mxu0
      %v1288 = vadd.f32 %v1103, %v1287
      %v1289 = vpop.f32.mrf.mxu0
      %1290 = vmatprep.mubr.f32.mxu0 0.0
      %1291 = vmatmul.mubr.f32.gmra.mxu0 %v467
      %v1292 = vpop.f32.mrf.mxu0
      %v1293 = vadd.f32 %v1108, %v1292
      %v1294 = vpop.f32.mrf.mxu0
      %1295 = vmatprep.mubr.f32.mxu0 0.0
      %1296 = vmatmul.mubr.f32.gmra.mxu0 %v469
      %v1297 = vpop.f32.mrf.mxu0
      %v1298 = vadd.f32 %v1113, %v1297
      %v1299 = vpop.f32.mrf.mxu0
      %1300 = vmatprep.mubr.f32.mxu0 0.0
      %1301 = vmatmul.mubr.f32.gmra.mxu0 %v471
      %v1302 = vpop.f32.mrf.mxu0
      %v1303 = vadd.f32 %v1118, %v1302
      %v1304 = vpop.f32.mrf.mxu0
      %1305 = vmatprep.mubr.f32.mxu0 0.0
      %1306 = vmatmul.mubr.f32.gmra.mxu0 %v473
      %v1307 = vpop.f32.mrf.mxu0
      %v1308 = vadd.f32 %v1123, %v1307
      %v1309 = vpop.f32.mrf.mxu0
      %1310 = vmatprep.mubr.f32.mxu0 0.0
      %1311 = vmatmul.mubr.f32.gmra.mxu0 %v475
      %v1312 = vpop.f32.mrf.mxu0
      %v1313 = vadd.f32 %v1128, %v1312
      %v1314 = vpop.f32.mrf.mxu0
      %1315 = vmatprep.mubr.f32.mxu0 0.0
      %1316 = vmatmul.mubr.f32.gmra.mxu0 %v477
      %v1317 = vpop.f32.mrf.mxu0
      %v1318 = vadd.f32 %v1133, %v1317
      %v1319 = vpop.f32.mrf.mxu0
      %1320 = vmatprep.mubr.f32.mxu0 0.0
      %1321 = vmatmul.mubr.f32.gmra.mxu0 %v479
      %v1322 = vpop.f32.mrf.mxu0
      %v1323 = vadd.f32 %v1138, %v1322
      %v1324 = vpop.f32.mrf.mxu0
      %1325 = vmatprep.mubr.f32.mxu0 0.0
      %1326 = vmatmul.mubr.f32.gmra.mxu0 %v481
      %v1327 = vpop.f32.mrf.mxu0
      %v1328 = vadd.f32 %v1143, %v1327
      %v1329 = vpop.f32.mrf.mxu0
      %1330 = vmatprep.mubr.f32.mxu0 0.0
      %1331 = vmatmul.mubr.f32.gmra.mxu0 %v483
      %v1332 = vpop.f32.mrf.mxu0
      %v1333 = vadd.f32 %v1148, %v1332
      %v1334 = vpop.f32.mrf.mxu0
      %1335 = vmatprep.mubr.f32.mxu0 0.0
      %1336 = vmatmul.mubr.f32.gmra.mxu0 %v485
      %v1337 = vpop.f32.mrf.mxu0
      %v1338 = vadd.f32 %v1153, %v1337
      %v1339 = vpop.f32.mrf.mxu0
      %1340 = vmatprep.mubr.f32.mxu0 0.0
      %1341 = vmatmul.mubr.f32.gmra.mxu0 %v487
      %v1342 = vpop.f32.mrf.mxu0
      %v1343 = vadd.f32 %v1158, %v1342
      %v1344 = vpop.f32.mrf.mxu0
      %1345 = vmatprep.mubr.f32.mxu0 0.0
      %1346 = vmatmul.mubr.f32.gmra.mxu0 %v489
      %v1347 = vpop.f32.mrf.mxu0
      %v1348 = vadd.f32 %v1163, %v1347
      %v1349 = vpop.f32.mrf.mxu0
      %1350 = vmatprep.mubr.f32.mxu0 0.0
      %1351 = vmatmul.mubr.f32.gmra.mxu0 %v491
      %v1352 = vpop.f32.mrf.mxu0
      %v1353 = vadd.f32 %v1168, %v1352
      %v1354 = vpop.f32.mrf.mxu0
      %1355 = vmatprep.mubr.f32.mxu0 0.0
      %1356 = vmatmul.mubr.f32.gmra.mxu0 %v493
      %v1357 = vpop.f32.mrf.mxu0
      %v1358 = vadd.f32 %v1173, %v1357
      %v1359 = vpop.f32.mrf.mxu0
      %1360 = vmatprep.mubr.f32.mxu0 0.0
      %1361 = vmatmul.mubr.f32.gmra.mxu0 %v495
      %v1362 = vpop.f32.mrf.mxu0
      %v1363 = vadd.f32 %v1178, %v1362
      %v1364 = vpop.f32.mrf.mxu0
      %1365 = vmatprep.mubr.f32.mxu0 0.0
      %1366 = vmatmul.mubr.f32.gmra.mxu0 %v497
      %v1367 = vpop.f32.mrf.mxu0
      %v1368 = vadd.f32 %v1183, %v1367
      %v1369 = vpop.f32.mrf.mxu0
      %1370 = vmatprep.mubr.f32.mxu0 0.0
      %1371 = vmatmul.mubr.f32.gmra.mxu0 %v499
      %v1372 = vpop.f32.mrf.mxu0
      %v1373 = vadd.f32 %v1188, %v1372
      %v1374 = vpop.f32.mrf.mxu0
      %1375 = vmatprep.mubr.f32.mxu0 0.0
      %1376 = vmatmul.mubr.f32.gmra.mxu0 %v501
      %v1377 = vpop.f32.mrf.mxu0
      %v1378 = vadd.f32 %v1193, %v1377
      %v1379 = vpop.f32.mrf.mxu0
      %1380 = vdwg.mxu0
      %s1381 = scalar_lea.vmem %s2, 768
      %v1382 = vld [vmem:[%s1381] sm:$0xff]
      %v1383 = vld [vmem:[%s1381 + $0x8] sm:$0xff]
      %v1384 = vld [vmem:[%s1381 + $0x10] sm:$0xff]
      %v1385 = vld [vmem:[%s1381 + $0x18] sm:$0xff]
      %v1386 = vld [vmem:[%s1381 + $0x20] sm:$0xff]
      %v1387 = vld [vmem:[%s1381 + $0x28] sm:$0xff]
      %v1388 = vld [vmem:[%s1381 + $0x30] sm:$0xff]
      %v1389 = vld [vmem:[%s1381 + $0x38] sm:$0xff]
      %v1390 = vld [vmem:[%s1381 + $0x40] sm:$0xff]
      %v1391 = vld [vmem:[%s1381 + $0x48] sm:$0xff]
      %v1392 = vld [vmem:[%s1381 + $0x50] sm:$0xff]
      %v1393 = vld [vmem:[%s1381 + $0x58] sm:$0xff]
      %v1394 = vld [vmem:[%s1381 + $0x60] sm:$0xff]
      %v1395 = vld [vmem:[%s1381 + $0x68] sm:$0xff]
      %v1396 = vld [vmem:[%s1381 + $0x70] sm:$0xff]
      %v1397 = vld [vmem:[%s1381 + $0x78] sm:$0xff]
      %v1398 = vld [vmem:[%s1381 + $0x80] sm:$0xff]
      %v1399 = vld [vmem:[%s1381 + $0x88] sm:$0xff]
      %v1400 = vld [vmem:[%s1381 + $0x90] sm:$0xff]
      %v1401 = vld [vmem:[%s1381 + $0x98] sm:$0xff]
      %v1402 = vld [vmem:[%s1381 + $0xa0] sm:$0xff]
      %v1403 = vld [vmem:[%s1381 + $0xa8] sm:$0xff]
      %v1404 = vld [vmem:[%s1381 + $0xb0] sm:$0xff]
      %v1405 = vld [vmem:[%s1381 + $0xb8] sm:$0xff]
      %v1406 = vld [vmem:[%s1381 + $0xc0] sm:$0xff]
      %v1407 = vld [vmem:[%s1381 + $0xc8] sm:$0xff]
      %v1408 = vld [vmem:[%s1381 + $0xd0] sm:$0xff]
      %v1409 = vld [vmem:[%s1381 + $0xd8] sm:$0xff]
      %v1410 = vld [vmem:[%s1381 + $0xe0] sm:$0xff]
      %v1411 = vld [vmem:[%s1381 + $0xe8] sm:$0xff]
      %v1412 = vld [vmem:[%s1381 + $0xf0] sm:$0xff]
      %v1413 = vld [vmem:[%s1381 + $0xf8] sm:$0xff]
      %v1414 = vld [vmem:[%s1381 + $0x100] sm:$0xff]
      %v1415 = vld [vmem:[%s1381 + $0x108] sm:$0xff]
      %v1416 = vld [vmem:[%s1381 + $0x110] sm:$0xff]
      %v1417 = vld [vmem:[%s1381 + $0x118] sm:$0xff]
      %v1418 = vld [vmem:[%s1381 + $0x120] sm:$0xff]
      %v1419 = vld [vmem:[%s1381 + $0x128] sm:$0xff]
      %v1420 = vld [vmem:[%s1381 + $0x130] sm:$0xff]
      %v1421 = vld [vmem:[%s1381 + $0x138] sm:$0xff]
      %v1422 = vld [vmem:[%s1381 + $0x140] sm:$0xff]
      %v1423 = vld [vmem:[%s1381 + $0x148] sm:$0xff]
      %v1424 = vld [vmem:[%s1381 + $0x150] sm:$0xff]
      %v1425 = vld [vmem:[%s1381 + $0x158] sm:$0xff]
      %v1426 = vld [vmem:[%s1381 + $0x160] sm:$0xff]
      %v1427 = vld [vmem:[%s1381 + $0x168] sm:$0xff]
      %v1428 = vld [vmem:[%s1381 + $0x170] sm:$0xff]
      %v1429 = vld [vmem:[%s1381 + $0x178] sm:$0xff]
      %1430 = vmatprep.subr.mxu0 0.0
      %1431 = vmatpush1.msra.mxu0 %v1397
      %1432 = vmatprep.subr.mxu0 0.0
      %1433 = vmatpush1.msra.mxu0 %v1396
      %1434 = vmatprep.subr.mxu0 0.0
      %1435 = vmatpush1.msra.mxu0 %v1395
      %1436 = vmatprep.subr.mxu0 0.0
      %1437 = vmatpush1.msra.mxu0 %v1394
      %1438 = vmatprep.subr.mxu0 0.0
      %1439 = vmatpush1.msra.mxu0 %v1393
      %1440 = vmatprep.subr.mxu0 0.0
      %1441 = vmatpush1.msra.mxu0 %v1392
      %1442 = vmatprep.subr.mxu0 0.0
      %1443 = vmatpush1.msra.mxu0 %v1391
      %1444 = vmatprep.subr.mxu0 0.0
      %1445 = vmatpush1.msra.mxu0 %v1390
      %1446 = vmatprep.subr.mxu0 0.0
      %1447 = vmatpush1.msra.mxu0 %v1389
      %1448 = vmatprep.subr.mxu0 0.0
      %1449 = vmatpush1.msra.mxu0 %v1388
      %1450 = vmatprep.subr.mxu0 0.0
      %1451 = vmatpush1.msra.mxu0 %v1387
      %1452 = vmatprep.subr.mxu0 0.0
      %1453 = vmatpush1.msra.mxu0 %v1386
      %1454 = vmatprep.subr.mxu0 0.0
      %1455 = vmatpush1.msra.mxu0 %v1385
      %1456 = vmatprep.subr.mxu0 0.0
      %1457 = vmatpush1.msra.mxu0 %v1384
      %1458 = vmatprep.subr.mxu0 0.0
      %1459 = vmatpush1.msra.mxu0 %v1383
      %1460 = vmatprep.subr.mxu0 0.0
      %1461 = vmatpush1.msra.mxu0 %v1382
      %1462 = vmatprep.subr.mxu0 0.0
      %1463 = vmatpush2.msra.mxu0 %v1413
      %1464 = vmatprep.subr.mxu0 0.0
      %1465 = vmatpush2.msra.mxu0 %v1412
      %1466 = vmatprep.subr.mxu0 0.0
      %1467 = vmatpush2.msra.mxu0 %v1411
      %1468 = vmatprep.subr.mxu0 0.0
      %1469 = vmatpush2.msra.mxu0 %v1410
      %1470 = vmatprep.subr.mxu0 0.0
      %1471 = vmatpush2.msra.mxu0 %v1409
      %1472 = vmatprep.subr.mxu0 0.0
      %1473 = vmatpush2.msra.mxu0 %v1408
      %1474 = vmatprep.subr.mxu0 0.0
      %1475 = vmatpush2.msra.mxu0 %v1407
      %1476 = vmatprep.subr.mxu0 0.0
      %1477 = vmatpush2.msra.mxu0 %v1406
      %1478 = vmatprep.subr.mxu0 0.0
      %1479 = vmatpush2.msra.mxu0 %v1405
      %1480 = vmatprep.subr.mxu0 0.0
      %1481 = vmatpush2.msra.mxu0 %v1404
      %1482 = vmatprep.subr.mxu0 0.0
      %1483 = vmatpush2.msra.mxu0 %v1403
      %1484 = vmatprep.subr.mxu0 0.0
      %1485 = vmatpush2.msra.mxu0 %v1402
      %1486 = vmatprep.subr.mxu0 0.0
      %1487 = vmatpush2.msra.mxu0 %v1401
      %1488 = vmatprep.subr.mxu0 0.0
      %1489 = vmatpush2.msra.mxu0 %v1400
      %1490 = vmatprep.subr.mxu0 0.0
      %1491 = vmatpush2.msra.mxu0 %v1399
      %1492 = vmatprep.subr.mxu0 0.0
      %1493 = vmatpush2.msra.mxu0 %v1398
      %1494 = vmatprep.mubr.f32.mxu0 %v375
      %1495 = vmatmul.mubr.f32.gmra.mxu0 %v306
      %v1496 = vpop.f32.mrf.mxu0
      %v1497 = vadd.f32 0.0, %v1496
      %v1498 = vpop.f32.mrf.mxu0
      %1499 = vmatprep.mubr.f32.mxu0 %v377
      %1500 = vmatmul.mubr.f32.gmra.mxu0 %v307
      %v1501 = vpop.f32.mrf.mxu0
      %v1502 = vadd.f32 0.0, %v1501
      %v1503 = vpop.f32.mrf.mxu0
      %1504 = vmatprep.mubr.f32.mxu0 %v379
      %1505 = vmatmul.mubr.f32.gmra.mxu0 %v308
      %v1506 = vpop.f32.mrf.mxu0
      %v1507 = vadd.f32 0.0, %v1506
      %v1508 = vpop.f32.mrf.mxu0
      %1509 = vmatprep.mubr.f32.mxu0 %v381
      %1510 = vmatmul.mubr.f32.gmra.mxu0 %v309
      %v1511 = vpop.f32.mrf.mxu0
      %v1512 = vadd.f32 0.0, %v1511
      %v1513 = vpop.f32.mrf.mxu0
      %1514 = vmatprep.mubr.f32.mxu0 %v383
      %1515 = vmatmul.mubr.f32.gmra.mxu0 %v310
      %v1516 = vpop.f32.mrf.mxu0
      %v1517 = vadd.f32 0.0, %v1516
      %v1518 = vpop.f32.mrf.mxu0
      %1519 = vmatprep.mubr.f32.mxu0 %v385
      %1520 = vmatmul.mubr.f32.gmra.mxu0 %v311
      %v1521 = vpop.f32.mrf.mxu0
      %v1522 = vadd.f32 0.0, %v1521
      %v1523 = vpop.f32.mrf.mxu0
      %1524 = vmatprep.mubr.f32.mxu0 %v387
      %1525 = vmatmul.mubr.f32.gmra.mxu0 %v312
      %v1526 = vpop.f32.mrf.mxu0
      %v1527 = vadd.f32 0.0, %v1526
      %v1528 = vpop.f32.mrf.mxu0
      %1529 = vmatprep.mubr.f32.mxu0 %v389
      %1530 = vmatmul.mubr.f32.gmra.mxu0 %v313
      %v1531 = vpop.f32.mrf.mxu0
      %v1532 = vadd.f32 0.0, %v1531
      %v1533 = vpop.f32.mrf.mxu0
      %1534 = vmatprep.mubr.f32.mxu0 %v391
      %1535 = vmatmul.mubr.f32.gmra.mxu0 %v314
      %v1536 = vpop.f32.mrf.mxu0
      %v1537 = vadd.f32 0.0, %v1536
      %v1538 = vpop.f32.mrf.mxu0
      %1539 = vmatprep.mubr.f32.mxu0 %v393
      %1540 = vmatmul.mubr.f32.gmra.mxu0 %v315
      %v1541 = vpop.f32.mrf.mxu0
      %v1542 = vadd.f32 0.0, %v1541
      %v1543 = vpop.f32.mrf.mxu0
      %1544 = vmatprep.mubr.f32.mxu0 %v395
      %1545 = vmatmul.mubr.f32.gmra.mxu0 %v316
      %v1546 = vpop.f32.mrf.mxu0
      %v1547 = vadd.f32 0.0, %v1546
      %v1548 = vpop.f32.mrf.mxu0
      %1549 = vmatprep.mubr.f32.mxu0 %v397
      %1550 = vmatmul.mubr.f32.gmra.mxu0 %v317
      %v1551 = vpop.f32.mrf.mxu0
      %v1552 = vadd.f32 0.0, %v1551
      %v1553 = vpop.f32.mrf.mxu0
      %1554 = vmatprep.mubr.f32.mxu0 %v399
      %1555 = vmatmul.mubr.f32.gmra.mxu0 %v318
      %v1556 = vpop.f32.mrf.mxu0
      %v1557 = vadd.f32 0.0, %v1556
      %v1558 = vpop.f32.mrf.mxu0
      %1559 = vmatprep.mubr.f32.mxu0 %v401
      %1560 = vmatmul.mubr.f32.gmra.mxu0 %v319
      %v1561 = vpop.f32.mrf.mxu0
      %v1562 = vadd.f32 0.0, %v1561
      %v1563 = vpop.f32.mrf.mxu0
      %1564 = vmatprep.mubr.f32.mxu0 %v403
      %1565 = vmatmul.mubr.f32.gmra.mxu0 %v320
      %v1566 = vpop.f32.mrf.mxu0
      %v1567 = vadd.f32 0.0, %v1566
      %v1568 = vpop.f32.mrf.mxu0
      %1569 = vmatprep.mubr.f32.mxu0 %v405
      %1570 = vmatmul.mubr.f32.gmra.mxu0 %v321
      %v1571 = vpop.f32.mrf.mxu0
      %v1572 = vadd.f32 0.0, %v1571
      %v1573 = vpop.f32.mrf.mxu0
      %1574 = vmatprep.mubr.f32.mxu0 %v407
      %1575 = vmatmul.mubr.f32.gmra.mxu0 %v322
      %v1576 = vpop.f32.mrf.mxu0
      %v1577 = vadd.f32 0.0, %v1576
      %v1578 = vpop.f32.mrf.mxu0
      %1579 = vmatprep.mubr.f32.mxu0 %v409
      %1580 = vmatmul.mubr.f32.gmra.mxu0 %v323
      %v1581 = vpop.f32.mrf.mxu0
      %v1582 = vadd.f32 0.0, %v1581
      %v1583 = vpop.f32.mrf.mxu0
      %1584 = vmatprep.mubr.f32.mxu0 %v411
      %1585 = vmatmul.mubr.f32.gmra.mxu0 %v324
      %v1586 = vpop.f32.mrf.mxu0
      %v1587 = vadd.f32 0.0, %v1586
      %v1588 = vpop.f32.mrf.mxu0
      %1589 = vmatprep.mubr.f32.mxu0 %v413
      %1590 = vmatmul.mubr.f32.gmra.mxu0 %v325
      %v1591 = vpop.f32.mrf.mxu0
      %v1592 = vadd.f32 0.0, %v1591
      %v1593 = vpop.f32.mrf.mxu0
      %1594 = vmatprep.mubr.f32.mxu0 %v415
      %1595 = vmatmul.mubr.f32.gmra.mxu0 %v326
      %v1596 = vpop.f32.mrf.mxu0
      %v1597 = vadd.f32 0.0, %v1596
      %v1598 = vpop.f32.mrf.mxu0
      %1599 = vmatprep.mubr.f32.mxu0 %v417
      %1600 = vmatmul.mubr.f32.gmra.mxu0 %v327
      %v1601 = vpop.f32.mrf.mxu0
      %v1602 = vadd.f32 0.0, %v1601
      %v1603 = vpop.f32.mrf.mxu0
      %1604 = vmatprep.mubr.f32.mxu0 %v419
      %1605 = vmatmul.mubr.f32.gmra.mxu0 %v328
      %v1606 = vpop.f32.mrf.mxu0
      %v1607 = vadd.f32 0.0, %v1606
      %v1608 = vpop.f32.mrf.mxu0
      %1609 = vmatprep.mubr.f32.mxu0 %v451
      %1610 = vmatmul.mubr.f32.gmra.mxu0 %v329
      %v1611 = vpop.f32.mrf.mxu0
      %v1612 = vadd.f32 0.0, %v1611
      %v1613 = vpop.f32.mrf.mxu0
      %1614 = vdwg.mxu0
      %1615 = vmatprep.subr.mxu0 0.0
      %1616 = vmatpush1.msra.mxu0 %v1429
      %1617 = vmatprep.subr.mxu0 0.0
      %1618 = vmatpush1.msra.mxu0 %v1428
      %1619 = vmatprep.subr.mxu0 0.0
      %1620 = vmatpush1.msra.mxu0 %v1427
      %1621 = vmatprep.subr.mxu0 0.0
      %1622 = vmatpush1.msra.mxu0 %v1426
      %1623 = vmatprep.subr.mxu0 0.0
      %1624 = vmatpush1.msra.mxu0 %v1425
      %1625 = vmatprep.subr.mxu0 0.0
      %1626 = vmatpush1.msra.mxu0 %v1424
      %1627 = vmatprep.subr.mxu0 0.0
      %1628 = vmatpush1.msra.mxu0 %v1423
      %1629 = vmatprep.subr.mxu0 0.0
      %1630 = vmatpush1.msra.mxu0 %v1422
      %1631 = vmatprep.subr.mxu0 0.0
      %1632 = vmatpush1.msra.mxu0 %v1421
      %1633 = vmatprep.subr.mxu0 0.0
      %1634 = vmatpush1.msra.mxu0 %v1420
      %1635 = vmatprep.subr.mxu0 0.0
      %1636 = vmatpush1.msra.mxu0 %v1419
      %1637 = vmatprep.subr.mxu0 0.0
      %1638 = vmatpush1.msra.mxu0 %v1418
      %1639 = vmatprep.subr.mxu0 0.0
      %1640 = vmatpush1.msra.mxu0 %v1417
      %1641 = vmatprep.subr.mxu0 0.0
      %1642 = vmatpush1.msra.mxu0 %v1416
      %1643 = vmatprep.subr.mxu0 0.0
      %1644 = vmatpush1.msra.mxu0 %v1415
      %1645 = vmatprep.subr.mxu0 0.0
      %1646 = vmatpush1.msra.mxu0 %v1414
      %1647 = vmatprep.subr.mxu0 0.0
      %1648 = vmatpush2.msra.mxu0 0.0
      %1649 = vmatprep.subr.mxu0 0.0
      %1650 = vmatpush2.msra.mxu0 0.0
      %1651 = vmatprep.subr.mxu0 0.0
      %1652 = vmatpush2.msra.mxu0 0.0
      %1653 = vmatprep.subr.mxu0 0.0
      %1654 = vmatpush2.msra.mxu0 0.0
      %1655 = vmatprep.subr.mxu0 0.0
      %1656 = vmatpush2.msra.mxu0 0.0
      %1657 = vmatprep.subr.mxu0 0.0
      %1658 = vmatpush2.msra.mxu0 0.0
      %1659 = vmatprep.subr.mxu0 0.0
      %1660 = vmatpush2.msra.mxu0 0.0
      %1661 = vmatprep.subr.mxu0 0.0
      %1662 = vmatpush2.msra.mxu0 0.0
      %1663 = vmatprep.subr.mxu0 0.0
      %1664 = vmatpush2.msra.mxu0 0.0
      %1665 = vmatprep.subr.mxu0 0.0
      %1666 = vmatpush2.msra.mxu0 0.0
      %1667 = vmatprep.subr.mxu0 0.0
      %1668 = vmatpush2.msra.mxu0 0.0
      %1669 = vmatprep.subr.mxu0 0.0
      %1670 = vmatpush2.msra.mxu0 0.0
      %1671 = vmatprep.subr.mxu0 0.0
      %1672 = vmatpush2.msra.mxu0 0.0
      %1673 = vmatprep.subr.mxu0 0.0
      %1674 = vmatpush2.msra.mxu0 0.0
      %1675 = vmatprep.subr.mxu0 0.0
      %1676 = vmatpush2.msra.mxu0 0.0
      %1677 = vmatprep.subr.mxu0 0.0
      %1678 = vmatpush2.msra.mxu0 0.0
      %1679 = vmatprep.mubr.f32.mxu0 0.0
      %1680 = vmatmul.mubr.f32.gmra.mxu0 %v467
      %v1681 = vpop.f32.mrf.mxu0
      %v1682 = vadd.f32 %v1497, %v1681
      %v1683 = vpop.f32.mrf.mxu0
      %1684 = vmatprep.mubr.f32.mxu0 0.0
      %1685 = vmatmul.mubr.f32.gmra.mxu0 %v469
      %v1686 = vpop.f32.mrf.mxu0
      %v1687 = vadd.f32 %v1502, %v1686
      %v1688 = vpop.f32.mrf.mxu0
      %1689 = vmatprep.mubr.f32.mxu0 0.0
      %1690 = vmatmul.mubr.f32.gmra.mxu0 %v471
      %v1691 = vpop.f32.mrf.mxu0
      %v1692 = vadd.f32 %v1507, %v1691
      %v1693 = vpop.f32.mrf.mxu0
      %1694 = vmatprep.mubr.f32.mxu0 0.0
      %1695 = vmatmul.mubr.f32.gmra.mxu0 %v473
      %v1696 = vpop.f32.mrf.mxu0
      %v1697 = vadd.f32 %v1512, %v1696
      %v1698 = vpop.f32.mrf.mxu0
      %1699 = vmatprep.mubr.f32.mxu0 0.0
      %1700 = vmatmul.mubr.f32.gmra.mxu0 %v475
      %v1701 = vpop.f32.mrf.mxu0
      %v1702 = vadd.f32 %v1517, %v1701
      %v1703 = vpop.f32.mrf.mxu0
      %1704 = vmatprep.mubr.f32.mxu0 0.0
      %1705 = vmatmul.mubr.f32.gmra.mxu0 %v477
      %v1706 = vpop.f32.mrf.mxu0
      %v1707 = vadd.f32 %v1522, %v1706
      %v1708 = vpop.f32.mrf.mxu0
      %1709 = vmatprep.mubr.f32.mxu0 0.0
      %1710 = vmatmul.mubr.f32.gmra.mxu0 %v479
      %v1711 = vpop.f32.mrf.mxu0
      %v1712 = vadd.f32 %v1527, %v1711
      %v1713 = vpop.f32.mrf.mxu0
      %1714 = vmatprep.mubr.f32.mxu0 0.0
      %1715 = vmatmul.mubr.f32.gmra.mxu0 %v481
      %v1716 = vpop.f32.mrf.mxu0
      %v1717 = vadd.f32 %v1532, %v1716
      %v1718 = vpop.f32.mrf.mxu0
      %1719 = vmatprep.mubr.f32.mxu0 0.0
      %1720 = vmatmul.mubr.f32.gmra.mxu0 %v483
      %v1721 = vpop.f32.mrf.mxu0
      %v1722 = vadd.f32 %v1537, %v1721
      %v1723 = vpop.f32.mrf.mxu0
      %1724 = vmatprep.mubr.f32.mxu0 0.0
      %1725 = vmatmul.mubr.f32.gmra.mxu0 %v485
      %v1726 = vpop.f32.mrf.mxu0
      %v1727 = vadd.f32 %v1542, %v1726
      %v1728 = vpop.f32.mrf.mxu0
      %1729 = vmatprep.mubr.f32.mxu0 0.0
      %1730 = vmatmul.mubr.f32.gmra.mxu0 %v487
      %v1731 = vpop.f32.mrf.mxu0
      %v1732 = vadd.f32 %v1547, %v1731
      %v1733 = vpop.f32.mrf.mxu0
      %1734 = vmatprep.mubr.f32.mxu0 0.0
      %1735 = vmatmul.mubr.f32.gmra.mxu0 %v489
      %v1736 = vpop.f32.mrf.mxu0
      %v1737 = vadd.f32 %v1552, %v1736
      %v1738 = vpop.f32.mrf.mxu0
      %1739 = vmatprep.mubr.f32.mxu0 0.0
      %1740 = vmatmul.mubr.f32.gmra.mxu0 %v491
      %v1741 = vpop.f32.mrf.mxu0
      %v1742 = vadd.f32 %v1557, %v1741
      %v1743 = vpop.f32.mrf.mxu0
      %1744 = vmatprep.mubr.f32.mxu0 0.0
      %1745 = vmatmul.mubr.f32.gmra.mxu0 %v493
      %v1746 = vpop.f32.mrf.mxu0
      %v1747 = vadd.f32 %v1562, %v1746
      %v1748 = vpop.f32.mrf.mxu0
      %1749 = vmatprep.mubr.f32.mxu0 0.0
      %1750 = vmatmul.mubr.f32.gmra.mxu0 %v495
      %v1751 = vpop.f32.mrf.mxu0
      %v1752 = vadd.f32 %v1567, %v1751
      %v1753 = vpop.f32.mrf.mxu0
      %1754 = vmatprep.mubr.f32.mxu0 0.0
      %1755 = vmatmul.mubr.f32.gmra.mxu0 %v497
      %v1756 = vpop.f32.mrf.mxu0
      %v1757 = vadd.f32 %v1572, %v1756
      %v1758 = vpop.f32.mrf.mxu0
      %1759 = vmatprep.mubr.f32.mxu0 0.0
      %1760 = vmatmul.mubr.f32.gmra.mxu0 %v499
      %v1761 = vpop.f32.mrf.mxu0
      %v1762 = vadd.f32 %v1577, %v1761
      %v1763 = vpop.f32.mrf.mxu0
      %1764 = vmatprep.mubr.f32.mxu0 0.0
      %1765 = vmatmul.mubr.f32.gmra.mxu0 %v501
      %v1766 = vpop.f32.mrf.mxu0
      %v1767 = vadd.f32 %v1582, %v1766
      %v1768 = vpop.f32.mrf.mxu0
      %1769 = vmatprep.mubr.f32.mxu0 0.0
      %1770 = vmatmul.mubr.f32.gmra.mxu0 %v503
      %v1771 = vpop.f32.mrf.mxu0
      %v1772 = vadd.f32 %v1587, %v1771
      %v1773 = vpop.f32.mrf.mxu0
      %1774 = vmatprep.mubr.f32.mxu0 0.0
      %1775 = vmatmul.mubr.f32.gmra.mxu0 %v505
      %v1776 = vpop.f32.mrf.mxu0
      %v1777 = vadd.f32 %v1592, %v1776
      %v1778 = vpop.f32.mrf.mxu0
      %1779 = vmatprep.mubr.f32.mxu0 0.0
      %1780 = vmatmul.mubr.f32.gmra.mxu0 %v507
      %v1781 = vpop.f32.mrf.mxu0
      %v1782 = vadd.f32 %v1597, %v1781
      %v1783 = vpop.f32.mrf.mxu0
      %1784 = vmatprep.mubr.f32.mxu0 0.0
      %1785 = vmatmul.mubr.f32.gmra.mxu0 %v509
      %v1786 = vpop.f32.mrf.mxu0
      %v1787 = vadd.f32 %v1602, %v1786
      %v1788 = vpop.f32.mrf.mxu0
      %1789 = vmatprep.mubr.f32.mxu0 0.0
      %1790 = vmatmul.mubr.f32.gmra.mxu0 %v511
      %v1791 = vpop.f32.mrf.mxu0
      %v1792 = vadd.f32 %v1607, %v1791
      %v1793 = vpop.f32.mrf.mxu0
      %1794 = vmatprep.mubr.f32.mxu0 0.0
      %1795 = vmatmul.mubr.f32.gmra.mxu0 %v543
      %v1796 = vpop.f32.mrf.mxu0
      %v1797 = vadd.f32 %v1612, %v1796
      %v1798 = vpop.f32.mrf.mxu0
      %1799 = vdwg.mxu0
      %v1800 = vadd.f32 %v1263, %v1682
      %v1801 = vadd.f32 %v1268, %v1687
      %v1802 = vadd.f32 %v1273, %v1692
      %v1803 = vadd.f32 %v1278, %v1697
      %v1804 = vadd.f32 %v1283, %v1702
      %v1805 = vadd.f32 %v1288, %v1707
      %v1806 = vadd.f32 %v1293, %v1712
      %v1807 = vadd.f32 %v1298, %v1717
      %v1808 = vadd.f32 %v1303, %v1722
      %v1809 = vadd.f32 %v1308, %v1727
      %v1810 = vadd.f32 %v1313, %v1732
      %v1811 = vadd.f32 %v1318, %v1737
      %v1812 = vadd.f32 %v1323, %v1742
      %v1813 = vadd.f32 %v1328, %v1747
      %v1814 = vadd.f32 %v1333, %v1752
      %v1815 = vadd.f32 %v1338, %v1757
      %v1816 = vadd.f32 %v1343, %v1762
      %v1817 = vadd.f32 %v1348, %v1767
      %v1818 = vadd.f32 %v1353, %v1772
      %v1819 = vadd.f32 %v1358, %v1777
      %v1820 = vadd.f32 %v1363, %v1782
      %v1821 = vadd.f32 %v1368, %v1787
      %v1822 = vadd.f32 %v1373, %v1792
      %v1823 = vadd.f32 %v1378, %v1797
      %s1824 = scalar_lea.vmem %s285, %s298
      %v1825 = vld [vmem:[%s1824] sm:$0xff]
      %v1826 = vld [vmem:[%s1824 + $0x8] sm:$0xff]
      %v1827 = vld [vmem:[%s1824 + $0x10] sm:$0xff]
      %v1828 = vld [vmem:[%s1824 + $0x18] sm:$0xff]
      %v1829 = vld [vmem:[%s1824 + $0x20] sm:$0xff]
      %v1830 = vld [vmem:[%s1824 + $0x28] sm:$0xff]
      %v1831 = vld [vmem:[%s1824 + $0x30] sm:$0xff]
      %v1832 = vld [vmem:[%s1824 + $0x38] sm:$0xff]
      %v1833 = vld [vmem:[%s1824 + $0x40] sm:$0xff]
      %v1834 = vld [vmem:[%s1824 + $0x48] sm:$0xff]
      %v1835 = vld [vmem:[%s1824 + $0x50] sm:$0xff]
      %v1836 = vld [vmem:[%s1824 + $0x58] sm:$0xff]
      %v1837 = vld [vmem:[%s1824 + $0x60] sm:$0xff]
      %v1838 = vld [vmem:[%s1824 + $0x68] sm:$0xff]
      %v1839 = vld [vmem:[%s1824 + $0x70] sm:$0xff]
      %v1840 = vld [vmem:[%s1824 + $0x78] sm:$0xff]
      %v1841 = vld [vmem:[%s1824 + $0x80] sm:$0xff]
      %v1842 = vld [vmem:[%s1824 + $0x88] sm:$0xff]
      %v1843 = vld [vmem:[%s1824 + $0x90] sm:$0xff]
      %v1844 = vld [vmem:[%s1824 + $0x98] sm:$0xff]
      %v1845 = vld [vmem:[%s1824 + $0xa0] sm:$0xff]
      %v1846 = vld [vmem:[%s1824 + $0xa8] sm:$0xff]
      %v1847 = vld [vmem:[%s1824 + $0xb0] sm:$0xff]
      %v1848 = vld [vmem:[%s1824 + $0xb8] sm:$0xff]
      %v1849 = vld [vmem:[%s1824 + $0xc0] sm:$0xff]
      %v1850 = vld [vmem:[%s1824 + $0xc8] sm:$0xff]
      %v1851 = vld [vmem:[%s1824 + $0xd0] sm:$0xff]
      %v1852 = vld [vmem:[%s1824 + $0xd8] sm:$0xff]
      %v1853 = vld [vmem:[%s1824 + $0xe0] sm:$0xff]
      %v1854 = vld [vmem:[%s1824 + $0xe8] sm:$0xff]
      %v1885 = vrot.slane %v1825, 1
      %v1886 = vrot.slane %v1826, 1
      %v1887 = vsel %vm360, %v1885, %v1886
      %v1888 = vrot.slane %v1827, 1
      %v1889 = vsel %vm360, %v1886, %v1888
      %v1890 = vrot.slane %v1828, 1
      %v1891 = vsel %vm360, %v1888, %v1890
      %v1892 = vrot.slane %v1829, 1
      %v1893 = vsel %vm360, %v1890, %v1892
      %v1894 = vrot.slane %v1830, 1
      %v1895 = vsel %vm360, %v1892, %v1894
      %v1896 = vrot.slane %v1831, 1
      %v1897 = vsel %vm360, %v1894, %v1896
      %v1898 = vrot.slane %v1832, 1
      %v1899 = vsel %vm360, %v1896, %v1898
      %v1900 = vrot.slane %v1833, 1
      %v1901 = vsel %vm360, %v1898, %v1900
      %v1902 = vrot.slane %v1834, 1
      %v1903 = vsel %vm360, %v1900, %v1902
      %v1904 = vrot.slane %v1835, 1
      %v1905 = vsel %vm360, %v1902, %v1904
      %v1906 = vrot.slane %v1836, 1
      %v1907 = vsel %vm360, %v1904, %v1906
      %v1908 = vrot.slane %v1837, 1
      %v1909 = vsel %vm360, %v1906, %v1908
      %v1910 = vrot.slane %v1838, 1
      %v1911 = vsel %vm360, %v1908, %v1910
      %v1912 = vrot.slane %v1839, 1
      %v1913 = vsel %vm360, %v1910, %v1912
      %v1914 = vrot.slane %v1840, 1
      %v1915 = vsel %vm360, %v1912, %v1914
      %v1916 = vrot.slane %v1841, 1
      %v1917 = vsel %vm360, %v1914, %v1916
      %v1918 = vrot.slane %v1842, 1
      %v1919 = vsel %vm360, %v1916, %v1918
      %v1920 = vrot.slane %v1843, 1
      %v1921 = vsel %vm360, %v1918, %v1920
      %v1922 = vrot.slane %v1844, 1
      %v1923 = vsel %vm360, %v1920, %v1922
      %v1924 = vrot.slane %v1845, 1
      %v1925 = vsel %vm360, %v1922, %v1924
      %v1926 = vrot.slane %v1846, 1
      %v1927 = vsel %vm360, %v1924, %v1926
      %v1928 = vrot.slane %v1847, 1
      %v1929 = vsel %vm360, %v1926, %v1928
      %v1930 = vrot.slane %v1848, 1
      %v1931 = vsel %vm360, %v1928, %v1930
      %v1932 = vrot.slane %v1849, 1
      %v1933 = vsel %vm360, %v1930, %v1932
      %v1934 = vrot.slane %v1850, 1
      %v1935 = vsel %vm360, %v1932, %v1934
      %v1936 = vrot.slane %v1851, 1
      %v1937 = vsel %vm360, %v1934, %v1936
      %v1938 = vrot.slane %v1852, 1
      %v1939 = vsel %vm360, %v1936, %v1938
      %v1940 = vrot.slane %v1853, 1
      %v1941 = vsel %vm360, %v1938, %v1940
      %v1942 = vrot.slane %v1854, 1
      %v1943 = vsel %vm360, %v1940, %v1942
      %v1975 = vsel %vm360, %v1942, %v1885
      %v1976 = vrot.slane %v1825, 2
      %v1977 = vrot.slane %v1826, 2
      %v1978 = vsel %vm452, %v1976, %v1977
      %v1979 = vrot.slane %v1827, 2
      %v1980 = vsel %vm452, %v1977, %v1979
      %v1981 = vrot.slane %v1828, 2
      %v1982 = vsel %vm452, %v1979, %v1981
      %v1983 = vrot.slane %v1829, 2
      %v1984 = vsel %vm452, %v1981, %v1983
      %v1985 = vrot.slane %v1830, 2
      %v1986 = vsel %vm452, %v1983, %v1985
      %v1987 = vrot.slane %v1831, 2
      %v1988 = vsel %vm452, %v1985, %v1987
      %v1989 = vrot.slane %v1832, 2
      %v1990 = vsel %vm452, %v1987, %v1989
      %v1991 = vrot.slane %v1833, 2
      %v1992 = vsel %vm452, %v1989, %v1991
      %v1993 = vrot.slane %v1834, 2
      %v1994 = vsel %vm452, %v1991, %v1993
      %v1995 = vrot.slane %v1835, 2
      %v1996 = vsel %vm452, %v1993, %v1995
      %v1997 = vrot.slane %v1836, 2
      %v1998 = vsel %vm452, %v1995, %v1997
      %v1999 = vrot.slane %v1837, 2
      %v2000 = vsel %vm452, %v1997, %v1999
      %v2001 = vrot.slane %v1838, 2
      %v2002 = vsel %vm452, %v1999, %v2001
      %v2003 = vrot.slane %v1839, 2
      %v2004 = vsel %vm452, %v2001, %v2003
      %v2005 = vrot.slane %v1840, 2
      %v2006 = vsel %vm452, %v2003, %v2005
      %v2007 = vrot.slane %v1841, 2
      %v2008 = vsel %vm452, %v2005, %v2007
      %v2009 = vrot.slane %v1842, 2
      %v2010 = vsel %vm452, %v2007, %v2009
      %v2011 = vrot.slane %v1843, 2
      %v2012 = vsel %vm452, %v2009, %v2011
      %v2013 = vrot.slane %v1844, 2
      %v2014 = vsel %vm452, %v2011, %v2013
      %v2015 = vrot.slane %v1845, 2
      %v2016 = vsel %vm452, %v2013, %v2015
      %v2017 = vrot.slane %v1846, 2
      %v2018 = vsel %vm452, %v2015, %v2017
      %v2019 = vrot.slane %v1847, 2
      %v2020 = vsel %vm452, %v2017, %v2019
      %v2021 = vrot.slane %v1848, 2
      %v2022 = vsel %vm452, %v2019, %v2021
      %v2023 = vrot.slane %v1849, 2
      %v2024 = vsel %vm452, %v2021, %v2023
      %v2025 = vrot.slane %v1850, 2
      %v2026 = vsel %vm452, %v2023, %v2025
      %v2027 = vrot.slane %v1851, 2
      %v2028 = vsel %vm452, %v2025, %v2027
      %v2029 = vrot.slane %v1852, 2
      %v2030 = vsel %vm452, %v2027, %v2029
      %v2031 = vrot.slane %v1853, 2
      %v2032 = vsel %vm452, %v2029, %v2031
      %v2033 = vrot.slane %v1854, 2
      %v2034 = vsel %vm452, %v2031, %v2033
      %v2066 = vsel %vm452, %v2033, %v1976
      %v2067 = vld [vmem:[%s3] sm:$0xff]
      %v2068 = vld [vmem:[%s3 + $0x8] sm:$0xff]
      %v2069 = vld [vmem:[%s3 + $0x10] sm:$0xff]
      %v2070 = vld [vmem:[%s3 + $0x18] sm:$0xff]
      %v2071 = vld [vmem:[%s3 + $0x20] sm:$0xff]
      %v2072 = vld [vmem:[%s3 + $0x28] sm:$0xff]
      %v2073 = vld [vmem:[%s3 + $0x30] sm:$0xff]
      %v2074 = vld [vmem:[%s3 + $0x38] sm:$0xff]
      %v2075 = vld [vmem:[%s3 + $0x40] sm:$0xff]
      %v2076 = vld [vmem:[%s3 + $0x48] sm:$0xff]
      %v2077 = vld [vmem:[%s3 + $0x50] sm:$0xff]
      %v2078 = vld [vmem:[%s3 + $0x58] sm:$0xff]
      %v2079 = vld [vmem:[%s3 + $0x60] sm:$0xff]
      %v2080 = vld [vmem:[%s3 + $0x68] sm:$0xff]
      %v2081 = vld [vmem:[%s3 + $0x70] sm:$0xff]
      %v2082 = vld [vmem:[%s3 + $0x78] sm:$0xff]
      %v2083 = vld [vmem:[%s3 + $0x80] sm:$0xff]
      %v2084 = vld [vmem:[%s3 + $0x88] sm:$0xff]
      %v2085 = vld [vmem:[%s3 + $0x90] sm:$0xff]
      %v2086 = vld [vmem:[%s3 + $0x98] sm:$0xff]
      %v2087 = vld [vmem:[%s3 + $0xa0] sm:$0xff]
      %v2088 = vld [vmem:[%s3 + $0xa8] sm:$0xff]
      %v2089 = vld [vmem:[%s3 + $0xb0] sm:$0xff]
      %v2090 = vld [vmem:[%s3 + $0xb8] sm:$0xff]
      %v2091 = vld [vmem:[%s3 + $0xc0] sm:$0xff]
      %v2092 = vld [vmem:[%s3 + $0xc8] sm:$0xff]
      %v2093 = vld [vmem:[%s3 + $0xd0] sm:$0xff]
      %v2094 = vld [vmem:[%s3 + $0xd8] sm:$0xff]
      %v2095 = vld [vmem:[%s3 + $0xe0] sm:$0xff]
      %v2096 = vld [vmem:[%s3 + $0xe8] sm:$0xff]
      %v2097 = vld [vmem:[%s3 + $0xf0] sm:$0xff]
      %v2098 = vld [vmem:[%s3 + $0xf8] sm:$0xff]
      %v2099 = vld [vmem:[%s3 + $0x100] sm:$0xff]
      %v2100 = vld [vmem:[%s3 + $0x108] sm:$0xff]
      %v2101 = vld [vmem:[%s3 + $0x110] sm:$0xff]
      %v2102 = vld [vmem:[%s3 + $0x118] sm:$0xff]
      %v2103 = vld [vmem:[%s3 + $0x120] sm:$0xff]
      %v2104 = vld [vmem:[%s3 + $0x128] sm:$0xff]
      %v2105 = vld [vmem:[%s3 + $0x130] sm:$0xff]
      %v2106 = vld [vmem:[%s3 + $0x138] sm:$0xff]
      %v2107 = vld [vmem:[%s3 + $0x140] sm:$0xff]
      %v2108 = vld [vmem:[%s3 + $0x148] sm:$0xff]
      %v2109 = vld [vmem:[%s3 + $0x150] sm:$0xff]
      %v2110 = vld [vmem:[%s3 + $0x158] sm:$0xff]
      %v2111 = vld [vmem:[%s3 + $0x160] sm:$0xff]
      %v2112 = vld [vmem:[%s3 + $0x168] sm:$0xff]
      %v2113 = vld [vmem:[%s3 + $0x170] sm:$0xff]
      %v2114 = vld [vmem:[%s3 + $0x178] sm:$0xff]
      %2115 = vmatprep.subr.mxu0 0.0
      %2116 = vmatpush1.msra.mxu0 %v2082
      %2117 = vmatprep.subr.mxu0 0.0
      %2118 = vmatpush1.msra.mxu0 %v2081
      %2119 = vmatprep.subr.mxu0 0.0
      %2120 = vmatpush1.msra.mxu0 %v2080
      %2121 = vmatprep.subr.mxu0 0.0
      %2122 = vmatpush1.msra.mxu0 %v2079
      %2123 = vmatprep.subr.mxu0 0.0
      %2124 = vmatpush1.msra.mxu0 %v2078
      %2125 = vmatprep.subr.mxu0 0.0
      %2126 = vmatpush1.msra.mxu0 %v2077
      %2127 = vmatprep.subr.mxu0 0.0
      %2128 = vmatpush1.msra.mxu0 %v2076
      %2129 = vmatprep.subr.mxu0 0.0
      %2130 = vmatpush1.msra.mxu0 %v2075
      %2131 = vmatprep.subr.mxu0 0.0
      %2132 = vmatpush1.msra.mxu0 %v2074
      %2133 = vmatprep.subr.mxu0 0.0
      %2134 = vmatpush1.msra.mxu0 %v2073
      %2135 = vmatprep.subr.mxu0 0.0
      %2136 = vmatpush1.msra.mxu0 %v2072
      %2137 = vmatprep.subr.mxu0 0.0
      %2138 = vmatpush1.msra.mxu0 %v2071
      %2139 = vmatprep.subr.mxu0 0.0
      %2140 = vmatpush1.msra.mxu0 %v2070
      %2141 = vmatprep.subr.mxu0 0.0
      %2142 = vmatpush1.msra.mxu0 %v2069
      %2143 = vmatprep.subr.mxu0 0.0
      %2144 = vmatpush1.msra.mxu0 %v2068
      %2145 = vmatprep.subr.mxu0 0.0
      %2146 = vmatpush1.msra.mxu0 %v2067
      %2147 = vmatprep.subr.mxu0 0.0
      %2148 = vmatpush2.msra.mxu0 %v2098
      %2149 = vmatprep.subr.mxu0 0.0
      %2150 = vmatpush2.msra.mxu0 %v2097
      %2151 = vmatprep.subr.mxu0 0.0
      %2152 = vmatpush2.msra.mxu0 %v2096
      %2153 = vmatprep.subr.mxu0 0.0
      %2154 = vmatpush2.msra.mxu0 %v2095
      %2155 = vmatprep.subr.mxu0 0.0
      %2156 = vmatpush2.msra.mxu0 %v2094
      %2157 = vmatprep.subr.mxu0 0.0
      %2158 = vmatpush2.msra.mxu0 %v2093
      %2159 = vmatprep.subr.mxu0 0.0
      %2160 = vmatpush2.msra.mxu0 %v2092
      %2161 = vmatprep.subr.mxu0 0.0
      %2162 = vmatpush2.msra.mxu0 %v2091
      %2163 = vmatprep.subr.mxu0 0.0
      %2164 = vmatpush2.msra.mxu0 %v2090
      %2165 = vmatprep.subr.mxu0 0.0
      %2166 = vmatpush2.msra.mxu0 %v2089
      %2167 = vmatprep.subr.mxu0 0.0
      %2168 = vmatpush2.msra.mxu0 %v2088
      %2169 = vmatprep.subr.mxu0 0.0
      %2170 = vmatpush2.msra.mxu0 %v2087
      %2171 = vmatprep.subr.mxu0 0.0
      %2172 = vmatpush2.msra.mxu0 %v2086
      %2173 = vmatprep.subr.mxu0 0.0
      %2174 = vmatpush2.msra.mxu0 %v2085
      %2175 = vmatprep.subr.mxu0 0.0
      %2176 = vmatpush2.msra.mxu0 %v2084
      %2177 = vmatprep.subr.mxu0 0.0
      %2178 = vmatpush2.msra.mxu0 %v2083
      %2179 = vmatprep.mubr.f32.mxu0 %v1887
      %2180 = vmatmul.mubr.f32.gmra.mxu0 %v1825
      %v2181 = vpop.f32.mrf.mxu0
      %v2182 = vadd.f32 0.0, %v2181
      %v2183 = vpop.f32.mrf.mxu0
      %2184 = vmatprep.mubr.f32.mxu0 %v1889
      %2185 = vmatmul.mubr.f32.gmra.mxu0 %v1826
      %v2186 = vpop.f32.mrf.mxu0
      %v2187 = vadd.f32 0.0, %v2186
      %v2188 = vpop.f32.mrf.mxu0
      %2189 = vmatprep.mubr.f32.mxu0 %v1891
      %2190 = vmatmul.mubr.f32.gmra.mxu0 %v1827
      %v2191 = vpop.f32.mrf.mxu0
      %v2192 = vadd.f32 0.0, %v2191
      %v2193 = vpop.f32.mrf.mxu0
      %2194 = vmatprep.mubr.f32.mxu0 %v1893
      %2195 = vmatmul.mubr.f32.gmra.mxu0 %v1828
      %v2196 = vpop.f32.mrf.mxu0
      %v2197 = vadd.f32 0.0, %v2196
      %v2198 = vpop.f32.mrf.mxu0
      %2199 = vmatprep.mubr.f32.mxu0 %v1895
      %2200 = vmatmul.mubr.f32.gmra.mxu0 %v1829
      %v2201 = vpop.f32.mrf.mxu0
      %v2202 = vadd.f32 0.0, %v2201
      %v2203 = vpop.f32.mrf.mxu0
      %2204 = vmatprep.mubr.f32.mxu0 %v1897
      %2205 = vmatmul.mubr.f32.gmra.mxu0 %v1830
      %v2206 = vpop.f32.mrf.mxu0
      %v2207 = vadd.f32 0.0, %v2206
      %v2208 = vpop.f32.mrf.mxu0
      %2209 = vmatprep.mubr.f32.mxu0 %v1899
      %2210 = vmatmul.mubr.f32.gmra.mxu0 %v1831
      %v2211 = vpop.f32.mrf.mxu0
      %v2212 = vadd.f32 0.0, %v2211
      %v2213 = vpop.f32.mrf.mxu0
      %2214 = vmatprep.mubr.f32.mxu0 %v1901
      %2215 = vmatmul.mubr.f32.gmra.mxu0 %v1832
      %v2216 = vpop.f32.mrf.mxu0
      %v2217 = vadd.f32 0.0, %v2216
      %v2218 = vpop.f32.mrf.mxu0
      %2219 = vmatprep.mubr.f32.mxu0 %v1903
      %2220 = vmatmul.mubr.f32.gmra.mxu0 %v1833
      %v2221 = vpop.f32.mrf.mxu0
      %v2222 = vadd.f32 0.0, %v2221
      %v2223 = vpop.f32.mrf.mxu0
      %2224 = vmatprep.mubr.f32.mxu0 %v1905
      %2225 = vmatmul.mubr.f32.gmra.mxu0 %v1834
      %v2226 = vpop.f32.mrf.mxu0
      %v2227 = vadd.f32 0.0, %v2226
      %v2228 = vpop.f32.mrf.mxu0
      %2229 = vmatprep.mubr.f32.mxu0 %v1907
      %2230 = vmatmul.mubr.f32.gmra.mxu0 %v1835
      %v2231 = vpop.f32.mrf.mxu0
      %v2232 = vadd.f32 0.0, %v2231
      %v2233 = vpop.f32.mrf.mxu0
      %2234 = vmatprep.mubr.f32.mxu0 %v1909
      %2235 = vmatmul.mubr.f32.gmra.mxu0 %v1836
      %v2236 = vpop.f32.mrf.mxu0
      %v2237 = vadd.f32 0.0, %v2236
      %v2238 = vpop.f32.mrf.mxu0
      %2239 = vmatprep.mubr.f32.mxu0 %v1911
      %2240 = vmatmul.mubr.f32.gmra.mxu0 %v1837
      %v2241 = vpop.f32.mrf.mxu0
      %v2242 = vadd.f32 0.0, %v2241
      %v2243 = vpop.f32.mrf.mxu0
      %2244 = vmatprep.mubr.f32.mxu0 %v1913
      %2245 = vmatmul.mubr.f32.gmra.mxu0 %v1838
      %v2246 = vpop.f32.mrf.mxu0
      %v2247 = vadd.f32 0.0, %v2246
      %v2248 = vpop.f32.mrf.mxu0
      %2249 = vmatprep.mubr.f32.mxu0 %v1915
      %2250 = vmatmul.mubr.f32.gmra.mxu0 %v1839
      %v2251 = vpop.f32.mrf.mxu0
      %v2252 = vadd.f32 0.0, %v2251
      %v2253 = vpop.f32.mrf.mxu0
      %2254 = vmatprep.mubr.f32.mxu0 %v1917
      %2255 = vmatmul.mubr.f32.gmra.mxu0 %v1840
      %v2256 = vpop.f32.mrf.mxu0
      %v2257 = vadd.f32 0.0, %v2256
      %v2258 = vpop.f32.mrf.mxu0
      %2259 = vmatprep.mubr.f32.mxu0 %v1919
      %2260 = vmatmul.mubr.f32.gmra.mxu0 %v1841
      %v2261 = vpop.f32.mrf.mxu0
      %v2262 = vadd.f32 0.0, %v2261
      %v2263 = vpop.f32.mrf.mxu0
      %2264 = vmatprep.mubr.f32.mxu0 %v1921
      %2265 = vmatmul.mubr.f32.gmra.mxu0 %v1842
      %v2266 = vpop.f32.mrf.mxu0
      %v2267 = vadd.f32 0.0, %v2266
      %v2268 = vpop.f32.mrf.mxu0
      %2269 = vmatprep.mubr.f32.mxu0 %v1923
      %2270 = vmatmul.mubr.f32.gmra.mxu0 %v1843
      %v2271 = vpop.f32.mrf.mxu0
      %v2272 = vadd.f32 0.0, %v2271
      %v2273 = vpop.f32.mrf.mxu0
      %2274 = vmatprep.mubr.f32.mxu0 %v1925
      %2275 = vmatmul.mubr.f32.gmra.mxu0 %v1844
      %v2276 = vpop.f32.mrf.mxu0
      %v2277 = vadd.f32 0.0, %v2276
      %v2278 = vpop.f32.mrf.mxu0
      %2279 = vmatprep.mubr.f32.mxu0 %v1927
      %2280 = vmatmul.mubr.f32.gmra.mxu0 %v1845
      %v2281 = vpop.f32.mrf.mxu0
      %v2282 = vadd.f32 0.0, %v2281
      %v2283 = vpop.f32.mrf.mxu0
      %2284 = vmatprep.mubr.f32.mxu0 %v1929
      %2285 = vmatmul.mubr.f32.gmra.mxu0 %v1846
      %v2286 = vpop.f32.mrf.mxu0
      %v2287 = vadd.f32 0.0, %v2286
      %v2288 = vpop.f32.mrf.mxu0
      %2289 = vmatprep.mubr.f32.mxu0 %v1931
      %2290 = vmatmul.mubr.f32.gmra.mxu0 %v1847
      %v2291 = vpop.f32.mrf.mxu0
      %v2292 = vadd.f32 0.0, %v2291
      %v2293 = vpop.f32.mrf.mxu0
      %2294 = vmatprep.mubr.f32.mxu0 %v1933
      %2295 = vmatmul.mubr.f32.gmra.mxu0 %v1848
      %v2296 = vpop.f32.mrf.mxu0
      %v2297 = vadd.f32 0.0, %v2296
      %v2298 = vpop.f32.mrf.mxu0
      %2299 = vdwg.mxu0
      %2300 = vmatprep.subr.mxu0 0.0
      %2301 = vmatpush1.msra.mxu0 %v2114
      %2302 = vmatprep.subr.mxu0 0.0
      %2303 = vmatpush1.msra.mxu0 %v2113
      %2304 = vmatprep.subr.mxu0 0.0
      %2305 = vmatpush1.msra.mxu0 %v2112
      %2306 = vmatprep.subr.mxu0 0.0
      %2307 = vmatpush1.msra.mxu0 %v2111
      %2308 = vmatprep.subr.mxu0 0.0
      %2309 = vmatpush1.msra.mxu0 %v2110
      %2310 = vmatprep.subr.mxu0 0.0
      %2311 = vmatpush1.msra.mxu0 %v2109
      %2312 = vmatprep.subr.mxu0 0.0
      %2313 = vmatpush1.msra.mxu0 %v2108
      %2314 = vmatprep.subr.mxu0 0.0
      %2315 = vmatpush1.msra.mxu0 %v2107
      %2316 = vmatprep.subr.mxu0 0.0
      %2317 = vmatpush1.msra.mxu0 %v2106
      %2318 = vmatprep.subr.mxu0 0.0
      %2319 = vmatpush1.msra.mxu0 %v2105
      %2320 = vmatprep.subr.mxu0 0.0
      %2321 = vmatpush1.msra.mxu0 %v2104
      %2322 = vmatprep.subr.mxu0 0.0
      %2323 = vmatpush1.msra.mxu0 %v2103
      %2324 = vmatprep.subr.mxu0 0.0
      %2325 = vmatpush1.msra.mxu0 %v2102
      %2326 = vmatprep.subr.mxu0 0.0
      %2327 = vmatpush1.msra.mxu0 %v2101
      %2328 = vmatprep.subr.mxu0 0.0
      %2329 = vmatpush1.msra.mxu0 %v2100
      %2330 = vmatprep.subr.mxu0 0.0
      %2331 = vmatpush1.msra.mxu0 %v2099
      %2332 = vmatprep.subr.mxu0 0.0
      %2333 = vmatpush2.msra.mxu0 0.0
      %2334 = vmatprep.subr.mxu0 0.0
      %2335 = vmatpush2.msra.mxu0 0.0
      %2336 = vmatprep.subr.mxu0 0.0
      %2337 = vmatpush2.msra.mxu0 0.0
      %2338 = vmatprep.subr.mxu0 0.0
      %2339 = vmatpush2.msra.mxu0 0.0
      %2340 = vmatprep.subr.mxu0 0.0
      %2341 = vmatpush2.msra.mxu0 0.0
      %2342 = vmatprep.subr.mxu0 0.0
      %2343 = vmatpush2.msra.mxu0 0.0
      %2344 = vmatprep.subr.mxu0 0.0
      %2345 = vmatpush2.msra.mxu0 0.0
      %2346 = vmatprep.subr.mxu0 0.0
      %2347 = vmatpush2.msra.mxu0 0.0
      %2348 = vmatprep.subr.mxu0 0.0
      %2349 = vmatpush2.msra.mxu0 0.0
      %2350 = vmatprep.subr.mxu0 0.0
      %2351 = vmatpush2.msra.mxu0 0.0
      %2352 = vmatprep.subr.mxu0 0.0
      %2353 = vmatpush2.msra.mxu0 0.0
      %2354 = vmatprep.subr.mxu0 0.0
      %2355 = vmatpush2.msra.mxu0 0.0
      %2356 = vmatprep.subr.mxu0 0.0
      %2357 = vmatpush2.msra.mxu0 0.0
      %2358 = vmatprep.subr.mxu0 0.0
      %2359 = vmatpush2.msra.mxu0 0.0
      %2360 = vmatprep.subr.mxu0 0.0
      %2361 = vmatpush2.msra.mxu0 0.0
      %2362 = vmatprep.subr.mxu0 0.0
      %2363 = vmatpush2.msra.mxu0 0.0
      %2364 = vmatprep.mubr.f32.mxu0 0.0
      %2365 = vmatmul.mubr.f32.gmra.mxu0 %v1978
      %v2366 = vpop.f32.mrf.mxu0
      %v2367 = vadd.f32 %v2182, %v2366
      %v2368 = vpop.f32.mrf.mxu0
      %2369 = vmatprep.mubr.f32.mxu0 0.0
      %2370 = vmatmul.mubr.f32.gmra.mxu0 %v1980
      %v2371 = vpop.f32.mrf.mxu0
      %v2372 = vadd.f32 %v2187, %v2371
      %v2373 = vpop.f32.mrf.mxu0
      %2374 = vmatprep.mubr.f32.mxu0 0.0
      %2375 = vmatmul.mubr.f32.gmra.mxu0 %v1982
      %v2376 = vpop.f32.mrf.mxu0
      %v2377 = vadd.f32 %v2192, %v2376
      %v2378 = vpop.f32.mrf.mxu0
      %2379 = vmatprep.mubr.f32.mxu0 0.0
      %2380 = vmatmul.mubr.f32.gmra.mxu0 %v1984
      %v2381 = vpop.f32.mrf.mxu0
      %v2382 = vadd.f32 %v2197, %v2381
      %v2383 = vpop.f32.mrf.mxu0
      %2384 = vmatprep.mubr.f32.mxu0 0.0
      %2385 = vmatmul.mubr.f32.gmra.mxu0 %v1986
      %v2386 = vpop.f32.mrf.mxu0
      %v2387 = vadd.f32 %v2202, %v2386
      %v2388 = vpop.f32.mrf.mxu0
      %2389 = vmatprep.mubr.f32.mxu0 0.0
      %2390 = vmatmul.mubr.f32.gmra.mxu0 %v1988
      %v2391 = vpop.f32.mrf.mxu0
      %v2392 = vadd.f32 %v2207, %v2391
      %v2393 = vpop.f32.mrf.mxu0
      %2394 = vmatprep.mubr.f32.mxu0 0.0
      %2395 = vmatmul.mubr.f32.gmra.mxu0 %v1990
      %v2396 = vpop.f32.mrf.mxu0
      %v2397 = vadd.f32 %v2212, %v2396
      %v2398 = vpop.f32.mrf.mxu0
      %2399 = vmatprep.mubr.f32.mxu0 0.0
      %2400 = vmatmul.mubr.f32.gmra.mxu0 %v1992
      %v2401 = vpop.f32.mrf.mxu0
      %v2402 = vadd.f32 %v2217, %v2401
      %v2403 = vpop.f32.mrf.mxu0
      %2404 = vmatprep.mubr.f32.mxu0 0.0
      %2405 = vmatmul.mubr.f32.gmra.mxu0 %v1994
      %v2406 = vpop.f32.mrf.mxu0
      %v2407 = vadd.f32 %v2222, %v2406
      %v2408 = vpop.f32.mrf.mxu0
      %2409 = vmatprep.mubr.f32.mxu0 0.0
      %2410 = vmatmul.mubr.f32.gmra.mxu0 %v1996
      %v2411 = vpop.f32.mrf.mxu0
      %v2412 = vadd.f32 %v2227, %v2411
      %v2413 = vpop.f32.mrf.mxu0
      %2414 = vmatprep.mubr.f32.mxu0 0.0
      %2415 = vmatmul.mubr.f32.gmra.mxu0 %v1998
      %v2416 = vpop.f32.mrf.mxu0
      %v2417 = vadd.f32 %v2232, %v2416
      %v2418 = vpop.f32.mrf.mxu0
      %2419 = vmatprep.mubr.f32.mxu0 0.0
      %2420 = vmatmul.mubr.f32.gmra.mxu0 %v2000
      %v2421 = vpop.f32.mrf.mxu0
      %v2422 = vadd.f32 %v2237, %v2421
      %v2423 = vpop.f32.mrf.mxu0
      %2424 = vmatprep.mubr.f32.mxu0 0.0
      %2425 = vmatmul.mubr.f32.gmra.mxu0 %v2002
      %v2426 = vpop.f32.mrf.mxu0
      %v2427 = vadd.f32 %v2242, %v2426
      %v2428 = vpop.f32.mrf.mxu0
      %2429 = vmatprep.mubr.f32.mxu0 0.0
      %2430 = vmatmul.mubr.f32.gmra.mxu0 %v2004
      %v2431 = vpop.f32.mrf.mxu0
      %v2432 = vadd.f32 %v2247, %v2431
      %v2433 = vpop.f32.mrf.mxu0
      %2434 = vmatprep.mubr.f32.mxu0 0.0
      %2435 = vmatmul.mubr.f32.gmra.mxu0 %v2006
      %v2436 = vpop.f32.mrf.mxu0
      %v2437 = vadd.f32 %v2252, %v2436
      %v2438 = vpop.f32.mrf.mxu0
      %2439 = vmatprep.mubr.f32.mxu0 0.0
      %2440 = vmatmul.mubr.f32.gmra.mxu0 %v2008
      %v2441 = vpop.f32.mrf.mxu0
      %v2442 = vadd.f32 %v2257, %v2441
      %v2443 = vpop.f32.mrf.mxu0
      %2444 = vmatprep.mubr.f32.mxu0 0.0
      %2445 = vmatmul.mubr.f32.gmra.mxu0 %v2010
      %v2446 = vpop.f32.mrf.mxu0
      %v2447 = vadd.f32 %v2262, %v2446
      %v2448 = vpop.f32.mrf.mxu0
      %2449 = vmatprep.mubr.f32.mxu0 0.0
      %2450 = vmatmul.mubr.f32.gmra.mxu0 %v2012
      %v2451 = vpop.f32.mrf.mxu0
      %v2452 = vadd.f32 %v2267, %v2451
      %v2453 = vpop.f32.mrf.mxu0
      %2454 = vmatprep.mubr.f32.mxu0 0.0
      %2455 = vmatmul.mubr.f32.gmra.mxu0 %v2014
      %v2456 = vpop.f32.mrf.mxu0
      %v2457 = vadd.f32 %v2272, %v2456
      %v2458 = vpop.f32.mrf.mxu0
      %2459 = vmatprep.mubr.f32.mxu0 0.0
      %2460 = vmatmul.mubr.f32.gmra.mxu0 %v2016
      %v2461 = vpop.f32.mrf.mxu0
      %v2462 = vadd.f32 %v2277, %v2461
      %v2463 = vpop.f32.mrf.mxu0
      %2464 = vmatprep.mubr.f32.mxu0 0.0
      %2465 = vmatmul.mubr.f32.gmra.mxu0 %v2018
      %v2466 = vpop.f32.mrf.mxu0
      %v2467 = vadd.f32 %v2282, %v2466
      %v2468 = vpop.f32.mrf.mxu0
      %2469 = vmatprep.mubr.f32.mxu0 0.0
      %2470 = vmatmul.mubr.f32.gmra.mxu0 %v2020
      %v2471 = vpop.f32.mrf.mxu0
      %v2472 = vadd.f32 %v2287, %v2471
      %v2473 = vpop.f32.mrf.mxu0
      %2474 = vmatprep.mubr.f32.mxu0 0.0
      %2475 = vmatmul.mubr.f32.gmra.mxu0 %v2022
      %v2476 = vpop.f32.mrf.mxu0
      %v2477 = vadd.f32 %v2292, %v2476
      %v2478 = vpop.f32.mrf.mxu0
      %2479 = vmatprep.mubr.f32.mxu0 0.0
      %2480 = vmatmul.mubr.f32.gmra.mxu0 %v2024
      %v2481 = vpop.f32.mrf.mxu0
      %v2482 = vadd.f32 %v2297, %v2481
      %v2483 = vpop.f32.mrf.mxu0
      %2484 = vdwg.mxu0
      %v2485 = vadd.f32 %v1800, %v2367
      %v2486 = vadd.f32 %v1801, %v2372
      %v2487 = vadd.f32 %v1802, %v2377
      %v2488 = vadd.f32 %v1803, %v2382
      %v2489 = vadd.f32 %v1804, %v2387
      %v2490 = vadd.f32 %v1805, %v2392
      %v2491 = vadd.f32 %v1806, %v2397
      %v2492 = vadd.f32 %v1807, %v2402
      %v2493 = vadd.f32 %v1808, %v2407
      %v2494 = vadd.f32 %v1809, %v2412
      %v2495 = vadd.f32 %v1810, %v2417
      %v2496 = vadd.f32 %v1811, %v2422
      %v2497 = vadd.f32 %v1812, %v2427
      %v2498 = vadd.f32 %v1813, %v2432
      %v2499 = vadd.f32 %v1814, %v2437
      %v2500 = vadd.f32 %v1815, %v2442
      %v2501 = vadd.f32 %v1816, %v2447
      %v2502 = vadd.f32 %v1817, %v2452
      %v2503 = vadd.f32 %v1818, %v2457
      %v2504 = vadd.f32 %v1819, %v2462
      %v2505 = vadd.f32 %v1820, %v2467
      %v2506 = vadd.f32 %v1821, %v2472
      %v2507 = vadd.f32 %v1822, %v2477
      %v2508 = vadd.f32 %v1823, %v2482
      %s2509 = scalar_lea.vmem %s3, 384
      %v2510 = vld [vmem:[%s2509] sm:$0xff]
      %v2511 = vld [vmem:[%s2509 + $0x8] sm:$0xff]
      %v2512 = vld [vmem:[%s2509 + $0x10] sm:$0xff]
      %v2513 = vld [vmem:[%s2509 + $0x18] sm:$0xff]
      %v2514 = vld [vmem:[%s2509 + $0x20] sm:$0xff]
      %v2515 = vld [vmem:[%s2509 + $0x28] sm:$0xff]
      %v2516 = vld [vmem:[%s2509 + $0x30] sm:$0xff]
      %v2517 = vld [vmem:[%s2509 + $0x38] sm:$0xff]
      %v2518 = vld [vmem:[%s2509 + $0x40] sm:$0xff]
      %v2519 = vld [vmem:[%s2509 + $0x48] sm:$0xff]
      %v2520 = vld [vmem:[%s2509 + $0x50] sm:$0xff]
      %v2521 = vld [vmem:[%s2509 + $0x58] sm:$0xff]
      %v2522 = vld [vmem:[%s2509 + $0x60] sm:$0xff]
      %v2523 = vld [vmem:[%s2509 + $0x68] sm:$0xff]
      %v2524 = vld [vmem:[%s2509 + $0x70] sm:$0xff]
      %v2525 = vld [vmem:[%s2509 + $0x78] sm:$0xff]
      %v2526 = vld [vmem:[%s2509 + $0x80] sm:$0xff]
      %v2527 = vld [vmem:[%s2509 + $0x88] sm:$0xff]
      %v2528 = vld [vmem:[%s2509 + $0x90] sm:$0xff]
      %v2529 = vld [vmem:[%s2509 + $0x98] sm:$0xff]
      %v2530 = vld [vmem:[%s2509 + $0xa0] sm:$0xff]
      %v2531 = vld [vmem:[%s2509 + $0xa8] sm:$0xff]
      %v2532 = vld [vmem:[%s2509 + $0xb0] sm:$0xff]
      %v2533 = vld [vmem:[%s2509 + $0xb8] sm:$0xff]
      %v2534 = vld [vmem:[%s2509 + $0xc0] sm:$0xff]
      %v2535 = vld [vmem:[%s2509 + $0xc8] sm:$0xff]
      %v2536 = vld [vmem:[%s2509 + $0xd0] sm:$0xff]
      %v2537 = vld [vmem:[%s2509 + $0xd8] sm:$0xff]
      %v2538 = vld [vmem:[%s2509 + $0xe0] sm:$0xff]
      %v2539 = vld [vmem:[%s2509 + $0xe8] sm:$0xff]
      %v2540 = vld [vmem:[%s2509 + $0xf0] sm:$0xff]
      %v2541 = vld [vmem:[%s2509 + $0xf8] sm:$0xff]
      %v2542 = vld [vmem:[%s2509 + $0x100] sm:$0xff]
      %v2543 = vld [vmem:[%s2509 + $0x108] sm:$0xff]
      %v2544 = vld [vmem:[%s2509 + $0x110] sm:$0xff]
      %v2545 = vld [vmem:[%s2509 + $0x118] sm:$0xff]
      %v2546 = vld [vmem:[%s2509 + $0x120] sm:$0xff]
      %v2547 = vld [vmem:[%s2509 + $0x128] sm:$0xff]
      %v2548 = vld [vmem:[%s2509 + $0x130] sm:$0xff]
      %v2549 = vld [vmem:[%s2509 + $0x138] sm:$0xff]
      %v2550 = vld [vmem:[%s2509 + $0x140] sm:$0xff]
      %v2551 = vld [vmem:[%s2509 + $0x148] sm:$0xff]
      %v2552 = vld [vmem:[%s2509 + $0x150] sm:$0xff]
      %v2553 = vld [vmem:[%s2509 + $0x158] sm:$0xff]
      %v2554 = vld [vmem:[%s2509 + $0x160] sm:$0xff]
      %v2555 = vld [vmem:[%s2509 + $0x168] sm:$0xff]
      %v2556 = vld [vmem:[%s2509 + $0x170] sm:$0xff]
      %v2557 = vld [vmem:[%s2509 + $0x178] sm:$0xff]
      %2558 = vmatprep.subr.mxu0 0.0
      %2559 = vmatpush1.msra.mxu0 %v2525
      %2560 = vmatprep.subr.mxu0 0.0
      %2561 = vmatpush1.msra.mxu0 %v2524
      %2562 = vmatprep.subr.mxu0 0.0
      %2563 = vmatpush1.msra.mxu0 %v2523
      %2564 = vmatprep.subr.mxu0 0.0
      %2565 = vmatpush1.msra.mxu0 %v2522
      %2566 = vmatprep.subr.mxu0 0.0
      %2567 = vmatpush1.msra.mxu0 %v2521
      %2568 = vmatprep.subr.mxu0 0.0
      %2569 = vmatpush1.msra.mxu0 %v2520
      %2570 = vmatprep.subr.mxu0 0.0
      %2571 = vmatpush1.msra.mxu0 %v2519
      %2572 = vmatprep.subr.mxu0 0.0
      %2573 = vmatpush1.msra.mxu0 %v2518
      %2574 = vmatprep.subr.mxu0 0.0
      %2575 = vmatpush1.msra.mxu0 %v2517
      %2576 = vmatprep.subr.mxu0 0.0
      %2577 = vmatpush1.msra.mxu0 %v2516
      %2578 = vmatprep.subr.mxu0 0.0
      %2579 = vmatpush1.msra.mxu0 %v2515
      %2580 = vmatprep.subr.mxu0 0.0
      %2581 = vmatpush1.msra.mxu0 %v2514
      %2582 = vmatprep.subr.mxu0 0.0
      %2583 = vmatpush1.msra.mxu0 %v2513
      %2584 = vmatprep.subr.mxu0 0.0
      %2585 = vmatpush1.msra.mxu0 %v2512
      %2586 = vmatprep.subr.mxu0 0.0
      %2587 = vmatpush1.msra.mxu0 %v2511
      %2588 = vmatprep.subr.mxu0 0.0
      %2589 = vmatpush1.msra.mxu0 %v2510
      %2590 = vmatprep.subr.mxu0 0.0
      %2591 = vmatpush2.msra.mxu0 %v2541
      %2592 = vmatprep.subr.mxu0 0.0
      %2593 = vmatpush2.msra.mxu0 %v2540
      %2594 = vmatprep.subr.mxu0 0.0
      %2595 = vmatpush2.msra.mxu0 %v2539
      %2596 = vmatprep.subr.mxu0 0.0
      %2597 = vmatpush2.msra.mxu0 %v2538
      %2598 = vmatprep.subr.mxu0 0.0
      %2599 = vmatpush2.msra.mxu0 %v2537
      %2600 = vmatprep.subr.mxu0 0.0
      %2601 = vmatpush2.msra.mxu0 %v2536
      %2602 = vmatprep.subr.mxu0 0.0
      %2603 = vmatpush2.msra.mxu0 %v2535
      %2604 = vmatprep.subr.mxu0 0.0
      %2605 = vmatpush2.msra.mxu0 %v2534
      %2606 = vmatprep.subr.mxu0 0.0
      %2607 = vmatpush2.msra.mxu0 %v2533
      %2608 = vmatprep.subr.mxu0 0.0
      %2609 = vmatpush2.msra.mxu0 %v2532
      %2610 = vmatprep.subr.mxu0 0.0
      %2611 = vmatpush2.msra.mxu0 %v2531
      %2612 = vmatprep.subr.mxu0 0.0
      %2613 = vmatpush2.msra.mxu0 %v2530
      %2614 = vmatprep.subr.mxu0 0.0
      %2615 = vmatpush2.msra.mxu0 %v2529
      %2616 = vmatprep.subr.mxu0 0.0
      %2617 = vmatpush2.msra.mxu0 %v2528
      %2618 = vmatprep.subr.mxu0 0.0
      %2619 = vmatpush2.msra.mxu0 %v2527
      %2620 = vmatprep.subr.mxu0 0.0
      %2621 = vmatpush2.msra.mxu0 %v2526
      %2622 = vmatprep.mubr.f32.mxu0 %v1893
      %2623 = vmatmul.mubr.f32.gmra.mxu0 %v1828
      %v2624 = vpop.f32.mrf.mxu0
      %v2625 = vadd.f32 0.0, %v2624
      %v2626 = vpop.f32.mrf.mxu0
      %2627 = vmatprep.mubr.f32.mxu0 %v1895
      %2628 = vmatmul.mubr.f32.gmra.mxu0 %v1829
      %v2629 = vpop.f32.mrf.mxu0
      %v2630 = vadd.f32 0.0, %v2629
      %v2631 = vpop.f32.mrf.mxu0
      %2632 = vmatprep.mubr.f32.mxu0 %v1897
      %2633 = vmatmul.mubr.f32.gmra.mxu0 %v1830
      %v2634 = vpop.f32.mrf.mxu0
      %v2635 = vadd.f32 0.0, %v2634
      %v2636 = vpop.f32.mrf.mxu0
      %2637 = vmatprep.mubr.f32.mxu0 %v1899
      %2638 = vmatmul.mubr.f32.gmra.mxu0 %v1831
      %v2639 = vpop.f32.mrf.mxu0
      %v2640 = vadd.f32 0.0, %v2639
      %v2641 = vpop.f32.mrf.mxu0
      %2642 = vmatprep.mubr.f32.mxu0 %v1901
      %2643 = vmatmul.mubr.f32.gmra.mxu0 %v1832
      %v2644 = vpop.f32.mrf.mxu0
      %v2645 = vadd.f32 0.0, %v2644
      %v2646 = vpop.f32.mrf.mxu0
      %2647 = vmatprep.mubr.f32.mxu0 %v1903
      %2648 = vmatmul.mubr.f32.gmra.mxu0 %v1833
      %v2649 = vpop.f32.mrf.mxu0
      %v2650 = vadd.f32 0.0, %v2649
      %v2651 = vpop.f32.mrf.mxu0
      %2652 = vmatprep.mubr.f32.mxu0 %v1905
      %2653 = vmatmul.mubr.f32.gmra.mxu0 %v1834
      %v2654 = vpop.f32.mrf.mxu0
      %v2655 = vadd.f32 0.0, %v2654
      %v2656 = vpop.f32.mrf.mxu0
      %2657 = vmatprep.mubr.f32.mxu0 %v1907
      %2658 = vmatmul.mubr.f32.gmra.mxu0 %v1835
      %v2659 = vpop.f32.mrf.mxu0
      %v2660 = vadd.f32 0.0, %v2659
      %v2661 = vpop.f32.mrf.mxu0
      %2662 = vmatprep.mubr.f32.mxu0 %v1909
      %2663 = vmatmul.mubr.f32.gmra.mxu0 %v1836
      %v2664 = vpop.f32.mrf.mxu0
      %v2665 = vadd.f32 0.0, %v2664
      %v2666 = vpop.f32.mrf.mxu0
      %2667 = vmatprep.mubr.f32.mxu0 %v1911
      %2668 = vmatmul.mubr.f32.gmra.mxu0 %v1837
      %v2669 = vpop.f32.mrf.mxu0
      %v2670 = vadd.f32 0.0, %v2669
      %v2671 = vpop.f32.mrf.mxu0
      %2672 = vmatprep.mubr.f32.mxu0 %v1913
      %2673 = vmatmul.mubr.f32.gmra.mxu0 %v1838
      %v2674 = vpop.f32.mrf.mxu0
      %v2675 = vadd.f32 0.0, %v2674
      %v2676 = vpop.f32.mrf.mxu0
      %2677 = vmatprep.mubr.f32.mxu0 %v1915
      %2678 = vmatmul.mubr.f32.gmra.mxu0 %v1839
      %v2679 = vpop.f32.mrf.mxu0
      %v2680 = vadd.f32 0.0, %v2679
      %v2681 = vpop.f32.mrf.mxu0
      %2682 = vmatprep.mubr.f32.mxu0 %v1917
      %2683 = vmatmul.mubr.f32.gmra.mxu0 %v1840
      %v2684 = vpop.f32.mrf.mxu0
      %v2685 = vadd.f32 0.0, %v2684
      %v2686 = vpop.f32.mrf.mxu0
      %2687 = vmatprep.mubr.f32.mxu0 %v1919
      %2688 = vmatmul.mubr.f32.gmra.mxu0 %v1841
      %v2689 = vpop.f32.mrf.mxu0
      %v2690 = vadd.f32 0.0, %v2689
      %v2691 = vpop.f32.mrf.mxu0
      %2692 = vmatprep.mubr.f32.mxu0 %v1921
      %2693 = vmatmul.mubr.f32.gmra.mxu0 %v1842
      %v2694 = vpop.f32.mrf.mxu0
      %v2695 = vadd.f32 0.0, %v2694
      %v2696 = vpop.f32.mrf.mxu0
      %2697 = vmatprep.mubr.f32.mxu0 %v1923
      %2698 = vmatmul.mubr.f32.gmra.mxu0 %v1843
      %v2699 = vpop.f32.mrf.mxu0
      %v2700 = vadd.f32 0.0, %v2699
      %v2701 = vpop.f32.mrf.mxu0
      %2702 = vmatprep.mubr.f32.mxu0 %v1925
      %2703 = vmatmul.mubr.f32.gmra.mxu0 %v1844
      %v2704 = vpop.f32.mrf.mxu0
      %v2705 = vadd.f32 0.0, %v2704
      %v2706 = vpop.f32.mrf.mxu0
      %2707 = vmatprep.mubr.f32.mxu0 %v1927
      %2708 = vmatmul.mubr.f32.gmra.mxu0 %v1845
      %v2709 = vpop.f32.mrf.mxu0
      %v2710 = vadd.f32 0.0, %v2709
      %v2711 = vpop.f32.mrf.mxu0
      %2712 = vmatprep.mubr.f32.mxu0 %v1929
      %2713 = vmatmul.mubr.f32.gmra.mxu0 %v1846
      %v2714 = vpop.f32.mrf.mxu0
      %v2715 = vadd.f32 0.0, %v2714
      %v2716 = vpop.f32.mrf.mxu0
      %2717 = vmatprep.mubr.f32.mxu0 %v1931
      %2718 = vmatmul.mubr.f32.gmra.mxu0 %v1847
      %v2719 = vpop.f32.mrf.mxu0
      %v2720 = vadd.f32 0.0, %v2719
      %v2721 = vpop.f32.mrf.mxu0
      %2722 = vmatprep.mubr.f32.mxu0 %v1933
      %2723 = vmatmul.mubr.f32.gmra.mxu0 %v1848
      %v2724 = vpop.f32.mrf.mxu0
      %v2725 = vadd.f32 0.0, %v2724
      %v2726 = vpop.f32.mrf.mxu0
      %2727 = vmatprep.mubr.f32.mxu0 %v1935
      %2728 = vmatmul.mubr.f32.gmra.mxu0 %v1849
      %v2729 = vpop.f32.mrf.mxu0
      %v2730 = vadd.f32 0.0, %v2729
      %v2731 = vpop.f32.mrf.mxu0
      %2732 = vmatprep.mubr.f32.mxu0 %v1937
      %2733 = vmatmul.mubr.f32.gmra.mxu0 %v1850
      %v2734 = vpop.f32.mrf.mxu0
      %v2735 = vadd.f32 0.0, %v2734
      %v2736 = vpop.f32.mrf.mxu0
      %2737 = vmatprep.mubr.f32.mxu0 %v1939
      %2738 = vmatmul.mubr.f32.gmra.mxu0 %v1851
      %v2739 = vpop.f32.mrf.mxu0
      %v2740 = vadd.f32 0.0, %v2739
      %v2741 = vpop.f32.mrf.mxu0
      %2742 = vdwg.mxu0
      %2743 = vmatprep.subr.mxu0 0.0
      %2744 = vmatpush1.msra.mxu0 %v2557
      %2745 = vmatprep.subr.mxu0 0.0
      %2746 = vmatpush1.msra.mxu0 %v2556
      %2747 = vmatprep.subr.mxu0 0.0
      %2748 = vmatpush1.msra.mxu0 %v2555
      %2749 = vmatprep.subr.mxu0 0.0
      %2750 = vmatpush1.msra.mxu0 %v2554
      %2751 = vmatprep.subr.mxu0 0.0
      %2752 = vmatpush1.msra.mxu0 %v2553
      %2753 = vmatprep.subr.mxu0 0.0
      %2754 = vmatpush1.msra.mxu0 %v2552
      %2755 = vmatprep.subr.mxu0 0.0
      %2756 = vmatpush1.msra.mxu0 %v2551
      %2757 = vmatprep.subr.mxu0 0.0
      %2758 = vmatpush1.msra.mxu0 %v2550
      %2759 = vmatprep.subr.mxu0 0.0
      %2760 = vmatpush1.msra.mxu0 %v2549
      %2761 = vmatprep.subr.mxu0 0.0
      %2762 = vmatpush1.msra.mxu0 %v2548
      %2763 = vmatprep.subr.mxu0 0.0
      %2764 = vmatpush1.msra.mxu0 %v2547
      %2765 = vmatprep.subr.mxu0 0.0
      %2766 = vmatpush1.msra.mxu0 %v2546
      %2767 = vmatprep.subr.mxu0 0.0
      %2768 = vmatpush1.msra.mxu0 %v2545
      %2769 = vmatprep.subr.mxu0 0.0
      %2770 = vmatpush1.msra.mxu0 %v2544
      %2771 = vmatprep.subr.mxu0 0.0
      %2772 = vmatpush1.msra.mxu0 %v2543
      %2773 = vmatprep.subr.mxu0 0.0
      %2774 = vmatpush1.msra.mxu0 %v2542
      %2775 = vmatprep.subr.mxu0 0.0
      %2776 = vmatpush2.msra.mxu0 0.0
      %2777 = vmatprep.subr.mxu0 0.0
      %2778 = vmatpush2.msra.mxu0 0.0
      %2779 = vmatprep.subr.mxu0 0.0
      %2780 = vmatpush2.msra.mxu0 0.0
      %2781 = vmatprep.subr.mxu0 0.0
      %2782 = vmatpush2.msra.mxu0 0.0
      %2783 = vmatprep.subr.mxu0 0.0
      %2784 = vmatpush2.msra.mxu0 0.0
      %2785 = vmatprep.subr.mxu0 0.0
      %2786 = vmatpush2.msra.mxu0 0.0
      %2787 = vmatprep.subr.mxu0 0.0
      %2788 = vmatpush2.msra.mxu0 0.0
      %2789 = vmatprep.subr.mxu0 0.0
      %2790 = vmatpush2.msra.mxu0 0.0
      %2791 = vmatprep.subr.mxu0 0.0
      %2792 = vmatpush2.msra.mxu0 0.0
      %2793 = vmatprep.subr.mxu0 0.0
      %2794 = vmatpush2.msra.mxu0 0.0
      %2795 = vmatprep.subr.mxu0 0.0
      %2796 = vmatpush2.msra.mxu0 0.0
      %2797 = vmatprep.subr.mxu0 0.0
      %2798 = vmatpush2.msra.mxu0 0.0
      %2799 = vmatprep.subr.mxu0 0.0
      %2800 = vmatpush2.msra.mxu0 0.0
      %2801 = vmatprep.subr.mxu0 0.0
      %2802 = vmatpush2.msra.mxu0 0.0
      %2803 = vmatprep.subr.mxu0 0.0
      %2804 = vmatpush2.msra.mxu0 0.0
      %2805 = vmatprep.subr.mxu0 0.0
      %2806 = vmatpush2.msra.mxu0 0.0
      %2807 = vmatprep.mubr.f32.mxu0 0.0
      %2808 = vmatmul.mubr.f32.gmra.mxu0 %v1984
      %v2809 = vpop.f32.mrf.mxu0
      %v2810 = vadd.f32 %v2625, %v2809
      %v2811 = vpop.f32.mrf.mxu0
      %2812 = vmatprep.mubr.f32.mxu0 0.0
      %2813 = vmatmul.mubr.f32.gmra.mxu0 %v1986
      %v2814 = vpop.f32.mrf.mxu0
      %v2815 = vadd.f32 %v2630, %v2814
      %v2816 = vpop.f32.mrf.mxu0
      %2817 = vmatprep.mubr.f32.mxu0 0.0
      %2818 = vmatmul.mubr.f32.gmra.mxu0 %v1988
      %v2819 = vpop.f32.mrf.mxu0
      %v2820 = vadd.f32 %v2635, %v2819
      %v2821 = vpop.f32.mrf.mxu0
      %2822 = vmatprep.mubr.f32.mxu0 0.0
      %2823 = vmatmul.mubr.f32.gmra.mxu0 %v1990
      %v2824 = vpop.f32.mrf.mxu0
      %v2825 = vadd.f32 %v2640, %v2824
      %v2826 = vpop.f32.mrf.mxu0
      %2827 = vmatprep.mubr.f32.mxu0 0.0
      %2828 = vmatmul.mubr.f32.gmra.mxu0 %v1992
      %v2829 = vpop.f32.mrf.mxu0
      %v2830 = vadd.f32 %v2645, %v2829
      %v2831 = vpop.f32.mrf.mxu0
      %2832 = vmatprep.mubr.f32.mxu0 0.0
      %2833 = vmatmul.mubr.f32.gmra.mxu0 %v1994
      %v2834 = vpop.f32.mrf.mxu0
      %v2835 = vadd.f32 %v2650, %v2834
      %v2836 = vpop.f32.mrf.mxu0
      %2837 = vmatprep.mubr.f32.mxu0 0.0
      %2838 = vmatmul.mubr.f32.gmra.mxu0 %v1996
      %v2839 = vpop.f32.mrf.mxu0
      %v2840 = vadd.f32 %v2655, %v2839
      %v2841 = vpop.f32.mrf.mxu0
      %2842 = vmatprep.mubr.f32.mxu0 0.0
      %2843 = vmatmul.mubr.f32.gmra.mxu0 %v1998
      %v2844 = vpop.f32.mrf.mxu0
      %v2845 = vadd.f32 %v2660, %v2844
      %v2846 = vpop.f32.mrf.mxu0
      %2847 = vmatprep.mubr.f32.mxu0 0.0
      %2848 = vmatmul.mubr.f32.gmra.mxu0 %v2000
      %v2849 = vpop.f32.mrf.mxu0
      %v2850 = vadd.f32 %v2665, %v2849
      %v2851 = vpop.f32.mrf.mxu0
      %2852 = vmatprep.mubr.f32.mxu0 0.0
      %2853 = vmatmul.mubr.f32.gmra.mxu0 %v2002
      %v2854 = vpop.f32.mrf.mxu0
      %v2855 = vadd.f32 %v2670, %v2854
      %v2856 = vpop.f32.mrf.mxu0
      %2857 = vmatprep.mubr.f32.mxu0 0.0
      %2858 = vmatmul.mubr.f32.gmra.mxu0 %v2004
      %v2859 = vpop.f32.mrf.mxu0
      %v2860 = vadd.f32 %v2675, %v2859
      %v2861 = vpop.f32.mrf.mxu0
      %2862 = vmatprep.mubr.f32.mxu0 0.0
      %2863 = vmatmul.mubr.f32.gmra.mxu0 %v2006
      %v2864 = vpop.f32.mrf.mxu0
      %v2865 = vadd.f32 %v2680, %v2864
      %v2866 = vpop.f32.mrf.mxu0
      %2867 = vmatprep.mubr.f32.mxu0 0.0
      %2868 = vmatmul.mubr.f32.gmra.mxu0 %v2008
      %v2869 = vpop.f32.mrf.mxu0
      %v2870 = vadd.f32 %v2685, %v2869
      %v2871 = vpop.f32.mrf.mxu0
      %2872 = vmatprep.mubr.f32.mxu0 0.0
      %2873 = vmatmul.mubr.f32.gmra.mxu0 %v2010
      %v2874 = vpop.f32.mrf.mxu0
      %v2875 = vadd.f32 %v2690, %v2874
      %v2876 = vpop.f32.mrf.mxu0
      %2877 = vmatprep.mubr.f32.mxu0 0.0
      %2878 = vmatmul.mubr.f32.gmra.mxu0 %v2012
      %v2879 = vpop.f32.mrf.mxu0
      %v2880 = vadd.f32 %v2695, %v2879
      %v2881 = vpop.f32.mrf.mxu0
      %2882 = vmatprep.mubr.f32.mxu0 0.0
      %2883 = vmatmul.mubr.f32.gmra.mxu0 %v2014
      %v2884 = vpop.f32.mrf.mxu0
      %v2885 = vadd.f32 %v2700, %v2884
      %v2886 = vpop.f32.mrf.mxu0
      %2887 = vmatprep.mubr.f32.mxu0 0.0
      %2888 = vmatmul.mubr.f32.gmra.mxu0 %v2016
      %v2889 = vpop.f32.mrf.mxu0
      %v2890 = vadd.f32 %v2705, %v2889
      %v2891 = vpop.f32.mrf.mxu0
      %2892 = vmatprep.mubr.f32.mxu0 0.0
      %2893 = vmatmul.mubr.f32.gmra.mxu0 %v2018
      %v2894 = vpop.f32.mrf.mxu0
      %v2895 = vadd.f32 %v2710, %v2894
      %v2896 = vpop.f32.mrf.mxu0
      %2897 = vmatprep.mubr.f32.mxu0 0.0
      %2898 = vmatmul.mubr.f32.gmra.mxu0 %v2020
      %v2899 = vpop.f32.mrf.mxu0
      %v2900 = vadd.f32 %v2715, %v2899
      %v2901 = vpop.f32.mrf.mxu0
      %2902 = vmatprep.mubr.f32.mxu0 0.0
      %2903 = vmatmul.mubr.f32.gmra.mxu0 %v2022
      %v2904 = vpop.f32.mrf.mxu0
      %v2905 = vadd.f32 %v2720, %v2904
      %v2906 = vpop.f32.mrf.mxu0
      %2907 = vmatprep.mubr.f32.mxu0 0.0
      %2908 = vmatmul.mubr.f32.gmra.mxu0 %v2024
      %v2909 = vpop.f32.mrf.mxu0
      %v2910 = vadd.f32 %v2725, %v2909
      %v2911 = vpop.f32.mrf.mxu0
      %2912 = vmatprep.mubr.f32.mxu0 0.0
      %2913 = vmatmul.mubr.f32.gmra.mxu0 %v2026
      %v2914 = vpop.f32.mrf.mxu0
      %v2915 = vadd.f32 %v2730, %v2914
      %v2916 = vpop.f32.mrf.mxu0
      %2917 = vmatprep.mubr.f32.mxu0 0.0
      %2918 = vmatmul.mubr.f32.gmra.mxu0 %v2028
      %v2919 = vpop.f32.mrf.mxu0
      %v2920 = vadd.f32 %v2735, %v2919
      %v2921 = vpop.f32.mrf.mxu0
      %2922 = vmatprep.mubr.f32.mxu0 0.0
      %2923 = vmatmul.mubr.f32.gmra.mxu0 %v2030
      %v2924 = vpop.f32.mrf.mxu0
      %v2925 = vadd.f32 %v2740, %v2924
      %v2926 = vpop.f32.mrf.mxu0
      %2927 = vdwg.mxu0
      %v2928 = vadd.f32 %v2485, %v2810
      %v2929 = vadd.f32 %v2486, %v2815
      %v2930 = vadd.f32 %v2487, %v2820
      %v2931 = vadd.f32 %v2488, %v2825
      %v2932 = vadd.f32 %v2489, %v2830
      %v2933 = vadd.f32 %v2490, %v2835
      %v2934 = vadd.f32 %v2491, %v2840
      %v2935 = vadd.f32 %v2492, %v2845
      %v2936 = vadd.f32 %v2493, %v2850
      %v2937 = vadd.f32 %v2494, %v2855
      %v2938 = vadd.f32 %v2495, %v2860
      %v2939 = vadd.f32 %v2496, %v2865
      %v2940 = vadd.f32 %v2497, %v2870
      %v2941 = vadd.f32 %v2498, %v2875
      %v2942 = vadd.f32 %v2499, %v2880
      %v2943 = vadd.f32 %v2500, %v2885
      %v2944 = vadd.f32 %v2501, %v2890
      %v2945 = vadd.f32 %v2502, %v2895
      %v2946 = vadd.f32 %v2503, %v2900
      %v2947 = vadd.f32 %v2504, %v2905
      %v2948 = vadd.f32 %v2505, %v2910
      %v2949 = vadd.f32 %v2506, %v2915
      %v2950 = vadd.f32 %v2507, %v2920
      %v2951 = vadd.f32 %v2508, %v2925
      %s2952 = scalar_lea.vmem %s3, 768
      %v2953 = vld [vmem:[%s2952] sm:$0xff]
      %v2954 = vld [vmem:[%s2952 + $0x8] sm:$0xff]
      %v2955 = vld [vmem:[%s2952 + $0x10] sm:$0xff]
      %v2956 = vld [vmem:[%s2952 + $0x18] sm:$0xff]
      %v2957 = vld [vmem:[%s2952 + $0x20] sm:$0xff]
      %v2958 = vld [vmem:[%s2952 + $0x28] sm:$0xff]
      %v2959 = vld [vmem:[%s2952 + $0x30] sm:$0xff]
      %v2960 = vld [vmem:[%s2952 + $0x38] sm:$0xff]
      %v2961 = vld [vmem:[%s2952 + $0x40] sm:$0xff]
      %v2962 = vld [vmem:[%s2952 + $0x48] sm:$0xff]
      %v2963 = vld [vmem:[%s2952 + $0x50] sm:$0xff]
      %v2964 = vld [vmem:[%s2952 + $0x58] sm:$0xff]
      %v2965 = vld [vmem:[%s2952 + $0x60] sm:$0xff]
      %v2966 = vld [vmem:[%s2952 + $0x68] sm:$0xff]
      %v2967 = vld [vmem:[%s2952 + $0x70] sm:$0xff]
      %v2968 = vld [vmem:[%s2952 + $0x78] sm:$0xff]
      %v2969 = vld [vmem:[%s2952 + $0x80] sm:$0xff]
      %v2970 = vld [vmem:[%s2952 + $0x88] sm:$0xff]
      %v2971 = vld [vmem:[%s2952 + $0x90] sm:$0xff]
      %v2972 = vld [vmem:[%s2952 + $0x98] sm:$0xff]
      %v2973 = vld [vmem:[%s2952 + $0xa0] sm:$0xff]
      %v2974 = vld [vmem:[%s2952 + $0xa8] sm:$0xff]
      %v2975 = vld [vmem:[%s2952 + $0xb0] sm:$0xff]
      %v2976 = vld [vmem:[%s2952 + $0xb8] sm:$0xff]
      %v2977 = vld [vmem:[%s2952 + $0xc0] sm:$0xff]
      %v2978 = vld [vmem:[%s2952 + $0xc8] sm:$0xff]
      %v2979 = vld [vmem:[%s2952 + $0xd0] sm:$0xff]
      %v2980 = vld [vmem:[%s2952 + $0xd8] sm:$0xff]
      %v2981 = vld [vmem:[%s2952 + $0xe0] sm:$0xff]
      %v2982 = vld [vmem:[%s2952 + $0xe8] sm:$0xff]
      %v2983 = vld [vmem:[%s2952 + $0xf0] sm:$0xff]
      %v2984 = vld [vmem:[%s2952 + $0xf8] sm:$0xff]
      %v2985 = vld [vmem:[%s2952 + $0x100] sm:$0xff]
      %v2986 = vld [vmem:[%s2952 + $0x108] sm:$0xff]
      %v2987 = vld [vmem:[%s2952 + $0x110] sm:$0xff]
      %v2988 = vld [vmem:[%s2952 + $0x118] sm:$0xff]
      %v2989 = vld [vmem:[%s2952 + $0x120] sm:$0xff]
      %v2990 = vld [vmem:[%s2952 + $0x128] sm:$0xff]
      %v2991 = vld [vmem:[%s2952 + $0x130] sm:$0xff]
      %v2992 = vld [vmem:[%s2952 + $0x138] sm:$0xff]
      %v2993 = vld [vmem:[%s2952 + $0x140] sm:$0xff]
      %v2994 = vld [vmem:[%s2952 + $0x148] sm:$0xff]
      %v2995 = vld [vmem:[%s2952 + $0x150] sm:$0xff]
      %v2996 = vld [vmem:[%s2952 + $0x158] sm:$0xff]
      %v2997 = vld [vmem:[%s2952 + $0x160] sm:$0xff]
      %v2998 = vld [vmem:[%s2952 + $0x168] sm:$0xff]
      %v2999 = vld [vmem:[%s2952 + $0x170] sm:$0xff]
      %v3000 = vld [vmem:[%s2952 + $0x178] sm:$0xff]
      %3001 = vmatprep.subr.mxu0 0.0
      %3002 = vmatpush1.msra.mxu0 %v2968
      %3003 = vmatprep.subr.mxu0 0.0
      %3004 = vmatpush1.msra.mxu0 %v2967
      %3005 = vmatprep.subr.mxu0 0.0
      %3006 = vmatpush1.msra.mxu0 %v2966
      %3007 = vmatprep.subr.mxu0 0.0
      %3008 = vmatpush1.msra.mxu0 %v2965
      %3009 = vmatprep.subr.mxu0 0.0
      %3010 = vmatpush1.msra.mxu0 %v2964
      %3011 = vmatprep.subr.mxu0 0.0
      %3012 = vmatpush1.msra.mxu0 %v2963
      %3013 = vmatprep.subr.mxu0 0.0
      %3014 = vmatpush1.msra.mxu0 %v2962
      %3015 = vmatprep.subr.mxu0 0.0
      %3016 = vmatpush1.msra.mxu0 %v2961
      %3017 = vmatprep.subr.mxu0 0.0
      %3018 = vmatpush1.msra.mxu0 %v2960
      %3019 = vmatprep.subr.mxu0 0.0
      %3020 = vmatpush1.msra.mxu0 %v2959
      %3021 = vmatprep.subr.mxu0 0.0
      %3022 = vmatpush1.msra.mxu0 %v2958
      %3023 = vmatprep.subr.mxu0 0.0
      %3024 = vmatpush1.msra.mxu0 %v2957
      %3025 = vmatprep.subr.mxu0 0.0
      %3026 = vmatpush1.msra.mxu0 %v2956
      %3027 = vmatprep.subr.mxu0 0.0
      %3028 = vmatpush1.msra.mxu0 %v2955
      %3029 = vmatprep.subr.mxu0 0.0
      %3030 = vmatpush1.msra.mxu0 %v2954
      %3031 = vmatprep.subr.mxu0 0.0
      %3032 = vmatpush1.msra.mxu0 %v2953
      %3033 = vmatprep.subr.mxu0 0.0
      %3034 = vmatpush2.msra.mxu0 %v2984
      %3035 = vmatprep.subr.mxu0 0.0
      %3036 = vmatpush2.msra.mxu0 %v2983
      %3037 = vmatprep.subr.mxu0 0.0
      %3038 = vmatpush2.msra.mxu0 %v2982
      %3039 = vmatprep.subr.mxu0 0.0
      %3040 = vmatpush2.msra.mxu0 %v2981
      %3041 = vmatprep.subr.mxu0 0.0
      %3042 = vmatpush2.msra.mxu0 %v2980
      %3043 = vmatprep.subr.mxu0 0.0
      %3044 = vmatpush2.msra.mxu0 %v2979
      %3045 = vmatprep.subr.mxu0 0.0
      %3046 = vmatpush2.msra.mxu0 %v2978
      %3047 = vmatprep.subr.mxu0 0.0
      %3048 = vmatpush2.msra.mxu0 %v2977
      %3049 = vmatprep.subr.mxu0 0.0
      %3050 = vmatpush2.msra.mxu0 %v2976
      %3051 = vmatprep.subr.mxu0 0.0
      %3052 = vmatpush2.msra.mxu0 %v2975
      %3053 = vmatprep.subr.mxu0 0.0
      %3054 = vmatpush2.msra.mxu0 %v2974
      %3055 = vmatprep.subr.mxu0 0.0
      %3056 = vmatpush2.msra.mxu0 %v2973
      %3057 = vmatprep.subr.mxu0 0.0
      %3058 = vmatpush2.msra.mxu0 %v2972
      %3059 = vmatprep.subr.mxu0 0.0
      %3060 = vmatpush2.msra.mxu0 %v2971
      %3061 = vmatprep.subr.mxu0 0.0
      %3062 = vmatpush2.msra.mxu0 %v2970
      %3063 = vmatprep.subr.mxu0 0.0
      %3064 = vmatpush2.msra.mxu0 %v2969
      %3065 = vmatprep.mubr.f32.mxu0 %v1899
      %3066 = vmatmul.mubr.f32.gmra.mxu0 %v1831
      %v3067 = vpop.f32.mrf.mxu0
      %v3068 = vadd.f32 0.0, %v3067
      %v3069 = vpop.f32.mrf.mxu0
      %3070 = vmatprep.mubr.f32.mxu0 %v1901
      %3071 = vmatmul.mubr.f32.gmra.mxu0 %v1832
      %v3072 = vpop.f32.mrf.mxu0
      %v3073 = vadd.f32 0.0, %v3072
      %v3074 = vpop.f32.mrf.mxu0
      %3075 = vmatprep.mubr.f32.mxu0 %v1903
      %3076 = vmatmul.mubr.f32.gmra.mxu0 %v1833
      %v3077 = vpop.f32.mrf.mxu0
      %v3078 = vadd.f32 0.0, %v3077
      %v3079 = vpop.f32.mrf.mxu0
      %3080 = vmatprep.mubr.f32.mxu0 %v1905
      %3081 = vmatmul.mubr.f32.gmra.mxu0 %v1834
      %v3082 = vpop.f32.mrf.mxu0
      %v3083 = vadd.f32 0.0, %v3082
      %v3084 = vpop.f32.mrf.mxu0
      %3085 = vmatprep.mubr.f32.mxu0 %v1907
      %3086 = vmatmul.mubr.f32.gmra.mxu0 %v1835
      %v3087 = vpop.f32.mrf.mxu0
      %v3088 = vadd.f32 0.0, %v3087
      %v3089 = vpop.f32.mrf.mxu0
      %3090 = vmatprep.mubr.f32.mxu0 %v1909
      %3091 = vmatmul.mubr.f32.gmra.mxu0 %v1836
      %v3092 = vpop.f32.mrf.mxu0
      %v3093 = vadd.f32 0.0, %v3092
      %v3094 = vpop.f32.mrf.mxu0
      %3095 = vmatprep.mubr.f32.mxu0 %v1911
      %3096 = vmatmul.mubr.f32.gmra.mxu0 %v1837
      %v3097 = vpop.f32.mrf.mxu0
      %v3098 = vadd.f32 0.0, %v3097
      %v3099 = vpop.f32.mrf.mxu0
      %3100 = vmatprep.mubr.f32.mxu0 %v1913
      %3101 = vmatmul.mubr.f32.gmra.mxu0 %v1838
      %v3102 = vpop.f32.mrf.mxu0
      %v3103 = vadd.f32 0.0, %v3102
      %v3104 = vpop.f32.mrf.mxu0
      %3105 = vmatprep.mubr.f32.mxu0 %v1915
      %3106 = vmatmul.mubr.f32.gmra.mxu0 %v1839
      %v3107 = vpop.f32.mrf.mxu0
      %v3108 = vadd.f32 0.0, %v3107
      %v3109 = vpop.f32.mrf.mxu0
      %3110 = vmatprep.mubr.f32.mxu0 %v1917
      %3111 = vmatmul.mubr.f32.gmra.mxu0 %v1840
      %v3112 = vpop.f32.mrf.mxu0
      %v3113 = vadd.f32 0.0, %v3112
      %v3114 = vpop.f32.mrf.mxu0
      %3115 = vmatprep.mubr.f32.mxu0 %v1919
      %3116 = vmatmul.mubr.f32.gmra.mxu0 %v1841
      %v3117 = vpop.f32.mrf.mxu0
      %v3118 = vadd.f32 0.0, %v3117
      %v3119 = vpop.f32.mrf.mxu0
      %3120 = vmatprep.mubr.f32.mxu0 %v1921
      %3121 = vmatmul.mubr.f32.gmra.mxu0 %v1842
      %v3122 = vpop.f32.mrf.mxu0
      %v3123 = vadd.f32 0.0, %v3122
      %v3124 = vpop.f32.mrf.mxu0
      %3125 = vmatprep.mubr.f32.mxu0 %v1923
      %3126 = vmatmul.mubr.f32.gmra.mxu0 %v1843
      %v3127 = vpop.f32.mrf.mxu0
      %v3128 = vadd.f32 0.0, %v3127
      %v3129 = vpop.f32.mrf.mxu0
      %3130 = vmatprep.mubr.f32.mxu0 %v1925
      %3131 = vmatmul.mubr.f32.gmra.mxu0 %v1844
      %v3132 = vpop.f32.mrf.mxu0
      %v3133 = vadd.f32 0.0, %v3132
      %v3134 = vpop.f32.mrf.mxu0
      %3135 = vmatprep.mubr.f32.mxu0 %v1927
      %3136 = vmatmul.mubr.f32.gmra.mxu0 %v1845
      %v3137 = vpop.f32.mrf.mxu0
      %v3138 = vadd.f32 0.0, %v3137
      %v3139 = vpop.f32.mrf.mxu0
      %3140 = vmatprep.mubr.f32.mxu0 %v1929
      %3141 = vmatmul.mubr.f32.gmra.mxu0 %v1846
      %v3142 = vpop.f32.mrf.mxu0
      %v3143 = vadd.f32 0.0, %v3142
      %v3144 = vpop.f32.mrf.mxu0
      %3145 = vmatprep.mubr.f32.mxu0 %v1931
      %3146 = vmatmul.mubr.f32.gmra.mxu0 %v1847
      %v3147 = vpop.f32.mrf.mxu0
      %v3148 = vadd.f32 0.0, %v3147
      %v3149 = vpop.f32.mrf.mxu0
      %3150 = vmatprep.mubr.f32.mxu0 %v1933
      %3151 = vmatmul.mubr.f32.gmra.mxu0 %v1848
      %v3152 = vpop.f32.mrf.mxu0
      %v3153 = vadd.f32 0.0, %v3152
      %v3154 = vpop.f32.mrf.mxu0
      %3155 = vmatprep.mubr.f32.mxu0 %v1935
      %3156 = vmatmul.mubr.f32.gmra.mxu0 %v1849
      %v3157 = vpop.f32.mrf.mxu0
      %v3158 = vadd.f32 0.0, %v3157
      %v3159 = vpop.f32.mrf.mxu0
      %3160 = vmatprep.mubr.f32.mxu0 %v1937
      %3161 = vmatmul.mubr.f32.gmra.mxu0 %v1850
      %v3162 = vpop.f32.mrf.mxu0
      %v3163 = vadd.f32 0.0, %v3162
      %v3164 = vpop.f32.mrf.mxu0
      %3165 = vmatprep.mubr.f32.mxu0 %v1939
      %3166 = vmatmul.mubr.f32.gmra.mxu0 %v1851
      %v3167 = vpop.f32.mrf.mxu0
      %v3168 = vadd.f32 0.0, %v3167
      %v3169 = vpop.f32.mrf.mxu0
      %3170 = vmatprep.mubr.f32.mxu0 %v1941
      %3171 = vmatmul.mubr.f32.gmra.mxu0 %v1852
      %v3172 = vpop.f32.mrf.mxu0
      %v3173 = vadd.f32 0.0, %v3172
      %v3174 = vpop.f32.mrf.mxu0
      %3175 = vmatprep.mubr.f32.mxu0 %v1943
      %3176 = vmatmul.mubr.f32.gmra.mxu0 %v1853
      %v3177 = vpop.f32.mrf.mxu0
      %v3178 = vadd.f32 0.0, %v3177
      %v3179 = vpop.f32.mrf.mxu0
      %3180 = vmatprep.mubr.f32.mxu0 %v1975
      %3181 = vmatmul.mubr.f32.gmra.mxu0 %v1854
      %v3182 = vpop.f32.mrf.mxu0
      %v3183 = vadd.f32 0.0, %v3182
      %v3184 = vpop.f32.mrf.mxu0
      %3185 = vdwg.mxu0
      %3186 = vmatprep.subr.mxu0 0.0
      %3187 = vmatpush1.msra.mxu0 %v3000
      %3188 = vmatprep.subr.mxu0 0.0
      %3189 = vmatpush1.msra.mxu0 %v2999
      %3190 = vmatprep.subr.mxu0 0.0
      %3191 = vmatpush1.msra.mxu0 %v2998
      %3192 = vmatprep.subr.mxu0 0.0
      %3193 = vmatpush1.msra.mxu0 %v2997
      %3194 = vmatprep.subr.mxu0 0.0
      %3195 = vmatpush1.msra.mxu0 %v2996
      %3196 = vmatprep.subr.mxu0 0.0
      %3197 = vmatpush1.msra.mxu0 %v2995
      %3198 = vmatprep.subr.mxu0 0.0
      %3199 = vmatpush1.msra.mxu0 %v2994
      %3200 = vmatprep.subr.mxu0 0.0
      %3201 = vmatpush1.msra.mxu0 %v2993
      %3202 = vmatprep.subr.mxu0 0.0
      %3203 = vmatpush1.msra.mxu0 %v2992
      %3204 = vmatprep.subr.mxu0 0.0
      %3205 = vmatpush1.msra.mxu0 %v2991
      %3206 = vmatprep.subr.mxu0 0.0
      %3207 = vmatpush1.msra.mxu0 %v2990
      %3208 = vmatprep.subr.mxu0 0.0
      %3209 = vmatpush1.msra.mxu0 %v2989
      %3210 = vmatprep.subr.mxu0 0.0
      %3211 = vmatpush1.msra.mxu0 %v2988
      %3212 = vmatprep.subr.mxu0 0.0
      %3213 = vmatpush1.msra.mxu0 %v2987
      %3214 = vmatprep.subr.mxu0 0.0
      %3215 = vmatpush1.msra.mxu0 %v2986
      %3216 = vmatprep.subr.mxu0 0.0
      %3217 = vmatpush1.msra.mxu0 %v2985
      %3218 = vmatprep.subr.mxu0 0.0
      %3219 = vmatpush2.msra.mxu0 0.0
      %3220 = vmatprep.subr.mxu0 0.0
      %3221 = vmatpush2.msra.mxu0 0.0
      %3222 = vmatprep.subr.mxu0 0.0
      %3223 = vmatpush2.msra.mxu0 0.0
      %3224 = vmatprep.subr.mxu0 0.0
      %3225 = vmatpush2.msra.mxu0 0.0
      %3226 = vmatprep.subr.mxu0 0.0
      %3227 = vmatpush2.msra.mxu0 0.0
      %3228 = vmatprep.subr.mxu0 0.0
      %3229 = vmatpush2.msra.mxu0 0.0
      %3230 = vmatprep.subr.mxu0 0.0
      %3231 = vmatpush2.msra.mxu0 0.0
      %3232 = vmatprep.subr.mxu0 0.0
      %3233 = vmatpush2.msra.mxu0 0.0
      %3234 = vmatprep.subr.mxu0 0.0
      %3235 = vmatpush2.msra.mxu0 0.0
      %3236 = vmatprep.subr.mxu0 0.0
      %3237 = vmatpush2.msra.mxu0 0.0
      %3238 = vmatprep.subr.mxu0 0.0
      %3239 = vmatpush2.msra.mxu0 0.0
      %3240 = vmatprep.subr.mxu0 0.0
      %3241 = vmatpush2.msra.mxu0 0.0
      %3242 = vmatprep.subr.mxu0 0.0
      %3243 = vmatpush2.msra.mxu0 0.0
      %3244 = vmatprep.subr.mxu0 0.0
      %3245 = vmatpush2.msra.mxu0 0.0
      %3246 = vmatprep.subr.mxu0 0.0
      %3247 = vmatpush2.msra.mxu0 0.0
      %3248 = vmatprep.subr.mxu0 0.0
      %3249 = vmatpush2.msra.mxu0 0.0
      %3250 = vmatprep.mubr.f32.mxu0 0.0
      %3251 = vmatmul.mubr.f32.gmra.mxu0 %v1990
      %v3252 = vpop.f32.mrf.mxu0
      %v3253 = vadd.f32 %v3068, %v3252
      %v3254 = vpop.f32.mrf.mxu0
      %3255 = vmatprep.mubr.f32.mxu0 0.0
      %3256 = vmatmul.mubr.f32.gmra.mxu0 %v1992
      %v3257 = vpop.f32.mrf.mxu0
      %v3258 = vadd.f32 %v3073, %v3257
      %v3259 = vpop.f32.mrf.mxu0
      %3260 = vmatprep.mubr.f32.mxu0 0.0
      %3261 = vmatmul.mubr.f32.gmra.mxu0 %v1994
      %v3262 = vpop.f32.mrf.mxu0
      %v3263 = vadd.f32 %v3078, %v3262
      %v3264 = vpop.f32.mrf.mxu0
      %3265 = vmatprep.mubr.f32.mxu0 0.0
      %3266 = vmatmul.mubr.f32.gmra.mxu0 %v1996
      %v3267 = vpop.f32.mrf.mxu0
      %v3268 = vadd.f32 %v3083, %v3267
      %v3269 = vpop.f32.mrf.mxu0
      %3270 = vmatprep.mubr.f32.mxu0 0.0
      %3271 = vmatmul.mubr.f32.gmra.mxu0 %v1998
      %v3272 = vpop.f32.mrf.mxu0
      %v3273 = vadd.f32 %v3088, %v3272
      %v3274 = vpop.f32.mrf.mxu0
      %3275 = vmatprep.mubr.f32.mxu0 0.0
      %3276 = vmatmul.mubr.f32.gmra.mxu0 %v2000
      %v3277 = vpop.f32.mrf.mxu0
      %v3278 = vadd.f32 %v3093, %v3277
      %v3279 = vpop.f32.mrf.mxu0
      %3280 = vmatprep.mubr.f32.mxu0 0.0
      %3281 = vmatmul.mubr.f32.gmra.mxu0 %v2002
      %v3282 = vpop.f32.mrf.mxu0
      %v3283 = vadd.f32 %v3098, %v3282
      %v3284 = vpop.f32.mrf.mxu0
      %3285 = vmatprep.mubr.f32.mxu0 0.0
      %3286 = vmatmul.mubr.f32.gmra.mxu0 %v2004
      %v3287 = vpop.f32.mrf.mxu0
      %v3288 = vadd.f32 %v3103, %v3287
      %v3289 = vpop.f32.mrf.mxu0
      %3290 = vmatprep.mubr.f32.mxu0 0.0
      %3291 = vmatmul.mubr.f32.gmra.mxu0 %v2006
      %v3292 = vpop.f32.mrf.mxu0
      %v3293 = vadd.f32 %v3108, %v3292
      %v3294 = vpop.f32.mrf.mxu0
      %3295 = vmatprep.mubr.f32.mxu0 0.0
      %3296 = vmatmul.mubr.f32.gmra.mxu0 %v2008
      %v3297 = vpop.f32.mrf.mxu0
      %v3298 = vadd.f32 %v3113, %v3297
      %v3299 = vpop.f32.mrf.mxu0
      %3300 = vmatprep.mubr.f32.mxu0 0.0
      %3301 = vmatmul.mubr.f32.gmra.mxu0 %v2010
      %v3302 = vpop.f32.mrf.mxu0
      %v3303 = vadd.f32 %v3118, %v3302
      %v3304 = vpop.f32.mrf.mxu0
      %3305 = vmatprep.mubr.f32.mxu0 0.0
      %3306 = vmatmul.mubr.f32.gmra.mxu0 %v2012
      %v3307 = vpop.f32.mrf.mxu0
      %v3308 = vadd.f32 %v3123, %v3307
      %v3309 = vpop.f32.mrf.mxu0
      %3310 = vmatprep.mubr.f32.mxu0 0.0
      %3311 = vmatmul.mubr.f32.gmra.mxu0 %v2014
      %v3312 = vpop.f32.mrf.mxu0
      %v3313 = vadd.f32 %v3128, %v3312
      %v3314 = vpop.f32.mrf.mxu0
      %3315 = vmatprep.mubr.f32.mxu0 0.0
      %3316 = vmatmul.mubr.f32.gmra.mxu0 %v2016
      %v3317 = vpop.f32.mrf.mxu0
      %v3318 = vadd.f32 %v3133, %v3317
      %v3319 = vpop.f32.mrf.mxu0
      %3320 = vmatprep.mubr.f32.mxu0 0.0
      %3321 = vmatmul.mubr.f32.gmra.mxu0 %v2018
      %v3322 = vpop.f32.mrf.mxu0
      %v3323 = vadd.f32 %v3138, %v3322
      %v3324 = vpop.f32.mrf.mxu0
      %3325 = vmatprep.mubr.f32.mxu0 0.0
      %3326 = vmatmul.mubr.f32.gmra.mxu0 %v2020
      %v3327 = vpop.f32.mrf.mxu0
      %v3328 = vadd.f32 %v3143, %v3327
      %v3329 = vpop.f32.mrf.mxu0
      %3330 = vmatprep.mubr.f32.mxu0 0.0
      %3331 = vmatmul.mubr.f32.gmra.mxu0 %v2022
      %v3332 = vpop.f32.mrf.mxu0
      %v3333 = vadd.f32 %v3148, %v3332
      %v3334 = vpop.f32.mrf.mxu0
      %3335 = vmatprep.mubr.f32.mxu0 0.0
      %3336 = vmatmul.mubr.f32.gmra.mxu0 %v2024
      %v3337 = vpop.f32.mrf.mxu0
      %v3338 = vadd.f32 %v3153, %v3337
      %v3339 = vpop.f32.mrf.mxu0
      %3340 = vmatprep.mubr.f32.mxu0 0.0
      %3341 = vmatmul.mubr.f32.gmra.mxu0 %v2026
      %v3342 = vpop.f32.mrf.mxu0
      %v3343 = vadd.f32 %v3158, %v3342
      %v3344 = vpop.f32.mrf.mxu0
      %3345 = vmatprep.mubr.f32.mxu0 0.0
      %3346 = vmatmul.mubr.f32.gmra.mxu0 %v2028
      %v3347 = vpop.f32.mrf.mxu0
      %v3348 = vadd.f32 %v3163, %v3347
      %v3349 = vpop.f32.mrf.mxu0
      %3350 = vmatprep.mubr.f32.mxu0 0.0
      %3351 = vmatmul.mubr.f32.gmra.mxu0 %v2030
      %v3352 = vpop.f32.mrf.mxu0
      %v3353 = vadd.f32 %v3168, %v3352
      %v3354 = vpop.f32.mrf.mxu0
      %3355 = vmatprep.mubr.f32.mxu0 0.0
      %3356 = vmatmul.mubr.f32.gmra.mxu0 %v2032
      %v3357 = vpop.f32.mrf.mxu0
      %v3358 = vadd.f32 %v3173, %v3357
      %v3359 = vpop.f32.mrf.mxu0
      %3360 = vmatprep.mubr.f32.mxu0 0.0
      %3361 = vmatmul.mubr.f32.gmra.mxu0 %v2034
      %v3362 = vpop.f32.mrf.mxu0
      %v3363 = vadd.f32 %v3178, %v3362
      %v3364 = vpop.f32.mrf.mxu0
      %3365 = vmatprep.mubr.f32.mxu0 0.0
      %3366 = vmatmul.mubr.f32.gmra.mxu0 %v2066
      %v3367 = vpop.f32.mrf.mxu0
      %v3368 = vadd.f32 %v3183, %v3367
      %v3369 = vpop.f32.mrf.mxu0
      %3370 = vdwg.mxu0
      %v3371 = vadd.f32 %v2928, %v3253
      %v3372 = vadd.f32 %v2929, %v3258
      %v3373 = vadd.f32 %v2930, %v3263
      %v3374 = vadd.f32 %v2931, %v3268
      %v3375 = vadd.f32 %v2932, %v3273
      %v3376 = vadd.f32 %v2933, %v3278
      %v3377 = vadd.f32 %v2934, %v3283
      %v3378 = vadd.f32 %v2935, %v3288
      %v3379 = vadd.f32 %v2936, %v3293
      %v3380 = vadd.f32 %v2937, %v3298
      %v3381 = vadd.f32 %v2938, %v3303
      %v3382 = vadd.f32 %v2939, %v3308
      %v3383 = vadd.f32 %v2940, %v3313
      %v3384 = vadd.f32 %v2941, %v3318
      %v3385 = vadd.f32 %v2942, %v3323
      %v3386 = vadd.f32 %v2943, %v3328
      %v3387 = vadd.f32 %v2944, %v3333
      %v3388 = vadd.f32 %v2945, %v3338
      %v3389 = vadd.f32 %v2946, %v3343
      %v3390 = vadd.f32 %v2947, %v3348
      %v3391 = vadd.f32 %v2948, %v3353
      %v3392 = vadd.f32 %v2949, %v3358
      %v3393 = vadd.f32 %v2950, %v3363
      %v3394 = vadd.f32 %v2951, %v3368
      %v3395 = vld [vmem:[%s4] sm:$0x1]
      %v3397 = vlaneseq
      %v3398 = vshrl.u32 %v3397, 7
      %v3399 = vsub.s32 0, %v3398
      %v3400 = vrot.slane %v3395, %v3399
      %v3402 = vmul.f32 %v3371, %v3400
      %v3403 = vmul.f32 %v3372, %v3400
      %v3404 = vmul.f32 %v3373, %v3400
      %v3405 = vmul.f32 %v3374, %v3400
      %v3406 = vmul.f32 %v3375, %v3400
      %v3407 = vmul.f32 %v3376, %v3400
      %v3408 = vmul.f32 %v3377, %v3400
      %v3409 = vmul.f32 %v3378, %v3400
      %v3410 = vmul.f32 %v3379, %v3400
      %v3411 = vmul.f32 %v3380, %v3400
      %v3412 = vmul.f32 %v3381, %v3400
      %v3413 = vmul.f32 %v3382, %v3400
      %v3414 = vmul.f32 %v3383, %v3400
      %v3415 = vmul.f32 %v3384, %v3400
      %v3416 = vmul.f32 %v3385, %v3400
      %v3417 = vmul.f32 %v3386, %v3400
      %v3418 = vmul.f32 %v3387, %v3400
      %v3419 = vmul.f32 %v3388, %v3400
      %v3420 = vmul.f32 %v3389, %v3400
      %v3421 = vmul.f32 %v3390, %v3400
      %v3422 = vmul.f32 %v3391, %v3400
      %v3423 = vmul.f32 %v3392, %v3400
      %v3424 = vmul.f32 %v3393, %v3400
      %v3425 = vmul.f32 %v3394, %v3400
      %v3426 = vld [vmem:[%s5] sm:$0x1]
      %v3428 = vlaneseq
      %v3429 = vshrl.u32 %v3428, 7
      %v3430 = vsub.s32 0, %v3429
      %v3431 = vrot.slane %v3426, %v3430
      %v3433 = vadd.f32 %v3402, %v3431
      %v3434 = vadd.f32 %v3403, %v3431
      %v3435 = vadd.f32 %v3404, %v3431
      %v3436 = vadd.f32 %v3405, %v3431
      %v3437 = vadd.f32 %v3406, %v3431
      %v3438 = vadd.f32 %v3407, %v3431
      %v3439 = vadd.f32 %v3408, %v3431
      %v3440 = vadd.f32 %v3409, %v3431
      %v3441 = vadd.f32 %v3410, %v3431
      %v3442 = vadd.f32 %v3411, %v3431
      %v3443 = vadd.f32 %v3412, %v3431
      %v3444 = vadd.f32 %v3413, %v3431
      %v3445 = vadd.f32 %v3414, %v3431
      %v3446 = vadd.f32 %v3415, %v3431
      %v3447 = vadd.f32 %v3416, %v3431
      %v3448 = vadd.f32 %v3417, %v3431
      %v3449 = vadd.f32 %v3418, %v3431
      %v3450 = vadd.f32 %v3419, %v3431
      %v3451 = vadd.f32 %v3420, %v3431
      %v3452 = vadd.f32 %v3421, %v3431
      %v3453 = vadd.f32 %v3422, %v3431
      %v3454 = vadd.f32 %v3423, %v3431
      %v3455 = vadd.f32 %v3424, %v3431
      %v3456 = vadd.f32 %v3425, %v3431
      %v3457 = vmax.f32 %v3433, 0.0
      %v3458 = vmax.f32 %v3434, 0.0
      %v3459 = vmax.f32 %v3435, 0.0
      %v3460 = vmax.f32 %v3436, 0.0
      %v3461 = vmax.f32 %v3437, 0.0
      %v3462 = vmax.f32 %v3438, 0.0
      %v3463 = vmax.f32 %v3439, 0.0
      %v3464 = vmax.f32 %v3440, 0.0
      %v3465 = vmax.f32 %v3441, 0.0
      %v3466 = vmax.f32 %v3442, 0.0
      %v3467 = vmax.f32 %v3443, 0.0
      %v3468 = vmax.f32 %v3444, 0.0
      %v3469 = vmax.f32 %v3445, 0.0
      %v3470 = vmax.f32 %v3446, 0.0
      %v3471 = vmax.f32 %v3447, 0.0
      %v3472 = vmax.f32 %v3448, 0.0
      %v3473 = vmax.f32 %v3449, 0.0
      %v3474 = vmax.f32 %v3450, 0.0
      %v3475 = vmax.f32 %v3451, 0.0
      %v3476 = vmax.f32 %v3452, 0.0
      %v3477 = vmax.f32 %v3453, 0.0
      %v3478 = vmax.f32 %v3454, 0.0
      %v3479 = vmax.f32 %v3455, 0.0
      %v3480 = vmax.f32 %v3456, 0.0
      %3481 = vst [vmem:[%s295] sm:$0xff] %v3457
      %3482 = vst [vmem:[%s295 + $0x8] sm:$0xff] %v3458
      %3483 = vst [vmem:[%s295 + $0x10] sm:$0xff] %v3459
      %3484 = vst [vmem:[%s295 + $0x18] sm:$0xff] %v3460
      %3485 = vst [vmem:[%s295 + $0x20] sm:$0xff] %v3461
      %3486 = vst [vmem:[%s295 + $0x28] sm:$0xff] %v3462
      %3487 = vst [vmem:[%s295 + $0x30] sm:$0xff] %v3463
      %3488 = vst [vmem:[%s295 + $0x38] sm:$0xff] %v3464
      %3489 = vst [vmem:[%s295 + $0x40] sm:$0xff] %v3465
      %3490 = vst [vmem:[%s295 + $0x48] sm:$0xff] %v3466
      %3491 = vst [vmem:[%s295 + $0x50] sm:$0xff] %v3467
      %3492 = vst [vmem:[%s295 + $0x58] sm:$0xff] %v3468
      %3493 = vst [vmem:[%s295 + $0x60] sm:$0xff] %v3469
      %3494 = vst [vmem:[%s295 + $0x68] sm:$0xff] %v3470
      %3495 = vst [vmem:[%s295 + $0x70] sm:$0xff] %v3471
      %3496 = vst [vmem:[%s295 + $0x78] sm:$0xff] %v3472
      %3497 = vst [vmem:[%s295 + $0x80] sm:$0xff] %v3473
      %3498 = vst [vmem:[%s295 + $0x88] sm:$0xff] %v3474
      %3499 = vst [vmem:[%s295 + $0x90] sm:$0xff] %v3475
      %3500 = vst [vmem:[%s295 + $0x98] sm:$0xff] %v3476
      %3501 = vst [vmem:[%s295 + $0xa0] sm:$0xff] %v3477
      %3502 = vst [vmem:[%s295 + $0xa8] sm:$0xff] %v3478
      %3503 = vst [vmem:[%s295 + $0xb0] sm:$0xff] %v3479
      %3504 = vst [vmem:[%s295 + $0xb8] sm:$0xff] %v3480
      %s3505 = smul.u32 8, %s22
      %p3506 = scmp.lt.s32.totalorder %s21, 1
      %s3507 = scalar_select %p3506, %s21, 1
      %p3508 = scmp.lt.s32.totalorder %s3505, 15
      %s3509 = scalar_select %p3508, %s3505, 15
      %s3510 = smul.addr %s3509, 3
      %s3511 = smul.addr %s3507, 48
      %s3512 = sadd.s32 %s3510, %s3511
      %s3513 = smul.addr %s3512, 8
      %s3514 = scalar_lea.vmem %s6, %s3513
      // Predicated region
      $region45: #{a_call__.6} parent=43 // pred_check
        %p3515 = pneg %p185
      $region46: #{a_call__.6} parent=43 // pred_check_branch
        %3517 = sbr.rel (%p3515) target = $region48
      $region47: #{a_call__.6} parent=43 // pred_region
        %s3518 = smul.u32 8, %s22
      $region48: #{a_call__.6} parent=43 // pred_fallthru
        _
    $region44: #{a_call__.6} parent=5 // pred_fallthru
      _
    %p3519 = scmp.le.s32.totalorder 2, %s12
    // Predicated region
    $region49: #{a_call__.6} parent=5 // pred_check
      %p3520 = pneg %p3519
    $region50: #{a_call__.6} parent=5 // pred_check_branch
      %3522 = sbr.rel (%p3520) target = $region52
    $region51: #{a_call__.6} parent=5 // pred_region
      %s3523 = ssub.s32 %s12, 2
      // Predicated region
      $region53: #{a_call__.6} parent=51 // pred_check
        %p3524 = pneg %p191
      $region54: #{a_call__.6} parent=51 // pred_check_branch
        %3526 = sbr.rel (%p3524) target = $region56
      $region55: #{a_call__.6} parent=51 // pred_region
        %s3527 = smul.u32 8, %s24
        %p3528 = scmp.lt.s32.totalorder %s23, 1
        %s3529 = scalar_select %p3528, %s23, 1
        %p3530 = scmp.lt.s32.totalorder %s3527, 15
        %s3531 = scalar_select %p3530, %s3527, 15
        %s3532 = smul.addr %s3531, 3
        %s3533 = smul.addr %s3529, 48
        %s3534 = sadd.s32 %s3532, %s3533
        %s3535 = smul.addr %s3534, 8
        %s3536 = scalar_lea.vmem %s6, %s3535
      $region56: #{a_call__.6} parent=51 // pred_fallthru
        _
    $region52: #{a_call__.6} parent=5 // pred_fallthru
      _
  $region6: #{a_call__.6} parent=0 // loop_footer
    %s16 = sadd.s32 1, %s12
  $region7: #{a_call__.6} parent=0 // loop_footer_branch
    %11 = sbr.rel target = $region3
  $region8: #{a_call__.6} parent=0 // loop_exit
    _

</llo_original>
